<compile_context>
chip_gen: v6e
topology: v6e:2x2x1
jax: 0.10.0
libtpu: 0.0.40
codegen_flags: <defaults>
</compile_context>

<pallas_src>
import jax
import jax.numpy as jnp
from jax.experimental import pallas as pl
from jax.experimental.pallas import tpu as pltpu


# Matmul operand dtype: bf16 halves weight/activation DMA bytes and ~doubles MXU
# throughput on v6e/v7x; accumulation is f32 (preferred_element_type) and all
# elementwise gate / softmax math stays f32 (v5e has no bf16 VPU/EUP path).
MXU_DTYPE = jnp.bfloat16
# dtype for the large activation streams (hoisted gi projection, GRU outputs)
STREAM_DTYPE = jnp.bfloat16


def _vmem_limit(est_bytes):
    """Explicit scoped-VMEM budget: estimated need x2 + 2 MiB headroom, clamped to a
    range that is legal from v5e (16 MiB scoped default) up to v7x (64 MiB physical)."""
    return int(min(max(2 * est_bytes + (2 << 20), 8 << 20), 48 << 20))


def _batch_chunk(B):
    """Leading "parallel" batch-chunk size. v7x has 2 TensorCores: splitting the
    batch across a parallel grid axis keeps the second core busy. Chunks stay a
    multiple of 8 (sublane) whenever possible."""
    if B > 8 and B % 8 == 0:
        return 8
    return B


# ----------------------------------------------------------------------------
# GRU recurrence kernel.
# Grid = (batch chunks ["parallel"], time chunks ["arbitrary"]).
# One time-grid step = `tc` timesteps; hidden state lives in VMEM scratch across the
# time axis. PyTorch nn.GRU gate semantics, gates ordered [r | z | n]. The input
# projection gi was precomputed outside (hoisted), so only the small recurrent
# matmul h @ W_hh remains on the sequential critical path.
# ----------------------------------------------------------------------------
def _gru_kernel(gi_ref, whh_ref, bhh_ref, out_ref, h_scr):
    @pl.when(pl.program_id(1) == 0)
    def _():
        h_scr[...] = jnp.zeros_like(h_scr)

    Bc, H = h_scr.shape
    tc = gi_ref.shape[1]
    whh = whh_ref[...]                                  # (H, 3H) bf16, grid-invariant
    # hoisted bias broadcast: JAX does not CSE broadcast_in_dim inside unrolled loops
    bhhb = jnp.broadcast_to(bhh_ref[...], (Bc, 3 * H))  # (Bc, 3H) f32
    h = h_scr[...]                                      # (Bc, H)  f32

    hs = []
    for t in range(tc):                                 # static, fully unrolled chunk
        gh = jnp.dot(h.astype(whh.dtype), whh,
                     preferred_element_type=jnp.float32) + bhhb          # (Bc, 3H)
        gi = gi_ref[:, t, :].astype(jnp.float32)        # bf16 stream -> f32 gate math
        r = jax.nn.sigmoid(gi[:, 0:H] + gh[:, 0:H])
        z = jax.nn.sigmoid(gi[:, H:2 * H] + gh[:, H:2 * H])
        n = jnp.tanh(gi[:, 2 * H:3 * H] + r * gh[:, 2 * H:3 * H])
        h = (1.0 - z) * n + z * h
        hs.append(h)

    # one lane/sublane-dense full-block store per chunk (instead of tc masked
    # per-sublane vst.msk stores)
    out_ref[...] = jnp.stack(hs, axis=1).astype(out_ref.dtype)
    h_scr[...] = h


def gru_layer(x, w_ih_t, w_hh_t, b_ih, b_hh, *, time_chunk=32):
    """Single-layer GRU (PyTorch nn.GRU semantics), batch-major.

    x       : (B, T, D) float32
    w_ih_t  : (D, 3H)  == torch weight_ih_l0.T   (gates ordered r|z|n)
    w_hh_t  : (H, 3H)  == torch weight_hh_l0.T
    b_ih    : (1, 3H),  b_hh : (1, 3H)
    Returns (B, T, H) bfloat16 activation stream.
    """
    B, T, _ = x.shape
    H3 = w_hh_t.shape[-1]
    H = H3 // 3

    # Hoisted input projection: one big (B*T, D) x (D, 3H) matmul in plain XLA
    # (non-recurrent, MXU-friendly). Emit the gi stream in bf16 — the recurrence
    # kernel is DMA-bound, so this halves its dominant HBM traffic.
    gi = jnp.einsum("btd,dg->btg", x.astype(MXU_DTYPE), w_ih_t.astype(MXU_DTYPE),
                    preferred_element_type=jnp.float32) + b_ih
    gi = gi.astype(STREAM_DTYPE)                                    # (B, T, 3H)

    # Big time chunks amortize the ~0.35us/step pipeline overhead (but never larger
    # than the (sublane-rounded) sequence itself, so short demo sequences don't pay
    # for padded compute).
    tc = max(8, min(int(time_chunk), pl.cdiv(T, 8) * 8))
    T_pad = pl.cdiv(T, tc) * tc
    if T_pad != T:
        gi = jnp.pad(gi, ((0, 0), (0, T_pad - T), (0, 0)))

    bb = _batch_chunk(B)
    n_b, n_t = B // bb, T_pad // tc

    # explicit VMEM budget: double-buffered gi/out blocks + weights + scratch
    est = (2 * bb * tc * H3 * 2          # gi blocks (bf16, double-buffered)
           + 2 * bb * tc * H * 2         # out blocks (bf16)
           + 2 * H * H3 * 2              # W_hh (bf16)
           + 2 * 8 * H3 * 4              # b_hh (sublane-padded f32)
           + bb * H * 4)                 # hidden-state scratch

    out = pl.pallas_call(
        _gru_kernel,
        out_shape=jax.ShapeDtypeStruct((B, T_pad, H), STREAM_DTYPE),
        grid_spec=pltpu.PrefetchScalarGridSpec(
            num_scalar_prefetch=0,
            grid=(n_b, n_t),
            in_specs=[
                pl.BlockSpec((bb, tc, H3), lambda b, c: (b, c, 0)),
                pl.BlockSpec((H, H3), lambda b, c: (0, 0)),   # grid-invariant weights
                pl.BlockSpec((1, H3), lambda b, c: (0, 0)),
            ],
            out_specs=pl.BlockSpec((bb, tc, H), lambda b, c: (b, c, 0)),
            scratch_shapes=[pltpu.VMEM((bb, H), jnp.float32)],
        ),
        # batch chunks are independent ("parallel", engages v7x's 2nd TensorCore);
        # time is a true recurrence -> "arbitrary" (sequential).
        compiler_params=pltpu.CompilerParams(
            dimension_semantics=("parallel", "arbitrary"),
            vmem_limit_bytes=_vmem_limit(est)),
    )(gi, w_hh_t.astype(MXU_DTYPE), b_hh)

    return out[:, :T, :] if T_pad != T else out


# ----------------------------------------------------------------------------
# Fused attention + output projection + log_softmax.
# Grid = (batch chunks ["parallel"], kv chunks ["arbitrary"]).
# Encoder frames are streamed over the kv axis with an online (flash-style) softmax
# carried in VMEM scratch; the fc + exact log_softmax epilogue runs on the last kv
# step. fc(tanh([dec ; ctx])) uses a single pre-concatenated (2H, C) weight.
# ----------------------------------------------------------------------------
def _attn_fc_kernel(dec_ref, enct_ref, enc_ref, mask_ref, wfc_ref, bfc_ref,
                    out_ref, m_sc, l_sc, acc_sc):
    kv = pl.program_id(1)

    @pl.when(kv == 0)
    def _():
        m_sc[...] = jnp.full_like(m_sc, -jnp.inf)
        l_sc[...] = jnp.zeros_like(l_sc)
        acc_sc[...] = jnp.zeros_like(acc_sc)

    dec = dec_ref[...]                      # (bb, L, H)  bf16
    enc_t = enct_ref[...]                   # (bb, H, tT) bf16 (pre-transposed in XLA)
    enc = enc_ref[...]                      # (bb, tT, H) bf16
    mask = mask_ref[...]                    # (bb, 1, tT) f32, 1 = valid, 0 = padding
    H = dec.shape[-1]
    scale = 1.0 / float(H) ** 0.5

    # scores: per-batch (L,H)x(H,tT) — natural MXU layout, no in-kernel transpose
    s = jnp.einsum("blh,bht->blt", dec, enc_t,
                   preferred_element_type=jnp.float32) * scale          # (bb, L, tT)
    s = s - (1.0 - mask) * 1e30             # mask padded encoder frames

    m_prev = m_sc[...]
    m_new = jnp.maximum(m_prev, jnp.max(s, axis=-1, keepdims=True))
    alpha = jnp.exp(m_prev - m_new)
    p = jnp.exp(s - m_new)
    l_sc[...] = alpha * l_sc[...] + jnp.sum(p, axis=-1, keepdims=True)
    acc_sc[...] = alpha * acc_sc[...] + jnp.einsum(
        "blt,bth->blh", p.astype(enc.dtype), enc,
        preferred_element_type=jnp.float32)                             # (bb, L, H)
    m_sc[...] = m_new

    @pl.when(kv == pl.num_programs(1) - 1)
    def _():
        bb, L, C = out_ref.shape
        ctx = acc_sc[...] * pl.reciprocal(l_sc[...], approx=True)       # (bb, L, H)
        # merged fc: concat on the 128-aligned feature axis, single (2H, C) matmul
        feat = jnp.concatenate(
            [jnp.tanh(dec.astype(jnp.float32)), jnp.tanh(ctx)], axis=-1)
        feat2 = feat.reshape(bb * L, 2 * H).astype(wfc_ref.dtype)
        logits = (jnp.dot(feat2, wfc_ref[...],
                          preferred_element_type=jnp.float32)
                  + bfc_ref[...])                                       # (bb*L, C)
        lm = jnp.max(logits, axis=-1, keepdims=True)
        lse = jnp.log(jnp.sum(jnp.exp(logits - lm), axis=-1, keepdims=True)) + lm
        out_ref[...] = (logits - lse).reshape(bb, L, C)


def attend_and_project(dec_states, encoder_outputs, enc_mask, fc_w, fc_b,
                       *, kv_chunk=128):
    """dec_states (B,L,H) bf16, encoder_outputs (B,T,H) bf16, enc_mask (B,1,T) f32,
    fc_w (2H,C), fc_b (1,C) -> log-probs (B,L,C) f32."""
    B, L, H = dec_states.shape
    T = encoder_outputs.shape[1]
    C = fc_w.shape[-1]

    # kv tiling (lane dim of the pre-transposed encoder block -> multiples of 128,
    # or the full T when T is small)
    if T <= kv_chunk:
        tT, T_a = T, T
    else:
        tT = kv_chunk
        T_a = pl.cdiv(T, tT) * tT
    if T_a != T:
        encoder_outputs = jnp.pad(encoder_outputs, ((0, 0), (0, T_a - T), (0, 0)))
        enc_mask = jnp.pad(enc_mask, ((0, 0), (0, 0), (0, T_a - T)))

    # pre-transposed copy for the scores matmul: one XLA transpose instead of a
    # per-kv-block XLU transpose inside the kernel (XLU stays free for softmax).
    enc_t = jnp.swapaxes(encoder_outputs, 1, 2)                         # (B, H, T_a)

    bb = _batch_chunk(B)
    n_b, n_kv = B // bb, T_a // tT

    est = (2 * bb * L * H * 2 + 2 * bb * H * tT * 2 + 2 * bb * tT * H * 2
           + 2 * bb * 8 * tT * 4 + 2 * 2 * H * C * 2 + 2 * 8 * C * 4
           + 2 * bb * L * C * 4
           + 2 * bb * L * 128 * 4 + bb * L * H * 4)

    # TODO(synk): for production vocab sizes (C in the thousands) also tile the class
    # dim with a grid axis + two-pass log-softmax so the fc weight streams through
    # VMEM (matters on v7x's 64 MiB VMEM).
    return pl.pallas_call(
        _attn_fc_kernel,
        out_shape=jax.ShapeDtypeStruct((B, L, C), jnp.float32),
        grid_spec=pltpu.PrefetchScalarGridSpec(
            num_scalar_prefetch=0,
            grid=(n_b, n_kv),
            in_specs=[
                pl.BlockSpec((bb, L, H), lambda b, t: (b, 0, 0)),
                pl.BlockSpec((bb, H, tT), lambda b, t: (b, 0, t)),
                pl.BlockSpec((bb, tT, H), lambda b, t: (b, t, 0)),
                pl.BlockSpec((bb, 1, tT), lambda b, t: (b, 0, t)),
                pl.BlockSpec((2 * H, C), lambda b, t: (0, 0)),
                pl.BlockSpec((1, C), lambda b, t: (0, 0)),
            ],
            out_specs=pl.BlockSpec((bb, L, C), lambda b, t: (b, 0, 0)),
            scratch_shapes=[pltpu.VMEM((bb, L, 1), jnp.float32),     # running max
                            pltpu.VMEM((bb, L, 1), jnp.float32),     # running denom
                            pltpu.VMEM((bb, L, H), jnp.float32)],    # context acc
        ),
        compiler_params=pltpu.CompilerParams(
            dimension_semantics=("parallel", "arbitrary"),
            vmem_limit_bytes=_vmem_limit(est)),
    )(dec_states, enc_t, encoder_outputs, enc_mask,
      fc_w.astype(MXU_DTYPE), fc_b)


# ----------------------------------------------------------------------------
# ListenAttendSpell.forward equivalent
# ----------------------------------------------------------------------------
def listen_attend_spell_forward(params, inputs, input_lengths, targets,
                                teacher_forcing_ratio=1.0):
    """
    inputs        : (B, T, D) float32
    input_lengths : (B,)      int32
    targets       : (B, L)    int32 token ids
    Returns (decoder_outputs_dict, encoder_log_probs, encoder_output_lengths).
    """
    B, T, _ = inputs.shape

    # ---- encoder (Listener) ----
    encoder_outputs = gru_layer(inputs, params["enc_w_ih"], params["enc_w_hh"],
                                params["enc_b_ih"], params["enc_b_hh"])   # (B,T,H) bf16
    encoder_log_probs = None              # no joint-CTC head in this configuration
    encoder_output_lengths = input_lengths                                # no downsampling

    # ---- decoder (Speller), teacher_forcing_ratio == 1.0 path ----
    # TODO(synk): teacher_forcing_ratio < 1.0 (sampled argmax feedback) needs a
    # sequential decode loop; only the fully teacher-forced path is implemented.
    embedded = jnp.take(params["embedding"], targets, axis=0)             # (B,L,E)
    dec_states = gru_layer(embedded, params["dec_w_ih"], params["dec_w_hh"],
                           params["dec_b_ih"], params["dec_b_hh"])        # (B,L,H) bf16
    # TODO(synk): for production decode lengths keep dec_states VMEM-resident
    # (fuse the decoder-GRU epilogue with attention) instead of the HBM round trip.

    # length mask so attention ignores padded encoder frames (matches
    # pack_padded_sequence / masked-attention behaviour for ragged batches)
    enc_mask = (jnp.arange(T, dtype=jnp.int32)[None, None, :]
                < input_lengths[:, None, None]).astype(jnp.float32)       # (B,1,T)

    decoder_log_probs = attend_and_project(dec_states, encoder_outputs, enc_mask,
                                           params["fc_w"], params["fc_b"])
    return ({"decoder_log_probs": decoder_log_probs},
            encoder_log_probs, encoder_output_lengths)


# ----------------------------------------------------------------------------
# Deterministic parameter init.  Layouts are pre-transposed / pre-concatenated
# versions of the PyTorch parameters (weight_ih.T, weight_hh.T, fc.weight.T with the
# [dec ; context] halves stacked along the input axis).
# ----------------------------------------------------------------------------
def init_params(key, input_dim, hidden_dim, embed_dim, num_classes):
    ks = jax.random.split(key, 11)
    k = 1.0 / jnp.sqrt(jnp.float32(hidden_dim))

    def u(kk, shape):
        return jax.random.uniform(kk, shape, jnp.float32, -k, k)

    return {
        # encoder GRU: (D, 3H), (H, 3H), biases (1, 3H); gates ordered r|z|n
        "enc_w_ih": u(ks[0], (input_dim, 3 * hidden_dim)),
        "enc_w_hh": u(ks[1], (hidden_dim, 3 * hidden_dim)),
        "enc_b_ih": u(ks[2], (1, 3 * hidden_dim)),
        "enc_b_hh": u(ks[3], (1, 3 * hidden_dim)),
        # decoder embedding + GRU
        "embedding": jax.random.normal(ks[4], (num_classes, embed_dim), jnp.float32),
        "dec_w_ih": u(ks[5], (embed_dim, 3 * hidden_dim)),
        "dec_w_hh": u(ks[6], (hidden_dim, 3 * hidden_dim)),
        "dec_b_ih": u(ks[7], (1, 3 * hidden_dim)),
        "dec_b_hh": u(ks[8], (1, 3 * hidden_dim)),
        # output projection over [dec_state ; context]: single (2H, C) weight
        "fc_w": u(ks[9], (2 * hidden_dim, num_classes)),
        "fc_b": u(ks[10], (1, num_classes)),
    }


if __name__ == "__main__":
    # Small but TPU-friendly shapes: lane dims (H, C, 3H, 2H) multiples of 128,
    # sublane dims (B, T, L) multiples of 8.
    B, T, D = 8, 16, 64          # batch, input seq len, feature dim
    H, E, C = 128, 64, 128       # hidden dim, embed dim, num classes
    L = 8                        # target length

    key = jax.random.PRNGKey(0)
    k_in, k_len, k_tgt, k_par = jax.random.split(key, 4)

    inputs = jax.random.normal(k_in, (B, T, D), jnp.float32)
    input_lengths = jax.random.randint(k_len, (B,), T // 2, T + 1, jnp.int32)
    targets = jax.random.randint(k_tgt, (B, L), 0, C, jnp.int32)
    params = init_params(k_par, D, H, E, C)

    fwd = jax.jit(lambda p, x, xl, y: listen_attend_spell_forward(p, x, xl, y, 1.0))
    dec_out, enc_log_probs, enc_lens = fwd(params, inputs, input_lengths, targets)

    log_probs = jax.block_until_ready(dec_out["decoder_log_probs"])
    jax.block_until_ready(enc_lens)

    assert log_probs.shape == (B, L, C)
    assert bool(jnp.all(jnp.isfinite(log_probs)))
    # rows of log_softmax must normalize to 1 in probability space
    assert jnp.allclose(jnp.sum(jnp.exp(log_probs), axis=-1), 1.0, atol=1e-3)
    print("KERNEL_OK")
</pallas_src>

<mosaic_0001>
module attributes {stable_mosaic.version = 11 : i64} {
  func.func @_gru_kernel(%arg0: i32, %arg1: i32, %arg2: memref<8x8x384xbf16, #tpu.memory_space<vmem>>, %arg3: memref<128x384xbf16, #tpu.memory_space<vmem>>, %arg4: memref<1x384xf32, #tpu.memory_space<vmem>>, %arg5: memref<8x8x128xbf16, #tpu.memory_space<vmem>>, %arg6: memref<8x128xf32, #tpu.memory_space<vmem>>) attributes {dimension_semantics = [#tpu.dimension_semantics<parallel>, #tpu.dimension_semantics<arbitrary>], iteration_bounds = array<i64: 1, 1>, scalar_prefetch = 0 : i64, scratch_operands = 1 : i64, tpu.core_type = #tpu.core_type<tc>, window_params = [{transform_indices = @transform_0, window_bounds = array<i64: 8, 8, 384>}, {pipeline_mode = #tpu.pipeline_mode<synchronous>, transform_indices = @transform_1, window_bounds = array<i64: 128, 384>}, {pipeline_mode = #tpu.pipeline_mode<synchronous>, transform_indices = @transform_2, window_bounds = array<i64: 1, 384>}, {transform_indices = @transform_3, window_bounds = array<i64: 8, 8, 128>}]} {
    %c0_i32 = arith.constant 0 : i32
    %0 = arith.cmpi eq, %arg1, %c0_i32 : i32
    %1 = arith.extui %0 : i1 to i32
    %c0_i32_0 = arith.constant 0 : i32
    %2 = arith.cmpi ne, %1, %c0_i32_0 : i32
    scf.if %2 {
      %cst_59 = arith.constant 0.000000e+00 : f32
      %276 = vector.broadcast %cst_59 : f32 to vector<8x128xf32>
      %c0_60 = arith.constant 0 : index
      %c0_61 = arith.constant 0 : index
      %277 = vector.load %arg6[%c0_60, %c0_61] : memref<8x128xf32, #tpu.memory_space<vmem>>, vector<8x128xf32>
      tpu.vector_store %arg6[%c0_60, %c0_61], %276 {strides = array<i32>} : memref<8x128xf32, #tpu.memory_space<vmem>>, vector<8x128xf32>,
    } else {
    }
    %c0 = arith.constant 0 : index
    %c0_1 = arith.constant 0 : index
    %3 = vector.load %arg3[%c0, %c0_1] : memref<128x384xbf16, #tpu.memory_space<vmem>>, vector<128x384xbf16>
    %c0_2 = arith.constant 0 : index
    %c0_3 = arith.constant 0 : index
    %4 = vector.load %arg4[%c0_2, %c0_3] : memref<1x384xf32, #tpu.memory_space<vmem>>, vector<1x384xf32>
    %5 = vector.shape_cast %4 : vector<1x384xf32> to vector<1x384xf32>
    %6 = vector.broadcast %5 : vector<1x384xf32> to vector<8x384xf32>
    %c0_4 = arith.constant 0 : index
    %c0_5 = arith.constant 0 : index
    %7 = vector.load %arg6[%c0_4, %c0_5] : memref<8x128xf32, #tpu.memory_space<vmem>>, vector<8x128xf32>
    %8 = arith.truncf %7 : vector<8x128xf32> to vector<8x128xbf16>
    %cst = arith.constant dense<0.000000e+00> : vector<8x384xf32>
    %9 = tpu.matmul %8, %3, %cst {dimension_numbers = #tpu.dot_dimension_numbers<[1], [0], [0], [1], [0, 0, 1, 1], [], []>} : vector<8x128xbf16>, vector<128x384xbf16>, vector<8x384xf32> -> vector<8x384xf32>
    %10 = arith.addf %9, %6 : vector<8x384xf32>
    %c0_6 = arith.constant 0 : index
    %c0_7 = arith.constant 0 : index
    %c0_8 = arith.constant 0 : index
    %11 = vector.load %arg2[%c0_6, %c0_7, %c0_8] : memref<8x8x384xbf16, #tpu.memory_space<vmem>>, vector<8x1x384xbf16>
    %12 = vector.shape_cast %11 : vector<8x1x384xbf16> to vector<8x384xbf16>
    %13 = arith.extf %12 : vector<8x384xbf16> to vector<8x384xf32>
    %14 = vector.extract_strided_slice %13 {offsets = [0, 0], sizes = [8, 128], strides = [1, 1]} : vector<8x384xf32> to vector<8x128xf32>
    %15 = vector.extract_strided_slice %10 {offsets = [0, 0], sizes = [8, 128], strides = [1, 1]} : vector<8x384xf32> to vector<8x128xf32>
    %16 = arith.addf %14, %15 : vector<8x128xf32>
    %17 = arith.negf %16 : vector<8x128xf32>
    %18 = math.exp %17 : vector<8x128xf32>
    %cst_9 = arith.constant 1.000000e+00 : f32
    %19 = vector.broadcast %cst_9 : f32 to vector<8x128xf32>
    %20 = arith.addf %19, %18 : vector<8x128xf32>
    %21 = arith.divf %19, %20 : vector<8x128xf32>
    %22 = vector.extract_strided_slice %13 {offsets = [0, 128], sizes = [8, 128], strides = [1, 1]} : vector<8x384xf32> to vector<8x128xf32>
    %23 = vector.extract_strided_slice %10 {offsets = [0, 128], sizes = [8, 128], strides = [1, 1]} : vector<8x384xf32> to vector<8x128xf32>
    %24 = arith.addf %22, %23 : vector<8x128xf32>
    %25 = arith.negf %24 : vector<8x128xf32>
    %26 = math.exp %25 : vector<8x128xf32>
    %cst_10 = arith.constant 1.000000e+00 : f32
    %27 = vector.broadcast %cst_10 : f32 to vector<8x128xf32>
    %28 = arith.addf %27, %26 : vector<8x128xf32>
    %29 = arith.divf %27, %28 : vector<8x128xf32>
    %30 = vector.extract_strided_slice %13 {offsets = [0, 256], sizes = [8, 128], strides = [1, 1]} : vector<8x384xf32> to vector<8x128xf32>
    %31 = vector.extract_strided_slice %10 {offsets = [0, 256], sizes = [8, 128], strides = [1, 1]} : vector<8x384xf32> to vector<8x128xf32>
    %32 = arith.mulf %21, %31 : vector<8x128xf32>
    %33 = arith.addf %30, %32 : vector<8x128xf32>
    %34 = math.tanh %33 : vector<8x128xf32>
    %cst_11 = arith.constant 1.000000e+00 : f32
    %35 = vector.broadcast %cst_11 : f32 to vector<8x128xf32>
    %36 = arith.subf %35, %29 : vector<8x128xf32>
    %37 = arith.mulf %36, %34 : vector<8x128xf32>
    %38 = arith.mulf %29, %7 : vector<8x128xf32>
    %39 = arith.addf %37, %38 : vector<8x128xf32>
    %40 = arith.truncf %39 : vector<8x128xf32> to vector<8x128xbf16>
    %cst_12 = arith.constant dense<0.000000e+00> : vector<8x384xf32>
    %41 = tpu.matmul %40, %3, %cst_12 {dimension_numbers = #tpu.dot_dimension_numbers<[1], [0], [0], [1], [0, 0, 1, 1], [], []>} : vector<8x128xbf16>, vector<128x384xbf16>, vector<8x384xf32> -> vector<8x384xf32>
    %42 = arith.addf %41, %6 : vector<8x384xf32>
    %c0_13 = arith.constant 0 : index
    %c1 = arith.constant 1 : index
    %c0_14 = arith.constant 0 : index
    %43 = vector.load %arg2[%c0_13, %c1, %c0_14] : memref<8x8x384xbf16, #tpu.memory_space<vmem>>, vector<8x1x384xbf16>
    %44 = vector.shape_cast %43 : vector<8x1x384xbf16> to vector<8x384xbf16>
    %45 = arith.extf %44 : vector<8x384xbf16> to vector<8x384xf32>
    %46 = vector.extract_strided_slice %45 {offsets = [0, 0], sizes = [8, 128], strides = [1, 1]} : vector<8x384xf32> to vector<8x128xf32>
    %47 = vector.extract_strided_slice %42 {offsets = [0, 0], sizes = [8, 128], strides = [1, 1]} : vector<8x384xf32> to vector<8x128xf32>
    %48 = arith.addf %46, %47 : vector<8x128xf32>
    %49 = arith.negf %48 : vector<8x128xf32>
    %50 = math.exp %49 : vector<8x128xf32>
    %cst_15 = arith.constant 1.000000e+00 : f32
    %51 = vector.broadcast %cst_15 : f32 to vector<8x128xf32>
    %52 = arith.addf %51, %50 : vector<8x128xf32>
    %53 = arith.divf %51, %52 : vector<8x128xf32>
    %54 = vector.extract_strided_slice %45 {offsets = [0, 128], sizes = [8, 128], strides = [1, 1]} : vector<8x384xf32> to vector<8x128xf32>
    %55 = vector.extract_strided_slice %42 {offsets = [0, 128], sizes = [8, 128], strides = [1, 1]} : vector<8x384xf32> to vector<8x128xf32>
    %56 = arith.addf %54, %55 : vector<8x128xf32>
    %57 = arith.negf %56 : vector<8x128xf32>
    %58 = math.exp %57 : vector<8x128xf32>
    %cst_16 = arith.constant 1.000000e+00 : f32
    %59 = vector.broadcast %cst_16 : f32 to vector<8x128xf32>
    %60 = arith.addf %59, %58 : vector<8x128xf32>
    %61 = arith.divf %59, %60 : vector<8x128xf32>
    %62 = vector.extract_strided_slice %45 {offsets = [0, 256], sizes = [8, 128], strides = [1, 1]} : vector<8x384xf32> to vector<8x128xf32>
    %63 = vector.extract_strided_slice %42 {offsets = [0, 256], sizes = [8, 128], strides = [1, 1]} : vector<8x384xf32> to vector<8x128xf32>
    %64 = arith.mulf %53, %63 : vector<8x128xf32>
    %65 = arith.addf %62, %64 : vector<8x128xf32>
    %66 = math.tanh %65 : vector<8x128xf32>
    %cst_17 = arith.constant 1.000000e+00 : f32
    %67 = vector.broadcast %cst_17 : f32 to vector<8x128xf32>
    %68 = arith.subf %67, %61 : vector<8x128xf32>
    %69 = arith.mulf %68, %66 : vector<8x128xf32>
    %70 = arith.mulf %61, %39 : vector<8x128xf32>
    %71 = arith.addf %69, %70 : vector<8x128xf32>
    %72 = arith.truncf %71 : vector<8x128xf32> to vector<8x128xbf16>
    %cst_18 = arith.constant dense<0.000000e+00> : vector<8x384xf32>
    %73 = tpu.matmul %72, %3, %cst_18 {dimension_numbers = #tpu.dot_dimension_numbers<[1], [0], [0], [1], [0, 0, 1, 1], [], []>} : vector<8x128xbf16>, vector<128x384xbf16>, vector<8x384xf32> -> vector<8x384xf32>
    %74 = arith.addf %73, %6 : vector<8x384xf32>
    %c0_19 = arith.constant 0 : index
    %c2 = arith.constant 2 : index
    %c0_20 = arith.constant 0 : index
    %75 = vector.load %arg2[%c0_19, %c2, %c0_20] : memref<8x8x384xbf16, #tpu.memory_space<vmem>>, vector<8x1x384xbf16>
    %76 = vector.shape_cast %75 : vector<8x1x384xbf16> to vector<8x384xbf16>
    %77 = arith.extf %76 : vector<8x384xbf16> to vector<8x384xf32>
    %78 = vector.extract_strided_slice %77 {offsets = [0, 0], sizes = [8, 128], strides = [1, 1]} : vector<8x384xf32> to vector<8x128xf32>
    %79 = vector.extract_strided_slice %74 {offsets = [0, 0], sizes = [8, 128], strides = [1, 1]} : vector<8x384xf32> to vector<8x128xf32>
    %80 = arith.addf %78, %79 : vector<8x128xf32>
    %81 = arith.negf %80 : vector<8x128xf32>
    %82 = math.exp %81 : vector<8x128xf32>
    %cst_21 = arith.constant 1.000000e+00 : f32
    %83 = vector.broadcast %cst_21 : f32 to vector<8x128xf32>
    %84 = arith.addf %83, %82 : vector<8x128xf32>
    %85 = arith.divf %83, %84 : vector<8x128xf32>
    %86 = vector.extract_strided_slice %77 {offsets = [0, 128], sizes = [8, 128], strides = [1, 1]} : vector<8x384xf32> to vector<8x128xf32>
    %87 = vector.extract_strided_slice %74 {offsets = [0, 128], sizes = [8, 128], strides = [1, 1]} : vector<8x384xf32> to vector<8x128xf32>
    %88 = arith.addf %86, %87 : vector<8x128xf32>
    %89 = arith.negf %88 : vector<8x128xf32>
    %90 = math.exp %89 : vector<8x128xf32>
    %cst_22 = arith.constant 1.000000e+00 : f32
    %91 = vector.broadcast %cst_22 : f32 to vector<8x128xf32>
    %92 = arith.addf %91, %90 : vector<8x128xf32>
    %93 = arith.divf %91, %92 : vector<8x128xf32>
    %94 = vector.extract_strided_slice %77 {offsets = [0, 256], sizes = [8, 128], strides = [1, 1]} : vector<8x384xf32> to vector<8x128xf32>
    %95 = vector.extract_strided_slice %74 {offsets = [0, 256], sizes = [8, 128], strides = [1, 1]} : vector<8x384xf32> to vector<8x128xf32>
    %96 = arith.mulf %85, %95 : vector<8x128xf32>
    %97 = arith.addf %94, %96 : vector<8x128xf32>
    %98 = math.tanh %97 : vector<8x128xf32>
    %cst_23 = arith.constant 1.000000e+00 : f32
    %99 = vector.broadcast %cst_23 : f32 to vector<8x128xf32>
    %100 = arith.subf %99, %93 : vector<8x128xf32>
    %101 = arith.mulf %100, %98 : vector<8x128xf32>
    %102 = arith.mulf %93, %71 : vector<8x128xf32>
    %103 = arith.addf %101, %102 : vector<8x128xf32>
    %104 = arith.truncf %103 : vector<8x128xf32> to vector<8x128xbf16>
    %cst_24 = arith.constant dense<0.000000e+00> : vector<8x384xf32>
    %105 = tpu.matmul %104, %3, %cst_24 {dimension_numbers = #tpu.dot_dimension_numbers<[1], [0], [0], [1], [0, 0, 1, 1], [], []>} : vector<8x128xbf16>, vector<128x384xbf16>, vector<8x384xf32> -> vector<8x384xf32>
    %106 = arith.addf %105, %6 : vector<8x384xf32>
    %c0_25 = arith.constant 0 : index
    %c3 = arith.constant 3 : index
    %c0_26 = arith.constant 0 : index
    %107 = vector.load %arg2[%c0_25, %c3, %c0_26] : memref<8x8x384xbf16, #tpu.memory_space<vmem>>, vector<8x1x384xbf16>
    %108 = vector.shape_cast %107 : vector<8x1x384xbf16> to vector<8x384xbf16>
    %109 = arith.extf %108 : vector<8x384xbf16> to vector<8x384xf32>
    %110 = vector.extract_strided_slice %109 {offsets = [0, 0], sizes = [8, 128], strides = [1, 1]} : vector<8x384xf32> to vector<8x128xf32>
    %111 = vector.extract_strided_slice %106 {offsets = [0, 0], sizes = [8, 128], strides = [1, 1]} : vector<8x384xf32> to vector<8x128xf32>
    %112 = arith.addf %110, %111 : vector<8x128xf32>
    %113 = arith.negf %112 : vector<8x128xf32>
    %114 = math.exp %113 : vector<8x128xf32>
    %cst_27 = arith.constant 1.000000e+00 : f32
    %115 = vector.broadcast %cst_27 : f32 to vector<8x128xf32>
    %116 = arith.addf %115, %114 : vector<8x128xf32>
    %117 = arith.divf %115, %116 : vector<8x128xf32>
    %118 = vector.extract_strided_slice %109 {offsets = [0, 128], sizes = [8, 128], strides = [1, 1]} : vector<8x384xf32> to vector<8x128xf32>
    %119 = vector.extract_strided_slice %106 {offsets = [0, 128], sizes = [8, 128], strides = [1, 1]} : vector<8x384xf32> to vector<8x128xf32>
    %120 = arith.addf %118, %119 : vector<8x128xf32>
    %121 = arith.negf %120 : vector<8x128xf32>
    %122 = math.exp %121 : vector<8x128xf32>
    %cst_28 = arith.constant 1.000000e+00 : f32
    %123 = vector.broadcast %cst_28 : f32 to vector<8x128xf32>
    %124 = arith.addf %123, %122 : vector<8x128xf32>
    %125 = arith.divf %123, %124 : vector<8x128xf32>
    %126 = vector.extract_strided_slice %109 {offsets = [0, 256], sizes = [8, 128], strides = [1, 1]} : vector<8x384xf32> to vector<8x128xf32>
    %127 = vector.extract_strided_slice %106 {offsets = [0, 256], sizes = [8, 128], strides = [1, 1]} : vector<8x384xf32> to vector<8x128xf32>
    %128 = arith.mulf %117, %127 : vector<8x128xf32>
    %129 = arith.addf %126, %128 : vector<8x128xf32>
    %130 = math.tanh %129 : vector<8x128xf32>
    %cst_29 = arith.constant 1.000000e+00 : f32
    %131 = vector.broadcast %cst_29 : f32 to vector<8x128xf32>
    %132 = arith.subf %131, %125 : vector<8x128xf32>
    %133 = arith.mulf %132, %130 : vector<8x128xf32>
    %134 = arith.mulf %125, %103 : vector<8x128xf32>
    %135 = arith.addf %133, %134 : vector<8x128xf32>
    %136 = arith.truncf %135 : vector<8x128xf32> to vector<8x128xbf16>
    %cst_30 = arith.constant dense<0.000000e+00> : vector<8x384xf32>
    %137 = tpu.matmul %136, %3, %cst_30 {dimension_numbers = #tpu.dot_dimension_numbers<[1], [0], [0], [1], [0, 0, 1, 1], [], []>} : vector<8x128xbf16>, vector<128x384xbf16>, vector<8x384xf32> -> vector<8x384xf32>
    %138 = arith.addf %137, %6 : vector<8x384xf32>
    %c0_31 = arith.constant 0 : index
    %c4 = arith.constant 4 : index
    %c0_32 = arith.constant 0 : index
    %139 = vector.load %arg2[%c0_31, %c4, %c0_32] : memref<8x8x384xbf16, #tpu.memory_space<vmem>>, vector<8x1x384xbf16>
    %140 = vector.shape_cast %139 : vector<8x1x384xbf16> to vector<8x384xbf16>
    %141 = arith.extf %140 : vector<8x384xbf16> to vector<8x384xf32>
    %142 = vector.extract_strided_slice %141 {offsets = [0, 0], sizes = [8, 128], strides = [1, 1]} : vector<8x384xf32> to vector<8x128xf32>
    %143 = vector.extract_strided_slice %138 {offsets = [0, 0], sizes = [8, 128], strides = [1, 1]} : vector<8x384xf32> to vector<8x128xf32>
    %144 = arith.addf %142, %143 : vector<8x128xf32>
    %145 = arith.negf %144 : vector<8x128xf32>
    %146 = math.exp %145 : vector<8x128xf32>
    %cst_33 = arith.constant 1.000000e+00 : f32
    %147 = vector.broadcast %cst_33 : f32 to vector<8x128xf32>
    %148 = arith.addf %147, %146 : vector<8x128xf32>
    %149 = arith.divf %147, %148 : vector<8x128xf32>
    %150 = vector.extract_strided_slice %141 {offsets = [0, 128], sizes = [8, 128], strides = [1, 1]} : vector<8x384xf32> to vector<8x128xf32>
    %151 = vector.extract_strided_slice %138 {offsets = [0, 128], sizes = [8, 128], strides = [1, 1]} : vector<8x384xf32> to vector<8x128xf32>
    %152 = arith.addf %150, %151 : vector<8x128xf32>
    %153 = arith.negf %152 : vector<8x128xf32>
    %154 = math.exp %153 : vector<8x128xf32>
    %cst_34 = arith.constant 1.000000e+00 : f32
    %155 = vector.broadcast %cst_34 : f32 to vector<8x128xf32>
    %156 = arith.addf %155, %154 : vector<8x128xf32>
    %157 = arith.divf %155, %156 : vector<8x128xf32>
    %158 = vector.extract_strided_slice %141 {offsets = [0, 256], sizes = [8, 128], strides = [1, 1]} : vector<8x384xf32> to vector<8x128xf32>
    %159 = vector.extract_strided_slice %138 {offsets = [0, 256], sizes = [8, 128], strides = [1, 1]} : vector<8x384xf32> to vector<8x128xf32>
    %160 = arith.mulf %149, %159 : vector<8x128xf32>
    %161 = arith.addf %158, %160 : vector<8x128xf32>
    %162 = math.tanh %161 : vector<8x128xf32>
    %cst_35 = arith.constant 1.000000e+00 : f32
    %163 = vector.broadcast %cst_35 : f32 to vector<8x128xf32>
    %164 = arith.subf %163, %157 : vector<8x128xf32>
    %165 = arith.mulf %164, %162 : vector<8x128xf32>
    %166 = arith.mulf %157, %135 : vector<8x128xf32>
    %167 = arith.addf %165, %166 : vector<8x128xf32>
    %168 = arith.truncf %167 : vector<8x128xf32> to vector<8x128xbf16>
    %cst_36 = arith.constant dense<0.000000e+00> : vector<8x384xf32>
    %169 = tpu.matmul %168, %3, %cst_36 {dimension_numbers = #tpu.dot_dimension_numbers<[1], [0], [0], [1], [0, 0, 1, 1], [], []>} : vector<8x128xbf16>, vector<128x384xbf16>, vector<8x384xf32> -> vector<8x384xf32>
    %170 = arith.addf %169, %6 : vector<8x384xf32>
    %c0_37 = arith.constant 0 : index
    %c5 = arith.constant 5 : index
    %c0_38 = arith.constant 0 : index
    %171 = vector.load %arg2[%c0_37, %c5, %c0_38] : memref<8x8x384xbf16, #tpu.memory_space<vmem>>, vector<8x1x384xbf16>
    %172 = vector.shape_cast %171 : vector<8x1x384xbf16> to vector<8x384xbf16>
    %173 = arith.extf %172 : vector<8x384xbf16> to vector<8x384xf32>
    %174 = vector.extract_strided_slice %173 {offsets = [0, 0], sizes = [8, 128], strides = [1, 1]} : vector<8x384xf32> to vector<8x128xf32>
    %175 = vector.extract_strided_slice %170 {offsets = [0, 0], sizes = [8, 128], strides = [1, 1]} : vector<8x384xf32> to vector<8x128xf32>
    %176 = arith.addf %174, %175 : vector<8x128xf32>
    %177 = arith.negf %176 : vector<8x128xf32>
    %178 = math.exp %177 : vector<8x128xf32>
    %cst_39 = arith.constant 1.000000e+00 : f32
    %179 = vector.broadcast %cst_39 : f32 to vector<8x128xf32>
    %180 = arith.addf %179, %178 : vector<8x128xf32>
    %181 = arith.divf %179, %180 : vector<8x128xf32>
    %182 = vector.extract_strided_slice %173 {offsets = [0, 128], sizes = [8, 128], strides = [1, 1]} : vector<8x384xf32> to vector<8x128xf32>
    %183 = vector.extract_strided_slice %170 {offsets = [0, 128], sizes = [8, 128], strides = [1, 1]} : vector<8x384xf32> to vector<8x128xf32>
    %184 = arith.addf %182, %183 : vector<8x128xf32>
    %185 = arith.negf %184 : vector<8x128xf32>
    %186 = math.exp %185 : vector<8x128xf32>
    %cst_40 = arith.constant 1.000000e+00 : f32
    %187 = vector.broadcast %cst_40 : f32 to vector<8x128xf32>
    %188 = arith.addf %187, %186 : vector<8x128xf32>
    %189 = arith.divf %187, %188 : vector<8x128xf32>
    %190 = vector.extract_strided_slice %173 {offsets = [0, 256], sizes = [8, 128], strides = [1, 1]} : vector<8x384xf32> to vector<8x128xf32>
    %191 = vector.extract_strided_slice %170 {offsets = [0, 256], sizes = [8, 128], strides = [1, 1]} : vector<8x384xf32> to vector<8x128xf32>
    %192 = arith.mulf %181, %191 : vector<8x128xf32>
    %193 = arith.addf %190, %192 : vector<8x128xf32>
    %194 = math.tanh %193 : vector<8x128xf32>
    %cst_41 = arith.constant 1.000000e+00 : f32
    %195 = vector.broadcast %cst_41 : f32 to vector<8x128xf32>
    %196 = arith.subf %195, %189 : vector<8x128xf32>
    %197 = arith.mulf %196, %194 : vector<8x128xf32>
    %198 = arith.mulf %189, %167 : vector<8x128xf32>
    %199 = arith.addf %197, %198 : vector<8x128xf32>
    %200 = arith.truncf %199 : vector<8x128xf32> to vector<8x128xbf16>
    %cst_42 = arith.constant dense<0.000000e+00> : vector<8x384xf32>
    %201 = tpu.matmul %200, %3, %cst_42 {dimension_numbers = #tpu.dot_dimension_numbers<[1], [0], [0], [1], [0, 0, 1, 1], [], []>} : vector<8x128xbf16>, vector<128x384xbf16>, vector<8x384xf32> -> vector<8x384xf32>
    %202 = arith.addf %201, %6 : vector<8x384xf32>
    %c0_43 = arith.constant 0 : index
    %c6 = arith.constant 6 : index
    %c0_44 = arith.constant 0 : index
    %203 = vector.load %arg2[%c0_43, %c6, %c0_44] : memref<8x8x384xbf16, #tpu.memory_space<vmem>>, vector<8x1x384xbf16>
    %204 = vector.shape_cast %203 : vector<8x1x384xbf16> to vector<8x384xbf16>
    %205 = arith.extf %204 : vector<8x384xbf16> to vector<8x384xf32>
    %206 = vector.extract_strided_slice %205 {offsets = [0, 0], sizes = [8, 128], strides = [1, 1]} : vector<8x384xf32> to vector<8x128xf32>
    %207 = vector.extract_strided_slice %202 {offsets = [0, 0], sizes = [8, 128], strides = [1, 1]} : vector<8x384xf32> to vector<8x128xf32>
    %208 = arith.addf %206, %207 : vector<8x128xf32>
    %209 = arith.negf %208 : vector<8x128xf32>
    %210 = math.exp %209 : vector<8x128xf32>
    %cst_45 = arith.constant 1.000000e+00 : f32
    %211 = vector.broadcast %cst_45 : f32 to vector<8x128xf32>
    %212 = arith.addf %211, %210 : vector<8x128xf32>
    %213 = arith.divf %211, %212 : vector<8x128xf32>
    %214 = vector.extract_strided_slice %205 {offsets = [0, 128], sizes = [8, 128], strides = [1, 1]} : vector<8x384xf32> to vector<8x128xf32>
    %215 = vector.extract_strided_slice %202 {offsets = [0, 128], sizes = [8, 128], strides = [1, 1]} : vector<8x384xf32> to vector<8x128xf32>
    %216 = arith.addf %214, %215 : vector<8x128xf32>
    %217 = arith.negf %216 : vector<8x128xf32>
    %218 = math.exp %217 : vector<8x128xf32>
    %cst_46 = arith.constant 1.000000e+00 : f32
    %219 = vector.broadcast %cst_46 : f32 to vector<8x128xf32>
    %220 = arith.addf %219, %218 : vector<8x128xf32>
    %221 = arith.divf %219, %220 : vector<8x128xf32>
    %222 = vector.extract_strided_slice %205 {offsets = [0, 256], sizes = [8, 128], strides = [1, 1]} : vector<8x384xf32> to vector<8x128xf32>
    %223 = vector.extract_strided_slice %202 {offsets = [0, 256], sizes = [8, 128], strides = [1, 1]} : vector<8x384xf32> to vector<8x128xf32>
    %224 = arith.mulf %213, %223 : vector<8x128xf32>
    %225 = arith.addf %222, %224 : vector<8x128xf32>
    %226 = math.tanh %225 : vector<8x128xf32>
    %cst_47 = arith.constant 1.000000e+00 : f32
    %227 = vector.broadcast %cst_47 : f32 to vector<8x128xf32>
    %228 = arith.subf %227, %221 : vector<8x128xf32>
    %229 = arith.mulf %228, %226 : vector<8x128xf32>
    %230 = arith.mulf %221, %199 : vector<8x128xf32>
    %231 = arith.addf %229, %230 : vector<8x128xf32>
    %232 = arith.truncf %231 : vector<8x128xf32> to vector<8x128xbf16>
    %cst_48 = arith.constant dense<0.000000e+00> : vector<8x384xf32>
    %233 = tpu.matmul %232, %3, %cst_48 {dimension_numbers = #tpu.dot_dimension_numbers<[1], [0], [0], [1], [0, 0, 1, 1], [], []>} : vector<8x128xbf16>, vector<128x384xbf16>, vector<8x384xf32> -> vector<8x384xf32>
    %234 = arith.addf %233, %6 : vector<8x384xf32>
    %c0_49 = arith.constant 0 : index
    %c7 = arith.constant 7 : index
    %c0_50 = arith.constant 0 : index
    %235 = vector.load %arg2[%c0_49, %c7, %c0_50] : memref<8x8x384xbf16, #tpu.memory_space<vmem>>, vector<8x1x384xbf16>
    %236 = vector.shape_cast %235 : vector<8x1x384xbf16> to vector<8x384xbf16>
    %237 = arith.extf %236 : vector<8x384xbf16> to vector<8x384xf32>
    %238 = vector.extract_strided_slice %237 {offsets = [0, 0], sizes = [8, 128], strides = [1, 1]} : vector<8x384xf32> to vector<8x128xf32>
    %239 = vector.extract_strided_slice %234 {offsets = [0, 0], sizes = [8, 128], strides = [1, 1]} : vector<8x384xf32> to vector<8x128xf32>
    %240 = arith.addf %238, %239 : vector<8x128xf32>
    %241 = arith.negf %240 : vector<8x128xf32>
    %242 = math.exp %241 : vector<8x128xf32>
    %cst_51 = arith.constant 1.000000e+00 : f32
    %243 = vector.broadcast %cst_51 : f32 to vector<8x128xf32>
    %244 = arith.addf %243, %242 : vector<8x128xf32>
    %245 = arith.divf %243, %244 : vector<8x128xf32>
    %246 = vector.extract_strided_slice %237 {offsets = [0, 128], sizes = [8, 128], strides = [1, 1]} : vector<8x384xf32> to vector<8x128xf32>
    %247 = vector.extract_strided_slice %234 {offsets = [0, 128], sizes = [8, 128], strides = [1, 1]} : vector<8x384xf32> to vector<8x128xf32>
    %248 = arith.addf %246, %247 : vector<8x128xf32>
    %249 = arith.negf %248 : vector<8x128xf32>
    %250 = math.exp %249 : vector<8x128xf32>
    %cst_52 = arith.constant 1.000000e+00 : f32
    %251 = vector.broadcast %cst_52 : f32 to vector<8x128xf32>
    %252 = arith.addf %251, %250 : vector<8x128xf32>
    %253 = arith.divf %251, %252 : vector<8x128xf32>
    %254 = vector.extract_strided_slice %237 {offsets = [0, 256], sizes = [8, 128], strides = [1, 1]} : vector<8x384xf32> to vector<8x128xf32>
    %255 = vector.extract_strided_slice %234 {offsets = [0, 256], sizes = [8, 128], strides = [1, 1]} : vector<8x384xf32> to vector<8x128xf32>
    %256 = arith.mulf %245, %255 : vector<8x128xf32>
    %257 = arith.addf %254, %256 : vector<8x128xf32>
    %258 = math.tanh %257 : vector<8x128xf32>
    %cst_53 = arith.constant 1.000000e+00 : f32
    %259 = vector.broadcast %cst_53 : f32 to vector<8x128xf32>
    %260 = arith.subf %259, %253 : vector<8x128xf32>
    %261 = arith.mulf %260, %258 : vector<8x128xf32>
    %262 = arith.mulf %253, %231 : vector<8x128xf32>
    %263 = arith.addf %261, %262 : vector<8x128xf32>
    %264 = vector.shape_cast %39 : vector<8x128xf32> to vector<8x1x128xf32>
    %265 = vector.shape_cast %71 : vector<8x128xf32> to vector<8x1x128xf32>
    %266 = vector.shape_cast %103 : vector<8x128xf32> to vector<8x1x128xf32>
    %267 = vector.shape_cast %135 : vector<8x128xf32> to vector<8x1x128xf32>
    %268 = vector.shape_cast %167 : vector<8x128xf32> to vector<8x1x128xf32>
    %269 = vector.shape_cast %199 : vector<8x128xf32> to vector<8x1x128xf32>
    %270 = vector.shape_cast %231 : vector<8x128xf32> to vector<8x1x128xf32>
    %271 = vector.shape_cast %263 : vector<8x128xf32> to vector<8x1x128xf32>
    %272 = tpu.concatenate %264, %265, %266, %267, %268, %269, %270, %271 in 1 : vector<8x1x128xf32>, vector<8x1x128xf32>, vector<8x1x128xf32>, vector<8x1x128xf32>, vector<8x1x128xf32>, vector<8x1x128xf32>, vector<8x1x128xf32>, vector<8x1x128xf32> -> vector<8x8x128xf32>
    %273 = arith.truncf %272 : vector<8x8x128xf32> to vector<8x8x128xbf16>
    %c0_54 = arith.constant 0 : index
    %c0_55 = arith.constant 0 : index
    %c0_56 = arith.constant 0 : index
    %274 = vector.load %arg5[%c0_54, %c0_55, %c0_56] : memref<8x8x128xbf16, #tpu.memory_space<vmem>>, vector<8x8x128xbf16>
    tpu.vector_store %arg5[%c0_54, %c0_55, %c0_56], %273 {strides = array<i32>} : memref<8x8x128xbf16, #tpu.memory_space<vmem>>, vector<8x8x128xbf16>,
    %c0_57 = arith.constant 0 : index
    %c0_58 = arith.constant 0 : index
    %275 = vector.load %arg6[%c0_57, %c0_58] : memref<8x128xf32, #tpu.memory_space<vmem>>, vector<8x128xf32>
    tpu.vector_store %arg6[%c0_57, %c0_58], %263 {strides = array<i32>} : memref<8x128xf32, #tpu.memory_space<vmem>>, vector<8x128xf32>,
    return
  }
  func.func @transform_0(%arg0: i32, %arg1: i32) -> (i32, i32, i32) {
    %c0_i32 = arith.constant 0 : i32
    %c0_i32_0 = arith.constant 0 : i32
    return %arg0, %arg1, %c0_i32 : i32, i32, i32
  }
  func.func @transform_1(%arg0: i32, %arg1: i32) -> (i32, i32) {
    %c0_i32 = arith.constant 0 : i32
    %c0_i32_0 = arith.constant 0 : i32
    %c0_i32_1 = arith.constant 0 : i32
    return %c0_i32, %c0_i32_0 : i32, i32
  }
  func.func @transform_2(%arg0: i32, %arg1: i32) -> (i32, i32) {
    %c0_i32 = arith.constant 0 : i32
    %c0_i32_0 = arith.constant 0 : i32
    %c0_i32_1 = arith.constant 0 : i32
    return %c0_i32, %c0_i32_0 : i32, i32
  }
  func.func @transform_3(%arg0: i32, %arg1: i32) -> (i32, i32, i32) {
    %c0_i32 = arith.constant 0 : i32
    %c0_i32_0 = arith.constant 0 : i32
    return %arg0, %arg1, %c0_i32 : i32, i32, i32
  }
}

module attributes {stable_mosaic.version = 11 : i64} {
  func.func @_gru_kernel(%arg0: i32, %arg1: i32, %arg2: memref<8x16x384xbf16, #tpu.memory_space<vmem>>, %arg3: memref<128x384xbf16, #tpu.memory_space<vmem>>, %arg4: memref<1x384xf32, #tpu.memory_space<vmem>>, %arg5: memref<8x16x128xbf16, #tpu.memory_space<vmem>>, %arg6: memref<8x128xf32, #tpu.memory_space<vmem>>) attributes {dimension_semantics = [#tpu.dimension_semantics<parallel>, #tpu.dimension_semantics<arbitrary>], iteration_bounds = array<i64: 1, 1>, scalar_prefetch = 0 : i64, scratch_operands = 1 : i64, tpu.core_type = #tpu.core_type<tc>, window_params = [{transform_indices = @transform_0, window_bounds = array<i64: 8, 16, 384>}, {pipeline_mode = #tpu.pipeline_mode<synchronous>, transform_indices = @transform_1, window_bounds = array<i64: 128, 384>}, {pipeline_mode = #tpu.pipeline_mode<synchronous>, transform_indices = @transform_2, window_bounds = array<i64: 1, 384>}, {transform_indices = @transform_3, window_bounds = array<i64: 8, 16, 128>}]} {
    %c0_i32 = arith.constant 0 : i32
    %0 = arith.cmpi eq, %arg1, %c0_i32 : i32
    %1 = arith.extui %0 : i1 to i32
    %c0_i32_0 = arith.constant 0 : i32
    %2 = arith.cmpi ne, %1, %c0_i32_0 : i32
    scf.if %2 {
      %cst_107 = arith.constant 0.000000e+00 : f32
      %540 = vector.broadcast %cst_107 : f32 to vector<8x128xf32>
      %c0_108 = arith.constant 0 : index
      %c0_109 = arith.constant 0 : index
      %541 = vector.load %arg6[%c0_108, %c0_109] : memref<8x128xf32, #tpu.memory_space<vmem>>, vector<8x128xf32>
      tpu.vector_store %arg6[%c0_108, %c0_109], %540 {strides = array<i32>} : memref<8x128xf32, #tpu.memory_space<vmem>>, vector<8x128xf32>,
    } else {
    }
    %c0 = arith.constant 0 : index
    %c0_1 = arith.constant 0 : index
    %3 = vector.load %arg3[%c0, %c0_1] : memref<128x384xbf16, #tpu.memory_space<vmem>>, vector<128x384xbf16>
    %c0_2 = arith.constant 0 : index
    %c0_3 = arith.constant 0 : index
    %4 = vector.load %arg4[%c0_2, %c0_3] : memref<1x384xf32, #tpu.memory_space<vmem>>, vector<1x384xf32>
    %5 = vector.shape_cast %4 : vector<1x384xf32> to vector<1x384xf32>
    %6 = vector.broadcast %5 : vector<1x384xf32> to vector<8x384xf32>
    %c0_4 = arith.constant 0 : index
    %c0_5 = arith.constant 0 : index
    %7 = vector.load %arg6[%c0_4, %c0_5] : memref<8x128xf32, #tpu.memory_space<vmem>>, vector<8x128xf32>
    %8 = arith.truncf %7 : vector<8x128xf32> to vector<8x128xbf16>
    %cst = arith.constant dense<0.000000e+00> : vector<8x384xf32>
    %9 = tpu.matmul %8, %3, %cst {dimension_numbers = #tpu.dot_dimension_numbers<[1], [0], [0], [1], [0, 0, 1, 1], [], []>} : vector<8x128xbf16>, vector<128x384xbf16>, vector<8x384xf32> -> vector<8x384xf32>
    %10 = arith.addf %9, %6 : vector<8x384xf32>
    %c0_6 = arith.constant 0 : index
    %c0_7 = arith.constant 0 : index
    %c0_8 = arith.constant 0 : index
    %11 = vector.load %arg2[%c0_6, %c0_7, %c0_8] : memref<8x16x384xbf16, #tpu.memory_space<vmem>>, vector<8x1x384xbf16>
    %12 = vector.shape_cast %11 : vector<8x1x384xbf16> to vector<8x384xbf16>
    %13 = arith.extf %12 : vector<8x384xbf16> to vector<8x384xf32>
    %14 = vector.extract_strided_slice %13 {offsets = [0, 0], sizes = [8, 128], strides = [1, 1]} : vector<8x384xf32> to vector<8x128xf32>
    %15 = vector.extract_strided_slice %10 {offsets = [0, 0], sizes = [8, 128], strides = [1, 1]} : vector<8x384xf32> to vector<8x128xf32>
    %16 = arith.addf %14, %15 : vector<8x128xf32>
    %17 = arith.negf %16 : vector<8x128xf32>
    %18 = math.exp %17 : vector<8x128xf32>
    %cst_9 = arith.constant 1.000000e+00 : f32
    %19 = vector.broadcast %cst_9 : f32 to vector<8x128xf32>
    %20 = arith.addf %19, %18 : vector<8x128xf32>
    %21 = arith.divf %19, %20 : vector<8x128xf32>
    %22 = vector.extract_strided_slice %13 {offsets = [0, 128], sizes = [8, 128], strides = [1, 1]} : vector<8x384xf32> to vector<8x128xf32>
    %23 = vector.extract_strided_slice %10 {offsets = [0, 128], sizes = [8, 128], strides = [1, 1]} : vector<8x384xf32> to vector<8x128xf32>
    %24 = arith.addf %22, %23 : vector<8x128xf32>
    %25 = arith.negf %24 : vector<8x128xf32>
    %26 = math.exp %25 : vector<8x128xf32>
    %cst_10 = arith.constant 1.000000e+00 : f32
    %27 = vector.broadcast %cst_10 : f32 to vector<8x128xf32>
    %28 = arith.addf %27, %26 : vector<8x128xf32>
    %29 = arith.divf %27, %28 : vector<8x128xf32>
    %30 = vector.extract_strided_slice %13 {offsets = [0, 256], sizes = [8, 128], strides = [1, 1]} : vector<8x384xf32> to vector<8x128xf32>
    %31 = vector.extract_strided_slice %10 {offsets = [0, 256], sizes = [8, 128], strides = [1, 1]} : vector<8x384xf32> to vector<8x128xf32>
    %32 = arith.mulf %21, %31 : vector<8x128xf32>
    %33 = arith.addf %30, %32 : vector<8x128xf32>
    %34 = math.tanh %33 : vector<8x128xf32>
    %cst_11 = arith.constant 1.000000e+00 : f32
    %35 = vector.broadcast %cst_11 : f32 to vector<8x128xf32>
    %36 = arith.subf %35, %29 : vector<8x128xf32>
    %37 = arith.mulf %36, %34 : vector<8x128xf32>
    %38 = arith.mulf %29, %7 : vector<8x128xf32>
    %39 = arith.addf %37, %38 : vector<8x128xf32>
    %40 = arith.truncf %39 : vector<8x128xf32> to vector<8x128xbf16>
    %cst_12 = arith.constant dense<0.000000e+00> : vector<8x384xf32>
    %41 = tpu.matmul %40, %3, %cst_12 {dimension_numbers = #tpu.dot_dimension_numbers<[1], [0], [0], [1], [0, 0, 1, 1], [], []>} : vector<8x128xbf16>, vector<128x384xbf16>, vector<8x384xf32> -> vector<8x384xf32>
    %42 = arith.addf %41, %6 : vector<8x384xf32>
    %c0_13 = arith.constant 0 : index
    %c1 = arith.constant 1 : index
    %c0_14 = arith.constant 0 : index
    %43 = vector.load %arg2[%c0_13, %c1, %c0_14] : memref<8x16x384xbf16, #tpu.memory_space<vmem>>, vector<8x1x384xbf16>
    %44 = vector.shape_cast %43 : vector<8x1x384xbf16> to vector<8x384xbf16>
    %45 = arith.extf %44 : vector<8x384xbf16> to vector<8x384xf32>
    %46 = vector.extract_strided_slice %45 {offsets = [0, 0], sizes = [8, 128], strides = [1, 1]} : vector<8x384xf32> to vector<8x128xf32>
    %47 = vector.extract_strided_slice %42 {offsets = [0, 0], sizes = [8, 128], strides = [1, 1]} : vector<8x384xf32> to vector<8x128xf32>
    %48 = arith.addf %46, %47 : vector<8x128xf32>
    %49 = arith.negf %48 : vector<8x128xf32>
    %50 = math.exp %49 : vector<8x128xf32>
    %cst_15 = arith.constant 1.000000e+00 : f32
    %51 = vector.broadcast %cst_15 : f32 to vector<8x128xf32>
    %52 = arith.addf %51, %50 : vector<8x128xf32>
    %53 = arith.divf %51, %52 : vector<8x128xf32>
    %54 = vector.extract_strided_slice %45 {offsets = [0, 128], sizes = [8, 128], strides = [1, 1]} : vector<8x384xf32> to vector<8x128xf32>
    %55 = vector.extract_strided_slice %42 {offsets = [0, 128], sizes = [8, 128], strides = [1, 1]} : vector<8x384xf32> to vector<8x128xf32>
    %56 = arith.addf %54, %55 : vector<8x128xf32>
    %57 = arith.negf %56 : vector<8x128xf32>
    %58 = math.exp %57 : vector<8x128xf32>
    %cst_16 = arith.constant 1.000000e+00 : f32
    %59 = vector.broadcast %cst_16 : f32 to vector<8x128xf32>
    %60 = arith.addf %59, %58 : vector<8x128xf32>
    %61 = arith.divf %59, %60 : vector<8x128xf32>
    %62 = vector.extract_strided_slice %45 {offsets = [0, 256], sizes = [8, 128], strides = [1, 1]} : vector<8x384xf32> to vector<8x128xf32>
    %63 = vector.extract_strided_slice %42 {offsets = [0, 256], sizes = [8, 128], strides = [1, 1]} : vector<8x384xf32> to vector<8x128xf32>
    %64 = arith.mulf %53, %63 : vector<8x128xf32>
    %65 = arith.addf %62, %64 : vector<8x128xf32>
    %66 = math.tanh %65 : vector<8x128xf32>
    %cst_17 = arith.constant 1.000000e+00 : f32
    %67 = vector.broadcast %cst_17 : f32 to vector<8x128xf32>
    %68 = arith.subf %67, %61 : vector<8x128xf32>
    %69 = arith.mulf %68, %66 : vector<8x128xf32>
    %70 = arith.mulf %61, %39 : vector<8x128xf32>
    %71 = arith.addf %69, %70 : vector<8x128xf32>
    %72 = arith.truncf %71 : vector<8x128xf32> to vector<8x128xbf16>
    %cst_18 = arith.constant dense<0.000000e+00> : vector<8x384xf32>
    %73 = tpu.matmul %72, %3, %cst_18 {dimension_numbers = #tpu.dot_dimension_numbers<[1], [0], [0], [1], [0, 0, 1, 1], [], []>} : vector<8x128xbf16>, vector<128x384xbf16>, vector<8x384xf32> -> vector<8x384xf32>
    %74 = arith.addf %73, %6 : vector<8x384xf32>
    %c0_19 = arith.constant 0 : index
    %c2 = arith.constant 2 : index
    %c0_20 = arith.constant 0 : index
    %75 = vector.load %arg2[%c0_19, %c2, %c0_20] : memref<8x16x384xbf16, #tpu.memory_space<vmem>>, vector<8x1x384xbf16>
    %76 = vector.shape_cast %75 : vector<8x1x384xbf16> to vector<8x384xbf16>
    %77 = arith.extf %76 : vector<8x384xbf16> to vector<8x384xf32>
    %78 = vector.extract_strided_slice %77 {offsets = [0, 0], sizes = [8, 128], strides = [1, 1]} : vector<8x384xf32> to vector<8x128xf32>
    %79 = vector.extract_strided_slice %74 {offsets = [0, 0], sizes = [8, 128], strides = [1, 1]} : vector<8x384xf32> to vector<8x128xf32>
    %80 = arith.addf %78, %79 : vector<8x128xf32>
    %81 = arith.negf %80 : vector<8x128xf32>
    %82 = math.exp %81 : vector<8x128xf32>
    %cst_21 = arith.constant 1.000000e+00 : f32
    %83 = vector.broadcast %cst_21 : f32 to vector<8x128xf32>
    %84 = arith.addf %83, %82 : vector<8x128xf32>
    %85 = arith.divf %83, %84 : vector<8x128xf32>
    %86 = vector.extract_strided_slice %77 {offsets = [0, 128], sizes = [8, 128], strides = [1, 1]} : vector<8x384xf32> to vector<8x128xf32>
    %87 = vector.extract_strided_slice %74 {offsets = [0, 128], sizes = [8, 128], strides = [1, 1]} : vector<8x384xf32> to vector<8x128xf32>
    %88 = arith.addf %86, %87 : vector<8x128xf32>
    %89 = arith.negf %88 : vector<8x128xf32>
    %90 = math.exp %89 : vector<8x128xf32>
    %cst_22 = arith.constant 1.000000e+00 : f32
    %91 = vector.broadcast %cst_22 : f32 to vector<8x128xf32>
    %92 = arith.addf %91, %90 : vector<8x128xf32>
    %93 = arith.divf %91, %92 : vector<8x128xf32>
    %94 = vector.extract_strided_slice %77 {offsets = [0, 256], sizes = [8, 128], strides = [1, 1]} : vector<8x384xf32> to vector<8x128xf32>
    %95 = vector.extract_strided_slice %74 {offsets = [0, 256], sizes = [8, 128], strides = [1, 1]} : vector<8x384xf32> to vector<8x128xf32>
    %96 = arith.mulf %85, %95 : vector<8x128xf32>
    %97 = arith.addf %94, %96 : vector<8x128xf32>
    %98 = math.tanh %97 : vector<8x128xf32>
    %cst_23 = arith.constant 1.000000e+00 : f32
    %99 = vector.broadcast %cst_23 : f32 to vector<8x128xf32>
    %100 = arith.subf %99, %93 : vector<8x128xf32>
    %101 = arith.mulf %100, %98 : vector<8x128xf32>
    %102 = arith.mulf %93, %71 : vector<8x128xf32>
    %103 = arith.addf %101, %102 : vector<8x128xf32>
    %104 = arith.truncf %103 : vector<8x128xf32> to vector<8x128xbf16>
    %cst_24 = arith.constant dense<0.000000e+00> : vector<8x384xf32>
    %105 = tpu.matmul %104, %3, %cst_24 {dimension_numbers = #tpu.dot_dimension_numbers<[1], [0], [0], [1], [0, 0, 1, 1], [], []>} : vector<8x128xbf16>, vector<128x384xbf16>, vector<8x384xf32> -> vector<8x384xf32>
    %106 = arith.addf %105, %6 : vector<8x384xf32>
    %c0_25 = arith.constant 0 : index
    %c3 = arith.constant 3 : index
    %c0_26 = arith.constant 0 : index
    %107 = vector.load %arg2[%c0_25, %c3, %c0_26] : memref<8x16x384xbf16, #tpu.memory_space<vmem>>, vector<8x1x384xbf16>
    %108 = vector.shape_cast %107 : vector<8x1x384xbf16> to vector<8x384xbf16>
    %109 = arith.extf %108 : vector<8x384xbf16> to vector<8x384xf32>
    %110 = vector.extract_strided_slice %109 {offsets = [0, 0], sizes = [8, 128], strides = [1, 1]} : vector<8x384xf32> to vector<8x128xf32>
    %111 = vector.extract_strided_slice %106 {offsets = [0, 0], sizes = [8, 128], strides = [1, 1]} : vector<8x384xf32> to vector<8x128xf32>
    %112 = arith.addf %110, %111 : vector<8x128xf32>
    %113 = arith.negf %112 : vector<8x128xf32>
    %114 = math.exp %113 : vector<8x128xf32>
    %cst_27 = arith.constant 1.000000e+00 : f32
    %115 = vector.broadcast %cst_27 : f32 to vector<8x128xf32>
    %116 = arith.addf %115, %114 : vector<8x128xf32>
    %117 = arith.divf %115, %116 : vector<8x128xf32>
    %118 = vector.extract_strided_slice %109 {offsets = [0, 128], sizes = [8, 128], strides = [1, 1]} : vector<8x384xf32> to vector<8x128xf32>
    %119 = vector.extract_strided_slice %106 {offsets = [0, 128], sizes = [8, 128], strides = [1, 1]} : vector<8x384xf32> to vector<8x128xf32>
    %120 = arith.addf %118, %119 : vector<8x128xf32>
    %121 = arith.negf %120 : vector<8x128xf32>
    %122 = math.exp %121 : vector<8x128xf32>
    %cst_28 = arith.constant 1.000000e+00 : f32
    %123 = vector.broadcast %cst_28 : f32 to vector<8x128xf32>
    %124 = arith.addf %123, %122 : vector<8x128xf32>
    %125 = arith.divf %123, %124 : vector<8x128xf32>
    %126 = vector.extract_strided_slice %109 {offsets = [0, 256], sizes = [8, 128], strides = [1, 1]} : vector<8x384xf32> to vector<8x128xf32>
    %127 = vector.extract_strided_slice %106 {offsets = [0, 256], sizes = [8, 128], strides = [1, 1]} : vector<8x384xf32> to vector<8x128xf32>
    %128 = arith.mulf %117, %127 : vector<8x128xf32>
    %129 = arith.addf %126, %128 : vector<8x128xf32>
    %130 = math.tanh %129 : vector<8x128xf32>
    %cst_29 = arith.constant 1.000000e+00 : f32
    %131 = vector.broadcast %cst_29 : f32 to vector<8x128xf32>
    %132 = arith.subf %131, %125 : vector<8x128xf32>
    %133 = arith.mulf %132, %130 : vector<8x128xf32>
    %134 = arith.mulf %125, %103 : vector<8x128xf32>
    %135 = arith.addf %133, %134 : vector<8x128xf32>
    %136 = arith.truncf %135 : vector<8x128xf32> to vector<8x128xbf16>
    %cst_30 = arith.constant dense<0.000000e+00> : vector<8x384xf32>
    %137 = tpu.matmul %136, %3, %cst_30 {dimension_numbers = #tpu.dot_dimension_numbers<[1], [0], [0], [1], [0, 0, 1, 1], [], []>} : vector<8x128xbf16>, vector<128x384xbf16>, vector<8x384xf32> -> vector<8x384xf32>
    %138 = arith.addf %137, %6 : vector<8x384xf32>
    %c0_31 = arith.constant 0 : index
    %c4 = arith.constant 4 : index
    %c0_32 = arith.constant 0 : index
    %139 = vector.load %arg2[%c0_31, %c4, %c0_32] : memref<8x16x384xbf16, #tpu.memory_space<vmem>>, vector<8x1x384xbf16>
    %140 = vector.shape_cast %139 : vector<8x1x384xbf16> to vector<8x384xbf16>
    %141 = arith.extf %140 : vector<8x384xbf16> to vector<8x384xf32>
    %142 = vector.extract_strided_slice %141 {offsets = [0, 0], sizes = [8, 128], strides = [1, 1]} : vector<8x384xf32> to vector<8x128xf32>
    %143 = vector.extract_strided_slice %138 {offsets = [0, 0], sizes = [8, 128], strides = [1, 1]} : vector<8x384xf32> to vector<8x128xf32>
    %144 = arith.addf %142, %143 : vector<8x128xf32>
    %145 = arith.negf %144 : vector<8x128xf32>
    %146 = math.exp %145 : vector<8x128xf32>
    %cst_33 = arith.constant 1.000000e+00 : f32
    %147 = vector.broadcast %cst_33 : f32 to vector<8x128xf32>
    %148 = arith.addf %147, %146 : vector<8x128xf32>
    %149 = arith.divf %147, %148 : vector<8x128xf32>
    %150 = vector.extract_strided_slice %141 {offsets = [0, 128], sizes = [8, 128], strides = [1, 1]} : vector<8x384xf32> to vector<8x128xf32>
    %151 = vector.extract_strided_slice %138 {offsets = [0, 128], sizes = [8, 128], strides = [1, 1]} : vector<8x384xf32> to vector<8x128xf32>
    %152 = arith.addf %150, %151 : vector<8x128xf32>
    %153 = arith.negf %152 : vector<8x128xf32>
    %154 = math.exp %153 : vector<8x128xf32>
    %cst_34 = arith.constant 1.000000e+00 : f32
    %155 = vector.broadcast %cst_34 : f32 to vector<8x128xf32>
    %156 = arith.addf %155, %154 : vector<8x128xf32>
    %157 = arith.divf %155, %156 : vector<8x128xf32>
    %158 = vector.extract_strided_slice %141 {offsets = [0, 256], sizes = [8, 128], strides = [1, 1]} : vector<8x384xf32> to vector<8x128xf32>
    %159 = vector.extract_strided_slice %138 {offsets = [0, 256], sizes = [8, 128], strides = [1, 1]} : vector<8x384xf32> to vector<8x128xf32>
    %160 = arith.mulf %149, %159 : vector<8x128xf32>
    %161 = arith.addf %158, %160 : vector<8x128xf32>
    %162 = math.tanh %161 : vector<8x128xf32>
    %cst_35 = arith.constant 1.000000e+00 : f32
    %163 = vector.broadcast %cst_35 : f32 to vector<8x128xf32>
    %164 = arith.subf %163, %157 : vector<8x128xf32>
    %165 = arith.mulf %164, %162 : vector<8x128xf32>
    %166 = arith.mulf %157, %135 : vector<8x128xf32>
    %167 = arith.addf %165, %166 : vector<8x128xf32>
    %168 = arith.truncf %167 : vector<8x128xf32> to vector<8x128xbf16>
    %cst_36 = arith.constant dense<0.000000e+00> : vector<8x384xf32>
    %169 = tpu.matmul %168, %3, %cst_36 {dimension_numbers = #tpu.dot_dimension_numbers<[1], [0], [0], [1], [0, 0, 1, 1], [], []>} : vector<8x128xbf16>, vector<128x384xbf16>, vector<8x384xf32> -> vector<8x384xf32>
    %170 = arith.addf %169, %6 : vector<8x384xf32>
    %c0_37 = arith.constant 0 : index
    %c5 = arith.constant 5 : index
    %c0_38 = arith.constant 0 : index
    %171 = vector.load %arg2[%c0_37, %c5, %c0_38] : memref<8x16x384xbf16, #tpu.memory_space<vmem>>, vector<8x1x384xbf16>
    %172 = vector.shape_cast %171 : vector<8x1x384xbf16> to vector<8x384xbf16>
    %173 = arith.extf %172 : vector<8x384xbf16> to vector<8x384xf32>
    %174 = vector.extract_strided_slice %173 {offsets = [0, 0], sizes = [8, 128], strides = [1, 1]} : vector<8x384xf32> to vector<8x128xf32>
    %175 = vector.extract_strided_slice %170 {offsets = [0, 0], sizes = [8, 128], strides = [1, 1]} : vector<8x384xf32> to vector<8x128xf32>
    %176 = arith.addf %174, %175 : vector<8x128xf32>
    %177 = arith.negf %176 : vector<8x128xf32>
    %178 = math.exp %177 : vector<8x128xf32>
    %cst_39 = arith.constant 1.000000e+00 : f32
    %179 = vector.broadcast %cst_39 : f32 to vector<8x128xf32>
    %180 = arith.addf %179, %178 : vector<8x128xf32>
    %181 = arith.divf %179, %180 : vector<8x128xf32>
    %182 = vector.extract_strided_slice %173 {offsets = [0, 128], sizes = [8, 128], strides = [1, 1]} : vector<8x384xf32> to vector<8x128xf32>
    %183 = vector.extract_strided_slice %170 {offsets = [0, 128], sizes = [8, 128], strides = [1, 1]} : vector<8x384xf32> to vector<8x128xf32>
    %184 = arith.addf %182, %183 : vector<8x128xf32>
    %185 = arith.negf %184 : vector<8x128xf32>
    %186 = math.exp %185 : vector<8x128xf32>
    %cst_40 = arith.constant 1.000000e+00 : f32
    %187 = vector.broadcast %cst_40 : f32 to vector<8x128xf32>
    %188 = arith.addf %187, %186 : vector<8x128xf32>
    %189 = arith.divf %187, %188 : vector<8x128xf32>
    %190 = vector.extract_strided_slice %173 {offsets = [0, 256], sizes = [8, 128], strides = [1, 1]} : vector<8x384xf32> to vector<8x128xf32>
    %191 = vector.extract_strided_slice %170 {offsets = [0, 256], sizes = [8, 128], strides = [1, 1]} : vector<8x384xf32> to vector<8x128xf32>
    %192 = arith.mulf %181, %191 : vector<8x128xf32>
    %193 = arith.addf %190, %192 : vector<8x128xf32>
    %194 = math.tanh %193 : vector<8x128xf32>
    %cst_41 = arith.constant 1.000000e+00 : f32
    %195 = vector.broadcast %cst_41 : f32 to vector<8x128xf32>
    %196 = arith.subf %195, %189 : vector<8x128xf32>
    %197 = arith.mulf %196, %194 : vector<8x128xf32>
    %198 = arith.mulf %189, %167 : vector<8x128xf32>
    %199 = arith.addf %197, %198 : vector<8x128xf32>
    %200 = arith.truncf %199 : vector<8x128xf32> to vector<8x128xbf16>
    %cst_42 = arith.constant dense<0.000000e+00> : vector<8x384xf32>
    %201 = tpu.matmul %200, %3, %cst_42 {dimension_numbers = #tpu.dot_dimension_numbers<[1], [0], [0], [1], [0, 0, 1, 1], [], []>} : vector<8x128xbf16>, vector<128x384xbf16>, vector<8x384xf32> -> vector<8x384xf32>
    %202 = arith.addf %201, %6 : vector<8x384xf32>
    %c0_43 = arith.constant 0 : index
    %c6 = arith.constant 6 : index
    %c0_44 = arith.constant 0 : index
    %203 = vector.load %arg2[%c0_43, %c6, %c0_44] : memref<8x16x384xbf16, #tpu.memory_space<vmem>>, vector<8x1x384xbf16>
    %204 = vector.shape_cast %203 : vector<8x1x384xbf16> to vector<8x384xbf16>
    %205 = arith.extf %204 : vector<8x384xbf16> to vector<8x384xf32>
    %206 = vector.extract_strided_slice %205 {offsets = [0, 0], sizes = [8, 128], strides = [1, 1]} : vector<8x384xf32> to vector<8x128xf32>
    %207 = vector.extract_strided_slice %202 {offsets = [0, 0], sizes = [8, 128], strides = [1, 1]} : vector<8x384xf32> to vector<8x128xf32>
    %208 = arith.addf %206, %207 : vector<8x128xf32>
    %209 = arith.negf %208 : vector<8x128xf32>
    %210 = math.exp %209 : vector<8x128xf32>
    %cst_45 = arith.constant 1.000000e+00 : f32
    %211 = vector.broadcast %cst_45 : f32 to vector<8x128xf32>
    %212 = arith.addf %211, %210 : vector<8x128xf32>
    %213 = arith.divf %211, %212 : vector<8x128xf32>
    %214 = vector.extract_strided_slice %205 {offsets = [0, 128], sizes = [8, 128], strides = [1, 1]} : vector<8x384xf32> to vector<8x128xf32>
    %215 = vector.extract_strided_slice %202 {offsets = [0, 128], sizes = [8, 128], strides = [1, 1]} : vector<8x384xf32> to vector<8x128xf32>
    %216 = arith.addf %214, %215 : vector<8x128xf32>
    %217 = arith.negf %216 : vector<8x128xf32>
    %218 = math.exp %217 : vector<8x128xf32>
    %cst_46 = arith.constant 1.000000e+00 : f32
    %219 = vector.broadcast %cst_46 : f32 to vector<8x128xf32>
    %220 = arith.addf %219, %218 : vector<8x128xf32>
    %221 = arith.divf %219, %220 : vector<8x128xf32>
    %222 = vector.extract_strided_slice %205 {offsets = [0, 256], sizes = [8, 128], strides = [1, 1]} : vector<8x384xf32> to vector<8x128xf32>
    %223 = vector.extract_strided_slice %202 {offsets = [0, 256], sizes = [8, 128], strides = [1, 1]} : vector<8x384xf32> to vector<8x128xf32>
    %224 = arith.mulf %213, %223 : vector<8x128xf32>
    %225 = arith.addf %222, %224 : vector<8x128xf32>
    %226 = math.tanh %225 : vector<8x128xf32>
    %cst_47 = arith.constant 1.000000e+00 : f32
    %227 = vector.broadcast %cst_47 : f32 to vector<8x128xf32>
    %228 = arith.subf %227, %221 : vector<8x128xf32>
    %229 = arith.mulf %228, %226 : vector<8x128xf32>
    %230 = arith.mulf %221, %199 : vector<8x128xf32>
    %231 = arith.addf %229, %230 : vector<8x128xf32>
    %232 = arith.truncf %231 : vector<8x128xf32> to vector<8x128xbf16>
    %cst_48 = arith.constant dense<0.000000e+00> : vector<8x384xf32>
    %233 = tpu.matmul %232, %3, %cst_48 {dimension_numbers = #tpu.dot_dimension_numbers<[1], [0], [0], [1], [0, 0, 1, 1], [], []>} : vector<8x128xbf16>, vector<128x384xbf16>, vector<8x384xf32> -> vector<8x384xf32>
    %234 = arith.addf %233, %6 : vector<8x384xf32>
    %c0_49 = arith.constant 0 : index
    %c7 = arith.constant 7 : index
    %c0_50 = arith.constant 0 : index
    %235 = vector.load %arg2[%c0_49, %c7, %c0_50] : memref<8x16x384xbf16, #tpu.memory_space<vmem>>, vector<8x1x384xbf16>
    %236 = vector.shape_cast %235 : vector<8x1x384xbf16> to vector<8x384xbf16>
    %237 = arith.extf %236 : vector<8x384xbf16> to vector<8x384xf32>
    %238 = vector.extract_strided_slice %237 {offsets = [0, 0], sizes = [8, 128], strides = [1, 1]} : vector<8x384xf32> to vector<8x128xf32>
    %239 = vector.extract_strided_slice %234 {offsets = [0, 0], sizes = [8, 128], strides = [1, 1]} : vector<8x384xf32> to vector<8x128xf32>
    %240 = arith.addf %238, %239 : vector<8x128xf32>
    %241 = arith.negf %240 : vector<8x128xf32>
    %242 = math.exp %241 : vector<8x128xf32>
    %cst_51 = arith.constant 1.000000e+00 : f32
    %243 = vector.broadcast %cst_51 : f32 to vector<8x128xf32>
    %244 = arith.addf %243, %242 : vector<8x128xf32>
    %245 = arith.divf %243, %244 : vector<8x128xf32>
    %246 = vector.extract_strided_slice %237 {offsets = [0, 128], sizes = [8, 128], strides = [1, 1]} : vector<8x384xf32> to vector<8x128xf32>
    %247 = vector.extract_strided_slice %234 {offsets = [0, 128], sizes = [8, 128], strides = [1, 1]} : vector<8x384xf32> to vector<8x128xf32>
    %248 = arith.addf %246, %247 : vector<8x128xf32>
    %249 = arith.negf %248 : vector<8x128xf32>
    %250 = math.exp %249 : vector<8x128xf32>
    %cst_52 = arith.constant 1.000000e+00 : f32
    %251 = vector.broadcast %cst_52 : f32 to vector<8x128xf32>
    %252 = arith.addf %251, %250 : vector<8x128xf32>
    %253 = arith.divf %251, %252 : vector<8x128xf32>
    %254 = vector.extract_strided_slice %237 {offsets = [0, 256], sizes = [8, 128], strides = [1, 1]} : vector<8x384xf32> to vector<8x128xf32>
    %255 = vector.extract_strided_slice %234 {offsets = [0, 256], sizes = [8, 128], strides = [1, 1]} : vector<8x384xf32> to vector<8x128xf32>
    %256 = arith.mulf %245, %255 : vector<8x128xf32>
    %257 = arith.addf %254, %256 : vector<8x128xf32>
    %258 = math.tanh %257 : vector<8x128xf32>
    %cst_53 = arith.constant 1.000000e+00 : f32
    %259 = vector.broadcast %cst_53 : f32 to vector<8x128xf32>
    %260 = arith.subf %259, %253 : vector<8x128xf32>
    %261 = arith.mulf %260, %258 : vector<8x128xf32>
    %262 = arith.mulf %253, %231 : vector<8x128xf32>
    %263 = arith.addf %261, %262 : vector<8x128xf32>
    %264 = arith.truncf %263 : vector<8x128xf32> to vector<8x128xbf16>
    %cst_54 = arith.constant dense<0.000000e+00> : vector<8x384xf32>
    %265 = tpu.matmul %264, %3, %cst_54 {dimension_numbers = #tpu.dot_dimension_numbers<[1], [0], [0], [1], [0, 0, 1, 1], [], []>} : vector<8x128xbf16>, vector<128x384xbf16>, vector<8x384xf32> -> vector<8x384xf32>
    %266 = arith.addf %265, %6 : vector<8x384xf32>
    %c0_55 = arith.constant 0 : index
    %c8 = arith.constant 8 : index
    %c0_56 = arith.constant 0 : index
    %267 = vector.load %arg2[%c0_55, %c8, %c0_56] : memref<8x16x384xbf16, #tpu.memory_space<vmem>>, vector<8x1x384xbf16>
    %268 = vector.shape_cast %267 : vector<8x1x384xbf16> to vector<8x384xbf16>
    %269 = arith.extf %268 : vector<8x384xbf16> to vector<8x384xf32>
    %270 = vector.extract_strided_slice %269 {offsets = [0, 0], sizes = [8, 128], strides = [1, 1]} : vector<8x384xf32> to vector<8x128xf32>
    %271 = vector.extract_strided_slice %266 {offsets = [0, 0], sizes = [8, 128], strides = [1, 1]} : vector<8x384xf32> to vector<8x128xf32>
    %272 = arith.addf %270, %271 : vector<8x128xf32>
    %273 = arith.negf %272 : vector<8x128xf32>
    %274 = math.exp %273 : vector<8x128xf32>
    %cst_57 = arith.constant 1.000000e+00 : f32
    %275 = vector.broadcast %cst_57 : f32 to vector<8x128xf32>
    %276 = arith.addf %275, %274 : vector<8x128xf32>
    %277 = arith.divf %275, %276 : vector<8x128xf32>
    %278 = vector.extract_strided_slice %269 {offsets = [0, 128], sizes = [8, 128], strides = [1, 1]} : vector<8x384xf32> to vector<8x128xf32>
    %279 = vector.extract_strided_slice %266 {offsets = [0, 128], sizes = [8, 128], strides = [1, 1]} : vector<8x384xf32> to vector<8x128xf32>
    %280 = arith.addf %278, %279 : vector<8x128xf32>
    %281 = arith.negf %280 : vector<8x128xf32>
    %282 = math.exp %281 : vector<8x128xf32>
    %cst_58 = arith.constant 1.000000e+00 : f32
    %283 = vector.broadcast %cst_58 : f32 to vector<8x128xf32>
    %284 = arith.addf %283, %282 : vector<8x128xf32>
    %285 = arith.divf %283, %284 : vector<8x128xf32>
    %286 = vector.extract_strided_slice %269 {offsets = [0, 256], sizes = [8, 128], strides = [1, 1]} : vector<8x384xf32> to vector<8x128xf32>
    %287 = vector.extract_strided_slice %266 {offsets = [0, 256], sizes = [8, 128], strides = [1, 1]} : vector<8x384xf32> to vector<8x128xf32>
    %288 = arith.mulf %277, %287 : vector<8x128xf32>
    %289 = arith.addf %286, %288 : vector<8x128xf32>
    %290 = math.tanh %289 : vector<8x128xf32>
    %cst_59 = arith.constant 1.000000e+00 : f32
    %291 = vector.broadcast %cst_59 : f32 to vector<8x128xf32>
    %292 = arith.subf %291, %285 : vector<8x128xf32>
    %293 = arith.mulf %292, %290 : vector<8x128xf32>
    %294 = arith.mulf %285, %263 : vector<8x128xf32>
    %295 = arith.addf %293, %294 : vector<8x128xf32>
    %296 = arith.truncf %295 : vector<8x128xf32> to vector<8x128xbf16>
    %cst_60 = arith.constant dense<0.000000e+00> : vector<8x384xf32>
    %297 = tpu.matmul %296, %3, %cst_60 {dimension_numbers = #tpu.dot_dimension_numbers<[1], [0], [0], [1], [0, 0, 1, 1], [], []>} : vector<8x128xbf16>, vector<128x384xbf16>, vector<8x384xf32> -> vector<8x384xf32>
    %298 = arith.addf %297, %6 : vector<8x384xf32>
    %c0_61 = arith.constant 0 : index
    %c9 = arith.constant 9 : index
    %c0_62 = arith.constant 0 : index
    %299 = vector.load %arg2[%c0_61, %c9, %c0_62] : memref<8x16x384xbf16, #tpu.memory_space<vmem>>, vector<8x1x384xbf16>
    %300 = vector.shape_cast %299 : vector<8x1x384xbf16> to vector<8x384xbf16>
    %301 = arith.extf %300 : vector<8x384xbf16> to vector<8x384xf32>
    %302 = vector.extract_strided_slice %301 {offsets = [0, 0], sizes = [8, 128], strides = [1, 1]} : vector<8x384xf32> to vector<8x128xf32>
    %303 = vector.extract_strided_slice %298 {offsets = [0, 0], sizes = [8, 128], strides = [1, 1]} : vector<8x384xf32> to vector<8x128xf32>
    %304 = arith.addf %302, %303 : vector<8x128xf32>
    %305 = arith.negf %304 : vector<8x128xf32>
    %306 = math.exp %305 : vector<8x128xf32>
    %cst_63 = arith.constant 1.000000e+00 : f32
    %307 = vector.broadcast %cst_63 : f32 to vector<8x128xf32>
    %308 = arith.addf %307, %306 : vector<8x128xf32>
    %309 = arith.divf %307, %308 : vector<8x128xf32>
    %310 = vector.extract_strided_slice %301 {offsets = [0, 128], sizes = [8, 128], strides = [1, 1]} : vector<8x384xf32> to vector<8x128xf32>
    %311 = vector.extract_strided_slice %298 {offsets = [0, 128], sizes = [8, 128], strides = [1, 1]} : vector<8x384xf32> to vector<8x128xf32>
    %312 = arith.addf %310, %311 : vector<8x128xf32>
    %313 = arith.negf %312 : vector<8x128xf32>
    %314 = math.exp %313 : vector<8x128xf32>
    %cst_64 = arith.constant 1.000000e+00 : f32
    %315 = vector.broadcast %cst_64 : f32 to vector<8x128xf32>
    %316 = arith.addf %315, %314 : vector<8x128xf32>
    %317 = arith.divf %315, %316 : vector<8x128xf32>
    %318 = vector.extract_strided_slice %301 {offsets = [0, 256], sizes = [8, 128], strides = [1, 1]} : vector<8x384xf32> to vector<8x128xf32>
    %319 = vector.extract_strided_slice %298 {offsets = [0, 256], sizes = [8, 128], strides = [1, 1]} : vector<8x384xf32> to vector<8x128xf32>
    %320 = arith.mulf %309, %319 : vector<8x128xf32>
    %321 = arith.addf %318, %320 : vector<8x128xf32>
    %322 = math.tanh %321 : vector<8x128xf32>
    %cst_65 = arith.constant 1.000000e+00 : f32
    %323 = vector.broadcast %cst_65 : f32 to vector<8x128xf32>
    %324 = arith.subf %323, %317 : vector<8x128xf32>
    %325 = arith.mulf %324, %322 : vector<8x128xf32>
    %326 = arith.mulf %317, %295 : vector<8x128xf32>
    %327 = arith.addf %325, %326 : vector<8x128xf32>
    %328 = arith.truncf %327 : vector<8x128xf32> to vector<8x128xbf16>
    %cst_66 = arith.constant dense<0.000000e+00> : vector<8x384xf32>
    %329 = tpu.matmul %328, %3, %cst_66 {dimension_numbers = #tpu.dot_dimension_numbers<[1], [0], [0], [1], [0, 0, 1, 1], [], []>} : vector<8x128xbf16>, vector<128x384xbf16>, vector<8x384xf32> -> vector<8x384xf32>
    %330 = arith.addf %329, %6 : vector<8x384xf32>
    %c0_67 = arith.constant 0 : index
    %c10 = arith.constant 10 : index
    %c0_68 = arith.constant 0 : index
    %331 = vector.load %arg2[%c0_67, %c10, %c0_68] : memref<8x16x384xbf16, #tpu.memory_space<vmem>>, vector<8x1x384xbf16>
    %332 = vector.shape_cast %331 : vector<8x1x384xbf16> to vector<8x384xbf16>
    %333 = arith.extf %332 : vector<8x384xbf16> to vector<8x384xf32>
    %334 = vector.extract_strided_slice %333 {offsets = [0, 0], sizes = [8, 128], strides = [1, 1]} : vector<8x384xf32> to vector<8x128xf32>
    %335 = vector.extract_strided_slice %330 {offsets = [0, 0], sizes = [8, 128], strides = [1, 1]} : vector<8x384xf32> to vector<8x128xf32>
    %336 = arith.addf %334, %335 : vector<8x128xf32>
    %337 = arith.negf %336 : vector<8x128xf32>
    %338 = math.exp %337 : vector<8x128xf32>
    %cst_69 = arith.constant 1.000000e+00 : f32
    %339 = vector.broadcast %cst_69 : f32 to vector<8x128xf32>
    %340 = arith.addf %339, %338 : vector<8x128xf32>
    %341 = arith.divf %339, %340 : vector<8x128xf32>
    %342 = vector.extract_strided_slice %333 {offsets = [0, 128], sizes = [8, 128], strides = [1, 1]} : vector<8x384xf32> to vector<8x128xf32>
    %343 = vector.extract_strided_slice %330 {offsets = [0, 128], sizes = [8, 128], strides = [1, 1]} : vector<8x384xf32> to vector<8x128xf32>
    %344 = arith.addf %342, %343 : vector<8x128xf32>
    %345 = arith.negf %344 : vector<8x128xf32>
    %346 = math.exp %345 : vector<8x128xf32>
    %cst_70 = arith.constant 1.000000e+00 : f32
    %347 = vector.broadcast %cst_70 : f32 to vector<8x128xf32>
    %348 = arith.addf %347, %346 : vector<8x128xf32>
    %349 = arith.divf %347, %348 : vector<8x128xf32>
    %350 = vector.extract_strided_slice %333 {offsets = [0, 256], sizes = [8, 128], strides = [1, 1]} : vector<8x384xf32> to vector<8x128xf32>
    %351 = vector.extract_strided_slice %330 {offsets = [0, 256], sizes = [8, 128], strides = [1, 1]} : vector<8x384xf32> to vector<8x128xf32>
    %352 = arith.mulf %341, %351 : vector<8x128xf32>
    %353 = arith.addf %350, %352 : vector<8x128xf32>
    %354 = math.tanh %353 : vector<8x128xf32>
    %cst_71 = arith.constant 1.000000e+00 : f32
    %355 = vector.broadcast %cst_71 : f32 to vector<8x128xf32>
    %356 = arith.subf %355, %349 : vector<8x128xf32>
    %357 = arith.mulf %356, %354 : vector<8x128xf32>
    %358 = arith.mulf %349, %327 : vector<8x128xf32>
    %359 = arith.addf %357, %358 : vector<8x128xf32>
    %360 = arith.truncf %359 : vector<8x128xf32> to vector<8x128xbf16>
    %cst_72 = arith.constant dense<0.000000e+00> : vector<8x384xf32>
    %361 = tpu.matmul %360, %3, %cst_72 {dimension_numbers = #tpu.dot_dimension_numbers<[1], [0], [0], [1], [0, 0, 1, 1], [], []>} : vector<8x128xbf16>, vector<128x384xbf16>, vector<8x384xf32> -> vector<8x384xf32>
    %362 = arith.addf %361, %6 : vector<8x384xf32>
    %c0_73 = arith.constant 0 : index
    %c11 = arith.constant 11 : index
    %c0_74 = arith.constant 0 : index
    %363 = vector.load %arg2[%c0_73, %c11, %c0_74] : memref<8x16x384xbf16, #tpu.memory_space<vmem>>, vector<8x1x384xbf16>
    %364 = vector.shape_cast %363 : vector<8x1x384xbf16> to vector<8x384xbf16>
    %365 = arith.extf %364 : vector<8x384xbf16> to vector<8x384xf32>
    %366 = vector.extract_strided_slice %365 {offsets = [0, 0], sizes = [8, 128], strides = [1, 1]} : vector<8x384xf32> to vector<8x128xf32>
    %367 = vector.extract_strided_slice %362 {offsets = [0, 0], sizes = [8, 128], strides = [1, 1]} : vector<8x384xf32> to vector<8x128xf32>
    %368 = arith.addf %366, %367 : vector<8x128xf32>
    %369 = arith.negf %368 : vector<8x128xf32>
    %370 = math.exp %369 : vector<8x128xf32>
    %cst_75 = arith.constant 1.000000e+00 : f32
    %371 = vector.broadcast %cst_75 : f32 to vector<8x128xf32>
    %372 = arith.addf %371, %370 : vector<8x128xf32>
    %373 = arith.divf %371, %372 : vector<8x128xf32>
    %374 = vector.extract_strided_slice %365 {offsets = [0, 128], sizes = [8, 128], strides = [1, 1]} : vector<8x384xf32> to vector<8x128xf32>
    %375 = vector.extract_strided_slice %362 {offsets = [0, 128], sizes = [8, 128], strides = [1, 1]} : vector<8x384xf32> to vector<8x128xf32>
    %376 = arith.addf %374, %375 : vector<8x128xf32>
    %377 = arith.negf %376 : vector<8x128xf32>
    %378 = math.exp %377 : vector<8x128xf32>
    %cst_76 = arith.constant 1.000000e+00 : f32
    %379 = vector.broadcast %cst_76 : f32 to vector<8x128xf32>
    %380 = arith.addf %379, %378 : vector<8x128xf32>
    %381 = arith.divf %379, %380 : vector<8x128xf32>
    %382 = vector.extract_strided_slice %365 {offsets = [0, 256], sizes = [8, 128], strides = [1, 1]} : vector<8x384xf32> to vector<8x128xf32>
    %383 = vector.extract_strided_slice %362 {offsets = [0, 256], sizes = [8, 128], strides = [1, 1]} : vector<8x384xf32> to vector<8x128xf32>
    %384 = arith.mulf %373, %383 : vector<8x128xf32>
    %385 = arith.addf %382, %384 : vector<8x128xf32>
    %386 = math.tanh %385 : vector<8x128xf32>
    %cst_77 = arith.constant 1.000000e+00 : f32
    %387 = vector.broadcast %cst_77 : f32 to vector<8x128xf32>
    %388 = arith.subf %387, %381 : vector<8x128xf32>
    %389 = arith.mulf %388, %386 : vector<8x128xf32>
    %390 = arith.mulf %381, %359 : vector<8x128xf32>
    %391 = arith.addf %389, %390 : vector<8x128xf32>
    %392 = arith.truncf %391 : vector<8x128xf32> to vector<8x128xbf16>
    %cst_78 = arith.constant dense<0.000000e+00> : vector<8x384xf32>
    %393 = tpu.matmul %392, %3, %cst_78 {dimension_numbers = #tpu.dot_dimension_numbers<[1], [0], [0], [1], [0, 0, 1, 1], [], []>} : vector<8x128xbf16>, vector<128x384xbf16>, vector<8x384xf32> -> vector<8x384xf32>
    %394 = arith.addf %393, %6 : vector<8x384xf32>
    %c0_79 = arith.constant 0 : index
    %c12 = arith.constant 12 : index
    %c0_80 = arith.constant 0 : index
    %395 = vector.load %arg2[%c0_79, %c12, %c0_80] : memref<8x16x384xbf16, #tpu.memory_space<vmem>>, vector<8x1x384xbf16>
    %396 = vector.shape_cast %395 : vector<8x1x384xbf16> to vector<8x384xbf16>
    %397 = arith.extf %396 : vector<8x384xbf16> to vector<8x384xf32>
    %398 = vector.extract_strided_slice %397 {offsets = [0, 0], sizes = [8, 128], strides = [1, 1]} : vector<8x384xf32> to vector<8x128xf32>
    %399 = vector.extract_strided_slice %394 {offsets = [0, 0], sizes = [8, 128], strides = [1, 1]} : vector<8x384xf32> to vector<8x128xf32>
    %400 = arith.addf %398, %399 : vector<8x128xf32>
    %401 = arith.negf %400 : vector<8x128xf32>
    %402 = math.exp %401 : vector<8x128xf32>
    %cst_81 = arith.constant 1.000000e+00 : f32
    %403 = vector.broadcast %cst_81 : f32 to vector<8x128xf32>
    %404 = arith.addf %403, %402 : vector<8x128xf32>
    %405 = arith.divf %403, %404 : vector<8x128xf32>
    %406 = vector.extract_strided_slice %397 {offsets = [0, 128], sizes = [8, 128], strides = [1, 1]} : vector<8x384xf32> to vector<8x128xf32>
    %407 = vector.extract_strided_slice %394 {offsets = [0, 128], sizes = [8, 128], strides = [1, 1]} : vector<8x384xf32> to vector<8x128xf32>
    %408 = arith.addf %406, %407 : vector<8x128xf32>
    %409 = arith.negf %408 : vector<8x128xf32>
    %410 = math.exp %409 : vector<8x128xf32>
    %cst_82 = arith.constant 1.000000e+00 : f32
    %411 = vector.broadcast %cst_82 : f32 to vector<8x128xf32>
    %412 = arith.addf %411, %410 : vector<8x128xf32>
    %413 = arith.divf %411, %412 : vector<8x128xf32>
    %414 = vector.extract_strided_slice %397 {offsets = [0, 256], sizes = [8, 128], strides = [1, 1]} : vector<8x384xf32> to vector<8x128xf32>
    %415 = vector.extract_strided_slice %394 {offsets = [0, 256], sizes = [8, 128], strides = [1, 1]} : vector<8x384xf32> to vector<8x128xf32>
    %416 = arith.mulf %405, %415 : vector<8x128xf32>
    %417 = arith.addf %414, %416 : vector<8x128xf32>
    %418 = math.tanh %417 : vector<8x128xf32>
    %cst_83 = arith.constant 1.000000e+00 : f32
    %419 = vector.broadcast %cst_83 : f32 to vector<8x128xf32>
    %420 = arith.subf %419, %413 : vector<8x128xf32>
    %421 = arith.mulf %420, %418 : vector<8x128xf32>
    %422 = arith.mulf %413, %391 : vector<8x128xf32>
    %423 = arith.addf %421, %422 : vector<8x128xf32>
    %424 = arith.truncf %423 : vector<8x128xf32> to vector<8x128xbf16>
    %cst_84 = arith.constant dense<0.000000e+00> : vector<8x384xf32>
    %425 = tpu.matmul %424, %3, %cst_84 {dimension_numbers = #tpu.dot_dimension_numbers<[1], [0], [0], [1], [0, 0, 1, 1], [], []>} : vector<8x128xbf16>, vector<128x384xbf16>, vector<8x384xf32> -> vector<8x384xf32>
    %426 = arith.addf %425, %6 : vector<8x384xf32>
    %c0_85 = arith.constant 0 : index
    %c13 = arith.constant 13 : index
    %c0_86 = arith.constant 0 : index
    %427 = vector.load %arg2[%c0_85, %c13, %c0_86] : memref<8x16x384xbf16, #tpu.memory_space<vmem>>, vector<8x1x384xbf16>
    %428 = vector.shape_cast %427 : vector<8x1x384xbf16> to vector<8x384xbf16>
    %429 = arith.extf %428 : vector<8x384xbf16> to vector<8x384xf32>
    %430 = vector.extract_strided_slice %429 {offsets = [0, 0], sizes = [8, 128], strides = [1, 1]} : vector<8x384xf32> to vector<8x128xf32>
    %431 = vector.extract_strided_slice %426 {offsets = [0, 0], sizes = [8, 128], strides = [1, 1]} : vector<8x384xf32> to vector<8x128xf32>
    %432 = arith.addf %430, %431 : vector<8x128xf32>
    %433 = arith.negf %432 : vector<8x128xf32>
    %434 = math.exp %433 : vector<8x128xf32>
    %cst_87 = arith.constant 1.000000e+00 : f32
    %435 = vector.broadcast %cst_87 : f32 to vector<8x128xf32>
    %436 = arith.addf %435, %434 : vector<8x128xf32>
    %437 = arith.divf %435, %436 : vector<8x128xf32>
    %438 = vector.extract_strided_slice %429 {offsets = [0, 128], sizes = [8, 128], strides = [1, 1]} : vector<8x384xf32> to vector<8x128xf32>
    %439 = vector.extract_strided_slice %426 {offsets = [0, 128], sizes = [8, 128], strides = [1, 1]} : vector<8x384xf32> to vector<8x128xf32>
    %440 = arith.addf %438, %439 : vector<8x128xf32>
    %441 = arith.negf %440 : vector<8x128xf32>
    %442 = math.exp %441 : vector<8x128xf32>
    %cst_88 = arith.constant 1.000000e+00 : f32
    %443 = vector.broadcast %cst_88 : f32 to vector<8x128xf32>
    %444 = arith.addf %443, %442 : vector<8x128xf32>
    %445 = arith.divf %443, %444 : vector<8x128xf32>
    %446 = vector.extract_strided_slice %429 {offsets = [0, 256], sizes = [8, 128], strides = [1, 1]} : vector<8x384xf32> to vector<8x128xf32>
    %447 = vector.extract_strided_slice %426 {offsets = [0, 256], sizes = [8, 128], strides = [1, 1]} : vector<8x384xf32> to vector<8x128xf32>
    %448 = arith.mulf %437, %447 : vector<8x128xf32>
    %449 = arith.addf %446, %448 : vector<8x128xf32>
    %450 = math.tanh %449 : vector<8x128xf32>
    %cst_89 = arith.constant 1.000000e+00 : f32
    %451 = vector.broadcast %cst_89 : f32 to vector<8x128xf32>
    %452 = arith.subf %451, %445 : vector<8x128xf32>
    %453 = arith.mulf %452, %450 : vector<8x128xf32>
    %454 = arith.mulf %445, %423 : vector<8x128xf32>
    %455 = arith.addf %453, %454 : vector<8x128xf32>
    %456 = arith.truncf %455 : vector<8x128xf32> to vector<8x128xbf16>
    %cst_90 = arith.constant dense<0.000000e+00> : vector<8x384xf32>
    %457 = tpu.matmul %456, %3, %cst_90 {dimension_numbers = #tpu.dot_dimension_numbers<[1], [0], [0], [1], [0, 0, 1, 1], [], []>} : vector<8x128xbf16>, vector<128x384xbf16>, vector<8x384xf32> -> vector<8x384xf32>
    %458 = arith.addf %457, %6 : vector<8x384xf32>
    %c0_91 = arith.constant 0 : index
    %c14 = arith.constant 14 : index
    %c0_92 = arith.constant 0 : index
    %459 = vector.load %arg2[%c0_91, %c14, %c0_92] : memref<8x16x384xbf16, #tpu.memory_space<vmem>>, vector<8x1x384xbf16>
    %460 = vector.shape_cast %459 : vector<8x1x384xbf16> to vector<8x384xbf16>
    %461 = arith.extf %460 : vector<8x384xbf16> to vector<8x384xf32>
    %462 = vector.extract_strided_slice %461 {offsets = [0, 0], sizes = [8, 128], strides = [1, 1]} : vector<8x384xf32> to vector<8x128xf32>
    %463 = vector.extract_strided_slice %458 {offsets = [0, 0], sizes = [8, 128], strides = [1, 1]} : vector<8x384xf32> to vector<8x128xf32>
    %464 = arith.addf %462, %463 : vector<8x128xf32>
    %465 = arith.negf %464 : vector<8x128xf32>
    %466 = math.exp %465 : vector<8x128xf32>
    %cst_93 = arith.constant 1.000000e+00 : f32
    %467 = vector.broadcast %cst_93 : f32 to vector<8x128xf32>
    %468 = arith.addf %467, %466 : vector<8x128xf32>
    %469 = arith.divf %467, %468 : vector<8x128xf32>
    %470 = vector.extract_strided_slice %461 {offsets = [0, 128], sizes = [8, 128], strides = [1, 1]} : vector<8x384xf32> to vector<8x128xf32>
    %471 = vector.extract_strided_slice %458 {offsets = [0, 128], sizes = [8, 128], strides = [1, 1]} : vector<8x384xf32> to vector<8x128xf32>
    %472 = arith.addf %470, %471 : vector<8x128xf32>
    %473 = arith.negf %472 : vector<8x128xf32>
    %474 = math.exp %473 : vector<8x128xf32>
    %cst_94 = arith.constant 1.000000e+00 : f32
    %475 = vector.broadcast %cst_94 : f32 to vector<8x128xf32>
    %476 = arith.addf %475, %474 : vector<8x128xf32>
    %477 = arith.divf %475, %476 : vector<8x128xf32>
    %478 = vector.extract_strided_slice %461 {offsets = [0, 256], sizes = [8, 128], strides = [1, 1]} : vector<8x384xf32> to vector<8x128xf32>
    %479 = vector.extract_strided_slice %458 {offsets = [0, 256], sizes = [8, 128], strides = [1, 1]} : vector<8x384xf32> to vector<8x128xf32>
    %480 = arith.mulf %469, %479 : vector<8x128xf32>
    %481 = arith.addf %478, %480 : vector<8x128xf32>
    %482 = math.tanh %481 : vector<8x128xf32>
    %cst_95 = arith.constant 1.000000e+00 : f32
    %483 = vector.broadcast %cst_95 : f32 to vector<8x128xf32>
    %484 = arith.subf %483, %477 : vector<8x128xf32>
    %485 = arith.mulf %484, %482 : vector<8x128xf32>
    %486 = arith.mulf %477, %455 : vector<8x128xf32>
    %487 = arith.addf %485, %486 : vector<8x128xf32>
    %488 = arith.truncf %487 : vector<8x128xf32> to vector<8x128xbf16>
    %cst_96 = arith.constant dense<0.000000e+00> : vector<8x384xf32>
    %489 = tpu.matmul %488, %3, %cst_96 {dimension_numbers = #tpu.dot_dimension_numbers<[1], [0], [0], [1], [0, 0, 1, 1], [], []>} : vector<8x128xbf16>, vector<128x384xbf16>, vector<8x384xf32> -> vector<8x384xf32>
    %490 = arith.addf %489, %6 : vector<8x384xf32>
    %c0_97 = arith.constant 0 : index
    %c15 = arith.constant 15 : index
    %c0_98 = arith.constant 0 : index
    %491 = vector.load %arg2[%c0_97, %c15, %c0_98] : memref<8x16x384xbf16, #tpu.memory_space<vmem>>, vector<8x1x384xbf16>
    %492 = vector.shape_cast %491 : vector<8x1x384xbf16> to vector<8x384xbf16>
    %493 = arith.extf %492 : vector<8x384xbf16> to vector<8x384xf32>
    %494 = vector.extract_strided_slice %493 {offsets = [0, 0], sizes = [8, 128], strides = [1, 1]} : vector<8x384xf32> to vector<8x128xf32>
    %495 = vector.extract_strided_slice %490 {offsets = [0, 0], sizes = [8, 128], strides = [1, 1]} : vector<8x384xf32> to vector<8x128xf32>
    %496 = arith.addf %494, %495 : vector<8x128xf32>
    %497 = arith.negf %496 : vector<8x128xf32>
    %498 = math.exp %497 : vector<8x128xf32>
    %cst_99 = arith.constant 1.000000e+00 : f32
    %499 = vector.broadcast %cst_99 : f32 to vector<8x128xf32>
    %500 = arith.addf %499, %498 : vector<8x128xf32>
    %501 = arith.divf %499, %500 : vector<8x128xf32>
    %502 = vector.extract_strided_slice %493 {offsets = [0, 128], sizes = [8, 128], strides = [1, 1]} : vector<8x384xf32> to vector<8x128xf32>
    %503 = vector.extract_strided_slice %490 {offsets = [0, 128], sizes = [8, 128], strides = [1, 1]} : vector<8x384xf32> to vector<8x128xf32>
    %504 = arith.addf %502, %503 : vector<8x128xf32>
    %505 = arith.negf %504 : vector<8x128xf32>
    %506 = math.exp %505 : vector<8x128xf32>
    %cst_100 = arith.constant 1.000000e+00 : f32
    %507 = vector.broadcast %cst_100 : f32 to vector<8x128xf32>
    %508 = arith.addf %507, %506 : vector<8x128xf32>
    %509 = arith.divf %507, %508 : vector<8x128xf32>
    %510 = vector.extract_strided_slice %493 {offsets = [0, 256], sizes = [8, 128], strides = [1, 1]} : vector<8x384xf32> to vector<8x128xf32>
    %511 = vector.extract_strided_slice %490 {offsets = [0, 256], sizes = [8, 128], strides = [1, 1]} : vector<8x384xf32> to vector<8x128xf32>
    %512 = arith.mulf %501, %511 : vector<8x128xf32>
    %513 = arith.addf %510, %512 : vector<8x128xf32>
    %514 = math.tanh %513 : vector<8x128xf32>
    %cst_101 = arith.constant 1.000000e+00 : f32
    %515 = vector.broadcast %cst_101 : f32 to vector<8x128xf32>
    %516 = arith.subf %515, %509 : vector<8x128xf32>
    %517 = arith.mulf %516, %514 : vector<8x128xf32>
    %518 = arith.mulf %509, %487 : vector<8x128xf32>
    %519 = arith.addf %517, %518 : vector<8x128xf32>
    %520 = vector.shape_cast %39 : vector<8x128xf32> to vector<8x1x128xf32>
    %521 = vector.shape_cast %71 : vector<8x128xf32> to vector<8x1x128xf32>
    %522 = vector.shape_cast %103 : vector<8x128xf32> to vector<8x1x128xf32>
    %523 = vector.shape_cast %135 : vector<8x128xf32> to vector<8x1x128xf32>
    %524 = vector.shape_cast %167 : vector<8x128xf32> to vector<8x1x128xf32>
    %525 = vector.shape_cast %199 : vector<8x128xf32> to vector<8x1x128xf32>
    %526 = vector.shape_cast %231 : vector<8x128xf32> to vector<8x1x128xf32>
    %527 = vector.shape_cast %263 : vector<8x128xf32> to vector<8x1x128xf32>
    %528 = vector.shape_cast %295 : vector<8x128xf32> to vector<8x1x128xf32>
    %529 = vector.shape_cast %327 : vector<8x128xf32> to vector<8x1x128xf32>
    %530 = vector.shape_cast %359 : vector<8x128xf32> to vector<8x1x128xf32>
    %531 = vector.shape_cast %391 : vector<8x128xf32> to vector<8x1x128xf32>
    %532 = vector.shape_cast %423 : vector<8x128xf32> to vector<8x1x128xf32>
    %533 = vector.shape_cast %455 : vector<8x128xf32> to vector<8x1x128xf32>
    %534 = vector.shape_cast %487 : vector<8x128xf32> to vector<8x1x128xf32>
    %535 = vector.shape_cast %519 : vector<8x128xf32> to vector<8x1x128xf32>
    %536 = tpu.concatenate %520, %521, %522, %523, %524, %525, %526, %527, %528, %529, %530, %531, %532, %533, %534, %535 in 1 : vector<8x1x128xf32>, vector<8x1x128xf32>, vector<8x1x128xf32>, vector<8x1x128xf32>, vector<8x1x128xf32>, vector<8x1x128xf32>, vector<8x1x128xf32>, vector<8x1x128xf32>, vector<8x1x128xf32>, vector<8x1x128xf32>, vector<8x1x128xf32>, vector<8x1x128xf32>, vector<8x1x128xf32>, vector<8x1x128xf32>, vector<8x1x128xf32>, vector<8x1x128xf32> -> vector<8x16x128xf32>
    %537 = arith.truncf %536 : vector<8x16x128xf32> to vector<8x16x128xbf16>
    %c0_102 = arith.constant 0 : index
    %c0_103 = arith.constant 0 : index
    %c0_104 = arith.constant 0 : index
    %538 = vector.load %arg5[%c0_102, %c0_103, %c0_104] : memref<8x16x128xbf16, #tpu.memory_space<vmem>>, vector<8x16x128xbf16>
    tpu.vector_store %arg5[%c0_102, %c0_103, %c0_104], %537 {strides = array<i32>} : memref<8x16x128xbf16, #tpu.memory_space<vmem>>, vector<8x16x128xbf16>,
    %c0_105 = arith.constant 0 : index
    %c0_106 = arith.constant 0 : index
    %539 = vector.load %arg6[%c0_105, %c0_106] : memref<8x128xf32, #tpu.memory_space<vmem>>, vector<8x128xf32>
    tpu.vector_store %arg6[%c0_105, %c0_106], %519 {strides = array<i32>} : memref<8x128xf32, #tpu.memory_space<vmem>>, vector<8x128xf32>,
    return
  }
  func.func @transform_0(%arg0: i32, %arg1: i32) -> (i32, i32, i32) {
    %c0_i32 = arith.constant 0 : i32
    %c0_i32_0 = arith.constant 0 : i32
    return %arg0, %arg1, %c0_i32 : i32, i32, i32
  }
  func.func @transform_1(%arg0: i32, %arg1: i32) -> (i32, i32) {
    %c0_i32 = arith.constant 0 : i32
    %c0_i32_0 = arith.constant 0 : i32
    %c0_i32_1 = arith.constant 0 : i32
    return %c0_i32, %c0_i32_0 : i32, i32
  }
  func.func @transform_2(%arg0: i32, %arg1: i32) -> (i32, i32) {
    %c0_i32 = arith.constant 0 : i32
    %c0_i32_0 = arith.constant 0 : i32
    %c0_i32_1 = arith.constant 0 : i32
    return %c0_i32, %c0_i32_0 : i32, i32
  }
  func.func @transform_3(%arg0: i32, %arg1: i32) -> (i32, i32, i32) {
    %c0_i32 = arith.constant 0 : i32
    %c0_i32_0 = arith.constant 0 : i32
    return %arg0, %arg1, %c0_i32 : i32, i32, i32
  }
}

module attributes {stable_mosaic.version = 11 : i64} {
  func.func @_attn_fc_kernel(%arg0: i32, %arg1: i32, %arg2: memref<8x8x128xbf16, #tpu.memory_space<vmem>>, %arg3: memref<8x128x16xbf16, #tpu.memory_space<vmem>>, %arg4: memref<8x16x128xbf16, #tpu.memory_space<vmem>>, %arg5: memref<8x1x16xf32, #tpu.memory_space<vmem>>, %arg6: memref<256x128xbf16, #tpu.memory_space<vmem>>, %arg7: memref<1x128xf32, #tpu.memory_space<vmem>>, %arg8: memref<8x8x128xf32, #tpu.memory_space<vmem>>, %arg9: memref<8x8x1xf32, #tpu.memory_space<vmem>>, %arg10: memref<8x8x1xf32, #tpu.memory_space<vmem>>, %arg11: memref<8x8x128xf32, #tpu.memory_space<vmem>>) attributes {dimension_semantics = [#tpu.dimension_semantics<parallel>, #tpu.dimension_semantics<arbitrary>], iteration_bounds = array<i64: 1, 1>, scalar_prefetch = 0 : i64, scratch_operands = 3 : i64, tpu.core_type = #tpu.core_type<tc>, window_params = [{transform_indices = @transform_0, window_bounds = array<i64: 8, 8, 128>}, {transform_indices = @transform_1, window_bounds = array<i64: 8, 128, 16>}, {transform_indices = @transform_2, window_bounds = array<i64: 8, 16, 128>}, {transform_indices = @transform_3, window_bounds = array<i64: 8, 1, 16>}, {pipeline_mode = #tpu.pipeline_mode<synchronous>, transform_indices = @transform_4, window_bounds = array<i64: 256, 128>}, {pipeline_mode = #tpu.pipeline_mode<synchronous>, transform_indices = @transform_5, window_bounds = array<i64: 1, 128>}, {transform_indices = @transform_6, window_bounds = array<i64: 8, 8, 128>}]} {
    %c0_i32 = arith.constant 0 : i32
    %0 = arith.cmpi eq, %arg1, %c0_i32 : i32
    %1 = arith.extui %0 : i1 to i32
    %c0_i32_0 = arith.constant 0 : i32
    %2 = arith.cmpi ne, %1, %c0_i32_0 : i32
    scf.if %2 {
      %cst_38 = arith.constant 0xFF800000 : f32
      %42 = vector.broadcast %cst_38 : f32 to vector<8x8x1xf32>
      %c0_39 = arith.constant 0 : index
      %c0_40 = arith.constant 0 : index
      %c0_41 = arith.constant 0 : index
      %43 = vector.load %arg9[%c0_39, %c0_40, %c0_41] : memref<8x8x1xf32, #tpu.memory_space<vmem>>, vector<8x8x1xf32>
      tpu.vector_store %arg9[%c0_39, %c0_40, %c0_41], %42 {strides = array<i32>} : memref<8x8x1xf32, #tpu.memory_space<vmem>>, vector<8x8x1xf32>,
      %cst_42 = arith.constant 0.000000e+00 : f32
      %44 = vector.broadcast %cst_42 : f32 to vector<8x8x1xf32>
      %c0_43 = arith.constant 0 : index
      %c0_44 = arith.constant 0 : index
      %c0_45 = arith.constant 0 : index
      %45 = vector.load %arg10[%c0_43, %c0_44, %c0_45] : memref<8x8x1xf32, #tpu.memory_space<vmem>>, vector<8x8x1xf32>
      tpu.vector_store %arg10[%c0_43, %c0_44, %c0_45], %44 {strides = array<i32>} : memref<8x8x1xf32, #tpu.memory_space<vmem>>, vector<8x8x1xf32>,
      %cst_46 = arith.constant 0.000000e+00 : f32
      %46 = vector.broadcast %cst_46 : f32 to vector<8x8x128xf32>
      %c0_47 = arith.constant 0 : index
      %c0_48 = arith.constant 0 : index
      %c0_49 = arith.constant 0 : index
      %47 = vector.load %arg11[%c0_47, %c0_48, %c0_49] : memref<8x8x128xf32, #tpu.memory_space<vmem>>, vector<8x8x128xf32>
      tpu.vector_store %arg11[%c0_47, %c0_48, %c0_49], %46 {strides = array<i32>} : memref<8x8x128xf32, #tpu.memory_space<vmem>>, vector<8x8x128xf32>,
    } else {
    }
    %c0 = arith.constant 0 : index
    %c0_1 = arith.constant 0 : index
    %c0_2 = arith.constant 0 : index
    %3 = vector.load %arg2[%c0, %c0_1, %c0_2] : memref<8x8x128xbf16, #tpu.memory_space<vmem>>, vector<8x8x128xbf16>
    %c0_3 = arith.constant 0 : index
    %c0_4 = arith.constant 0 : index
    %c0_5 = arith.constant 0 : index
    %4 = vector.load %arg3[%c0_3, %c0_4, %c0_5] : memref<8x128x16xbf16, #tpu.memory_space<vmem>>, vector<8x128x16xbf16>
    %c0_6 = arith.constant 0 : index
    %c0_7 = arith.constant 0 : index
    %c0_8 = arith.constant 0 : index
    %5 = vector.load %arg4[%c0_6, %c0_7, %c0_8] : memref<8x16x128xbf16, #tpu.memory_space<vmem>>, vector<8x16x128xbf16>
    %c0_9 = arith.constant 0 : index
    %c0_10 = arith.constant 0 : index
    %c0_11 = arith.constant 0 : index
    %6 = vector.load %arg5[%c0_9, %c0_10, %c0_11] : memref<8x1x16xf32, #tpu.memory_space<vmem>>, vector<8x1x16xf32>
    "tpu.trace_start"() <{level = 10 : i32, message = "blh,bht->blt"}> : () -> ()
    %cst = arith.constant dense<0.000000e+00> : vector<8x8x16xf32>
    %7 = tpu.matmul %3, %4, %cst {dimension_numbers = #tpu.dot_dimension_numbers<[2], [1], [1], [2], [0, 0, 0, 1, 1, 2], [0], [0]>} : vector<8x8x128xbf16>, vector<8x128x16xbf16>, vector<8x8x16xf32> -> vector<8x8x16xf32>
    "tpu.trace_stop"() : () -> ()
    %cst_12 = arith.constant 0.0883883461 : f32
    %8 = vector.broadcast %cst_12 : f32 to vector<8x8x16xf32>
    %9 = arith.mulf %7, %8 : vector<8x8x16xf32>
    %cst_13 = arith.constant 1.000000e+00 : f32
    %10 = vector.broadcast %cst_13 : f32 to vector<8x1x16xf32>
    %11 = arith.subf %10, %6 : vector<8x1x16xf32>
    %cst_14 = arith.constant 1.000000e+30 : f32
    %12 = vector.broadcast %cst_14 : f32 to vector<8x1x16xf32>
    %13 = arith.mulf %11, %12 : vector<8x1x16xf32>
    %14 = vector.broadcast %13 : vector<8x1x16xf32> to vector<8x8x16xf32>
    %15 = arith.subf %9, %14 : vector<8x8x16xf32>
    %c0_15 = arith.constant 0 : index
    %c0_16 = arith.constant 0 : index
    %c0_17 = arith.constant 0 : index
    %16 = vector.load %arg9[%c0_15, %c0_16, %c0_17] : memref<8x8x1xf32, #tpu.memory_space<vmem>>, vector<8x8x1xf32>
    %cst_18 = arith.constant dense<0xFF800000> : vector<8x8xf32>
    %17 = vector.multi_reduction <maximumf>, %15, %cst_18 [2] : vector<8x8x16xf32> to vector<8x8xf32>
    %18 = vector.shape_cast %17 : vector<8x8xf32> to vector<8x8x1xf32>
    %19 = arith.maximumf %16, %18 : vector<8x8x1xf32>
    %20 = arith.subf %16, %19 : vector<8x8x1xf32>
    %21 = math.exp %20 : vector<8x8x1xf32>
    %22 = vector.broadcast %19 : vector<8x8x1xf32> to vector<8x8x16xf32>
    %23 = arith.subf %15, %22 : vector<8x8x16xf32>
    %24 = math.exp %23 : vector<8x8x16xf32>
    %c0_19 = arith.constant 0 : index
    %c0_20 = arith.constant 0 : index
    %c0_21 = arith.constant 0 : index
    %25 = vector.load %arg10[%c0_19, %c0_20, %c0_21] : memref<8x8x1xf32, #tpu.memory_space<vmem>>, vector<8x8x1xf32>
    %26 = arith.mulf %21, %25 : vector<8x8x1xf32>
    %cst_22 = arith.constant dense<0.000000e+00> : vector<8x8xf32>
    %27 = vector.multi_reduction <add>, %24, %cst_22 [2] : vector<8x8x16xf32> to vector<8x8xf32>
    %28 = vector.shape_cast %27 : vector<8x8xf32> to vector<8x8x1xf32>
    %29 = arith.addf %26, %28 : vector<8x8x1xf32>
    %c0_23 = arith.constant 0 : index
    %c0_24 = arith.constant 0 : index
    %c0_25 = arith.constant 0 : index
    %30 = vector.load %arg10[%c0_23, %c0_24, %c0_25] : memref<8x8x1xf32, #tpu.memory_space<vmem>>, vector<8x8x1xf32>
    tpu.vector_store %arg10[%c0_23, %c0_24, %c0_25], %29 {strides = array<i32>} : memref<8x8x1xf32, #tpu.memory_space<vmem>>, vector<8x8x1xf32>,
    %c0_26 = arith.constant 0 : index
    %c0_27 = arith.constant 0 : index
    %c0_28 = arith.constant 0 : index
    %31 = vector.load %arg11[%c0_26, %c0_27, %c0_28] : memref<8x8x128xf32, #tpu.memory_space<vmem>>, vector<8x8x128xf32>
    %32 = vector.broadcast %21 : vector<8x8x1xf32> to vector<8x8x128xf32>
    %33 = arith.mulf %32, %31 : vector<8x8x128xf32>
    %34 = arith.truncf %24 : vector<8x8x16xf32> to vector<8x8x16xbf16>
    "tpu.trace_start"() <{level = 10 : i32, message = "blt,bth->blh"}> : () -> ()
    %cst_29 = arith.constant dense<0.000000e+00> : vector<8x8x128xf32>
    %35 = tpu.matmul %34, %5, %cst_29 {dimension_numbers = #tpu.dot_dimension_numbers<[2], [1], [1], [2], [0, 0, 0, 1, 1, 2], [0], [0]>} : vector<8x8x16xbf16>, vector<8x16x128xbf16>, vector<8x8x128xf32> -> vector<8x8x128xf32>
    "tpu.trace_stop"() : () -> ()
    %36 = arith.addf %33, %35 : vector<8x8x128xf32>
    %c0_30 = arith.constant 0 : index
    %c0_31 = arith.constant 0 : index
    %c0_32 = arith.constant 0 : index
    %37 = vector.load %arg11[%c0_30, %c0_31, %c0_32] : memref<8x8x128xf32, #tpu.memory_space<vmem>>, vector<8x8x128xf32>
    tpu.vector_store %arg11[%c0_30, %c0_31, %c0_32], %36 {strides = array<i32>} : memref<8x8x128xf32, #tpu.memory_space<vmem>>, vector<8x8x128xf32>,
    %c0_33 = arith.constant 0 : index
    %c0_34 = arith.constant 0 : index
    %c0_35 = arith.constant 0 : index
    %38 = vector.load %arg9[%c0_33, %c0_34, %c0_35] : memref<8x8x1xf32, #tpu.memory_space<vmem>>, vector<8x8x1xf32>
    tpu.vector_store %arg9[%c0_33, %c0_34, %c0_35], %19 {strides = array<i32>} : memref<8x8x1xf32, #tpu.memory_space<vmem>>, vector<8x8x1xf32>,
    %c0_i32_36 = arith.constant 0 : i32
    %39 = arith.cmpi eq, %arg1, %c0_i32_36 : i32
    %40 = arith.extui %39 : i1 to i32
    %c0_i32_37 = arith.constant 0 : i32
    %41 = arith.cmpi ne, %40, %c0_i32_37 : i32
    scf.if %41 {
      %c0_38 = arith.constant 0 : index
      %c0_39 = arith.constant 0 : index
      %c0_40 = arith.constant 0 : index
      %42 = vector.load %arg11[%c0_38, %c0_39, %c0_40] : memref<8x8x128xf32, #tpu.memory_space<vmem>>, vector<8x8x128xf32>
      %c0_41 = arith.constant 0 : index
      %c0_42 = arith.constant 0 : index
      %c0_43 = arith.constant 0 : index
      %43 = vector.load %arg10[%c0_41, %c0_42, %c0_43] : memref<8x8x1xf32, #tpu.memory_space<vmem>>, vector<8x8x1xf32>
      %44 = tpu.reciprocal %43 {approx = true} : vector<8x8x1xf32> -> vector<8x8x1xf32>
      %45 = vector.broadcast %44 : vector<8x8x1xf32> to vector<8x8x128xf32>
      %46 = arith.mulf %42, %45 : vector<8x8x128xf32>
      %47 = arith.extf %3 : vector<8x8x128xbf16> to vector<8x8x128xf32>
      %48 = math.tanh %47 : vector<8x8x128xf32>
      %49 = math.tanh %46 : vector<8x8x128xf32>
      %50 = tpu.concatenate %48, %49 in 2 : vector<8x8x128xf32>, vector<8x8x128xf32> -> vector<8x8x256xf32>
      %51 = vector.shape_cast %50 : vector<8x8x256xf32> to vector<64x256xf32>
      %52 = arith.truncf %51 : vector<64x256xf32> to vector<64x256xbf16>
      %c0_44 = arith.constant 0 : index
      %c0_45 = arith.constant 0 : index
      %53 = vector.load %arg6[%c0_44, %c0_45] : memref<256x128xbf16, #tpu.memory_space<vmem>>, vector<256x128xbf16>
      %cst_46 = arith.constant dense<0.000000e+00> : vector<64x128xf32>
      %54 = tpu.matmul %52, %53, %cst_46 {dimension_numbers = #tpu.dot_dimension_numbers<[1], [0], [0], [1], [0, 0, 1, 1], [], []>} : vector<64x256xbf16>, vector<256x128xbf16>, vector<64x128xf32> -> vector<64x128xf32>
      %c0_47 = arith.constant 0 : index
      %c0_48 = arith.constant 0 : index
      %55 = vector.load %arg7[%c0_47, %c0_48] : memref<1x128xf32, #tpu.memory_space<vmem>>, vector<1x128xf32>
      %56 = vector.broadcast %55 : vector<1x128xf32> to vector<64x128xf32>
      %57 = arith.addf %54, %56 : vector<64x128xf32>
      %cst_49 = arith.constant dense<0xFF800000> : vector<64xf32>
      %58 = vector.multi_reduction <maximumf>, %57, %cst_49 [1] : vector<64x128xf32> to vector<64xf32>
      %59 = vector.shape_cast %58 : vector<64xf32> to vector<64x1xf32>
      %60 = vector.broadcast %59 : vector<64x1xf32> to vector<64x128xf32>
      %61 = arith.subf %57, %60 : vector<64x128xf32>
      %62 = math.exp %61 : vector<64x128xf32>
      %cst_50 = arith.constant dense<0.000000e+00> : vector<64xf32>
      %63 = vector.multi_reduction <add>, %62, %cst_50 [1] : vector<64x128xf32> to vector<64xf32>
      %64 = vector.shape_cast %63 : vector<64xf32> to vector<64x1xf32>
      %65 = math.log %64 : vector<64x1xf32>
      %66 = arith.addf %65, %59 : vector<64x1xf32>
      %67 = vector.broadcast %66 : vector<64x1xf32> to vector<64x128xf32>
      %68 = arith.subf %57, %67 : vector<64x128xf32>
      %69 = vector.shape_cast %68 : vector<64x128xf32> to vector<8x8x128xf32>
      %c0_51 = arith.constant 0 : index
      %c0_52 = arith.constant 0 : index
      %c0_53 = arith.constant 0 : index
      %70 = vector.load %arg8[%c0_51, %c0_52, %c0_53] : memref<8x8x128xf32, #tpu.memory_space<vmem>>, vector<8x8x128xf32>
      tpu.vector_store %arg8[%c0_51, %c0_52, %c0_53], %69 {strides = array<i32>} : memref<8x8x128xf32, #tpu.memory_space<vmem>>, vector<8x8x128xf32>,
    } else {
    }
    return
  }
  func.func @transform_0(%arg0: i32, %arg1: i32) -> (i32, i32, i32) {
    %c0_i32 = arith.constant 0 : i32
    %c0_i32_0 = arith.constant 0 : i32
    %c0_i32_1 = arith.constant 0 : i32
    return %arg0, %c0_i32, %c0_i32_0 : i32, i32, i32
  }
  func.func @transform_1(%arg0: i32, %arg1: i32) -> (i32, i32, i32) {
    %c0_i32 = arith.constant 0 : i32
    %c0_i32_0 = arith.constant 0 : i32
    return %arg0, %c0_i32, %arg1 : i32, i32, i32
  }
  func.func @transform_2(%arg0: i32, %arg1: i32) -> (i32, i32, i32) {
    %c0_i32 = arith.constant 0 : i32
    %c0_i32_0 = arith.constant 0 : i32
    return %arg0, %arg1, %c0_i32 : i32, i32, i32
  }
  func.func @transform_3(%arg0: i32, %arg1: i32) -> (i32, i32, i32) {
    %c0_i32 = arith.constant 0 : i32
    %c0_i32_0 = arith.constant 0 : i32
    return %arg0, %c0_i32, %arg1 : i32, i32, i32
  }
  func.func @transform_4(%arg0: i32, %arg1: i32) -> (i32, i32) {
    %c0_i32 = arith.constant 0 : i32
    %c0_i32_0 = arith.constant 0 : i32
    %c0_i32_1 = arith.constant 0 : i32
    return %c0_i32, %c0_i32_0 : i32, i32
  }
  func.func @transform_5(%arg0: i32, %arg1: i32) -> (i32, i32) {
    %c0_i32 = arith.constant 0 : i32
    %c0_i32_0 = arith.constant 0 : i32
    %c0_i32_1 = arith.constant 0 : i32
    return %c0_i32, %c0_i32_0 : i32, i32
  }
  func.func @transform_6(%arg0: i32, %arg1: i32) -> (i32, i32, i32) {
    %c0_i32 = arith.constant 0 : i32
    %c0_i32_0 = arith.constant 0 : i32
    %c0_i32_1 = arith.constant 0 : i32
    return %arg0, %c0_i32, %c0_i32_0 : i32, i32, i32
  }
}

</mosaic_0001>

<llo_original>
// kernel: _lambda_.4
$region0: #{_lambda_.4}
  #allocation0 [shape = 'u32[]', space=smem, size = 0x4, offset = 0x4, fixed_abs, tag = 'smem constant byte address 0x4 - core index']
  #allocation1 [shape = 'u32[144,128]{1,0:T(1,128)}', space=vmem, size = 0x12000, scoped, tag = 'internal scratch']
  #allocation2 [shape = 'f32[8,128]{1,0:T(8,128)}', space=vmem, size = 0x1000, scoped, tag = 'scratch operand']
  %s0 = inlined_call_operand.vmem [shape: bf16[8,8,384], index: 0, kind: input, shape index: {}]
  %s1 = inlined_call_operand.vmem [shape: bf16[128,384], index: 1, kind: input, shape index: {}]
  %s2 = inlined_call_operand.vmem [shape: f32[1,384], index: 2, kind: input, shape index: {}]
  %s3 = inlined_call_operand.vmem [shape: bf16[8,8,128], index: 3, kind: output, shape index: {}]
  %s4 = sld [smem:[#allocation0]]
  $region26: #{_lambda_.4} parent=0
    _
  %s6 = ssub.s32 1, %s4
  %s7 = scalar_select 0, %s6, %s4
  // Predicated region
  $region2: #{_lambda_.4} parent=0 // pred_check
    _
  $region3: #{_lambda_.4} parent=0 // pred_check_branch
    %9 = sbr.rel (0) target = $region5
  $region4: #{_lambda_.4} parent=0 // pred_region
    _
  $region5: #{_lambda_.4} parent=0 // pred_fallthru
    _
  // Predicated region
  $region6: #{_lambda_.4} parent=0 // pred_check
    _
  $region7: #{_lambda_.4} parent=0 // pred_check_branch
    %11 = sbr.rel (0) target = $region9
  $region8: #{_lambda_.4} parent=0 // pred_region
    _
  $region9: #{_lambda_.4} parent=0 // pred_fallthru
    _
  // Predicated region
  $region10: #{_lambda_.4} parent=0 // pred_check
    _
  $region11: #{_lambda_.4} parent=0 // pred_check_branch
    %13 = sbr.rel (0) target = $region13
  $region12: #{_lambda_.4} parent=0 // pred_region
    _
  $region13: #{_lambda_.4} parent=0 // pred_fallthru
    _
  %p15 = scmp.eq.s32.totalorder 0, 0
  // Predicated region
  $region14: #{_lambda_.4} parent=0 // pred_check
    %p16 = pneg %p15
  $region15: #{_lambda_.4} parent=0 // pred_check_branch
    %18 = sbr.rel (%p16) target = $region17
  $region16: #{_lambda_.4} parent=0 // pred_region
    %19 = vst [vmem:[#allocation2] sm:$0xff] 0.0
  $region17: #{_lambda_.4} parent=0 // pred_fallthru
    _
  %v20 = vld [vmem:[%s1] sm:$0xff]
  %v21 = vld [vmem:[%s1 + $0x8] sm:$0xf]
  %v22 = vld [vmem:[%s1 + $0xc] sm:$0xff]
  %v23 = vld [vmem:[%s1 + $0x14] sm:$0xf]
  %v24 = vld [vmem:[%s1 + $0x18] sm:$0xff]
  %v25 = vld [vmem:[%s1 + $0x20] sm:$0xf]
  %v26 = vld [vmem:[%s1 + $0x24] sm:$0xff]
  %v27 = vld [vmem:[%s1 + $0x2c] sm:$0xf]
  %v28 = vld [vmem:[%s1 + $0x30] sm:$0xff]
  %v29 = vld [vmem:[%s1 + $0x38] sm:$0xf]
  %v30 = vld [vmem:[%s1 + $0x3c] sm:$0xff]
  %v31 = vld [vmem:[%s1 + $0x44] sm:$0xf]
  %v32 = vld [vmem:[%s1 + $0x48] sm:$0xff]
  %v33 = vld [vmem:[%s1 + $0x50] sm:$0xf]
  %v34 = vld [vmem:[%s1 + $0x54] sm:$0xff]
  %v35 = vld [vmem:[%s1 + $0x5c] sm:$0xf]
  %v36 = vld [vmem:[%s1 + $0x60] sm:$0xff]
  %v37 = vld [vmem:[%s1 + $0x68] sm:$0xf]
  %v38 = vld [vmem:[%s1 + $0x6c] sm:$0xff]
  %v39 = vld [vmem:[%s1 + $0x74] sm:$0xf]
  %v40 = vld [vmem:[%s1 + $0x78] sm:$0xff]
  %v41 = vld [vmem:[%s1 + $0x80] sm:$0xf]
  %v42 = vld [vmem:[%s1 + $0x84] sm:$0xff]
  %v43 = vld [vmem:[%s1 + $0x8c] sm:$0xf]
  %v44 = vld [vmem:[%s1 + $0x90] sm:$0xff]
  %v45 = vld [vmem:[%s1 + $0x98] sm:$0xf]
  %v46 = vld [vmem:[%s1 + $0x9c] sm:$0xff]
  %v47 = vld [vmem:[%s1 + $0xa4] sm:$0xf]
  %v48 = vld [vmem:[%s1 + $0xa8] sm:$0xff]
  %v49 = vld [vmem:[%s1 + $0xb0] sm:$0xf]
  %v50 = vld [vmem:[%s1 + $0xb4] sm:$0xff]
  %v51 = vld [vmem:[%s1 + $0xbc] sm:$0xf]
  %v52 = vld [vmem:[%s2] sm:$0x7]
  %v54 = vlaneseq
  %v55 = vshrl.u32 %v54, 7
  %v56 = vsub.s32 0, %v55
  %v57 = vrot.slane %v52, %v56
  %v58 = vlaneseq
  %v59 = vshrl.u32 %v58, 7
  %v60 = vsub.s32 1, %v59
  %v61 = vrot.slane %v52, %v60
  %v62 = vlaneseq
  %v63 = vshrl.u32 %v62, 7
  %v64 = vsub.s32 2, %v63
  %v65 = vrot.slane %v52, %v64
  %v69 = vld [vmem:[#allocation2] sm:$0xff]
  %v70 = vpack.c.bf16 %v69, %v69
  %v103 = vunpack.c.l.b16 %v20
  %v104 = vunpack.c.h.b16 %v20
  %v105 = vunpack.c.l.b16 %v21
  %v106 = vunpack.c.l.b16 %v22
  %v107 = vunpack.c.h.b16 %v22
  %v108 = vunpack.c.l.b16 %v23
  %v109 = vunpack.c.l.b16 %v24
  %v110 = vunpack.c.h.b16 %v24
  %v111 = vunpack.c.l.b16 %v25
  %v112 = vunpack.c.l.b16 %v26
  %v113 = vunpack.c.h.b16 %v26
  %v114 = vunpack.c.l.b16 %v27
  %v115 = vunpack.c.l.b16 %v28
  %v116 = vunpack.c.h.b16 %v28
  %v117 = vunpack.c.l.b16 %v29
  %v118 = vunpack.c.l.b16 %v30
  %v119 = vunpack.c.h.b16 %v30
  %v120 = vunpack.c.l.b16 %v31
  %v121 = vunpack.c.l.b16 %v32
  %v122 = vunpack.c.h.b16 %v32
  %v123 = vunpack.c.l.b16 %v33
  %v124 = vunpack.c.l.b16 %v34
  %v125 = vunpack.c.h.b16 %v34
  %v126 = vunpack.c.l.b16 %v35
  %v127 = vunpack.c.l.b16 %v36
  %v128 = vunpack.c.h.b16 %v36
  %v129 = vunpack.c.l.b16 %v37
  %v130 = vunpack.c.l.b16 %v38
  %v131 = vunpack.c.h.b16 %v38
  %v132 = vunpack.c.l.b16 %v39
  %v133 = vunpack.c.l.b16 %v40
  %v134 = vunpack.c.h.b16 %v40
  %v135 = vunpack.c.l.b16 %v41
  %v136 = vunpack.c.l.b16 %v42
  %v137 = vunpack.c.h.b16 %v42
  %v138 = vunpack.c.l.b16 %v43
  %v139 = vunpack.c.l.b16 %v44
  %v140 = vunpack.c.h.b16 %v44
  %v141 = vunpack.c.l.b16 %v45
  %v142 = vunpack.c.l.b16 %v46
  %v143 = vunpack.c.h.b16 %v46
  %v144 = vunpack.c.l.b16 %v47
  %v145 = vunpack.c.l.b16 %v48
  %v146 = vunpack.c.h.b16 %v48
  %v147 = vunpack.c.l.b16 %v49
  %v148 = vunpack.c.l.b16 %v50
  %v149 = vunpack.c.h.b16 %v50
  %v150 = vunpack.c.l.b16 %v51
  %v151 = vpack.c.b16 %v106, %v103
  %v152 = vpack.c.b16 %v107, %v104
  %v153 = vpack.c.b16 %v108, %v105
  %v154 = vpack.c.b16 %v112, %v109
  %v155 = vpack.c.b16 %v113, %v110
  %v156 = vpack.c.b16 %v114, %v111
  %v157 = vpack.c.b16 %v118, %v115
  %v158 = vpack.c.b16 %v119, %v116
  %v159 = vpack.c.b16 %v120, %v117
  %v160 = vpack.c.b16 %v124, %v121
  %v161 = vpack.c.b16 %v125, %v122
  %v162 = vpack.c.b16 %v126, %v123
  %v163 = vpack.c.b16 %v130, %v127
  %v164 = vpack.c.b16 %v131, %v128
  %v165 = vpack.c.b16 %v132, %v129
  %v166 = vpack.c.b16 %v136, %v133
  %v167 = vpack.c.b16 %v137, %v134
  %v168 = vpack.c.b16 %v138, %v135
  %v169 = vpack.c.b16 %v142, %v139
  %v170 = vpack.c.b16 %v143, %v140
  %v171 = vpack.c.b16 %v144, %v141
  %v172 = vpack.c.b16 %v148, %v145
  %v173 = vpack.c.b16 %v149, %v146
  %v174 = vpack.c.b16 %v150, %v147
  %199 = vmatprep.subr.bf16.mxu0 %v173
  %200 = vmatpush1.bf16.msra.mxu0 %v172
  %201 = vmatprep.subr.bf16.mxu0 %v170
  %202 = vmatpush1.bf16.msra.mxu0 %v169
  %203 = vmatprep.subr.bf16.mxu0 %v167
  %204 = vmatpush1.bf16.msra.mxu0 %v166
  %205 = vmatprep.subr.bf16.mxu0 %v164
  %206 = vmatpush1.bf16.msra.mxu0 %v163
  %207 = vmatprep.subr.bf16.mxu0 %v161
  %208 = vmatpush1.bf16.msra.mxu0 %v160
  %209 = vmatprep.subr.bf16.mxu0 %v158
  %210 = vmatpush1.bf16.msra.mxu0 %v157
  %211 = vmatprep.subr.bf16.mxu0 %v155
  %212 = vmatpush1.bf16.msra.mxu0 %v154
  %213 = vmatprep.subr.bf16.mxu0 %v152
  %214 = vmatpush1.bf16.msra.mxu0 %v151
  %215 = vmatprep.subr.bf16.mxu0 0
  %216 = vmatpush2.bf16.msra.mxu0 0
  %217 = vmatprep.subr.bf16.mxu0 0
  %218 = vmatpush2.bf16.msra.mxu0 0
  %219 = vmatprep.subr.bf16.mxu0 0
  %220 = vmatpush2.bf16.msra.mxu0 0
  %221 = vmatprep.subr.bf16.mxu0 0
  %222 = vmatpush2.bf16.msra.mxu0 0
  %223 = vmatprep.subr.bf16.mxu0 0
  %224 = vmatpush2.bf16.msra.mxu0 0
  %225 = vmatprep.subr.bf16.mxu0 0
  %226 = vmatpush2.bf16.msra.mxu0 0
  %227 = vmatprep.subr.bf16.mxu0 0
  %228 = vmatpush2.bf16.msra.mxu0 0
  %229 = vmatprep.subr.bf16.mxu0 0
  %230 = vmatpush2.bf16.msra.mxu0 0
  %231 = vmatprep.mubr.bf16.mxu0 0
  %232 = vmatmul.mubr.bf16.gmra.mxu0 %v70
  %v233 = vpop.f32.mrf.mxu0
  %v234 = vadd.f32 %v57, %v233
  %v235 = vpop.f32.mrf.mxu0
  %v236 = vadd.f32 %v61, %v235
  %v237 = vpop.f32.mrf.mxu0
  %v238 = vpop.f32.mrf.mxu0
  %239 = vdwg.mxu0
  %240 = vmatprep.subr.bf16.mxu0 0
  %241 = vmatpush1.bf16.msra.mxu0 %v174
  %242 = vmatprep.subr.bf16.mxu0 0
  %243 = vmatpush1.bf16.msra.mxu0 %v171
  %244 = vmatprep.subr.bf16.mxu0 0
  %245 = vmatpush1.bf16.msra.mxu0 %v168
  %246 = vmatprep.subr.bf16.mxu0 0
  %247 = vmatpush1.bf16.msra.mxu0 %v165
  %248 = vmatprep.subr.bf16.mxu0 0
  %249 = vmatpush1.bf16.msra.mxu0 %v162
  %250 = vmatprep.subr.bf16.mxu0 0
  %251 = vmatpush1.bf16.msra.mxu0 %v159
  %252 = vmatprep.subr.bf16.mxu0 0
  %253 = vmatpush1.bf16.msra.mxu0 %v156
  %254 = vmatprep.subr.bf16.mxu0 0
  %255 = vmatpush1.bf16.msra.mxu0 %v153
  %256 = vmatprep.subr.bf16.mxu0 0
  %257 = vmatpush2.bf16.msra.mxu0 0
  %258 = vmatprep.subr.bf16.mxu0 0
  %259 = vmatpush2.bf16.msra.mxu0 0
  %260 = vmatprep.subr.bf16.mxu0 0
  %261 = vmatpush2.bf16.msra.mxu0 0
  %262 = vmatprep.subr.bf16.mxu0 0
  %263 = vmatpush2.bf16.msra.mxu0 0
  %264 = vmatprep.subr.bf16.mxu0 0
  %265 = vmatpush2.bf16.msra.mxu0 0
  %266 = vmatprep.subr.bf16.mxu0 0
  %267 = vmatpush2.bf16.msra.mxu0 0
  %268 = vmatprep.subr.bf16.mxu0 0
  %269 = vmatpush2.bf16.msra.mxu0 0
  %270 = vmatprep.subr.bf16.mxu0 0
  %271 = vmatpush2.bf16.msra.mxu0 0
  %272 = vmatprep.mubr.bf16.mxu0 0
  %273 = vmatmul.mubr.bf16.gmra.mxu0 %v70
  %v274 = vpop.f32.mrf.mxu0
  %v275 = vadd.f32 %v65, %v274
  %v276 = vpop.f32.mrf.mxu0
  %v277 = vpop.f32.mrf.mxu0
  %v278 = vpop.f32.mrf.mxu0
  %279 = vdwg.mxu0
  %v280 = vld [vmem:[%s0] sm:$0x11]
  %v281 = vld [vmem:[%s0 + $0x8] sm:$0x1]
  %v282 = vld [vmem:[%s0 + $0xc] sm:$0x11]
  %v283 = vld [vmem:[%s0 + $0x14] sm:$0x1]
  %v284 = vld [vmem:[%s0 + $0x18] sm:$0x11]
  %v285 = vld [vmem:[%s0 + $0x20] sm:$0x1]
  %v286 = vld [vmem:[%s0 + $0x24] sm:$0x11]
  %v287 = vld [vmem:[%s0 + $0x2c] sm:$0x1]
  %v288 = vld [vmem:[%s0 + $0x30] sm:$0x11]
  %v289 = vld [vmem:[%s0 + $0x38] sm:$0x1]
  %v290 = vld [vmem:[%s0 + $0x3c] sm:$0x11]
  %v291 = vld [vmem:[%s0 + $0x44] sm:$0x1]
  %v292 = vld [vmem:[%s0 + $0x48] sm:$0x11]
  %v293 = vld [vmem:[%s0 + $0x50] sm:$0x1]
  %v294 = vld [vmem:[%s0 + $0x54] sm:$0x11]
  %v295 = vld [vmem:[%s0 + $0x5c] sm:$0x1]
  %v296 = vunpack.c.l.bf16 %v280
  %v297 = vunpack.c.h.bf16 %v280
  %v298 = vunpack.c.l.bf16 %v281
  %v299 = vunpack.c.l.bf16 %v282
  %v300 = vunpack.c.h.bf16 %v282
  %v301 = vunpack.c.l.bf16 %v283
  %v302 = vunpack.c.l.bf16 %v284
  %v303 = vunpack.c.h.bf16 %v284
  %v304 = vunpack.c.l.bf16 %v285
  %v305 = vunpack.c.l.bf16 %v286
  %v306 = vunpack.c.h.bf16 %v286
  %v307 = vunpack.c.l.bf16 %v287
  %v308 = vunpack.c.l.bf16 %v288
  %v309 = vunpack.c.h.bf16 %v288
  %v310 = vunpack.c.l.bf16 %v289
  %v311 = vunpack.c.l.bf16 %v290
  %v312 = vunpack.c.h.bf16 %v290
  %v313 = vunpack.c.l.bf16 %v291
  %v314 = vunpack.c.l.bf16 %v292
  %v315 = vunpack.c.h.bf16 %v292
  %v316 = vunpack.c.l.bf16 %v293
  %v317 = vunpack.c.l.bf16 %v294
  %v318 = vunpack.c.h.bf16 %v294
  %v319 = vunpack.c.l.bf16 %v295
  %v321 = vrot.slane %v234, 1
  %v322 = vrot.slane %v234, 2
  %v323 = vrot.slane %v234, 3
  %v324 = vrot.slane %v234, 4
  %v325 = vrot.slane %v234, 5
  %v326 = vrot.slane %v234, 6
  %v327 = vrot.slane %v234, 7
  %v336 = vadd.f32 %v296, %v234
  %v337 = vadd.f32 %v299, %v321
  %v338 = vadd.f32 %v302, %v322
  %v339 = vadd.f32 %v305, %v323
  %v340 = vadd.f32 %v308, %v324
  %v341 = vadd.f32 %v311, %v325
  %v342 = vadd.f32 %v314, %v326
  %v343 = vadd.f32 %v317, %v327
  %v344 = vxor.u32 %v336, 2147483648
  %v345 = vxor.u32 %v337, 2147483648
  %v346 = vxor.u32 %v338, 2147483648
  %v347 = vxor.u32 %v339, 2147483648
  %v348 = vxor.u32 %v340, 2147483648
  %v349 = vxor.u32 %v341, 2147483648
  %v350 = vxor.u32 %v342, 2147483648
  %v351 = vxor.u32 %v343, 2147483648
  %v352 = vmul.f32 %v344, 1.442695
  %v353 = vpow.pop %v352
  %v354 = vmul.f32 %v345, 1.442695
  %v355 = vpow.pop %v354
  %v356 = vmul.f32 %v346, 1.442695
  %v357 = vpow.pop %v356
  %v358 = vmul.f32 %v347, 1.442695
  %v359 = vpow.pop %v358
  %v360 = vmul.f32 %v348, 1.442695
  %v361 = vpow.pop %v360
  %v362 = vmul.f32 %v349, 1.442695
  %v363 = vpow.pop %v362
  %v364 = vmul.f32 %v350, 1.442695
  %v365 = vpow.pop %v364
  %v366 = vmul.f32 %v351, 1.442695
  %v367 = vpow.pop %v366
  %v368 = vadd.f32 %v353, 1.0
  %v369 = vadd.f32 %v355, 1.0
  %v370 = vadd.f32 %v357, 1.0
  %v371 = vadd.f32 %v359, 1.0
  %v372 = vadd.f32 %v361, 1.0
  %v373 = vadd.f32 %v363, 1.0
  %v374 = vadd.f32 %v365, 1.0
  %v375 = vadd.f32 %v367, 1.0
  %v376 = vrcp.pop %v368
  %v377 = vmul.f32 1.0, %v376
  %v378 = vrcp.pop %v369
  %v379 = vmul.f32 1.0, %v378
  %v380 = vrcp.pop %v370
  %v381 = vmul.f32 1.0, %v380
  %v382 = vrcp.pop %v371
  %v383 = vmul.f32 1.0, %v382
  %v384 = vrcp.pop %v372
  %v385 = vmul.f32 1.0, %v384
  %v386 = vrcp.pop %v373
  %v387 = vmul.f32 1.0, %v386
  %v388 = vrcp.pop %v374
  %v389 = vmul.f32 1.0, %v388
  %v390 = vrcp.pop %v375
  %v391 = vmul.f32 1.0, %v390
  %v393 = vrot.slane %v236, 1
  %v394 = vrot.slane %v236, 2
  %v395 = vrot.slane %v236, 3
  %v396 = vrot.slane %v236, 4
  %v397 = vrot.slane %v236, 5
  %v398 = vrot.slane %v236, 6
  %v399 = vrot.slane %v236, 7
  %v408 = vadd.f32 %v297, %v236
  %v409 = vadd.f32 %v300, %v393
  %v410 = vadd.f32 %v303, %v394
  %v411 = vadd.f32 %v306, %v395
  %v412 = vadd.f32 %v309, %v396
  %v413 = vadd.f32 %v312, %v397
  %v414 = vadd.f32 %v315, %v398
  %v415 = vadd.f32 %v318, %v399
  %v416 = vxor.u32 %v408, 2147483648
  %v417 = vxor.u32 %v409, 2147483648
  %v418 = vxor.u32 %v410, 2147483648
  %v419 = vxor.u32 %v411, 2147483648
  %v420 = vxor.u32 %v412, 2147483648
  %v421 = vxor.u32 %v413, 2147483648
  %v422 = vxor.u32 %v414, 2147483648
  %v423 = vxor.u32 %v415, 2147483648
  %v424 = vmul.f32 %v416, 1.442695
  %v425 = vpow.pop %v424
  %v426 = vmul.f32 %v417, 1.442695
  %v427 = vpow.pop %v426
  %v428 = vmul.f32 %v418, 1.442695
  %v429 = vpow.pop %v428
  %v430 = vmul.f32 %v419, 1.442695
  %v431 = vpow.pop %v430
  %v432 = vmul.f32 %v420, 1.442695
  %v433 = vpow.pop %v432
  %v434 = vmul.f32 %v421, 1.442695
  %v435 = vpow.pop %v434
  %v436 = vmul.f32 %v422, 1.442695
  %v437 = vpow.pop %v436
  %v438 = vmul.f32 %v423, 1.442695
  %v439 = vpow.pop %v438
  %v440 = vadd.f32 %v425, 1.0
  %v441 = vadd.f32 %v427, 1.0
  %v442 = vadd.f32 %v429, 1.0
  %v443 = vadd.f32 %v431, 1.0
  %v444 = vadd.f32 %v433, 1.0
  %v445 = vadd.f32 %v435, 1.0
  %v446 = vadd.f32 %v437, 1.0
  %v447 = vadd.f32 %v439, 1.0
  %v448 = vrcp.pop %v440
  %v449 = vmul.f32 1.0, %v448
  %v450 = vrcp.pop %v441
  %v451 = vmul.f32 1.0, %v450
  %v452 = vrcp.pop %v442
  %v453 = vmul.f32 1.0, %v452
  %v454 = vrcp.pop %v443
  %v455 = vmul.f32 1.0, %v454
  %v456 = vrcp.pop %v444
  %v457 = vmul.f32 1.0, %v456
  %v458 = vrcp.pop %v445
  %v459 = vmul.f32 1.0, %v458
  %v460 = vrcp.pop %v446
  %v461 = vmul.f32 1.0, %v460
  %v462 = vrcp.pop %v447
  %v463 = vmul.f32 1.0, %v462
  %v465 = vrot.slane %v275, 1
  %v466 = vrot.slane %v275, 2
  %v467 = vrot.slane %v275, 3
  %v468 = vrot.slane %v275, 4
  %v469 = vrot.slane %v275, 5
  %v470 = vrot.slane %v275, 6
  %v471 = vrot.slane %v275, 7
  %v480 = vmul.f32 %v377, %v275
  %v481 = vmul.f32 %v379, %v465
  %v482 = vmul.f32 %v381, %v466
  %v483 = vmul.f32 %v383, %v467
  %v484 = vmul.f32 %v385, %v468
  %v485 = vmul.f32 %v387, %v469
  %v486 = vmul.f32 %v389, %v470
  %v487 = vmul.f32 %v391, %v471
  %v488 = vadd.f32 %v298, %v480
  %v489 = vadd.f32 %v301, %v481
  %v490 = vadd.f32 %v304, %v482
  %v491 = vadd.f32 %v307, %v483
  %v492 = vadd.f32 %v310, %v484
  %v493 = vadd.f32 %v313, %v485
  %v494 = vadd.f32 %v316, %v486
  %v495 = vadd.f32 %v319, %v487
  %v496 = vtanh.pop %v488
  %v497 = vtanh.pop %v489
  %v498 = vtanh.pop %v490
  %v499 = vtanh.pop %v491
  %v500 = vtanh.pop %v492
  %v501 = vtanh.pop %v493
  %v502 = vtanh.pop %v494
  %v503 = vtanh.pop %v495
  %v504 = vsub.f32 1.0, %v449
  %v505 = vsub.f32 1.0, %v451
  %v506 = vsub.f32 1.0, %v453
  %v507 = vsub.f32 1.0, %v455
  %v508 = vsub.f32 1.0, %v457
  %v509 = vsub.f32 1.0, %v459
  %v510 = vsub.f32 1.0, %v461
  %v511 = vsub.f32 1.0, %v463
  %v512 = vmul.f32 %v504, %v496
  %v513 = vmul.f32 %v505, %v497
  %v514 = vmul.f32 %v506, %v498
  %v515 = vmul.f32 %v507, %v499
  %v516 = vmul.f32 %v508, %v500
  %v517 = vmul.f32 %v509, %v501
  %v518 = vmul.f32 %v510, %v502
  %v519 = vmul.f32 %v511, %v503
  %v521 = vrot.slane %v69, 1
  %v522 = vrot.slane %v69, 2
  %v523 = vrot.slane %v69, 3
  %v524 = vrot.slane %v69, 4
  %v525 = vrot.slane %v69, 5
  %v526 = vrot.slane %v69, 6
  %v527 = vrot.slane %v69, 7
  %v536 = vmul.f32 %v449, %v69
  %v537 = vmul.f32 %v451, %v521
  %v538 = vmul.f32 %v453, %v522
  %v539 = vmul.f32 %v455, %v523
  %v540 = vmul.f32 %v457, %v524
  %v541 = vmul.f32 %v459, %v525
  %v542 = vmul.f32 %v461, %v526
  %v543 = vmul.f32 %v463, %v527
  %v544 = vadd.f32 %v512, %v536
  %v545 = vadd.f32 %v513, %v537
  %v546 = vadd.f32 %v514, %v538
  %v547 = vadd.f32 %v515, %v539
  %v548 = vadd.f32 %v516, %v540
  %v549 = vadd.f32 %v517, %v541
  %v550 = vadd.f32 %v518, %v542
  %v551 = vadd.f32 %v519, %v543
  %v552 = vpack.c.bf16 %v544, %v544
  %v553 = vpack.c.bf16 %v545, %v545
  %v554 = vpack.c.bf16 %v546, %v546
  %v555 = vpack.c.bf16 %v547, %v547
  %v556 = vpack.c.bf16 %v548, %v548
  %v557 = vpack.c.bf16 %v549, %v549
  %v558 = vpack.c.bf16 %v550, %v550
  %v559 = vpack.c.bf16 %v551, %v551
  %v568 = vunpack.c.l.b16 %v552
  %v569 = vunpack.c.l.b16 %v553
  %v570 = vunpack.c.l.b16 %v554
  %v571 = vunpack.c.l.b16 %v555
  %v572 = vunpack.c.l.b16 %v556
  %v573 = vunpack.c.l.b16 %v557
  %v574 = vunpack.c.l.b16 %v558
  %v575 = vunpack.c.l.b16 %v559
  %v576 = vrot.slane %v569, 7
  %vm577 = vcmask 1041409
  %v578 = vsel %vm577, %v576, %v568
  %v579 = vrot.slane %v570, 6
  %vm580 = vcmask 1042434
  %v581 = vsel %vm580, %v579, %v578
  %v582 = vrot.slane %v571, 5
  %vm583 = vcmask 1043459
  %v584 = vsel %vm583, %v582, %v581
  %v585 = vrot.slane %v572, 4
  %vm586 = vcmask 1044484
  %v587 = vsel %vm586, %v585, %v584
  %v588 = vrot.slane %v573, 3
  %vm589 = vcmask 1045509
  %v590 = vsel %vm589, %v588, %v587
  %v591 = vrot.slane %v574, 2
  %vm592 = vcmask 1046534
  %v593 = vsel %vm592, %v591, %v590
  %v594 = vrot.slane %v575, 1
  %vm595 = vcmask 1047559
  %v596 = vsel %vm595, %v594, %v593
  %v597 = vpack.c.b16 %v596, %v596
  %599 = vmatprep.subr.bf16.mxu0 %v173
  %600 = vmatpush1.bf16.msra.mxu0 %v172
  %601 = vmatprep.subr.bf16.mxu0 %v170
  %602 = vmatpush1.bf16.msra.mxu0 %v169
  %603 = vmatprep.subr.bf16.mxu0 %v167
  %604 = vmatpush1.bf16.msra.mxu0 %v166
  %605 = vmatprep.subr.bf16.mxu0 %v164
  %606 = vmatpush1.bf16.msra.mxu0 %v163
  %607 = vmatprep.subr.bf16.mxu0 %v161
  %608 = vmatpush1.bf16.msra.mxu0 %v160
  %609 = vmatprep.subr.bf16.mxu0 %v158
  %610 = vmatpush1.bf16.msra.mxu0 %v157
  %611 = vmatprep.subr.bf16.mxu0 %v155
  %612 = vmatpush1.bf16.msra.mxu0 %v154
  %613 = vmatprep.subr.bf16.mxu0 %v152
  %614 = vmatpush1.bf16.msra.mxu0 %v151
  %615 = vmatprep.subr.bf16.mxu0 0
  %616 = vmatpush2.bf16.msra.mxu0 0
  %617 = vmatprep.subr.bf16.mxu0 0
  %618 = vmatpush2.bf16.msra.mxu0 0
  %619 = vmatprep.subr.bf16.mxu0 0
  %620 = vmatpush2.bf16.msra.mxu0 0
  %621 = vmatprep.subr.bf16.mxu0 0
  %622 = vmatpush2.bf16.msra.mxu0 0
  %623 = vmatprep.subr.bf16.mxu0 0
  %624 = vmatpush2.bf16.msra.mxu0 0
  %625 = vmatprep.subr.bf16.mxu0 0
  %626 = vmatpush2.bf16.msra.mxu0 0
  %627 = vmatprep.subr.bf16.mxu0 0
  %628 = vmatpush2.bf16.msra.mxu0 0
  %629 = vmatprep.subr.bf16.mxu0 0
  %630 = vmatpush2.bf16.msra.mxu0 0
  %631 = vmatprep.mubr.bf16.mxu0 0
  %632 = vmatmul.mubr.bf16.gmra.mxu0 %v597
  %v633 = vpop.f32.mrf.mxu0
  %v634 = vadd.f32 %v57, %v633
  %v635 = vpop.f32.mrf.mxu0
  %v636 = vadd.f32 %v61, %v635
  %v637 = vpop.f32.mrf.mxu0
  %v638 = vpop.f32.mrf.mxu0
  %639 = vdwg.mxu0
  %640 = vmatprep.subr.bf16.mxu0 0
  %641 = vmatpush1.bf16.msra.mxu0 %v174
  %642 = vmatprep.subr.bf16.mxu0 0
  %643 = vmatpush1.bf16.msra.mxu0 %v171
  %644 = vmatprep.subr.bf16.mxu0 0
  %645 = vmatpush1.bf16.msra.mxu0 %v168
  %646 = vmatprep.subr.bf16.mxu0 0
  %647 = vmatpush1.bf16.msra.mxu0 %v165
  %648 = vmatprep.subr.bf16.mxu0 0
  %649 = vmatpush1.bf16.msra.mxu0 %v162
  %650 = vmatprep.subr.bf16.mxu0 0
  %651 = vmatpush1.bf16.msra.mxu0 %v159
  %652 = vmatprep.subr.bf16.mxu0 0
  %653 = vmatpush1.bf16.msra.mxu0 %v156
  %654 = vmatprep.subr.bf16.mxu0 0
  %655 = vmatpush1.bf16.msra.mxu0 %v153
  %656 = vmatprep.subr.bf16.mxu0 0
  %657 = vmatpush2.bf16.msra.mxu0 0
  %658 = vmatprep.subr.bf16.mxu0 0
  %659 = vmatpush2.bf16.msra.mxu0 0
  %660 = vmatprep.subr.bf16.mxu0 0
  %661 = vmatpush2.bf16.msra.mxu0 0
  %662 = vmatprep.subr.bf16.mxu0 0
  %663 = vmatpush2.bf16.msra.mxu0 0
  %664 = vmatprep.subr.bf16.mxu0 0
  %665 = vmatpush2.bf16.msra.mxu0 0
  %666 = vmatprep.subr.bf16.mxu0 0
  %667 = vmatpush2.bf16.msra.mxu0 0
  %668 = vmatprep.subr.bf16.mxu0 0
  %669 = vmatpush2.bf16.msra.mxu0 0
  %670 = vmatprep.subr.bf16.mxu0 0
  %671 = vmatpush2.bf16.msra.mxu0 0
  %672 = vmatprep.mubr.bf16.mxu0 0
  %673 = vmatmul.mubr.bf16.gmra.mxu0 %v597
  %v674 = vpop.f32.mrf.mxu0
  %v675 = vadd.f32 %v65, %v674
  %v676 = vpop.f32.mrf.mxu0
  %v677 = vpop.f32.mrf.mxu0
  %v678 = vpop.f32.mrf.mxu0
  %679 = vdwg.mxu0
  %v681 = vrot.slane %v634, 7
  %v682 = vrot.slane %v634, 1
  %v683 = vrot.slane %v634, 2
  %v684 = vrot.slane %v634, 3
  %v685 = vrot.slane %v634, 4
  %v686 = vrot.slane %v634, 5
  %v687 = vrot.slane %v634, 6
  %v696 = vadd.f32 %v296, %v681
  %v697 = vadd.f32 %v299, %v634
  %v698 = vadd.f32 %v302, %v682
  %v699 = vadd.f32 %v305, %v683
  %v700 = vadd.f32 %v308, %v684
  %v701 = vadd.f32 %v311, %v685
  %v702 = vadd.f32 %v314, %v686
  %v703 = vadd.f32 %v317, %v687
  %v704 = vxor.u32 %v696, 2147483648
  %v705 = vxor.u32 %v697, 2147483648
  %v706 = vxor.u32 %v698, 2147483648
  %v707 = vxor.u32 %v699, 2147483648
  %v708 = vxor.u32 %v700, 2147483648
  %v709 = vxor.u32 %v701, 2147483648
  %v710 = vxor.u32 %v702, 2147483648
  %v711 = vxor.u32 %v703, 2147483648
  %v712 = vmul.f32 %v704, 1.442695
  %v713 = vpow.pop %v712
  %v714 = vmul.f32 %v705, 1.442695
  %v715 = vpow.pop %v714
  %v716 = vmul.f32 %v706, 1.442695
  %v717 = vpow.pop %v716
  %v718 = vmul.f32 %v707, 1.442695
  %v719 = vpow.pop %v718
  %v720 = vmul.f32 %v708, 1.442695
  %v721 = vpow.pop %v720
  %v722 = vmul.f32 %v709, 1.442695
  %v723 = vpow.pop %v722
  %v724 = vmul.f32 %v710, 1.442695
  %v725 = vpow.pop %v724
  %v726 = vmul.f32 %v711, 1.442695
  %v727 = vpow.pop %v726
  %v728 = vadd.f32 %v713, 1.0
  %v729 = vadd.f32 %v715, 1.0
  %v730 = vadd.f32 %v717, 1.0
  %v731 = vadd.f32 %v719, 1.0
  %v732 = vadd.f32 %v721, 1.0
  %v733 = vadd.f32 %v723, 1.0
  %v734 = vadd.f32 %v725, 1.0
  %v735 = vadd.f32 %v727, 1.0
  %v736 = vrcp.pop %v728
  %v737 = vmul.f32 1.0, %v736
  %v738 = vrcp.pop %v729
  %v739 = vmul.f32 1.0, %v738
  %v740 = vrcp.pop %v730
  %v741 = vmul.f32 1.0, %v740
  %v742 = vrcp.pop %v731
  %v743 = vmul.f32 1.0, %v742
  %v744 = vrcp.pop %v732
  %v745 = vmul.f32 1.0, %v744
  %v746 = vrcp.pop %v733
  %v747 = vmul.f32 1.0, %v746
  %v748 = vrcp.pop %v734
  %v749 = vmul.f32 1.0, %v748
  %v750 = vrcp.pop %v735
  %v751 = vmul.f32 1.0, %v750
  %v753 = vrot.slane %v636, 7
  %v754 = vrot.slane %v636, 1
  %v755 = vrot.slane %v636, 2
  %v756 = vrot.slane %v636, 3
  %v757 = vrot.slane %v636, 4
  %v758 = vrot.slane %v636, 5
  %v759 = vrot.slane %v636, 6
  %v768 = vadd.f32 %v297, %v753
  %v769 = vadd.f32 %v300, %v636
  %v770 = vadd.f32 %v303, %v754
  %v771 = vadd.f32 %v306, %v755
  %v772 = vadd.f32 %v309, %v756
  %v773 = vadd.f32 %v312, %v757
  %v774 = vadd.f32 %v315, %v758
  %v775 = vadd.f32 %v318, %v759
  %v776 = vxor.u32 %v768, 2147483648
  %v777 = vxor.u32 %v769, 2147483648
  %v778 = vxor.u32 %v770, 2147483648
  %v779 = vxor.u32 %v771, 2147483648
  %v780 = vxor.u32 %v772, 2147483648
  %v781 = vxor.u32 %v773, 2147483648
  %v782 = vxor.u32 %v774, 2147483648
  %v783 = vxor.u32 %v775, 2147483648
  %v784 = vmul.f32 %v776, 1.442695
  %v785 = vpow.pop %v784
  %v786 = vmul.f32 %v777, 1.442695
  %v787 = vpow.pop %v786
  %v788 = vmul.f32 %v778, 1.442695
  %v789 = vpow.pop %v788
  %v790 = vmul.f32 %v779, 1.442695
  %v791 = vpow.pop %v790
  %v792 = vmul.f32 %v780, 1.442695
  %v793 = vpow.pop %v792
  %v794 = vmul.f32 %v781, 1.442695
  %v795 = vpow.pop %v794
  %v796 = vmul.f32 %v782, 1.442695
  %v797 = vpow.pop %v796
  %v798 = vmul.f32 %v783, 1.442695
  %v799 = vpow.pop %v798
  %v800 = vadd.f32 %v785, 1.0
  %v801 = vadd.f32 %v787, 1.0
  %v802 = vadd.f32 %v789, 1.0
  %v803 = vadd.f32 %v791, 1.0
  %v804 = vadd.f32 %v793, 1.0
  %v805 = vadd.f32 %v795, 1.0
  %v806 = vadd.f32 %v797, 1.0
  %v807 = vadd.f32 %v799, 1.0
  %v808 = vrcp.pop %v800
  %v809 = vmul.f32 1.0, %v808
  %v810 = vrcp.pop %v801
  %v811 = vmul.f32 1.0, %v810
  %v812 = vrcp.pop %v802
  %v813 = vmul.f32 1.0, %v812
  %v814 = vrcp.pop %v803
  %v815 = vmul.f32 1.0, %v814
  %v816 = vrcp.pop %v804
  %v817 = vmul.f32 1.0, %v816
  %v818 = vrcp.pop %v805
  %v819 = vmul.f32 1.0, %v818
  %v820 = vrcp.pop %v806
  %v821 = vmul.f32 1.0, %v820
  %v822 = vrcp.pop %v807
  %v823 = vmul.f32 1.0, %v822
  %v825 = vrot.slane %v675, 7
  %v826 = vrot.slane %v675, 1
  %v827 = vrot.slane %v675, 2
  %v828 = vrot.slane %v675, 3
  %v829 = vrot.slane %v675, 4
  %v830 = vrot.slane %v675, 5
  %v831 = vrot.slane %v675, 6
  %v840 = vmul.f32 %v737, %v825
  %v841 = vmul.f32 %v739, %v675
  %v842 = vmul.f32 %v741, %v826
  %v843 = vmul.f32 %v743, %v827
  %v844 = vmul.f32 %v745, %v828
  %v845 = vmul.f32 %v747, %v829
  %v846 = vmul.f32 %v749, %v830
  %v847 = vmul.f32 %v751, %v831
  %v848 = vadd.f32 %v298, %v840
  %v849 = vadd.f32 %v301, %v841
  %v850 = vadd.f32 %v304, %v842
  %v851 = vadd.f32 %v307, %v843
  %v852 = vadd.f32 %v310, %v844
  %v853 = vadd.f32 %v313, %v845
  %v854 = vadd.f32 %v316, %v846
  %v855 = vadd.f32 %v319, %v847
  %v856 = vtanh.pop %v848
  %v857 = vtanh.pop %v849
  %v858 = vtanh.pop %v850
  %v859 = vtanh.pop %v851
  %v860 = vtanh.pop %v852
  %v861 = vtanh.pop %v853
  %v862 = vtanh.pop %v854
  %v863 = vtanh.pop %v855
  %v864 = vsub.f32 1.0, %v809
  %v865 = vsub.f32 1.0, %v811
  %v866 = vsub.f32 1.0, %v813
  %v867 = vsub.f32 1.0, %v815
  %v868 = vsub.f32 1.0, %v817
  %v869 = vsub.f32 1.0, %v819
  %v870 = vsub.f32 1.0, %v821
  %v871 = vsub.f32 1.0, %v823
  %v872 = vmul.f32 %v864, %v856
  %v873 = vmul.f32 %v865, %v857
  %v874 = vmul.f32 %v866, %v858
  %v875 = vmul.f32 %v867, %v859
  %v876 = vmul.f32 %v868, %v860
  %v877 = vmul.f32 %v869, %v861
  %v878 = vmul.f32 %v870, %v862
  %v879 = vmul.f32 %v871, %v863
  %v888 = vrot.slane %v544, 7
  %v889 = vrot.slane %v545, 7
  %v890 = vrot.slane %v546, 7
  %v891 = vrot.slane %v547, 7
  %v892 = vrot.slane %v548, 7
  %v893 = vrot.slane %v549, 7
  %v894 = vrot.slane %v550, 7
  %v895 = vrot.slane %v551, 7
  %v904 = vmul.f32 %v809, %v888
  %v905 = vmul.f32 %v811, %v889
  %v906 = vmul.f32 %v813, %v890
  %v907 = vmul.f32 %v815, %v891
  %v908 = vmul.f32 %v817, %v892
  %v909 = vmul.f32 %v819, %v893
  %v910 = vmul.f32 %v821, %v894
  %v911 = vmul.f32 %v823, %v895
  %v912 = vadd.f32 %v872, %v904
  %v913 = vadd.f32 %v873, %v905
  %v914 = vadd.f32 %v874, %v906
  %v915 = vadd.f32 %v875, %v907
  %v916 = vadd.f32 %v876, %v908
  %v917 = vadd.f32 %v877, %v909
  %v918 = vadd.f32 %v878, %v910
  %v919 = vadd.f32 %v879, %v911
  %v920 = vpack.c.bf16 %v912, %v912
  %v921 = vpack.c.bf16 %v913, %v913
  %v922 = vpack.c.bf16 %v914, %v914
  %v923 = vpack.c.bf16 %v915, %v915
  %v924 = vpack.c.bf16 %v916, %v916
  %v925 = vpack.c.bf16 %v917, %v917
  %v926 = vpack.c.bf16 %v918, %v918
  %v927 = vpack.c.bf16 %v919, %v919
  %v936 = vunpack.c.l.b16 %v920
  %v937 = vunpack.c.l.b16 %v921
  %v938 = vunpack.c.l.b16 %v922
  %v939 = vunpack.c.l.b16 %v923
  %v940 = vunpack.c.l.b16 %v924
  %v941 = vunpack.c.l.b16 %v925
  %v942 = vunpack.c.l.b16 %v926
  %v943 = vunpack.c.l.b16 %v927
  %v944 = vrot.slane %v936, 1
  %v945 = vsel %vm577, %v937, %v944
  %v946 = vrot.slane %v938, 7
  %v947 = vsel %vm580, %v946, %v945
  %v948 = vrot.slane %v939, 6
  %v949 = vsel %vm583, %v948, %v947
  %v950 = vrot.slane %v940, 5
  %v951 = vsel %vm586, %v950, %v949
  %v952 = vrot.slane %v941, 4
  %v953 = vsel %vm589, %v952, %v951
  %v954 = vrot.slane %v942, 3
  %v955 = vsel %vm592, %v954, %v953
  %v956 = vrot.slane %v943, 2
  %v957 = vsel %vm595, %v956, %v955
  %v958 = vpack.c.b16 %v957, %v957
  %960 = vmatprep.subr.bf16.mxu0 %v173
  %961 = vmatpush1.bf16.msra.mxu0 %v172
  %962 = vmatprep.subr.bf16.mxu0 %v170
  %963 = vmatpush1.bf16.msra.mxu0 %v169
  %964 = vmatprep.subr.bf16.mxu0 %v167
  %965 = vmatpush1.bf16.msra.mxu0 %v166
  %966 = vmatprep.subr.bf16.mxu0 %v164
  %967 = vmatpush1.bf16.msra.mxu0 %v163
  %968 = vmatprep.subr.bf16.mxu0 %v161
  %969 = vmatpush1.bf16.msra.mxu0 %v160
  %970 = vmatprep.subr.bf16.mxu0 %v158
  %971 = vmatpush1.bf16.msra.mxu0 %v157
  %972 = vmatprep.subr.bf16.mxu0 %v155
  %973 = vmatpush1.bf16.msra.mxu0 %v154
  %974 = vmatprep.subr.bf16.mxu0 %v152
  %975 = vmatpush1.bf16.msra.mxu0 %v151
  %976 = vmatprep.subr.bf16.mxu0 0
  %977 = vmatpush2.bf16.msra.mxu0 0
  %978 = vmatprep.subr.bf16.mxu0 0
  %979 = vmatpush2.bf16.msra.mxu0 0
  %980 = vmatprep.subr.bf16.mxu0 0
  %981 = vmatpush2.bf16.msra.mxu0 0
  %982 = vmatprep.subr.bf16.mxu0 0
  %983 = vmatpush2.bf16.msra.mxu0 0
  %984 = vmatprep.subr.bf16.mxu0 0
  %985 = vmatpush2.bf16.msra.mxu0 0
  %986 = vmatprep.subr.bf16.mxu0 0
  %987 = vmatpush2.bf16.msra.mxu0 0
  %988 = vmatprep.subr.bf16.mxu0 0
  %989 = vmatpush2.bf16.msra.mxu0 0
  %990 = vmatprep.subr.bf16.mxu0 0
  %991 = vmatpush2.bf16.msra.mxu0 0
  %992 = vmatprep.mubr.bf16.mxu0 0
  %993 = vmatmul.mubr.bf16.gmra.mxu0 %v958
  %v994 = vpop.f32.mrf.mxu0
  %v995 = vadd.f32 %v57, %v994
  %v996 = vpop.f32.mrf.mxu0
  %v997 = vadd.f32 %v61, %v996
  %v998 = vpop.f32.mrf.mxu0
  %v999 = vpop.f32.mrf.mxu0
  %1000 = vdwg.mxu0
  %1001 = vmatprep.subr.bf16.mxu0 0
  %1002 = vmatpush1.bf16.msra.mxu0 %v174
  %1003 = vmatprep.subr.bf16.mxu0 0
  %1004 = vmatpush1.bf16.msra.mxu0 %v171
  %1005 = vmatprep.subr.bf16.mxu0 0
  %1006 = vmatpush1.bf16.msra.mxu0 %v168
  %1007 = vmatprep.subr.bf16.mxu0 0
  %1008 = vmatpush1.bf16.msra.mxu0 %v165
  %1009 = vmatprep.subr.bf16.mxu0 0
  %1010 = vmatpush1.bf16.msra.mxu0 %v162
  %1011 = vmatprep.subr.bf16.mxu0 0
  %1012 = vmatpush1.bf16.msra.mxu0 %v159
  %1013 = vmatprep.subr.bf16.mxu0 0
  %1014 = vmatpush1.bf16.msra.mxu0 %v156
  %1015 = vmatprep.subr.bf16.mxu0 0
  %1016 = vmatpush1.bf16.msra.mxu0 %v153
  %1017 = vmatprep.subr.bf16.mxu0 0
  %1018 = vmatpush2.bf16.msra.mxu0 0
  %1019 = vmatprep.subr.bf16.mxu0 0
  %1020 = vmatpush2.bf16.msra.mxu0 0
  %1021 = vmatprep.subr.bf16.mxu0 0
  %1022 = vmatpush2.bf16.msra.mxu0 0
  %1023 = vmatprep.subr.bf16.mxu0 0
  %1024 = vmatpush2.bf16.msra.mxu0 0
  %1025 = vmatprep.subr.bf16.mxu0 0
  %1026 = vmatpush2.bf16.msra.mxu0 0
  %1027 = vmatprep.subr.bf16.mxu0 0
  %1028 = vmatpush2.bf16.msra.mxu0 0
  %1029 = vmatprep.subr.bf16.mxu0 0
  %1030 = vmatpush2.bf16.msra.mxu0 0
  %1031 = vmatprep.subr.bf16.mxu0 0
  %1032 = vmatpush2.bf16.msra.mxu0 0
  %1033 = vmatprep.mubr.bf16.mxu0 0
  %1034 = vmatmul.mubr.bf16.gmra.mxu0 %v958
  %v1035 = vpop.f32.mrf.mxu0
  %v1036 = vadd.f32 %v65, %v1035
  %v1037 = vpop.f32.mrf.mxu0
  %v1038 = vpop.f32.mrf.mxu0
  %v1039 = vpop.f32.mrf.mxu0
  %1040 = vdwg.mxu0
  %v1041 = vld [vmem:[%s0] sm:$0x22]
  %v1042 = vld [vmem:[%s0 + $0x8] sm:$0x2]
  %v1043 = vld [vmem:[%s0 + $0xc] sm:$0x22]
  %v1044 = vld [vmem:[%s0 + $0x14] sm:$0x2]
  %v1045 = vld [vmem:[%s0 + $0x18] sm:$0x22]
  %v1046 = vld [vmem:[%s0 + $0x20] sm:$0x2]
  %v1047 = vld [vmem:[%s0 + $0x24] sm:$0x22]
  %v1048 = vld [vmem:[%s0 + $0x2c] sm:$0x2]
  %v1049 = vld [vmem:[%s0 + $0x30] sm:$0x22]
  %v1050 = vld [vmem:[%s0 + $0x38] sm:$0x2]
  %v1051 = vld [vmem:[%s0 + $0x3c] sm:$0x22]
  %v1052 = vld [vmem:[%s0 + $0x44] sm:$0x2]
  %v1053 = vld [vmem:[%s0 + $0x48] sm:$0x22]
  %v1054 = vld [vmem:[%s0 + $0x50] sm:$0x2]
  %v1055 = vld [vmem:[%s0 + $0x54] sm:$0x22]
  %v1056 = vld [vmem:[%s0 + $0x5c] sm:$0x2]
  %v1057 = vunpack.c.l.bf16 %v1041
  %v1058 = vunpack.c.h.bf16 %v1041
  %v1059 = vunpack.c.l.bf16 %v1042
  %v1060 = vunpack.c.l.bf16 %v1043
  %v1061 = vunpack.c.h.bf16 %v1043
  %v1062 = vunpack.c.l.bf16 %v1044
  %v1063 = vunpack.c.l.bf16 %v1045
  %v1064 = vunpack.c.h.bf16 %v1045
  %v1065 = vunpack.c.l.bf16 %v1046
  %v1066 = vunpack.c.l.bf16 %v1047
  %v1067 = vunpack.c.h.bf16 %v1047
  %v1068 = vunpack.c.l.bf16 %v1048
  %v1069 = vunpack.c.l.bf16 %v1049
  %v1070 = vunpack.c.h.bf16 %v1049
  %v1071 = vunpack.c.l.bf16 %v1050
  %v1072 = vunpack.c.l.bf16 %v1051
  %v1073 = vunpack.c.h.bf16 %v1051
  %v1074 = vunpack.c.l.bf16 %v1052
  %v1075 = vunpack.c.l.bf16 %v1053
  %v1076 = vunpack.c.h.bf16 %v1053
  %v1077 = vunpack.c.l.bf16 %v1054
  %v1078 = vunpack.c.l.bf16 %v1055
  %v1079 = vunpack.c.h.bf16 %v1055
  %v1080 = vunpack.c.l.bf16 %v1056
  %v1082 = vrot.slane %v995, 6
  %v1083 = vrot.slane %v995, 7
  %v1084 = vrot.slane %v995, 1
  %v1085 = vrot.slane %v995, 2
  %v1086 = vrot.slane %v995, 3
  %v1087 = vrot.slane %v995, 4
  %v1088 = vrot.slane %v995, 5
  %v1097 = vadd.f32 %v1057, %v1082
  %v1098 = vadd.f32 %v1060, %v1083
  %v1099 = vadd.f32 %v1063, %v995
  %v1100 = vadd.f32 %v1066, %v1084
  %v1101 = vadd.f32 %v1069, %v1085
  %v1102 = vadd.f32 %v1072, %v1086
  %v1103 = vadd.f32 %v1075, %v1087
  %v1104 = vadd.f32 %v1078, %v1088
  %v1105 = vxor.u32 %v1097, 2147483648
  %v1106 = vxor.u32 %v1098, 2147483648
  %v1107 = vxor.u32 %v1099, 2147483648
  %v1108 = vxor.u32 %v1100, 2147483648
  %v1109 = vxor.u32 %v1101, 2147483648
  %v1110 = vxor.u32 %v1102, 2147483648
  %v1111 = vxor.u32 %v1103, 2147483648
  %v1112 = vxor.u32 %v1104, 2147483648
  %v1113 = vmul.f32 %v1105, 1.442695
  %v1114 = vpow.pop %v1113
  %v1115 = vmul.f32 %v1106, 1.442695
  %v1116 = vpow.pop %v1115
  %v1117 = vmul.f32 %v1107, 1.442695
  %v1118 = vpow.pop %v1117
  %v1119 = vmul.f32 %v1108, 1.442695
  %v1120 = vpow.pop %v1119
  %v1121 = vmul.f32 %v1109, 1.442695
  %v1122 = vpow.pop %v1121
  %v1123 = vmul.f32 %v1110, 1.442695
  %v1124 = vpow.pop %v1123
  %v1125 = vmul.f32 %v1111, 1.442695
  %v1126 = vpow.pop %v1125
  %v1127 = vmul.f32 %v1112, 1.442695
  %v1128 = vpow.pop %v1127
  %v1129 = vadd.f32 %v1114, 1.0
  %v1130 = vadd.f32 %v1116, 1.0
  %v1131 = vadd.f32 %v1118, 1.0
  %v1132 = vadd.f32 %v1120, 1.0
  %v1133 = vadd.f32 %v1122, 1.0
  %v1134 = vadd.f32 %v1124, 1.0
  %v1135 = vadd.f32 %v1126, 1.0
  %v1136 = vadd.f32 %v1128, 1.0
  %v1137 = vrcp.pop %v1129
  %v1138 = vmul.f32 1.0, %v1137
  %v1139 = vrcp.pop %v1130
  %v1140 = vmul.f32 1.0, %v1139
  %v1141 = vrcp.pop %v1131
  %v1142 = vmul.f32 1.0, %v1141
  %v1143 = vrcp.pop %v1132
  %v1144 = vmul.f32 1.0, %v1143
  %v1145 = vrcp.pop %v1133
  %v1146 = vmul.f32 1.0, %v1145
  %v1147 = vrcp.pop %v1134
  %v1148 = vmul.f32 1.0, %v1147
  %v1149 = vrcp.pop %v1135
  %v1150 = vmul.f32 1.0, %v1149
  %v1151 = vrcp.pop %v1136
  %v1152 = vmul.f32 1.0, %v1151
  %v1154 = vrot.slane %v997, 6
  %v1155 = vrot.slane %v997, 7
  %v1156 = vrot.slane %v997, 1
  %v1157 = vrot.slane %v997, 2
  %v1158 = vrot.slane %v997, 3
  %v1159 = vrot.slane %v997, 4
  %v1160 = vrot.slane %v997, 5
  %v1169 = vadd.f32 %v1058, %v1154
  %v1170 = vadd.f32 %v1061, %v1155
  %v1171 = vadd.f32 %v1064, %v997
  %v1172 = vadd.f32 %v1067, %v1156
  %v1173 = vadd.f32 %v1070, %v1157
  %v1174 = vadd.f32 %v1073, %v1158
  %v1175 = vadd.f32 %v1076, %v1159
  %v1176 = vadd.f32 %v1079, %v1160
  %v1177 = vxor.u32 %v1169, 2147483648
  %v1178 = vxor.u32 %v1170, 2147483648
  %v1179 = vxor.u32 %v1171, 2147483648
  %v1180 = vxor.u32 %v1172, 2147483648
  %v1181 = vxor.u32 %v1173, 2147483648
  %v1182 = vxor.u32 %v1174, 2147483648
  %v1183 = vxor.u32 %v1175, 2147483648
  %v1184 = vxor.u32 %v1176, 2147483648
  %v1185 = vmul.f32 %v1177, 1.442695
  %v1186 = vpow.pop %v1185
  %v1187 = vmul.f32 %v1178, 1.442695
  %v1188 = vpow.pop %v1187
  %v1189 = vmul.f32 %v1179, 1.442695
  %v1190 = vpow.pop %v1189
  %v1191 = vmul.f32 %v1180, 1.442695
  %v1192 = vpow.pop %v1191
  %v1193 = vmul.f32 %v1181, 1.442695
  %v1194 = vpow.pop %v1193
  %v1195 = vmul.f32 %v1182, 1.442695
  %v1196 = vpow.pop %v1195
  %v1197 = vmul.f32 %v1183, 1.442695
  %v1198 = vpow.pop %v1197
  %v1199 = vmul.f32 %v1184, 1.442695
  %v1200 = vpow.pop %v1199
  %v1201 = vadd.f32 %v1186, 1.0
  %v1202 = vadd.f32 %v1188, 1.0
  %v1203 = vadd.f32 %v1190, 1.0
  %v1204 = vadd.f32 %v1192, 1.0
  %v1205 = vadd.f32 %v1194, 1.0
  %v1206 = vadd.f32 %v1196, 1.0
  %v1207 = vadd.f32 %v1198, 1.0
  %v1208 = vadd.f32 %v1200, 1.0
  %v1209 = vrcp.pop %v1201
  %v1210 = vmul.f32 1.0, %v1209
  %v1211 = vrcp.pop %v1202
  %v1212 = vmul.f32 1.0, %v1211
  %v1213 = vrcp.pop %v1203
  %v1214 = vmul.f32 1.0, %v1213
  %v1215 = vrcp.pop %v1204
  %v1216 = vmul.f32 1.0, %v1215
  %v1217 = vrcp.pop %v1205
  %v1218 = vmul.f32 1.0, %v1217
  %v1219 = vrcp.pop %v1206
  %v1220 = vmul.f32 1.0, %v1219
  %v1221 = vrcp.pop %v1207
  %v1222 = vmul.f32 1.0, %v1221
  %v1223 = vrcp.pop %v1208
  %v1224 = vmul.f32 1.0, %v1223
  %v1226 = vrot.slane %v1036, 6
  %v1227 = vrot.slane %v1036, 7
  %v1228 = vrot.slane %v1036, 1
  %v1229 = vrot.slane %v1036, 2
  %v1230 = vrot.slane %v1036, 3
  %v1231 = vrot.slane %v1036, 4
  %v1232 = vrot.slane %v1036, 5
  %v1241 = vmul.f32 %v1138, %v1226
  %v1242 = vmul.f32 %v1140, %v1227
  %v1243 = vmul.f32 %v1142, %v1036
  %v1244 = vmul.f32 %v1144, %v1228
  %v1245 = vmul.f32 %v1146, %v1229
  %v1246 = vmul.f32 %v1148, %v1230
  %v1247 = vmul.f32 %v1150, %v1231
  %v1248 = vmul.f32 %v1152, %v1232
  %v1249 = vadd.f32 %v1059, %v1241
  %v1250 = vadd.f32 %v1062, %v1242
  %v1251 = vadd.f32 %v1065, %v1243
  %v1252 = vadd.f32 %v1068, %v1244
  %v1253 = vadd.f32 %v1071, %v1245
  %v1254 = vadd.f32 %v1074, %v1246
  %v1255 = vadd.f32 %v1077, %v1247
  %v1256 = vadd.f32 %v1080, %v1248
  %v1257 = vtanh.pop %v1249
  %v1258 = vtanh.pop %v1250
  %v1259 = vtanh.pop %v1251
  %v1260 = vtanh.pop %v1252
  %v1261 = vtanh.pop %v1253
  %v1262 = vtanh.pop %v1254
  %v1263 = vtanh.pop %v1255
  %v1264 = vtanh.pop %v1256
  %v1265 = vsub.f32 1.0, %v1210
  %v1266 = vsub.f32 1.0, %v1212
  %v1267 = vsub.f32 1.0, %v1214
  %v1268 = vsub.f32 1.0, %v1216
  %v1269 = vsub.f32 1.0, %v1218
  %v1270 = vsub.f32 1.0, %v1220
  %v1271 = vsub.f32 1.0, %v1222
  %v1272 = vsub.f32 1.0, %v1224
  %v1273 = vmul.f32 %v1265, %v1257
  %v1274 = vmul.f32 %v1266, %v1258
  %v1275 = vmul.f32 %v1267, %v1259
  %v1276 = vmul.f32 %v1268, %v1260
  %v1277 = vmul.f32 %v1269, %v1261
  %v1278 = vmul.f32 %v1270, %v1262
  %v1279 = vmul.f32 %v1271, %v1263
  %v1280 = vmul.f32 %v1272, %v1264
  %v1289 = vrot.slane %v912, 7
  %v1290 = vrot.slane %v913, 7
  %v1291 = vrot.slane %v914, 7
  %v1292 = vrot.slane %v915, 7
  %v1293 = vrot.slane %v916, 7
  %v1294 = vrot.slane %v917, 7
  %v1295 = vrot.slane %v918, 7
  %v1296 = vrot.slane %v919, 7
  %v1305 = vmul.f32 %v1210, %v1289
  %v1306 = vmul.f32 %v1212, %v1290
  %v1307 = vmul.f32 %v1214, %v1291
  %v1308 = vmul.f32 %v1216, %v1292
  %v1309 = vmul.f32 %v1218, %v1293
  %v1310 = vmul.f32 %v1220, %v1294
  %v1311 = vmul.f32 %v1222, %v1295
  %v1312 = vmul.f32 %v1224, %v1296
  %v1313 = vadd.f32 %v1273, %v1305
  %v1314 = vadd.f32 %v1274, %v1306
  %v1315 = vadd.f32 %v1275, %v1307
  %v1316 = vadd.f32 %v1276, %v1308
  %v1317 = vadd.f32 %v1277, %v1309
  %v1318 = vadd.f32 %v1278, %v1310
  %v1319 = vadd.f32 %v1279, %v1311
  %v1320 = vadd.f32 %v1280, %v1312
  %v1321 = vpack.c.bf16 %v1313, %v1313
  %v1322 = vpack.c.bf16 %v1314, %v1314
  %v1323 = vpack.c.bf16 %v1315, %v1315
  %v1324 = vpack.c.bf16 %v1316, %v1316
  %v1325 = vpack.c.bf16 %v1317, %v1317
  %v1326 = vpack.c.bf16 %v1318, %v1318
  %v1327 = vpack.c.bf16 %v1319, %v1319
  %v1328 = vpack.c.bf16 %v1320, %v1320
  %v1337 = vunpack.c.l.b16 %v1321
  %v1338 = vunpack.c.l.b16 %v1322
  %v1339 = vunpack.c.l.b16 %v1323
  %v1340 = vunpack.c.l.b16 %v1324
  %v1341 = vunpack.c.l.b16 %v1325
  %v1342 = vunpack.c.l.b16 %v1326
  %v1343 = vunpack.c.l.b16 %v1327
  %v1344 = vunpack.c.l.b16 %v1328
  %v1345 = vrot.slane %v1337, 2
  %v1346 = vrot.slane %v1338, 1
  %v1347 = vsel %vm577, %v1346, %v1345
  %v1348 = vsel %vm580, %v1339, %v1347
  %v1349 = vrot.slane %v1340, 7
  %v1350 = vsel %vm583, %v1349, %v1348
  %v1351 = vrot.slane %v1341, 6
  %v1352 = vsel %vm586, %v1351, %v1350
  %v1353 = vrot.slane %v1342, 5
  %v1354 = vsel %vm589, %v1353, %v1352
  %v1355 = vrot.slane %v1343, 4
  %v1356 = vsel %vm592, %v1355, %v1354
  %v1357 = vrot.slane %v1344, 3
  %v1358 = vsel %vm595, %v1357, %v1356
  %v1359 = vpack.c.b16 %v1358, %v1358
  %1361 = vmatprep.subr.bf16.mxu0 %v173
  %1362 = vmatpush1.bf16.msra.mxu0 %v172
  %1363 = vmatprep.subr.bf16.mxu0 %v170
  %1364 = vmatpush1.bf16.msra.mxu0 %v169
  %1365 = vmatprep.subr.bf16.mxu0 %v167
  %1366 = vmatpush1.bf16.msra.mxu0 %v166
  %1367 = vmatprep.subr.bf16.mxu0 %v164
  %1368 = vmatpush1.bf16.msra.mxu0 %v163
  %1369 = vmatprep.subr.bf16.mxu0 %v161
  %1370 = vmatpush1.bf16.msra.mxu0 %v160
  %1371 = vmatprep.subr.bf16.mxu0 %v158
  %1372 = vmatpush1.bf16.msra.mxu0 %v157
  %1373 = vmatprep.subr.bf16.mxu0 %v155
  %1374 = vmatpush1.bf16.msra.mxu0 %v154
  %1375 = vmatprep.subr.bf16.mxu0 %v152
  %1376 = vmatpush1.bf16.msra.mxu0 %v151
  %1377 = vmatprep.subr.bf16.mxu0 0
  %1378 = vmatpush2.bf16.msra.mxu0 0
  %1379 = vmatprep.subr.bf16.mxu0 0
  %1380 = vmatpush2.bf16.msra.mxu0 0
  %1381 = vmatprep.subr.bf16.mxu0 0
  %1382 = vmatpush2.bf16.msra.mxu0 0
  %1383 = vmatprep.subr.bf16.mxu0 0
  %1384 = vmatpush2.bf16.msra.mxu0 0
  %1385 = vmatprep.subr.bf16.mxu0 0
  %1386 = vmatpush2.bf16.msra.mxu0 0
  %1387 = vmatprep.subr.bf16.mxu0 0
  %1388 = vmatpush2.bf16.msra.mxu0 0
  %1389 = vmatprep.subr.bf16.mxu0 0
  %1390 = vmatpush2.bf16.msra.mxu0 0
  %1391 = vmatprep.subr.bf16.mxu0 0
  %1392 = vmatpush2.bf16.msra.mxu0 0
  %1393 = vmatprep.mubr.bf16.mxu0 0
  %1394 = vmatmul.mubr.bf16.gmra.mxu0 %v1359
  %v1395 = vpop.f32.mrf.mxu0
  %v1396 = vadd.f32 %v57, %v1395
  %v1397 = vpop.f32.mrf.mxu0
  %v1398 = vadd.f32 %v61, %v1397
  %v1399 = vpop.f32.mrf.mxu0
  %v1400 = vpop.f32.mrf.mxu0
  %1401 = vdwg.mxu0
  %1402 = vmatprep.subr.bf16.mxu0 0
  %1403 = vmatpush1.bf16.msra.mxu0 %v174
  %1404 = vmatprep.subr.bf16.mxu0 0
  %1405 = vmatpush1.bf16.msra.mxu0 %v171
  %1406 = vmatprep.subr.bf16.mxu0 0
  %1407 = vmatpush1.bf16.msra.mxu0 %v168
  %1408 = vmatprep.subr.bf16.mxu0 0
  %1409 = vmatpush1.bf16.msra.mxu0 %v165
  %1410 = vmatprep.subr.bf16.mxu0 0
  %1411 = vmatpush1.bf16.msra.mxu0 %v162
  %1412 = vmatprep.subr.bf16.mxu0 0
  %1413 = vmatpush1.bf16.msra.mxu0 %v159
  %1414 = vmatprep.subr.bf16.mxu0 0
  %1415 = vmatpush1.bf16.msra.mxu0 %v156
  %1416 = vmatprep.subr.bf16.mxu0 0
  %1417 = vmatpush1.bf16.msra.mxu0 %v153
  %1418 = vmatprep.subr.bf16.mxu0 0
  %1419 = vmatpush2.bf16.msra.mxu0 0
  %1420 = vmatprep.subr.bf16.mxu0 0
  %1421 = vmatpush2.bf16.msra.mxu0 0
  %1422 = vmatprep.subr.bf16.mxu0 0
  %1423 = vmatpush2.bf16.msra.mxu0 0
  %1424 = vmatprep.subr.bf16.mxu0 0
  %1425 = vmatpush2.bf16.msra.mxu0 0
  %1426 = vmatprep.subr.bf16.mxu0 0
  %1427 = vmatpush2.bf16.msra.mxu0 0
  %1428 = vmatprep.subr.bf16.mxu0 0
  %1429 = vmatpush2.bf16.msra.mxu0 0
  %1430 = vmatprep.subr.bf16.mxu0 0
  %1431 = vmatpush2.bf16.msra.mxu0 0
  %1432 = vmatprep.subr.bf16.mxu0 0
  %1433 = vmatpush2.bf16.msra.mxu0 0
  %1434 = vmatprep.mubr.bf16.mxu0 0
  %1435 = vmatmul.mubr.bf16.gmra.mxu0 %v1359
  %v1436 = vpop.f32.mrf.mxu0
  %v1437 = vadd.f32 %v65, %v1436
  %v1438 = vpop.f32.mrf.mxu0
  %v1439 = vpop.f32.mrf.mxu0
  %v1440 = vpop.f32.mrf.mxu0
  %1441 = vdwg.mxu0
  %v1443 = vrot.slane %v1396, 5
  %v1444 = vrot.slane %v1396, 6
  %v1445 = vrot.slane %v1396, 7
  %v1446 = vrot.slane %v1396, 1
  %v1447 = vrot.slane %v1396, 2
  %v1448 = vrot.slane %v1396, 3
  %v1449 = vrot.slane %v1396, 4
  %v1458 = vadd.f32 %v1057, %v1443
  %v1459 = vadd.f32 %v1060, %v1444
  %v1460 = vadd.f32 %v1063, %v1445
  %v1461 = vadd.f32 %v1066, %v1396
  %v1462 = vadd.f32 %v1069, %v1446
  %v1463 = vadd.f32 %v1072, %v1447
  %v1464 = vadd.f32 %v1075, %v1448
  %v1465 = vadd.f32 %v1078, %v1449
  %v1466 = vxor.u32 %v1458, 2147483648
  %v1467 = vxor.u32 %v1459, 2147483648
  %v1468 = vxor.u32 %v1460, 2147483648
  %v1469 = vxor.u32 %v1461, 2147483648
  %v1470 = vxor.u32 %v1462, 2147483648
  %v1471 = vxor.u32 %v1463, 2147483648
  %v1472 = vxor.u32 %v1464, 2147483648
  %v1473 = vxor.u32 %v1465, 2147483648
  %v1474 = vmul.f32 %v1466, 1.442695
  %v1475 = vpow.pop %v1474
  %v1476 = vmul.f32 %v1467, 1.442695
  %v1477 = vpow.pop %v1476
  %v1478 = vmul.f32 %v1468, 1.442695
  %v1479 = vpow.pop %v1478
  %v1480 = vmul.f32 %v1469, 1.442695
  %v1481 = vpow.pop %v1480
  %v1482 = vmul.f32 %v1470, 1.442695
  %v1483 = vpow.pop %v1482
  %v1484 = vmul.f32 %v1471, 1.442695
  %v1485 = vpow.pop %v1484
  %v1486 = vmul.f32 %v1472, 1.442695
  %v1487 = vpow.pop %v1486
  %v1488 = vmul.f32 %v1473, 1.442695
  %v1489 = vpow.pop %v1488
  %v1490 = vadd.f32 %v1475, 1.0
  %v1491 = vadd.f32 %v1477, 1.0
  %v1492 = vadd.f32 %v1479, 1.0
  %v1493 = vadd.f32 %v1481, 1.0
  %v1494 = vadd.f32 %v1483, 1.0
  %v1495 = vadd.f32 %v1485, 1.0
  %v1496 = vadd.f32 %v1487, 1.0
  %v1497 = vadd.f32 %v1489, 1.0
  %v1498 = vrcp.pop %v1490
  %v1499 = vmul.f32 1.0, %v1498
  %v1500 = vrcp.pop %v1491
  %v1501 = vmul.f32 1.0, %v1500
  %v1502 = vrcp.pop %v1492
  %v1503 = vmul.f32 1.0, %v1502
  %v1504 = vrcp.pop %v1493
  %v1505 = vmul.f32 1.0, %v1504
  %v1506 = vrcp.pop %v1494
  %v1507 = vmul.f32 1.0, %v1506
  %v1508 = vrcp.pop %v1495
  %v1509 = vmul.f32 1.0, %v1508
  %v1510 = vrcp.pop %v1496
  %v1511 = vmul.f32 1.0, %v1510
  %v1512 = vrcp.pop %v1497
  %v1513 = vmul.f32 1.0, %v1512
  %v1515 = vrot.slane %v1398, 5
  %v1516 = vrot.slane %v1398, 6
  %v1517 = vrot.slane %v1398, 7
  %v1518 = vrot.slane %v1398, 1
  %v1519 = vrot.slane %v1398, 2
  %v1520 = vrot.slane %v1398, 3
  %v1521 = vrot.slane %v1398, 4
  %v1530 = vadd.f32 %v1058, %v1515
  %v1531 = vadd.f32 %v1061, %v1516
  %v1532 = vadd.f32 %v1064, %v1517
  %v1533 = vadd.f32 %v1067, %v1398
  %v1534 = vadd.f32 %v1070, %v1518
  %v1535 = vadd.f32 %v1073, %v1519
  %v1536 = vadd.f32 %v1076, %v1520
  %v1537 = vadd.f32 %v1079, %v1521
  %v1538 = vxor.u32 %v1530, 2147483648
  %v1539 = vxor.u32 %v1531, 2147483648
  %v1540 = vxor.u32 %v1532, 2147483648
  %v1541 = vxor.u32 %v1533, 2147483648
  %v1542 = vxor.u32 %v1534, 2147483648
  %v1543 = vxor.u32 %v1535, 2147483648
  %v1544 = vxor.u32 %v1536, 2147483648
  %v1545 = vxor.u32 %v1537, 2147483648
  %v1546 = vmul.f32 %v1538, 1.442695
  %v1547 = vpow.pop %v1546
  %v1548 = vmul.f32 %v1539, 1.442695
  %v1549 = vpow.pop %v1548
  %v1550 = vmul.f32 %v1540, 1.442695
  %v1551 = vpow.pop %v1550
  %v1552 = vmul.f32 %v1541, 1.442695
  %v1553 = vpow.pop %v1552
  %v1554 = vmul.f32 %v1542, 1.442695
  %v1555 = vpow.pop %v1554
  %v1556 = vmul.f32 %v1543, 1.442695
  %v1557 = vpow.pop %v1556
  %v1558 = vmul.f32 %v1544, 1.442695
  %v1559 = vpow.pop %v1558
  %v1560 = vmul.f32 %v1545, 1.442695
  %v1561 = vpow.pop %v1560
  %v1562 = vadd.f32 %v1547, 1.0
  %v1563 = vadd.f32 %v1549, 1.0
  %v1564 = vadd.f32 %v1551, 1.0
  %v1565 = vadd.f32 %v1553, 1.0
  %v1566 = vadd.f32 %v1555, 1.0
  %v1567 = vadd.f32 %v1557, 1.0
  %v1568 = vadd.f32 %v1559, 1.0
  %v1569 = vadd.f32 %v1561, 1.0
  %v1570 = vrcp.pop %v1562
  %v1571 = vmul.f32 1.0, %v1570
  %v1572 = vrcp.pop %v1563
  %v1573 = vmul.f32 1.0, %v1572
  %v1574 = vrcp.pop %v1564
  %v1575 = vmul.f32 1.0, %v1574
  %v1576 = vrcp.pop %v1565
  %v1577 = vmul.f32 1.0, %v1576
  %v1578 = vrcp.pop %v1566
  %v1579 = vmul.f32 1.0, %v1578
  %v1580 = vrcp.pop %v1567
  %v1581 = vmul.f32 1.0, %v1580
  %v1582 = vrcp.pop %v1568
  %v1583 = vmul.f32 1.0, %v1582
  %v1584 = vrcp.pop %v1569
  %v1585 = vmul.f32 1.0, %v1584
  %v1587 = vrot.slane %v1437, 5
  %v1588 = vrot.slane %v1437, 6
  %v1589 = vrot.slane %v1437, 7
  %v1590 = vrot.slane %v1437, 1
  %v1591 = vrot.slane %v1437, 2
  %v1592 = vrot.slane %v1437, 3
  %v1593 = vrot.slane %v1437, 4
  %v1602 = vmul.f32 %v1499, %v1587
  %v1603 = vmul.f32 %v1501, %v1588
  %v1604 = vmul.f32 %v1503, %v1589
  %v1605 = vmul.f32 %v1505, %v1437
  %v1606 = vmul.f32 %v1507, %v1590
  %v1607 = vmul.f32 %v1509, %v1591
  %v1608 = vmul.f32 %v1511, %v1592
  %v1609 = vmul.f32 %v1513, %v1593
  %v1610 = vadd.f32 %v1059, %v1602
  %v1611 = vadd.f32 %v1062, %v1603
  %v1612 = vadd.f32 %v1065, %v1604
  %v1613 = vadd.f32 %v1068, %v1605
  %v1614 = vadd.f32 %v1071, %v1606
  %v1615 = vadd.f32 %v1074, %v1607
  %v1616 = vadd.f32 %v1077, %v1608
  %v1617 = vadd.f32 %v1080, %v1609
  %v1618 = vtanh.pop %v1610
  %v1619 = vtanh.pop %v1611
  %v1620 = vtanh.pop %v1612
  %v1621 = vtanh.pop %v1613
  %v1622 = vtanh.pop %v1614
  %v1623 = vtanh.pop %v1615
  %v1624 = vtanh.pop %v1616
  %v1625 = vtanh.pop %v1617
  %v1626 = vsub.f32 1.0, %v1571
  %v1627 = vsub.f32 1.0, %v1573
  %v1628 = vsub.f32 1.0, %v1575
  %v1629 = vsub.f32 1.0, %v1577
  %v1630 = vsub.f32 1.0, %v1579
  %v1631 = vsub.f32 1.0, %v1581
  %v1632 = vsub.f32 1.0, %v1583
  %v1633 = vsub.f32 1.0, %v1585
  %v1634 = vmul.f32 %v1626, %v1618
  %v1635 = vmul.f32 %v1627, %v1619
  %v1636 = vmul.f32 %v1628, %v1620
  %v1637 = vmul.f32 %v1629, %v1621
  %v1638 = vmul.f32 %v1630, %v1622
  %v1639 = vmul.f32 %v1631, %v1623
  %v1640 = vmul.f32 %v1632, %v1624
  %v1641 = vmul.f32 %v1633, %v1625
  %v1650 = vrot.slane %v1313, 7
  %v1651 = vrot.slane %v1314, 7
  %v1652 = vrot.slane %v1315, 7
  %v1653 = vrot.slane %v1316, 7
  %v1654 = vrot.slane %v1317, 7
  %v1655 = vrot.slane %v1318, 7
  %v1656 = vrot.slane %v1319, 7
  %v1657 = vrot.slane %v1320, 7
  %v1666 = vmul.f32 %v1571, %v1650
  %v1667 = vmul.f32 %v1573, %v1651
  %v1668 = vmul.f32 %v1575, %v1652
  %v1669 = vmul.f32 %v1577, %v1653
  %v1670 = vmul.f32 %v1579, %v1654
  %v1671 = vmul.f32 %v1581, %v1655
  %v1672 = vmul.f32 %v1583, %v1656
  %v1673 = vmul.f32 %v1585, %v1657
  %v1674 = vadd.f32 %v1634, %v1666
  %v1675 = vadd.f32 %v1635, %v1667
  %v1676 = vadd.f32 %v1636, %v1668
  %v1677 = vadd.f32 %v1637, %v1669
  %v1678 = vadd.f32 %v1638, %v1670
  %v1679 = vadd.f32 %v1639, %v1671
  %v1680 = vadd.f32 %v1640, %v1672
  %v1681 = vadd.f32 %v1641, %v1673
  %v1682 = vpack.c.bf16 %v1674, %v1674
  %v1683 = vpack.c.bf16 %v1675, %v1675
  %v1684 = vpack.c.bf16 %v1676, %v1676
  %v1685 = vpack.c.bf16 %v1677, %v1677
  %v1686 = vpack.c.bf16 %v1678, %v1678
  %v1687 = vpack.c.bf16 %v1679, %v1679
  %v1688 = vpack.c.bf16 %v1680, %v1680
  %v1689 = vpack.c.bf16 %v1681, %v1681
  %v1698 = vunpack.c.l.b16 %v1682
  %v1699 = vunpack.c.l.b16 %v1683
  %v1700 = vunpack.c.l.b16 %v1684
  %v1701 = vunpack.c.l.b16 %v1685
  %v1702 = vunpack.c.l.b16 %v1686
  %v1703 = vunpack.c.l.b16 %v1687
  %v1704 = vunpack.c.l.b16 %v1688
  %v1705 = vunpack.c.l.b16 %v1689
  %v1706 = vrot.slane %v1698, 3
  %v1707 = vrot.slane %v1699, 2
  %v1708 = vsel %vm577, %v1707, %v1706
  %v1709 = vrot.slane %v1700, 1
  %v1710 = vsel %vm580, %v1709, %v1708
  %v1711 = vsel %vm583, %v1701, %v1710
  %v1712 = vrot.slane %v1702, 7
  %v1713 = vsel %vm586, %v1712, %v1711
  %v1714 = vrot.slane %v1703, 6
  %v1715 = vsel %vm589, %v1714, %v1713
  %v1716 = vrot.slane %v1704, 5
  %v1717 = vsel %vm592, %v1716, %v1715
  %v1718 = vrot.slane %v1705, 4
  %v1719 = vsel %vm595, %v1718, %v1717
  %v1720 = vpack.c.b16 %v1719, %v1719
  %1722 = vmatprep.subr.bf16.mxu0 %v173
  %1723 = vmatpush1.bf16.msra.mxu0 %v172
  %1724 = vmatprep.subr.bf16.mxu0 %v170
  %1725 = vmatpush1.bf16.msra.mxu0 %v169
  %1726 = vmatprep.subr.bf16.mxu0 %v167
  %1727 = vmatpush1.bf16.msra.mxu0 %v166
  %1728 = vmatprep.subr.bf16.mxu0 %v164
  %1729 = vmatpush1.bf16.msra.mxu0 %v163
  %1730 = vmatprep.subr.bf16.mxu0 %v161
  %1731 = vmatpush1.bf16.msra.mxu0 %v160
  %1732 = vmatprep.subr.bf16.mxu0 %v158
  %1733 = vmatpush1.bf16.msra.mxu0 %v157
  %1734 = vmatprep.subr.bf16.mxu0 %v155
  %1735 = vmatpush1.bf16.msra.mxu0 %v154
  %1736 = vmatprep.subr.bf16.mxu0 %v152
  %1737 = vmatpush1.bf16.msra.mxu0 %v151
  %1738 = vmatprep.subr.bf16.mxu0 0
  %1739 = vmatpush2.bf16.msra.mxu0 0
  %1740 = vmatprep.subr.bf16.mxu0 0
  %1741 = vmatpush2.bf16.msra.mxu0 0
  %1742 = vmatprep.subr.bf16.mxu0 0
  %1743 = vmatpush2.bf16.msra.mxu0 0
  %1744 = vmatprep.subr.bf16.mxu0 0
  %1745 = vmatpush2.bf16.msra.mxu0 0
  %1746 = vmatprep.subr.bf16.mxu0 0
  %1747 = vmatpush2.bf16.msra.mxu0 0
  %1748 = vmatprep.subr.bf16.mxu0 0
  %1749 = vmatpush2.bf16.msra.mxu0 0
  %1750 = vmatprep.subr.bf16.mxu0 0
  %1751 = vmatpush2.bf16.msra.mxu0 0
  %1752 = vmatprep.subr.bf16.mxu0 0
  %1753 = vmatpush2.bf16.msra.mxu0 0
  %1754 = vmatprep.mubr.bf16.mxu0 0
  %1755 = vmatmul.mubr.bf16.gmra.mxu0 %v1720
  %v1756 = vpop.f32.mrf.mxu0
  %v1757 = vadd.f32 %v57, %v1756
  %v1758 = vpop.f32.mrf.mxu0
  %v1759 = vadd.f32 %v61, %v1758
  %v1760 = vpop.f32.mrf.mxu0
  %v1761 = vpop.f32.mrf.mxu0
  %1762 = vdwg.mxu0
  %1763 = vmatprep.subr.bf16.mxu0 0
  %1764 = vmatpush1.bf16.msra.mxu0 %v174
  %1765 = vmatprep.subr.bf16.mxu0 0
  %1766 = vmatpush1.bf16.msra.mxu0 %v171
  %1767 = vmatprep.subr.bf16.mxu0 0
  %1768 = vmatpush1.bf16.msra.mxu0 %v168
  %1769 = vmatprep.subr.bf16.mxu0 0
  %1770 = vmatpush1.bf16.msra.mxu0 %v165
  %1771 = vmatprep.subr.bf16.mxu0 0
  %1772 = vmatpush1.bf16.msra.mxu0 %v162
  %1773 = vmatprep.subr.bf16.mxu0 0
  %1774 = vmatpush1.bf16.msra.mxu0 %v159
  %1775 = vmatprep.subr.bf16.mxu0 0
  %1776 = vmatpush1.bf16.msra.mxu0 %v156
  %1777 = vmatprep.subr.bf16.mxu0 0
  %1778 = vmatpush1.bf16.msra.mxu0 %v153
  %1779 = vmatprep.subr.bf16.mxu0 0
  %1780 = vmatpush2.bf16.msra.mxu0 0
  %1781 = vmatprep.subr.bf16.mxu0 0
  %1782 = vmatpush2.bf16.msra.mxu0 0
  %1783 = vmatprep.subr.bf16.mxu0 0
  %1784 = vmatpush2.bf16.msra.mxu0 0
  %1785 = vmatprep.subr.bf16.mxu0 0
  %1786 = vmatpush2.bf16.msra.mxu0 0
  %1787 = vmatprep.subr.bf16.mxu0 0
  %1788 = vmatpush2.bf16.msra.mxu0 0
  %1789 = vmatprep.subr.bf16.mxu0 0
  %1790 = vmatpush2.bf16.msra.mxu0 0
  %1791 = vmatprep.subr.bf16.mxu0 0
  %1792 = vmatpush2.bf16.msra.mxu0 0
  %1793 = vmatprep.subr.bf16.mxu0 0
  %1794 = vmatpush2.bf16.msra.mxu0 0
  %1795 = vmatprep.mubr.bf16.mxu0 0
  %1796 = vmatmul.mubr.bf16.gmra.mxu0 %v1720
  %v1797 = vpop.f32.mrf.mxu0
  %v1798 = vadd.f32 %v65, %v1797
  %v1799 = vpop.f32.mrf.mxu0
  %v1800 = vpop.f32.mrf.mxu0
  %v1801 = vpop.f32.mrf.mxu0
  %1802 = vdwg.mxu0
  %v1803 = vld [vmem:[%s0] sm:$0x44]
  %v1804 = vld [vmem:[%s0 + $0x8] sm:$0x4]
  %v1805 = vld [vmem:[%s0 + $0xc] sm:$0x44]
  %v1806 = vld [vmem:[%s0 + $0x14] sm:$0x4]
  %v1807 = vld [vmem:[%s0 + $0x18] sm:$0x44]
  %v1808 = vld [vmem:[%s0 + $0x20] sm:$0x4]
  %v1809 = vld [vmem:[%s0 + $0x24] sm:$0x44]
  %v1810 = vld [vmem:[%s0 + $0x2c] sm:$0x4]
  %v1811 = vld [vmem:[%s0 + $0x30] sm:$0x44]
  %v1812 = vld [vmem:[%s0 + $0x38] sm:$0x4]
  %v1813 = vld [vmem:[%s0 + $0x3c] sm:$0x44]
  %v1814 = vld [vmem:[%s0 + $0x44] sm:$0x4]
  %v1815 = vld [vmem:[%s0 + $0x48] sm:$0x44]
  %v1816 = vld [vmem:[%s0 + $0x50] sm:$0x4]
  %v1817 = vld [vmem:[%s0 + $0x54] sm:$0x44]
  %v1818 = vld [vmem:[%s0 + $0x5c] sm:$0x4]
  %v1819 = vunpack.c.l.bf16 %v1803
  %v1820 = vunpack.c.h.bf16 %v1803
  %v1821 = vunpack.c.l.bf16 %v1804
  %v1822 = vunpack.c.l.bf16 %v1805
  %v1823 = vunpack.c.h.bf16 %v1805
  %v1824 = vunpack.c.l.bf16 %v1806
  %v1825 = vunpack.c.l.bf16 %v1807
  %v1826 = vunpack.c.h.bf16 %v1807
  %v1827 = vunpack.c.l.bf16 %v1808
  %v1828 = vunpack.c.l.bf16 %v1809
  %v1829 = vunpack.c.h.bf16 %v1809
  %v1830 = vunpack.c.l.bf16 %v1810
  %v1831 = vunpack.c.l.bf16 %v1811
  %v1832 = vunpack.c.h.bf16 %v1811
  %v1833 = vunpack.c.l.bf16 %v1812
  %v1834 = vunpack.c.l.bf16 %v1813
  %v1835 = vunpack.c.h.bf16 %v1813
  %v1836 = vunpack.c.l.bf16 %v1814
  %v1837 = vunpack.c.l.bf16 %v1815
  %v1838 = vunpack.c.h.bf16 %v1815
  %v1839 = vunpack.c.l.bf16 %v1816
  %v1840 = vunpack.c.l.bf16 %v1817
  %v1841 = vunpack.c.h.bf16 %v1817
  %v1842 = vunpack.c.l.bf16 %v1818
  %v1844 = vrot.slane %v1757, 4
  %v1845 = vrot.slane %v1757, 5
  %v1846 = vrot.slane %v1757, 6
  %v1847 = vrot.slane %v1757, 7
  %v1848 = vrot.slane %v1757, 1
  %v1849 = vrot.slane %v1757, 2
  %v1850 = vrot.slane %v1757, 3
  %v1859 = vadd.f32 %v1819, %v1844
  %v1860 = vadd.f32 %v1822, %v1845
  %v1861 = vadd.f32 %v1825, %v1846
  %v1862 = vadd.f32 %v1828, %v1847
  %v1863 = vadd.f32 %v1831, %v1757
  %v1864 = vadd.f32 %v1834, %v1848
  %v1865 = vadd.f32 %v1837, %v1849
  %v1866 = vadd.f32 %v1840, %v1850
  %v1867 = vxor.u32 %v1859, 2147483648
  %v1868 = vxor.u32 %v1860, 2147483648
  %v1869 = vxor.u32 %v1861, 2147483648
  %v1870 = vxor.u32 %v1862, 2147483648
  %v1871 = vxor.u32 %v1863, 2147483648
  %v1872 = vxor.u32 %v1864, 2147483648
  %v1873 = vxor.u32 %v1865, 2147483648
  %v1874 = vxor.u32 %v1866, 2147483648
  %v1875 = vmul.f32 %v1867, 1.442695
  %v1876 = vpow.pop %v1875
  %v1877 = vmul.f32 %v1868, 1.442695
  %v1878 = vpow.pop %v1877
  %v1879 = vmul.f32 %v1869, 1.442695
  %v1880 = vpow.pop %v1879
  %v1881 = vmul.f32 %v1870, 1.442695
  %v1882 = vpow.pop %v1881
  %v1883 = vmul.f32 %v1871, 1.442695
  %v1884 = vpow.pop %v1883
  %v1885 = vmul.f32 %v1872, 1.442695
  %v1886 = vpow.pop %v1885
  %v1887 = vmul.f32 %v1873, 1.442695
  %v1888 = vpow.pop %v1887
  %v1889 = vmul.f32 %v1874, 1.442695
  %v1890 = vpow.pop %v1889
  %v1891 = vadd.f32 %v1876, 1.0
  %v1892 = vadd.f32 %v1878, 1.0
  %v1893 = vadd.f32 %v1880, 1.0
  %v1894 = vadd.f32 %v1882, 1.0
  %v1895 = vadd.f32 %v1884, 1.0
  %v1896 = vadd.f32 %v1886, 1.0
  %v1897 = vadd.f32 %v1888, 1.0
  %v1898 = vadd.f32 %v1890, 1.0
  %v1899 = vrcp.pop %v1891
  %v1900 = vmul.f32 1.0, %v1899
  %v1901 = vrcp.pop %v1892
  %v1902 = vmul.f32 1.0, %v1901
  %v1903 = vrcp.pop %v1893
  %v1904 = vmul.f32 1.0, %v1903
  %v1905 = vrcp.pop %v1894
  %v1906 = vmul.f32 1.0, %v1905
  %v1907 = vrcp.pop %v1895
  %v1908 = vmul.f32 1.0, %v1907
  %v1909 = vrcp.pop %v1896
  %v1910 = vmul.f32 1.0, %v1909
  %v1911 = vrcp.pop %v1897
  %v1912 = vmul.f32 1.0, %v1911
  %v1913 = vrcp.pop %v1898
  %v1914 = vmul.f32 1.0, %v1913
  %v1916 = vrot.slane %v1759, 4
  %v1917 = vrot.slane %v1759, 5
  %v1918 = vrot.slane %v1759, 6
  %v1919 = vrot.slane %v1759, 7
  %v1920 = vrot.slane %v1759, 1
  %v1921 = vrot.slane %v1759, 2
  %v1922 = vrot.slane %v1759, 3
  %v1931 = vadd.f32 %v1820, %v1916
  %v1932 = vadd.f32 %v1823, %v1917
  %v1933 = vadd.f32 %v1826, %v1918
  %v1934 = vadd.f32 %v1829, %v1919
  %v1935 = vadd.f32 %v1832, %v1759
  %v1936 = vadd.f32 %v1835, %v1920
  %v1937 = vadd.f32 %v1838, %v1921
  %v1938 = vadd.f32 %v1841, %v1922
  %v1939 = vxor.u32 %v1931, 2147483648
  %v1940 = vxor.u32 %v1932, 2147483648
  %v1941 = vxor.u32 %v1933, 2147483648
  %v1942 = vxor.u32 %v1934, 2147483648
  %v1943 = vxor.u32 %v1935, 2147483648
  %v1944 = vxor.u32 %v1936, 2147483648
  %v1945 = vxor.u32 %v1937, 2147483648
  %v1946 = vxor.u32 %v1938, 2147483648
  %v1947 = vmul.f32 %v1939, 1.442695
  %v1948 = vpow.pop %v1947
  %v1949 = vmul.f32 %v1940, 1.442695
  %v1950 = vpow.pop %v1949
  %v1951 = vmul.f32 %v1941, 1.442695
  %v1952 = vpow.pop %v1951
  %v1953 = vmul.f32 %v1942, 1.442695
  %v1954 = vpow.pop %v1953
  %v1955 = vmul.f32 %v1943, 1.442695
  %v1956 = vpow.pop %v1955
  %v1957 = vmul.f32 %v1944, 1.442695
  %v1958 = vpow.pop %v1957
  %v1959 = vmul.f32 %v1945, 1.442695
  %v1960 = vpow.pop %v1959
  %v1961 = vmul.f32 %v1946, 1.442695
  %v1962 = vpow.pop %v1961
  %v1963 = vadd.f32 %v1948, 1.0
  %v1964 = vadd.f32 %v1950, 1.0
  %v1965 = vadd.f32 %v1952, 1.0
  %v1966 = vadd.f32 %v1954, 1.0
  %v1967 = vadd.f32 %v1956, 1.0
  %v1968 = vadd.f32 %v1958, 1.0
  %v1969 = vadd.f32 %v1960, 1.0
  %v1970 = vadd.f32 %v1962, 1.0
  %v1971 = vrcp.pop %v1963
  %v1972 = vmul.f32 1.0, %v1971
  %v1973 = vrcp.pop %v1964
  %v1974 = vmul.f32 1.0, %v1973
  %v1975 = vrcp.pop %v1965
  %v1976 = vmul.f32 1.0, %v1975
  %v1977 = vrcp.pop %v1966
  %v1978 = vmul.f32 1.0, %v1977
  %v1979 = vrcp.pop %v1967
  %v1980 = vmul.f32 1.0, %v1979
  %v1981 = vrcp.pop %v1968
  %v1982 = vmul.f32 1.0, %v1981
  %v1983 = vrcp.pop %v1969
  %v1984 = vmul.f32 1.0, %v1983
  %v1985 = vrcp.pop %v1970
  %v1986 = vmul.f32 1.0, %v1985
  %v1988 = vrot.slane %v1798, 4
  %v1989 = vrot.slane %v1798, 5
  %v1990 = vrot.slane %v1798, 6
  %v1991 = vrot.slane %v1798, 7
  %v1992 = vrot.slane %v1798, 1
  %v1993 = vrot.slane %v1798, 2
  %v1994 = vrot.slane %v1798, 3
  %v2003 = vmul.f32 %v1900, %v1988
  %v2004 = vmul.f32 %v1902, %v1989
  %v2005 = vmul.f32 %v1904, %v1990
  %v2006 = vmul.f32 %v1906, %v1991
  %v2007 = vmul.f32 %v1908, %v1798
  %v2008 = vmul.f32 %v1910, %v1992
  %v2009 = vmul.f32 %v1912, %v1993
  %v2010 = vmul.f32 %v1914, %v1994
  %v2011 = vadd.f32 %v1821, %v2003
  %v2012 = vadd.f32 %v1824, %v2004
  %v2013 = vadd.f32 %v1827, %v2005
  %v2014 = vadd.f32 %v1830, %v2006
  %v2015 = vadd.f32 %v1833, %v2007
  %v2016 = vadd.f32 %v1836, %v2008
  %v2017 = vadd.f32 %v1839, %v2009
  %v2018 = vadd.f32 %v1842, %v2010
  %v2019 = vtanh.pop %v2011
  %v2020 = vtanh.pop %v2012
  %v2021 = vtanh.pop %v2013
  %v2022 = vtanh.pop %v2014
  %v2023 = vtanh.pop %v2015
  %v2024 = vtanh.pop %v2016
  %v2025 = vtanh.pop %v2017
  %v2026 = vtanh.pop %v2018
  %v2027 = vsub.f32 1.0, %v1972
  %v2028 = vsub.f32 1.0, %v1974
  %v2029 = vsub.f32 1.0, %v1976
  %v2030 = vsub.f32 1.0, %v1978
  %v2031 = vsub.f32 1.0, %v1980
  %v2032 = vsub.f32 1.0, %v1982
  %v2033 = vsub.f32 1.0, %v1984
  %v2034 = vsub.f32 1.0, %v1986
  %v2035 = vmul.f32 %v2027, %v2019
  %v2036 = vmul.f32 %v2028, %v2020
  %v2037 = vmul.f32 %v2029, %v2021
  %v2038 = vmul.f32 %v2030, %v2022
  %v2039 = vmul.f32 %v2031, %v2023
  %v2040 = vmul.f32 %v2032, %v2024
  %v2041 = vmul.f32 %v2033, %v2025
  %v2042 = vmul.f32 %v2034, %v2026
  %v2051 = vrot.slane %v1674, 7
  %v2052 = vrot.slane %v1675, 7
  %v2053 = vrot.slane %v1676, 7
  %v2054 = vrot.slane %v1677, 7
  %v2055 = vrot.slane %v1678, 7
  %v2056 = vrot.slane %v1679, 7
  %v2057 = vrot.slane %v1680, 7
  %v2058 = vrot.slane %v1681, 7
  %v2067 = vmul.f32 %v1972, %v2051
  %v2068 = vmul.f32 %v1974, %v2052
  %v2069 = vmul.f32 %v1976, %v2053
  %v2070 = vmul.f32 %v1978, %v2054
  %v2071 = vmul.f32 %v1980, %v2055
  %v2072 = vmul.f32 %v1982, %v2056
  %v2073 = vmul.f32 %v1984, %v2057
  %v2074 = vmul.f32 %v1986, %v2058
  %v2075 = vadd.f32 %v2035, %v2067
  %v2076 = vadd.f32 %v2036, %v2068
  %v2077 = vadd.f32 %v2037, %v2069
  %v2078 = vadd.f32 %v2038, %v2070
  %v2079 = vadd.f32 %v2039, %v2071
  %v2080 = vadd.f32 %v2040, %v2072
  %v2081 = vadd.f32 %v2041, %v2073
  %v2082 = vadd.f32 %v2042, %v2074
  %v2083 = vpack.c.bf16 %v2075, %v2075
  %v2084 = vpack.c.bf16 %v2076, %v2076
  %v2085 = vpack.c.bf16 %v2077, %v2077
  %v2086 = vpack.c.bf16 %v2078, %v2078
  %v2087 = vpack.c.bf16 %v2079, %v2079
  %v2088 = vpack.c.bf16 %v2080, %v2080
  %v2089 = vpack.c.bf16 %v2081, %v2081
  %v2090 = vpack.c.bf16 %v2082, %v2082
  %v2099 = vunpack.c.l.b16 %v2083
  %v2100 = vunpack.c.l.b16 %v2084
  %v2101 = vunpack.c.l.b16 %v2085
  %v2102 = vunpack.c.l.b16 %v2086
  %v2103 = vunpack.c.l.b16 %v2087
  %v2104 = vunpack.c.l.b16 %v2088
  %v2105 = vunpack.c.l.b16 %v2089
  %v2106 = vunpack.c.l.b16 %v2090
  %v2107 = vrot.slane %v2099, 4
  %v2108 = vrot.slane %v2100, 3
  %v2109 = vsel %vm577, %v2108, %v2107
  %v2110 = vrot.slane %v2101, 2
  %v2111 = vsel %vm580, %v2110, %v2109
  %v2112 = vrot.slane %v2102, 1
  %v2113 = vsel %vm583, %v2112, %v2111
  %v2114 = vsel %vm586, %v2103, %v2113
  %v2115 = vrot.slane %v2104, 7
  %v2116 = vsel %vm589, %v2115, %v2114
  %v2117 = vrot.slane %v2105, 6
  %v2118 = vsel %vm592, %v2117, %v2116
  %v2119 = vrot.slane %v2106, 5
  %v2120 = vsel %vm595, %v2119, %v2118
  %v2121 = vpack.c.b16 %v2120, %v2120
  %2123 = vmatprep.subr.bf16.mxu0 %v173
  %2124 = vmatpush1.bf16.msra.mxu0 %v172
  %2125 = vmatprep.subr.bf16.mxu0 %v170
  %2126 = vmatpush1.bf16.msra.mxu0 %v169
  %2127 = vmatprep.subr.bf16.mxu0 %v167
  %2128 = vmatpush1.bf16.msra.mxu0 %v166
  %2129 = vmatprep.subr.bf16.mxu0 %v164
  %2130 = vmatpush1.bf16.msra.mxu0 %v163
  %2131 = vmatprep.subr.bf16.mxu0 %v161
  %2132 = vmatpush1.bf16.msra.mxu0 %v160
  %2133 = vmatprep.subr.bf16.mxu0 %v158
  %2134 = vmatpush1.bf16.msra.mxu0 %v157
  %2135 = vmatprep.subr.bf16.mxu0 %v155
  %2136 = vmatpush1.bf16.msra.mxu0 %v154
  %2137 = vmatprep.subr.bf16.mxu0 %v152
  %2138 = vmatpush1.bf16.msra.mxu0 %v151
  %2139 = vmatprep.subr.bf16.mxu0 0
  %2140 = vmatpush2.bf16.msra.mxu0 0
  %2141 = vmatprep.subr.bf16.mxu0 0
  %2142 = vmatpush2.bf16.msra.mxu0 0
  %2143 = vmatprep.subr.bf16.mxu0 0
  %2144 = vmatpush2.bf16.msra.mxu0 0
  %2145 = vmatprep.subr.bf16.mxu0 0
  %2146 = vmatpush2.bf16.msra.mxu0 0
  %2147 = vmatprep.subr.bf16.mxu0 0
  %2148 = vmatpush2.bf16.msra.mxu0 0
  %2149 = vmatprep.subr.bf16.mxu0 0
  %2150 = vmatpush2.bf16.msra.mxu0 0
  %2151 = vmatprep.subr.bf16.mxu0 0
  %2152 = vmatpush2.bf16.msra.mxu0 0
  %2153 = vmatprep.subr.bf16.mxu0 0
  %2154 = vmatpush2.bf16.msra.mxu0 0
  %2155 = vmatprep.mubr.bf16.mxu0 0
  %2156 = vmatmul.mubr.bf16.gmra.mxu0 %v2121
  %v2157 = vpop.f32.mrf.mxu0
  %v2158 = vadd.f32 %v57, %v2157
  %v2159 = vpop.f32.mrf.mxu0
  %v2160 = vadd.f32 %v61, %v2159
  %v2161 = vpop.f32.mrf.mxu0
  %v2162 = vpop.f32.mrf.mxu0
  %2163 = vdwg.mxu0
  %2164 = vmatprep.subr.bf16.mxu0 0
  %2165 = vmatpush1.bf16.msra.mxu0 %v174
  %2166 = vmatprep.subr.bf16.mxu0 0
  %2167 = vmatpush1.bf16.msra.mxu0 %v171
  %2168 = vmatprep.subr.bf16.mxu0 0
  %2169 = vmatpush1.bf16.msra.mxu0 %v168
  %2170 = vmatprep.subr.bf16.mxu0 0
  %2171 = vmatpush1.bf16.msra.mxu0 %v165
  %2172 = vmatprep.subr.bf16.mxu0 0
  %2173 = vmatpush1.bf16.msra.mxu0 %v162
  %2174 = vmatprep.subr.bf16.mxu0 0
  %2175 = vmatpush1.bf16.msra.mxu0 %v159
  %2176 = vmatprep.subr.bf16.mxu0 0
  %2177 = vmatpush1.bf16.msra.mxu0 %v156
  %2178 = vmatprep.subr.bf16.mxu0 0
  %2179 = vmatpush1.bf16.msra.mxu0 %v153
  %2180 = vmatprep.subr.bf16.mxu0 0
  %2181 = vmatpush2.bf16.msra.mxu0 0
  %2182 = vmatprep.subr.bf16.mxu0 0
  %2183 = vmatpush2.bf16.msra.mxu0 0
  %2184 = vmatprep.subr.bf16.mxu0 0
  %2185 = vmatpush2.bf16.msra.mxu0 0
  %2186 = vmatprep.subr.bf16.mxu0 0
  %2187 = vmatpush2.bf16.msra.mxu0 0
  %2188 = vmatprep.subr.bf16.mxu0 0
  %2189 = vmatpush2.bf16.msra.mxu0 0
  %2190 = vmatprep.subr.bf16.mxu0 0
  %2191 = vmatpush2.bf16.msra.mxu0 0
  %2192 = vmatprep.subr.bf16.mxu0 0
  %2193 = vmatpush2.bf16.msra.mxu0 0
  %2194 = vmatprep.subr.bf16.mxu0 0
  %2195 = vmatpush2.bf16.msra.mxu0 0
  %2196 = vmatprep.mubr.bf16.mxu0 0
  %2197 = vmatmul.mubr.bf16.gmra.mxu0 %v2121
  %v2198 = vpop.f32.mrf.mxu0
  %v2199 = vadd.f32 %v65, %v2198
  %v2200 = vpop.f32.mrf.mxu0
  %v2201 = vpop.f32.mrf.mxu0
  %v2202 = vpop.f32.mrf.mxu0
  %2203 = vdwg.mxu0
  %v2205 = vrot.slane %v2158, 3
  %v2206 = vrot.slane %v2158, 4
  %v2207 = vrot.slane %v2158, 5
  %v2208 = vrot.slane %v2158, 6
  %v2209 = vrot.slane %v2158, 7
  %v2210 = vrot.slane %v2158, 1
  %v2211 = vrot.slane %v2158, 2
  %v2220 = vadd.f32 %v1819, %v2205
  %v2221 = vadd.f32 %v1822, %v2206
  %v2222 = vadd.f32 %v1825, %v2207
  %v2223 = vadd.f32 %v1828, %v2208
  %v2224 = vadd.f32 %v1831, %v2209
  %v2225 = vadd.f32 %v1834, %v2158
  %v2226 = vadd.f32 %v1837, %v2210
  %v2227 = vadd.f32 %v1840, %v2211
  %v2228 = vxor.u32 %v2220, 2147483648
  %v2229 = vxor.u32 %v2221, 2147483648
  %v2230 = vxor.u32 %v2222, 2147483648
  %v2231 = vxor.u32 %v2223, 2147483648
  %v2232 = vxor.u32 %v2224, 2147483648
  %v2233 = vxor.u32 %v2225, 2147483648
  %v2234 = vxor.u32 %v2226, 2147483648
  %v2235 = vxor.u32 %v2227, 2147483648
  %v2236 = vmul.f32 %v2228, 1.442695
  %v2237 = vpow.pop %v2236
  %v2238 = vmul.f32 %v2229, 1.442695
  %v2239 = vpow.pop %v2238
  %v2240 = vmul.f32 %v2230, 1.442695
  %v2241 = vpow.pop %v2240
  %v2242 = vmul.f32 %v2231, 1.442695
  %v2243 = vpow.pop %v2242
  %v2244 = vmul.f32 %v2232, 1.442695
  %v2245 = vpow.pop %v2244
  %v2246 = vmul.f32 %v2233, 1.442695
  %v2247 = vpow.pop %v2246
  %v2248 = vmul.f32 %v2234, 1.442695
  %v2249 = vpow.pop %v2248
  %v2250 = vmul.f32 %v2235, 1.442695
  %v2251 = vpow.pop %v2250
  %v2252 = vadd.f32 %v2237, 1.0
  %v2253 = vadd.f32 %v2239, 1.0
  %v2254 = vadd.f32 %v2241, 1.0
  %v2255 = vadd.f32 %v2243, 1.0
  %v2256 = vadd.f32 %v2245, 1.0
  %v2257 = vadd.f32 %v2247, 1.0
  %v2258 = vadd.f32 %v2249, 1.0
  %v2259 = vadd.f32 %v2251, 1.0
  %v2260 = vrcp.pop %v2252
  %v2261 = vmul.f32 1.0, %v2260
  %v2262 = vrcp.pop %v2253
  %v2263 = vmul.f32 1.0, %v2262
  %v2264 = vrcp.pop %v2254
  %v2265 = vmul.f32 1.0, %v2264
  %v2266 = vrcp.pop %v2255
  %v2267 = vmul.f32 1.0, %v2266
  %v2268 = vrcp.pop %v2256
  %v2269 = vmul.f32 1.0, %v2268
  %v2270 = vrcp.pop %v2257
  %v2271 = vmul.f32 1.0, %v2270
  %v2272 = vrcp.pop %v2258
  %v2273 = vmul.f32 1.0, %v2272
  %v2274 = vrcp.pop %v2259
  %v2275 = vmul.f32 1.0, %v2274
  %v2277 = vrot.slane %v2160, 3
  %v2278 = vrot.slane %v2160, 4
  %v2279 = vrot.slane %v2160, 5
  %v2280 = vrot.slane %v2160, 6
  %v2281 = vrot.slane %v2160, 7
  %v2282 = vrot.slane %v2160, 1
  %v2283 = vrot.slane %v2160, 2
  %v2292 = vadd.f32 %v1820, %v2277
  %v2293 = vadd.f32 %v1823, %v2278
  %v2294 = vadd.f32 %v1826, %v2279
  %v2295 = vadd.f32 %v1829, %v2280
  %v2296 = vadd.f32 %v1832, %v2281
  %v2297 = vadd.f32 %v1835, %v2160
  %v2298 = vadd.f32 %v1838, %v2282
  %v2299 = vadd.f32 %v1841, %v2283
  %v2300 = vxor.u32 %v2292, 2147483648
  %v2301 = vxor.u32 %v2293, 2147483648
  %v2302 = vxor.u32 %v2294, 2147483648
  %v2303 = vxor.u32 %v2295, 2147483648
  %v2304 = vxor.u32 %v2296, 2147483648
  %v2305 = vxor.u32 %v2297, 2147483648
  %v2306 = vxor.u32 %v2298, 2147483648
  %v2307 = vxor.u32 %v2299, 2147483648
  %v2308 = vmul.f32 %v2300, 1.442695
  %v2309 = vpow.pop %v2308
  %v2310 = vmul.f32 %v2301, 1.442695
  %v2311 = vpow.pop %v2310
  %v2312 = vmul.f32 %v2302, 1.442695
  %v2313 = vpow.pop %v2312
  %v2314 = vmul.f32 %v2303, 1.442695
  %v2315 = vpow.pop %v2314
  %v2316 = vmul.f32 %v2304, 1.442695
  %v2317 = vpow.pop %v2316
  %v2318 = vmul.f32 %v2305, 1.442695
  %v2319 = vpow.pop %v2318
  %v2320 = vmul.f32 %v2306, 1.442695
  %v2321 = vpow.pop %v2320
  %v2322 = vmul.f32 %v2307, 1.442695
  %v2323 = vpow.pop %v2322
  %v2324 = vadd.f32 %v2309, 1.0
  %v2325 = vadd.f32 %v2311, 1.0
  %v2326 = vadd.f32 %v2313, 1.0
  %v2327 = vadd.f32 %v2315, 1.0
  %v2328 = vadd.f32 %v2317, 1.0
  %v2329 = vadd.f32 %v2319, 1.0
  %v2330 = vadd.f32 %v2321, 1.0
  %v2331 = vadd.f32 %v2323, 1.0
  %v2332 = vrcp.pop %v2324
  %v2333 = vmul.f32 1.0, %v2332
  %v2334 = vrcp.pop %v2325
  %v2335 = vmul.f32 1.0, %v2334
  %v2336 = vrcp.pop %v2326
  %v2337 = vmul.f32 1.0, %v2336
  %v2338 = vrcp.pop %v2327
  %v2339 = vmul.f32 1.0, %v2338
  %v2340 = vrcp.pop %v2328
  %v2341 = vmul.f32 1.0, %v2340
  %v2342 = vrcp.pop %v2329
  %v2343 = vmul.f32 1.0, %v2342
  %v2344 = vrcp.pop %v2330
  %v2345 = vmul.f32 1.0, %v2344
  %v2346 = vrcp.pop %v2331
  %v2347 = vmul.f32 1.0, %v2346
  %v2349 = vrot.slane %v2199, 3
  %v2350 = vrot.slane %v2199, 4
  %v2351 = vrot.slane %v2199, 5
  %v2352 = vrot.slane %v2199, 6
  %v2353 = vrot.slane %v2199, 7
  %v2354 = vrot.slane %v2199, 1
  %v2355 = vrot.slane %v2199, 2
  %v2364 = vmul.f32 %v2261, %v2349
  %v2365 = vmul.f32 %v2263, %v2350
  %v2366 = vmul.f32 %v2265, %v2351
  %v2367 = vmul.f32 %v2267, %v2352
  %v2368 = vmul.f32 %v2269, %v2353
  %v2369 = vmul.f32 %v2271, %v2199
  %v2370 = vmul.f32 %v2273, %v2354
  %v2371 = vmul.f32 %v2275, %v2355
  %v2372 = vadd.f32 %v1821, %v2364
  %v2373 = vadd.f32 %v1824, %v2365
  %v2374 = vadd.f32 %v1827, %v2366
  %v2375 = vadd.f32 %v1830, %v2367
  %v2376 = vadd.f32 %v1833, %v2368
  %v2377 = vadd.f32 %v1836, %v2369
  %v2378 = vadd.f32 %v1839, %v2370
  %v2379 = vadd.f32 %v1842, %v2371
  %v2380 = vtanh.pop %v2372
  %v2381 = vtanh.pop %v2373
  %v2382 = vtanh.pop %v2374
  %v2383 = vtanh.pop %v2375
  %v2384 = vtanh.pop %v2376
  %v2385 = vtanh.pop %v2377
  %v2386 = vtanh.pop %v2378
  %v2387 = vtanh.pop %v2379
  %v2388 = vsub.f32 1.0, %v2333
  %v2389 = vsub.f32 1.0, %v2335
  %v2390 = vsub.f32 1.0, %v2337
  %v2391 = vsub.f32 1.0, %v2339
  %v2392 = vsub.f32 1.0, %v2341
  %v2393 = vsub.f32 1.0, %v2343
  %v2394 = vsub.f32 1.0, %v2345
  %v2395 = vsub.f32 1.0, %v2347
  %v2396 = vmul.f32 %v2388, %v2380
  %v2397 = vmul.f32 %v2389, %v2381
  %v2398 = vmul.f32 %v2390, %v2382
  %v2399 = vmul.f32 %v2391, %v2383
  %v2400 = vmul.f32 %v2392, %v2384
  %v2401 = vmul.f32 %v2393, %v2385
  %v2402 = vmul.f32 %v2394, %v2386
  %v2403 = vmul.f32 %v2395, %v2387
  %v2412 = vrot.slane %v2075, 7
  %v2413 = vrot.slane %v2076, 7
  %v2414 = vrot.slane %v2077, 7
  %v2415 = vrot.slane %v2078, 7
  %v2416 = vrot.slane %v2079, 7
  %v2417 = vrot.slane %v2080, 7
  %v2418 = vrot.slane %v2081, 7
  %v2419 = vrot.slane %v2082, 7
  %v2428 = vmul.f32 %v2333, %v2412
  %v2429 = vmul.f32 %v2335, %v2413
  %v2430 = vmul.f32 %v2337, %v2414
  %v2431 = vmul.f32 %v2339, %v2415
  %v2432 = vmul.f32 %v2341, %v2416
  %v2433 = vmul.f32 %v2343, %v2417
  %v2434 = vmul.f32 %v2345, %v2418
  %v2435 = vmul.f32 %v2347, %v2419
  %v2436 = vadd.f32 %v2396, %v2428
  %v2437 = vadd.f32 %v2397, %v2429
  %v2438 = vadd.f32 %v2398, %v2430
  %v2439 = vadd.f32 %v2399, %v2431
  %v2440 = vadd.f32 %v2400, %v2432
  %v2441 = vadd.f32 %v2401, %v2433
  %v2442 = vadd.f32 %v2402, %v2434
  %v2443 = vadd.f32 %v2403, %v2435
  %v2444 = vpack.c.bf16 %v2436, %v2436
  %v2445 = vpack.c.bf16 %v2437, %v2437
  %v2446 = vpack.c.bf16 %v2438, %v2438
  %v2447 = vpack.c.bf16 %v2439, %v2439
  %v2448 = vpack.c.bf16 %v2440, %v2440
  %v2449 = vpack.c.bf16 %v2441, %v2441
  %v2450 = vpack.c.bf16 %v2442, %v2442
  %v2451 = vpack.c.bf16 %v2443, %v2443
  %v2460 = vunpack.c.l.b16 %v2444
  %v2461 = vunpack.c.l.b16 %v2445
  %v2462 = vunpack.c.l.b16 %v2446
  %v2463 = vunpack.c.l.b16 %v2447
  %v2464 = vunpack.c.l.b16 %v2448
  %v2465 = vunpack.c.l.b16 %v2449
  %v2466 = vunpack.c.l.b16 %v2450
  %v2467 = vunpack.c.l.b16 %v2451
  %v2468 = vrot.slane %v2460, 5
  %v2469 = vrot.slane %v2461, 4
  %v2470 = vsel %vm577, %v2469, %v2468
  %v2471 = vrot.slane %v2462, 3
  %v2472 = vsel %vm580, %v2471, %v2470
  %v2473 = vrot.slane %v2463, 2
  %v2474 = vsel %vm583, %v2473, %v2472
  %v2475 = vrot.slane %v2464, 1
  %v2476 = vsel %vm586, %v2475, %v2474
  %v2477 = vsel %vm589, %v2465, %v2476
  %v2478 = vrot.slane %v2466, 7
  %v2479 = vsel %vm592, %v2478, %v2477
  %v2480 = vrot.slane %v2467, 6
  %v2481 = vsel %vm595, %v2480, %v2479
  %v2482 = vpack.c.b16 %v2481, %v2481
  %2484 = vmatprep.subr.bf16.mxu0 %v173
  %2485 = vmatpush1.bf16.msra.mxu0 %v172
  %2486 = vmatprep.subr.bf16.mxu0 %v170
  %2487 = vmatpush1.bf16.msra.mxu0 %v169
  %2488 = vmatprep.subr.bf16.mxu0 %v167
  %2489 = vmatpush1.bf16.msra.mxu0 %v166
  %2490 = vmatprep.subr.bf16.mxu0 %v164
  %2491 = vmatpush1.bf16.msra.mxu0 %v163
  %2492 = vmatprep.subr.bf16.mxu0 %v161
  %2493 = vmatpush1.bf16.msra.mxu0 %v160
  %2494 = vmatprep.subr.bf16.mxu0 %v158
  %2495 = vmatpush1.bf16.msra.mxu0 %v157
  %2496 = vmatprep.subr.bf16.mxu0 %v155
  %2497 = vmatpush1.bf16.msra.mxu0 %v154
  %2498 = vmatprep.subr.bf16.mxu0 %v152
  %2499 = vmatpush1.bf16.msra.mxu0 %v151
  %2500 = vmatprep.subr.bf16.mxu0 0
  %2501 = vmatpush2.bf16.msra.mxu0 0
  %2502 = vmatprep.subr.bf16.mxu0 0
  %2503 = vmatpush2.bf16.msra.mxu0 0
  %2504 = vmatprep.subr.bf16.mxu0 0
  %2505 = vmatpush2.bf16.msra.mxu0 0
  %2506 = vmatprep.subr.bf16.mxu0 0
  %2507 = vmatpush2.bf16.msra.mxu0 0
  %2508 = vmatprep.subr.bf16.mxu0 0
  %2509 = vmatpush2.bf16.msra.mxu0 0
  %2510 = vmatprep.subr.bf16.mxu0 0
  %2511 = vmatpush2.bf16.msra.mxu0 0
  %2512 = vmatprep.subr.bf16.mxu0 0
  %2513 = vmatpush2.bf16.msra.mxu0 0
  %2514 = vmatprep.subr.bf16.mxu0 0
  %2515 = vmatpush2.bf16.msra.mxu0 0
  %2516 = vmatprep.mubr.bf16.mxu0 0
  %2517 = vmatmul.mubr.bf16.gmra.mxu0 %v2482
  %v2518 = vpop.f32.mrf.mxu0
  %v2519 = vadd.f32 %v57, %v2518
  %v2520 = vpop.f32.mrf.mxu0
  %v2521 = vadd.f32 %v61, %v2520
  %v2522 = vpop.f32.mrf.mxu0
  %v2523 = vpop.f32.mrf.mxu0
  %2524 = vdwg.mxu0
  %2525 = vmatprep.subr.bf16.mxu0 0
  %2526 = vmatpush1.bf16.msra.mxu0 %v174
  %2527 = vmatprep.subr.bf16.mxu0 0
  %2528 = vmatpush1.bf16.msra.mxu0 %v171
  %2529 = vmatprep.subr.bf16.mxu0 0
  %2530 = vmatpush1.bf16.msra.mxu0 %v168
  %2531 = vmatprep.subr.bf16.mxu0 0
  %2532 = vmatpush1.bf16.msra.mxu0 %v165
  %2533 = vmatprep.subr.bf16.mxu0 0
  %2534 = vmatpush1.bf16.msra.mxu0 %v162
  %2535 = vmatprep.subr.bf16.mxu0 0
  %2536 = vmatpush1.bf16.msra.mxu0 %v159
  %2537 = vmatprep.subr.bf16.mxu0 0
  %2538 = vmatpush1.bf16.msra.mxu0 %v156
  %2539 = vmatprep.subr.bf16.mxu0 0
  %2540 = vmatpush1.bf16.msra.mxu0 %v153
  %2541 = vmatprep.subr.bf16.mxu0 0
  %2542 = vmatpush2.bf16.msra.mxu0 0
  %2543 = vmatprep.subr.bf16.mxu0 0
  %2544 = vmatpush2.bf16.msra.mxu0 0
  %2545 = vmatprep.subr.bf16.mxu0 0
  %2546 = vmatpush2.bf16.msra.mxu0 0
  %2547 = vmatprep.subr.bf16.mxu0 0
  %2548 = vmatpush2.bf16.msra.mxu0 0
  %2549 = vmatprep.subr.bf16.mxu0 0
  %2550 = vmatpush2.bf16.msra.mxu0 0
  %2551 = vmatprep.subr.bf16.mxu0 0
  %2552 = vmatpush2.bf16.msra.mxu0 0
  %2553 = vmatprep.subr.bf16.mxu0 0
  %2554 = vmatpush2.bf16.msra.mxu0 0
  %2555 = vmatprep.subr.bf16.mxu0 0
  %2556 = vmatpush2.bf16.msra.mxu0 0
  %2557 = vmatprep.mubr.bf16.mxu0 0
  %2558 = vmatmul.mubr.bf16.gmra.mxu0 %v2482
  %v2559 = vpop.f32.mrf.mxu0
  %v2560 = vadd.f32 %v65, %v2559
  %v2561 = vpop.f32.mrf.mxu0
  %v2562 = vpop.f32.mrf.mxu0
  %v2563 = vpop.f32.mrf.mxu0
  %2564 = vdwg.mxu0
  %v2565 = vld [vmem:[%s0] sm:$0x88]
  %v2566 = vld [vmem:[%s0 + $0x8] sm:$0x8]
  %v2567 = vld [vmem:[%s0 + $0xc] sm:$0x88]
  %v2568 = vld [vmem:[%s0 + $0x14] sm:$0x8]
  %v2569 = vld [vmem:[%s0 + $0x18] sm:$0x88]
  %v2570 = vld [vmem:[%s0 + $0x20] sm:$0x8]
  %v2571 = vld [vmem:[%s0 + $0x24] sm:$0x88]
  %v2572 = vld [vmem:[%s0 + $0x2c] sm:$0x8]
  %v2573 = vld [vmem:[%s0 + $0x30] sm:$0x88]
  %v2574 = vld [vmem:[%s0 + $0x38] sm:$0x8]
  %v2575 = vld [vmem:[%s0 + $0x3c] sm:$0x88]
  %v2576 = vld [vmem:[%s0 + $0x44] sm:$0x8]
  %v2577 = vld [vmem:[%s0 + $0x48] sm:$0x88]
  %v2578 = vld [vmem:[%s0 + $0x50] sm:$0x8]
  %v2579 = vld [vmem:[%s0 + $0x54] sm:$0x88]
  %v2580 = vld [vmem:[%s0 + $0x5c] sm:$0x8]
  %v2581 = vunpack.c.l.bf16 %v2565
  %v2582 = vunpack.c.h.bf16 %v2565
  %v2583 = vunpack.c.l.bf16 %v2566
  %v2584 = vunpack.c.l.bf16 %v2567
  %v2585 = vunpack.c.h.bf16 %v2567
  %v2586 = vunpack.c.l.bf16 %v2568
  %v2587 = vunpack.c.l.bf16 %v2569
  %v2588 = vunpack.c.h.bf16 %v2569
  %v2589 = vunpack.c.l.bf16 %v2570
  %v2590 = vunpack.c.l.bf16 %v2571
  %v2591 = vunpack.c.h.bf16 %v2571
  %v2592 = vunpack.c.l.bf16 %v2572
  %v2593 = vunpack.c.l.bf16 %v2573
  %v2594 = vunpack.c.h.bf16 %v2573
  %v2595 = vunpack.c.l.bf16 %v2574
  %v2596 = vunpack.c.l.bf16 %v2575
  %v2597 = vunpack.c.h.bf16 %v2575
  %v2598 = vunpack.c.l.bf16 %v2576
  %v2599 = vunpack.c.l.bf16 %v2577
  %v2600 = vunpack.c.h.bf16 %v2577
  %v2601 = vunpack.c.l.bf16 %v2578
  %v2602 = vunpack.c.l.bf16 %v2579
  %v2603 = vunpack.c.h.bf16 %v2579
  %v2604 = vunpack.c.l.bf16 %v2580
  %v2606 = vrot.slane %v2519, 2
  %v2607 = vrot.slane %v2519, 3
  %v2608 = vrot.slane %v2519, 4
  %v2609 = vrot.slane %v2519, 5
  %v2610 = vrot.slane %v2519, 6
  %v2611 = vrot.slane %v2519, 7
  %v2612 = vrot.slane %v2519, 1
  %v2621 = vadd.f32 %v2581, %v2606
  %v2622 = vadd.f32 %v2584, %v2607
  %v2623 = vadd.f32 %v2587, %v2608
  %v2624 = vadd.f32 %v2590, %v2609
  %v2625 = vadd.f32 %v2593, %v2610
  %v2626 = vadd.f32 %v2596, %v2611
  %v2627 = vadd.f32 %v2599, %v2519
  %v2628 = vadd.f32 %v2602, %v2612
  %v2629 = vxor.u32 %v2621, 2147483648
  %v2630 = vxor.u32 %v2622, 2147483648
  %v2631 = vxor.u32 %v2623, 2147483648
  %v2632 = vxor.u32 %v2624, 2147483648
  %v2633 = vxor.u32 %v2625, 2147483648
  %v2634 = vxor.u32 %v2626, 2147483648
  %v2635 = vxor.u32 %v2627, 2147483648
  %v2636 = vxor.u32 %v2628, 2147483648
  %v2637 = vmul.f32 %v2629, 1.442695
  %v2638 = vpow.pop %v2637
  %v2639 = vmul.f32 %v2630, 1.442695
  %v2640 = vpow.pop %v2639
  %v2641 = vmul.f32 %v2631, 1.442695
  %v2642 = vpow.pop %v2641
  %v2643 = vmul.f32 %v2632, 1.442695
  %v2644 = vpow.pop %v2643
  %v2645 = vmul.f32 %v2633, 1.442695
  %v2646 = vpow.pop %v2645
  %v2647 = vmul.f32 %v2634, 1.442695
  %v2648 = vpow.pop %v2647
  %v2649 = vmul.f32 %v2635, 1.442695
  %v2650 = vpow.pop %v2649
  %v2651 = vmul.f32 %v2636, 1.442695
  %v2652 = vpow.pop %v2651
  %v2653 = vadd.f32 %v2638, 1.0
  %v2654 = vadd.f32 %v2640, 1.0
  %v2655 = vadd.f32 %v2642, 1.0
  %v2656 = vadd.f32 %v2644, 1.0
  %v2657 = vadd.f32 %v2646, 1.0
  %v2658 = vadd.f32 %v2648, 1.0
  %v2659 = vadd.f32 %v2650, 1.0
  %v2660 = vadd.f32 %v2652, 1.0
  %v2661 = vrcp.pop %v2653
  %v2662 = vmul.f32 1.0, %v2661
  %v2663 = vrcp.pop %v2654
  %v2664 = vmul.f32 1.0, %v2663
  %v2665 = vrcp.pop %v2655
  %v2666 = vmul.f32 1.0, %v2665
  %v2667 = vrcp.pop %v2656
  %v2668 = vmul.f32 1.0, %v2667
  %v2669 = vrcp.pop %v2657
  %v2670 = vmul.f32 1.0, %v2669
  %v2671 = vrcp.pop %v2658
  %v2672 = vmul.f32 1.0, %v2671
  %v2673 = vrcp.pop %v2659
  %v2674 = vmul.f32 1.0, %v2673
  %v2675 = vrcp.pop %v2660
  %v2676 = vmul.f32 1.0, %v2675
  %v2678 = vrot.slane %v2521, 2
  %v2679 = vrot.slane %v2521, 3
  %v2680 = vrot.slane %v2521, 4
  %v2681 = vrot.slane %v2521, 5
  %v2682 = vrot.slane %v2521, 6
  %v2683 = vrot.slane %v2521, 7
  %v2684 = vrot.slane %v2521, 1
  %v2693 = vadd.f32 %v2582, %v2678
  %v2694 = vadd.f32 %v2585, %v2679
  %v2695 = vadd.f32 %v2588, %v2680
  %v2696 = vadd.f32 %v2591, %v2681
  %v2697 = vadd.f32 %v2594, %v2682
  %v2698 = vadd.f32 %v2597, %v2683
  %v2699 = vadd.f32 %v2600, %v2521
  %v2700 = vadd.f32 %v2603, %v2684
  %v2701 = vxor.u32 %v2693, 2147483648
  %v2702 = vxor.u32 %v2694, 2147483648
  %v2703 = vxor.u32 %v2695, 2147483648
  %v2704 = vxor.u32 %v2696, 2147483648
  %v2705 = vxor.u32 %v2697, 2147483648
  %v2706 = vxor.u32 %v2698, 2147483648
  %v2707 = vxor.u32 %v2699, 2147483648
  %v2708 = vxor.u32 %v2700, 2147483648
  %v2709 = vmul.f32 %v2701, 1.442695
  %v2710 = vpow.pop %v2709
  %v2711 = vmul.f32 %v2702, 1.442695
  %v2712 = vpow.pop %v2711
  %v2713 = vmul.f32 %v2703, 1.442695
  %v2714 = vpow.pop %v2713
  %v2715 = vmul.f32 %v2704, 1.442695
  %v2716 = vpow.pop %v2715
  %v2717 = vmul.f32 %v2705, 1.442695
  %v2718 = vpow.pop %v2717
  %v2719 = vmul.f32 %v2706, 1.442695
  %v2720 = vpow.pop %v2719
  %v2721 = vmul.f32 %v2707, 1.442695
  %v2722 = vpow.pop %v2721
  %v2723 = vmul.f32 %v2708, 1.442695
  %v2724 = vpow.pop %v2723
  %v2725 = vadd.f32 %v2710, 1.0
  %v2726 = vadd.f32 %v2712, 1.0
  %v2727 = vadd.f32 %v2714, 1.0
  %v2728 = vadd.f32 %v2716, 1.0
  %v2729 = vadd.f32 %v2718, 1.0
  %v2730 = vadd.f32 %v2720, 1.0
  %v2731 = vadd.f32 %v2722, 1.0
  %v2732 = vadd.f32 %v2724, 1.0
  %v2733 = vrcp.pop %v2725
  %v2734 = vmul.f32 1.0, %v2733
  %v2735 = vrcp.pop %v2726
  %v2736 = vmul.f32 1.0, %v2735
  %v2737 = vrcp.pop %v2727
  %v2738 = vmul.f32 1.0, %v2737
  %v2739 = vrcp.pop %v2728
  %v2740 = vmul.f32 1.0, %v2739
  %v2741 = vrcp.pop %v2729
  %v2742 = vmul.f32 1.0, %v2741
  %v2743 = vrcp.pop %v2730
  %v2744 = vmul.f32 1.0, %v2743
  %v2745 = vrcp.pop %v2731
  %v2746 = vmul.f32 1.0, %v2745
  %v2747 = vrcp.pop %v2732
  %v2748 = vmul.f32 1.0, %v2747
  %v2750 = vrot.slane %v2560, 2
  %v2751 = vrot.slane %v2560, 3
  %v2752 = vrot.slane %v2560, 4
  %v2753 = vrot.slane %v2560, 5
  %v2754 = vrot.slane %v2560, 6
  %v2755 = vrot.slane %v2560, 7
  %v2756 = vrot.slane %v2560, 1
  %v2765 = vmul.f32 %v2662, %v2750
  %v2766 = vmul.f32 %v2664, %v2751
  %v2767 = vmul.f32 %v2666, %v2752
  %v2768 = vmul.f32 %v2668, %v2753
  %v2769 = vmul.f32 %v2670, %v2754
  %v2770 = vmul.f32 %v2672, %v2755
  %v2771 = vmul.f32 %v2674, %v2560
  %v2772 = vmul.f32 %v2676, %v2756
  %v2773 = vadd.f32 %v2583, %v2765
  %v2774 = vadd.f32 %v2586, %v2766
  %v2775 = vadd.f32 %v2589, %v2767
  %v2776 = vadd.f32 %v2592, %v2768
  %v2777 = vadd.f32 %v2595, %v2769
  %v2778 = vadd.f32 %v2598, %v2770
  %v2779 = vadd.f32 %v2601, %v2771
  %v2780 = vadd.f32 %v2604, %v2772
  %v2781 = vtanh.pop %v2773
  %v2782 = vtanh.pop %v2774
  %v2783 = vtanh.pop %v2775
  %v2784 = vtanh.pop %v2776
  %v2785 = vtanh.pop %v2777
  %v2786 = vtanh.pop %v2778
  %v2787 = vtanh.pop %v2779
  %v2788 = vtanh.pop %v2780
  %v2789 = vsub.f32 1.0, %v2734
  %v2790 = vsub.f32 1.0, %v2736
  %v2791 = vsub.f32 1.0, %v2738
  %v2792 = vsub.f32 1.0, %v2740
  %v2793 = vsub.f32 1.0, %v2742
  %v2794 = vsub.f32 1.0, %v2744
  %v2795 = vsub.f32 1.0, %v2746
  %v2796 = vsub.f32 1.0, %v2748
  %v2797 = vmul.f32 %v2789, %v2781
  %v2798 = vmul.f32 %v2790, %v2782
  %v2799 = vmul.f32 %v2791, %v2783
  %v2800 = vmul.f32 %v2792, %v2784
  %v2801 = vmul.f32 %v2793, %v2785
  %v2802 = vmul.f32 %v2794, %v2786
  %v2803 = vmul.f32 %v2795, %v2787
  %v2804 = vmul.f32 %v2796, %v2788
  %v2813 = vrot.slane %v2436, 7
  %v2814 = vrot.slane %v2437, 7
  %v2815 = vrot.slane %v2438, 7
  %v2816 = vrot.slane %v2439, 7
  %v2817 = vrot.slane %v2440, 7
  %v2818 = vrot.slane %v2441, 7
  %v2819 = vrot.slane %v2442, 7
  %v2820 = vrot.slane %v2443, 7
  %v2829 = vmul.f32 %v2734, %v2813
  %v2830 = vmul.f32 %v2736, %v2814
  %v2831 = vmul.f32 %v2738, %v2815
  %v2832 = vmul.f32 %v2740, %v2816
  %v2833 = vmul.f32 %v2742, %v2817
  %v2834 = vmul.f32 %v2744, %v2818
  %v2835 = vmul.f32 %v2746, %v2819
  %v2836 = vmul.f32 %v2748, %v2820
  %v2837 = vadd.f32 %v2797, %v2829
  %v2838 = vadd.f32 %v2798, %v2830
  %v2839 = vadd.f32 %v2799, %v2831
  %v2840 = vadd.f32 %v2800, %v2832
  %v2841 = vadd.f32 %v2801, %v2833
  %v2842 = vadd.f32 %v2802, %v2834
  %v2843 = vadd.f32 %v2803, %v2835
  %v2844 = vadd.f32 %v2804, %v2836
  %v2845 = vpack.c.bf16 %v2837, %v2837
  %v2846 = vpack.c.bf16 %v2838, %v2838
  %v2847 = vpack.c.bf16 %v2839, %v2839
  %v2848 = vpack.c.bf16 %v2840, %v2840
  %v2849 = vpack.c.bf16 %v2841, %v2841
  %v2850 = vpack.c.bf16 %v2842, %v2842
  %v2851 = vpack.c.bf16 %v2843, %v2843
  %v2852 = vpack.c.bf16 %v2844, %v2844
  %v2861 = vunpack.c.l.b16 %v2845
  %v2862 = vunpack.c.l.b16 %v2846
  %v2863 = vunpack.c.l.b16 %v2847
  %v2864 = vunpack.c.l.b16 %v2848
  %v2865 = vunpack.c.l.b16 %v2849
  %v2866 = vunpack.c.l.b16 %v2850
  %v2867 = vunpack.c.l.b16 %v2851
  %v2868 = vunpack.c.l.b16 %v2852
  %v2869 = vrot.slane %v2861, 6
  %v2870 = vrot.slane %v2862, 5
  %v2871 = vsel %vm577, %v2870, %v2869
  %v2872 = vrot.slane %v2863, 4
  %v2873 = vsel %vm580, %v2872, %v2871
  %v2874 = vrot.slane %v2864, 3
  %v2875 = vsel %vm583, %v2874, %v2873
  %v2876 = vrot.slane %v2865, 2
  %v2877 = vsel %vm586, %v2876, %v2875
  %v2878 = vrot.slane %v2866, 1
  %v2879 = vsel %vm589, %v2878, %v2877
  %v2880 = vsel %vm592, %v2867, %v2879
  %v2881 = vrot.slane %v2868, 7
  %v2882 = vsel %vm595, %v2881, %v2880
  %v2883 = vpack.c.b16 %v2882, %v2882
  %2885 = vmatprep.subr.bf16.mxu0 %v173
  %2886 = vmatpush1.bf16.msra.mxu0 %v172
  %2887 = vmatprep.subr.bf16.mxu0 %v170
  %2888 = vmatpush1.bf16.msra.mxu0 %v169
  %2889 = vmatprep.subr.bf16.mxu0 %v167
  %2890 = vmatpush1.bf16.msra.mxu0 %v166
  %2891 = vmatprep.subr.bf16.mxu0 %v164
  %2892 = vmatpush1.bf16.msra.mxu0 %v163
  %2893 = vmatprep.subr.bf16.mxu0 %v161
  %2894 = vmatpush1.bf16.msra.mxu0 %v160
  %2895 = vmatprep.subr.bf16.mxu0 %v158
  %2896 = vmatpush1.bf16.msra.mxu0 %v157
  %2897 = vmatprep.subr.bf16.mxu0 %v155
  %2898 = vmatpush1.bf16.msra.mxu0 %v154
  %2899 = vmatprep.subr.bf16.mxu0 %v152
  %2900 = vmatpush1.bf16.msra.mxu0 %v151
  %2901 = vmatprep.subr.bf16.mxu0 0
  %2902 = vmatpush2.bf16.msra.mxu0 0
  %2903 = vmatprep.subr.bf16.mxu0 0
  %2904 = vmatpush2.bf16.msra.mxu0 0
  %2905 = vmatprep.subr.bf16.mxu0 0
  %2906 = vmatpush2.bf16.msra.mxu0 0
  %2907 = vmatprep.subr.bf16.mxu0 0
  %2908 = vmatpush2.bf16.msra.mxu0 0
  %2909 = vmatprep.subr.bf16.mxu0 0
  %2910 = vmatpush2.bf16.msra.mxu0 0
  %2911 = vmatprep.subr.bf16.mxu0 0
  %2912 = vmatpush2.bf16.msra.mxu0 0
  %2913 = vmatprep.subr.bf16.mxu0 0
  %2914 = vmatpush2.bf16.msra.mxu0 0
  %2915 = vmatprep.subr.bf16.mxu0 0
  %2916 = vmatpush2.bf16.msra.mxu0 0
  %2917 = vmatprep.mubr.bf16.mxu0 0
  %2918 = vmatmul.mubr.bf16.gmra.mxu0 %v2883
  %v2919 = vpop.f32.mrf.mxu0
  %v2920 = vadd.f32 %v57, %v2919
  %v2921 = vpop.f32.mrf.mxu0
  %v2922 = vadd.f32 %v61, %v2921
  %v2923 = vpop.f32.mrf.mxu0
  %v2924 = vpop.f32.mrf.mxu0
  %2925 = vdwg.mxu0
  %2926 = vmatprep.subr.bf16.mxu0 0
  %2927 = vmatpush1.bf16.msra.mxu0 %v174
  %2928 = vmatprep.subr.bf16.mxu0 0
  %2929 = vmatpush1.bf16.msra.mxu0 %v171
  %2930 = vmatprep.subr.bf16.mxu0 0
  %2931 = vmatpush1.bf16.msra.mxu0 %v168
  %2932 = vmatprep.subr.bf16.mxu0 0
  %2933 = vmatpush1.bf16.msra.mxu0 %v165
  %2934 = vmatprep.subr.bf16.mxu0 0
  %2935 = vmatpush1.bf16.msra.mxu0 %v162
  %2936 = vmatprep.subr.bf16.mxu0 0
  %2937 = vmatpush1.bf16.msra.mxu0 %v159
  %2938 = vmatprep.subr.bf16.mxu0 0
  %2939 = vmatpush1.bf16.msra.mxu0 %v156
  %2940 = vmatprep.subr.bf16.mxu0 0
  %2941 = vmatpush1.bf16.msra.mxu0 %v153
  %2942 = vmatprep.subr.bf16.mxu0 0
  %2943 = vmatpush2.bf16.msra.mxu0 0
  %2944 = vmatprep.subr.bf16.mxu0 0
  %2945 = vmatpush2.bf16.msra.mxu0 0
  %2946 = vmatprep.subr.bf16.mxu0 0
  %2947 = vmatpush2.bf16.msra.mxu0 0
  %2948 = vmatprep.subr.bf16.mxu0 0
  %2949 = vmatpush2.bf16.msra.mxu0 0
  %2950 = vmatprep.subr.bf16.mxu0 0
  %2951 = vmatpush2.bf16.msra.mxu0 0
  %2952 = vmatprep.subr.bf16.mxu0 0
  %2953 = vmatpush2.bf16.msra.mxu0 0
  %2954 = vmatprep.subr.bf16.mxu0 0
  %2955 = vmatpush2.bf16.msra.mxu0 0
  %2956 = vmatprep.subr.bf16.mxu0 0
  %2957 = vmatpush2.bf16.msra.mxu0 0
  %2958 = vmatprep.mubr.bf16.mxu0 0
  %2959 = vmatmul.mubr.bf16.gmra.mxu0 %v2883
  %v2960 = vpop.f32.mrf.mxu0
  %v2961 = vadd.f32 %v65, %v2960
  %v2962 = vpop.f32.mrf.mxu0
  %v2963 = vpop.f32.mrf.mxu0
  %v2964 = vpop.f32.mrf.mxu0
  %2965 = vdwg.mxu0
  %v2967 = vrot.slane %v2920, 1
  %v2968 = vrot.slane %v2920, 2
  %v2969 = vrot.slane %v2920, 3
  %v2970 = vrot.slane %v2920, 4
  %v2971 = vrot.slane %v2920, 5
  %v2972 = vrot.slane %v2920, 6
  %v2973 = vrot.slane %v2920, 7
  %v2982 = vadd.f32 %v2581, %v2967
  %v2983 = vadd.f32 %v2584, %v2968
  %v2984 = vadd.f32 %v2587, %v2969
  %v2985 = vadd.f32 %v2590, %v2970
  %v2986 = vadd.f32 %v2593, %v2971
  %v2987 = vadd.f32 %v2596, %v2972
  %v2988 = vadd.f32 %v2599, %v2973
  %v2989 = vadd.f32 %v2602, %v2920
  %v2990 = vxor.u32 %v2982, 2147483648
  %v2991 = vxor.u32 %v2983, 2147483648
  %v2992 = vxor.u32 %v2984, 2147483648
  %v2993 = vxor.u32 %v2985, 2147483648
  %v2994 = vxor.u32 %v2986, 2147483648
  %v2995 = vxor.u32 %v2987, 2147483648
  %v2996 = vxor.u32 %v2988, 2147483648
  %v2997 = vxor.u32 %v2989, 2147483648
  %v2998 = vmul.f32 %v2990, 1.442695
  %v2999 = vpow.pop %v2998
  %v3000 = vmul.f32 %v2991, 1.442695
  %v3001 = vpow.pop %v3000
  %v3002 = vmul.f32 %v2992, 1.442695
  %v3003 = vpow.pop %v3002
  %v3004 = vmul.f32 %v2993, 1.442695
  %v3005 = vpow.pop %v3004
  %v3006 = vmul.f32 %v2994, 1.442695
  %v3007 = vpow.pop %v3006
  %v3008 = vmul.f32 %v2995, 1.442695
  %v3009 = vpow.pop %v3008
  %v3010 = vmul.f32 %v2996, 1.442695
  %v3011 = vpow.pop %v3010
  %v3012 = vmul.f32 %v2997, 1.442695
  %v3013 = vpow.pop %v3012
  %v3014 = vadd.f32 %v2999, 1.0
  %v3015 = vadd.f32 %v3001, 1.0
  %v3016 = vadd.f32 %v3003, 1.0
  %v3017 = vadd.f32 %v3005, 1.0
  %v3018 = vadd.f32 %v3007, 1.0
  %v3019 = vadd.f32 %v3009, 1.0
  %v3020 = vadd.f32 %v3011, 1.0
  %v3021 = vadd.f32 %v3013, 1.0
  %v3022 = vrcp.pop %v3014
  %v3023 = vmul.f32 1.0, %v3022
  %v3024 = vrcp.pop %v3015
  %v3025 = vmul.f32 1.0, %v3024
  %v3026 = vrcp.pop %v3016
  %v3027 = vmul.f32 1.0, %v3026
  %v3028 = vrcp.pop %v3017
  %v3029 = vmul.f32 1.0, %v3028
  %v3030 = vrcp.pop %v3018
  %v3031 = vmul.f32 1.0, %v3030
  %v3032 = vrcp.pop %v3019
  %v3033 = vmul.f32 1.0, %v3032
  %v3034 = vrcp.pop %v3020
  %v3035 = vmul.f32 1.0, %v3034
  %v3036 = vrcp.pop %v3021
  %v3037 = vmul.f32 1.0, %v3036
  %v3039 = vrot.slane %v2922, 1
  %v3040 = vrot.slane %v2922, 2
  %v3041 = vrot.slane %v2922, 3
  %v3042 = vrot.slane %v2922, 4
  %v3043 = vrot.slane %v2922, 5
  %v3044 = vrot.slane %v2922, 6
  %v3045 = vrot.slane %v2922, 7
  %v3054 = vadd.f32 %v2582, %v3039
  %v3055 = vadd.f32 %v2585, %v3040
  %v3056 = vadd.f32 %v2588, %v3041
  %v3057 = vadd.f32 %v2591, %v3042
  %v3058 = vadd.f32 %v2594, %v3043
  %v3059 = vadd.f32 %v2597, %v3044
  %v3060 = vadd.f32 %v2600, %v3045
  %v3061 = vadd.f32 %v2603, %v2922
  %v3062 = vxor.u32 %v3054, 2147483648
  %v3063 = vxor.u32 %v3055, 2147483648
  %v3064 = vxor.u32 %v3056, 2147483648
  %v3065 = vxor.u32 %v3057, 2147483648
  %v3066 = vxor.u32 %v3058, 2147483648
  %v3067 = vxor.u32 %v3059, 2147483648
  %v3068 = vxor.u32 %v3060, 2147483648
  %v3069 = vxor.u32 %v3061, 2147483648
  %v3070 = vmul.f32 %v3062, 1.442695
  %v3071 = vpow.pop %v3070
  %v3072 = vmul.f32 %v3063, 1.442695
  %v3073 = vpow.pop %v3072
  %v3074 = vmul.f32 %v3064, 1.442695
  %v3075 = vpow.pop %v3074
  %v3076 = vmul.f32 %v3065, 1.442695
  %v3077 = vpow.pop %v3076
  %v3078 = vmul.f32 %v3066, 1.442695
  %v3079 = vpow.pop %v3078
  %v3080 = vmul.f32 %v3067, 1.442695
  %v3081 = vpow.pop %v3080
  %v3082 = vmul.f32 %v3068, 1.442695
  %v3083 = vpow.pop %v3082
  %v3084 = vmul.f32 %v3069, 1.442695
  %v3085 = vpow.pop %v3084
  %v3086 = vadd.f32 %v3071, 1.0
  %v3087 = vadd.f32 %v3073, 1.0
  %v3088 = vadd.f32 %v3075, 1.0
  %v3089 = vadd.f32 %v3077, 1.0
  %v3090 = vadd.f32 %v3079, 1.0
  %v3091 = vadd.f32 %v3081, 1.0
  %v3092 = vadd.f32 %v3083, 1.0
  %v3093 = vadd.f32 %v3085, 1.0
  %v3094 = vrcp.pop %v3086
  %v3095 = vmul.f32 1.0, %v3094
  %v3096 = vrcp.pop %v3087
  %v3097 = vmul.f32 1.0, %v3096
  %v3098 = vrcp.pop %v3088
  %v3099 = vmul.f32 1.0, %v3098
  %v3100 = vrcp.pop %v3089
  %v3101 = vmul.f32 1.0, %v3100
  %v3102 = vrcp.pop %v3090
  %v3103 = vmul.f32 1.0, %v3102
  %v3104 = vrcp.pop %v3091
  %v3105 = vmul.f32 1.0, %v3104
  %v3106 = vrcp.pop %v3092
  %v3107 = vmul.f32 1.0, %v3106
  %v3108 = vrcp.pop %v3093
  %v3109 = vmul.f32 1.0, %v3108
  %v3111 = vrot.slane %v2961, 1
  %v3112 = vrot.slane %v2961, 2
  %v3113 = vrot.slane %v2961, 3
  %v3114 = vrot.slane %v2961, 4
  %v3115 = vrot.slane %v2961, 5
  %v3116 = vrot.slane %v2961, 6
  %v3117 = vrot.slane %v2961, 7
  %v3126 = vmul.f32 %v3023, %v3111
  %v3127 = vmul.f32 %v3025, %v3112
  %v3128 = vmul.f32 %v3027, %v3113
  %v3129 = vmul.f32 %v3029, %v3114
  %v3130 = vmul.f32 %v3031, %v3115
  %v3131 = vmul.f32 %v3033, %v3116
  %v3132 = vmul.f32 %v3035, %v3117
  %v3133 = vmul.f32 %v3037, %v2961
  %v3134 = vadd.f32 %v2583, %v3126
  %v3135 = vadd.f32 %v2586, %v3127
  %v3136 = vadd.f32 %v2589, %v3128
  %v3137 = vadd.f32 %v2592, %v3129
  %v3138 = vadd.f32 %v2595, %v3130
  %v3139 = vadd.f32 %v2598, %v3131
  %v3140 = vadd.f32 %v2601, %v3132
  %v3141 = vadd.f32 %v2604, %v3133
  %v3142 = vtanh.pop %v3134
  %v3143 = vtanh.pop %v3135
  %v3144 = vtanh.pop %v3136
  %v3145 = vtanh.pop %v3137
  %v3146 = vtanh.pop %v3138
  %v3147 = vtanh.pop %v3139
  %v3148 = vtanh.pop %v3140
  %v3149 = vtanh.pop %v3141
  %v3150 = vsub.f32 1.0, %v3095
  %v3151 = vsub.f32 1.0, %v3097
  %v3152 = vsub.f32 1.0, %v3099
  %v3153 = vsub.f32 1.0, %v3101
  %v3154 = vsub.f32 1.0, %v3103
  %v3155 = vsub.f32 1.0, %v3105
  %v3156 = vsub.f32 1.0, %v3107
  %v3157 = vsub.f32 1.0, %v3109
  %v3158 = vmul.f32 %v3150, %v3142
  %v3159 = vmul.f32 %v3151, %v3143
  %v3160 = vmul.f32 %v3152, %v3144
  %v3161 = vmul.f32 %v3153, %v3145
  %v3162 = vmul.f32 %v3154, %v3146
  %v3163 = vmul.f32 %v3155, %v3147
  %v3164 = vmul.f32 %v3156, %v3148
  %v3165 = vmul.f32 %v3157, %v3149
  %v3174 = vrot.slane %v2837, 7
  %v3175 = vrot.slane %v2838, 7
  %v3176 = vrot.slane %v2839, 7
  %v3177 = vrot.slane %v2840, 7
  %v3178 = vrot.slane %v2841, 7
  %v3179 = vrot.slane %v2842, 7
  %v3180 = vrot.slane %v2843, 7
  %v3181 = vrot.slane %v2844, 7
  %v3190 = vmul.f32 %v3095, %v3174
  %v3191 = vmul.f32 %v3097, %v3175
  %v3192 = vmul.f32 %v3099, %v3176
  %v3193 = vmul.f32 %v3101, %v3177
  %v3194 = vmul.f32 %v3103, %v3178
  %v3195 = vmul.f32 %v3105, %v3179
  %v3196 = vmul.f32 %v3107, %v3180
  %v3197 = vmul.f32 %v3109, %v3181
  %v3198 = vadd.f32 %v3158, %v3190
  %v3199 = vadd.f32 %v3159, %v3191
  %v3200 = vadd.f32 %v3160, %v3192
  %v3201 = vadd.f32 %v3161, %v3193
  %v3202 = vadd.f32 %v3162, %v3194
  %v3203 = vadd.f32 %v3163, %v3195
  %v3204 = vadd.f32 %v3164, %v3196
  %v3205 = vadd.f32 %v3165, %v3197
  %vm3206 = vcmask 1040384
  %v3207 = vsel %vm3206, %v544, %v912
  %v3208 = vsel %vm3206, %v545, %v913
  %v3209 = vsel %vm3206, %v546, %v914
  %v3210 = vsel %vm3206, %v547, %v915
  %v3211 = vsel %vm3206, %v548, %v916
  %v3212 = vsel %vm3206, %v549, %v917
  %v3213 = vsel %vm3206, %v550, %v918
  %v3214 = vsel %vm3206, %v551, %v919
  %vm3215 = vcmask 1041408
  %v3216 = vsel %vm3215, %v3207, %v1313
  %v3217 = vsel %vm3215, %v3208, %v1314
  %v3218 = vsel %vm3215, %v3209, %v1315
  %v3219 = vsel %vm3215, %v3210, %v1316
  %v3220 = vsel %vm3215, %v3211, %v1317
  %v3221 = vsel %vm3215, %v3212, %v1318
  %v3222 = vsel %vm3215, %v3213, %v1319
  %v3223 = vsel %vm3215, %v3214, %v1320
  %vm3224 = vcmask 1042432
  %v3225 = vsel %vm3224, %v3216, %v1674
  %v3226 = vsel %vm3224, %v3217, %v1675
  %v3227 = vsel %vm3224, %v3218, %v1676
  %v3228 = vsel %vm3224, %v3219, %v1677
  %v3229 = vsel %vm3224, %v3220, %v1678
  %v3230 = vsel %vm3224, %v3221, %v1679
  %v3231 = vsel %vm3224, %v3222, %v1680
  %v3232 = vsel %vm3224, %v3223, %v1681
  %vm3233 = vcmask 1043456
  %v3234 = vsel %vm3233, %v3225, %v2075
  %v3235 = vsel %vm3233, %v3226, %v2076
  %v3236 = vsel %vm3233, %v3227, %v2077
  %v3237 = vsel %vm3233, %v3228, %v2078
  %v3238 = vsel %vm3233, %v3229, %v2079
  %v3239 = vsel %vm3233, %v3230, %v2080
  %v3240 = vsel %vm3233, %v3231, %v2081
  %v3241 = vsel %vm3233, %v3232, %v2082
  %vm3242 = vcmask 1044480
  %v3243 = vsel %vm3242, %v3234, %v2436
  %v3244 = vsel %vm3242, %v3235, %v2437
  %v3245 = vsel %vm3242, %v3236, %v2438
  %v3246 = vsel %vm3242, %v3237, %v2439
  %v3247 = vsel %vm3242, %v3238, %v2440
  %v3248 = vsel %vm3242, %v3239, %v2441
  %v3249 = vsel %vm3242, %v3240, %v2442
  %v3250 = vsel %vm3242, %v3241, %v2443
  %vm3251 = vcmask 1045504
  %v3252 = vsel %vm3251, %v3243, %v2837
  %v3253 = vsel %vm3251, %v3244, %v2838
  %v3254 = vsel %vm3251, %v3245, %v2839
  %v3255 = vsel %vm3251, %v3246, %v2840
  %v3256 = vsel %vm3251, %v3247, %v2841
  %v3257 = vsel %vm3251, %v3248, %v2842
  %v3258 = vsel %vm3251, %v3249, %v2843
  %v3259 = vsel %vm3251, %v3250, %v2844
  %vm3260 = vcmask 1046528
  %v3261 = vsel %vm3260, %v3252, %v3198
  %v3262 = vsel %vm3260, %v3253, %v3199
  %v3263 = vsel %vm3260, %v3254, %v3200
  %v3264 = vsel %vm3260, %v3255, %v3201
  %v3265 = vsel %vm3260, %v3256, %v3202
  %v3266 = vsel %vm3260, %v3257, %v3203
  %v3267 = vsel %vm3260, %v3258, %v3204
  %v3268 = vsel %vm3260, %v3259, %v3205
  %v3269 = vpack.c.bf16 %v3261, %v3261
  %v3270 = vpack.c.bf16 %v3262, %v3262
  %v3271 = vpack.c.bf16 %v3263, %v3263
  %v3272 = vpack.c.bf16 %v3264, %v3264
  %v3273 = vpack.c.bf16 %v3265, %v3265
  %v3274 = vpack.c.bf16 %v3266, %v3266
  %v3275 = vpack.c.bf16 %v3267, %v3267
  %v3276 = vpack.c.bf16 %v3268, %v3268
  %3277 = vst [vmem:[%s3] sm:$0xf] %v3269
  %3278 = vst [vmem:[%s3 + $0x4] sm:$0xf] %v3270
  %3279 = vst [vmem:[%s3 + $0x8] sm:$0xf] %v3271
  %3280 = vst [vmem:[%s3 + $0xc] sm:$0xf] %v3272
  %3281 = vst [vmem:[%s3 + $0x10] sm:$0xf] %v3273
  %3282 = vst [vmem:[%s3 + $0x14] sm:$0xf] %v3274
  %3283 = vst [vmem:[%s3 + $0x18] sm:$0xf] %v3275
  %3284 = vst [vmem:[%s3 + $0x1c] sm:$0xf] %v3276
  %v3293 = vrot.slane %v3199, 7
  %v3294 = vrot.slane %v3200, 6
  %v3295 = vsel %vm577, %v3294, %v3293
  %v3296 = vrot.slane %v3201, 5
  %v3297 = vsel %vm580, %v3296, %v3295
  %v3298 = vrot.slane %v3202, 4
  %v3299 = vsel %vm583, %v3298, %v3297
  %v3300 = vrot.slane %v3203, 3
  %v3301 = vsel %vm586, %v3300, %v3299
  %v3302 = vrot.slane %v3204, 2
  %v3303 = vsel %vm589, %v3302, %v3301
  %v3304 = vrot.slane %v3205, 1
  %v3305 = vsel %vm592, %v3304, %v3303
  %3308 = vst [vmem:[#allocation2 - $0x7] sm:$0x80] %v3198
  %3309 = vst [vmem:[#allocation2 + $0x1] sm:$0x7f] %v3305
  // Predicated region
  $region18: #{_lambda_.4} parent=0 // pred_check
    _
  $region19: #{_lambda_.4} parent=0 // pred_check_branch
    %3311 = sbr.rel (0) target = $region21
  $region20: #{_lambda_.4} parent=0 // pred_region
    _
  $region21: #{_lambda_.4} parent=0 // pred_fallthru
    _
  // Predicated region
  $region22: #{_lambda_.4} parent=0 // pred_check
    _
  $region23: #{_lambda_.4} parent=0 // pred_check_branch
    %3313 = sbr.rel (0) target = $region25
  $region24: #{_lambda_.4} parent=0 // pred_region
    _
  $region25: #{_lambda_.4} parent=0 // pred_fallthru
    _

// kernel: _lambda_.5
$region0: #{_lambda_.5}
  #allocation0 [shape = 'u32[]', space=smem, size = 0x4, offset = 0x4, fixed_abs, tag = 'smem constant byte address 0x4 - core index']
  #allocation1 [shape = 'u32[144,128]{1,0:T(1,128)}', space=vmem, size = 0x12000, scoped, tag = 'internal scratch']
  #allocation2 [shape = 'f32[8,8,1]{2,1,0:T(8,128)}', space=vmem, size = 0x8000, scoped, tag = 'scratch operand']
  #allocation3 [shape = 'f32[8,8,1]{2,1,0:T(8,128)}', space=vmem, size = 0x8000, scoped, tag = 'scratch operand']
  #allocation4 [shape = 'f32[8,8,128]{2,1,0:T(8,128)}', space=vmem, size = 0x8000, scoped, tag = 'scratch operand']
  %s0 = inlined_call_operand.vmem [shape: bf16[8,8,128], index: 0, kind: input, shape index: {}]
  %s1 = inlined_call_operand.vmem [shape: bf16[8,128,16], index: 1, kind: input, shape index: {}]
  %s2 = inlined_call_operand.vmem [shape: bf16[8,16,128], index: 2, kind: input, shape index: {}]
  %s3 = inlined_call_operand.vmem [shape: f32[8,1,16], index: 3, kind: input, shape index: {}]
  %s4 = inlined_call_operand.vmem [shape: bf16[256,128], index: 4, kind: input, shape index: {}]
  %s5 = inlined_call_operand.vmem [shape: f32[1,128], index: 5, kind: input, shape index: {}]
  %s6 = inlined_call_operand.hbm [shape: f32[8,8,128], index: 6, kind: output, shape index: {}]
  %s7 = sld [smem:[#allocation0]]
  $region42: #{_lambda_.5} parent=0
    _
  %s9 = ssub.s32 1, %s7
  %s10 = scalar_select 0, %s9, %s7
  $region1: #{_lambda_.5} parent=0
    #allocation5 [shape = 'u8[32768]{0}', space=vmem, size = 0x8000, scoped, tag = 'output window, operand 0, single buffered']
    #allocation6 [shape = 's32[1]{0}', space=sflag, size = 0x4, scoped, tag = 'scoped memory for _lambda_.5']
    %11 = vsyncpa [#allocation6], 0
    // Predicated region
    $region2: #{_lambda_.5} parent=1 // pred_check
      _
    $region3: #{_lambda_.5} parent=1 // pred_check_branch
      %13 = sbr.rel (0) target = $region5
    $region4: #{_lambda_.5} parent=1 // pred_region
      _
    $region5: #{_lambda_.5} parent=1 // pred_fallthru
      _
    // Predicated region
    $region6: #{_lambda_.5} parent=1 // pred_check
      _
    $region7: #{_lambda_.5} parent=1 // pred_check_branch
      %15 = sbr.rel (0) target = $region9
    $region8: #{_lambda_.5} parent=1 // pred_region
      _
    $region9: #{_lambda_.5} parent=1 // pred_fallthru
      _
    // Predicated region
    $region10: #{_lambda_.5} parent=1 // pred_check
      _
    $region11: #{_lambda_.5} parent=1 // pred_check_branch
      %17 = sbr.rel (0) target = $region13
    $region12: #{_lambda_.5} parent=1 // pred_region
      _
    $region13: #{_lambda_.5} parent=1 // pred_fallthru
      _
    // Predicated region
    $region14: #{_lambda_.5} parent=1 // pred_check
      _
    $region15: #{_lambda_.5} parent=1 // pred_check_branch
      %19 = sbr.rel (0) target = $region17
    $region16: #{_lambda_.5} parent=1 // pred_region
      _
    $region17: #{_lambda_.5} parent=1 // pred_fallthru
      _
    // Predicated region
    $region18: #{_lambda_.5} parent=1 // pred_check
      _
    $region19: #{_lambda_.5} parent=1 // pred_check_branch
      %21 = sbr.rel (0) target = $region21
    $region20: #{_lambda_.5} parent=1 // pred_region
      _
    $region21: #{_lambda_.5} parent=1 // pred_fallthru
      _
    // Predicated region
    $region22: #{_lambda_.5} parent=1 // pred_check
      _
    $region23: #{_lambda_.5} parent=1 // pred_check_branch
      %23 = sbr.rel (0) target = $region25
    $region24: #{_lambda_.5} parent=1 // pred_region
      _
    $region25: #{_lambda_.5} parent=1 // pred_fallthru
      _
    %p25 = scmp.eq.s32.totalorder 0, 0
    // Predicated region
    $region26: #{_lambda_.5} parent=1 // pred_check
      %p26 = pneg %p25
    $region27: #{_lambda_.5} parent=1 // pred_check_branch
      %28 = sbr.rel (%p26) target = $region29
    $region28: #{_lambda_.5} parent=1 // pred_region
      %vm29 = vcmask 7168
      %30 = vst.msk [vmem:[#allocation2] sm:$0xff] %vm29, -inf
      %31 = vst.msk [vmem:[#allocation2 + $0x8] sm:$0xff] %vm29, -inf
      %32 = vst.msk [vmem:[#allocation2 + $0x10] sm:$0xff] %vm29, -inf
      %33 = vst.msk [vmem:[#allocation2 + $0x18] sm:$0xff] %vm29, -inf
      %34 = vst.msk [vmem:[#allocation2 + $0x20] sm:$0xff] %vm29, -inf
      %35 = vst.msk [vmem:[#allocation2 + $0x28] sm:$0xff] %vm29, -inf
      %36 = vst.msk [vmem:[#allocation2 + $0x30] sm:$0xff] %vm29, -inf
      %37 = vst.msk [vmem:[#allocation2 + $0x38] sm:$0xff] %vm29, -inf
      %38 = vst.msk [vmem:[#allocation3] sm:$0xff] %vm29, 0.0
      %39 = vst.msk [vmem:[#allocation3 + $0x8] sm:$0xff] %vm29, 0.0
      %40 = vst.msk [vmem:[#allocation3 + $0x10] sm:$0xff] %vm29, 0.0
      %41 = vst.msk [vmem:[#allocation3 + $0x18] sm:$0xff] %vm29, 0.0
      %42 = vst.msk [vmem:[#allocation3 + $0x20] sm:$0xff] %vm29, 0.0
      %43 = vst.msk [vmem:[#allocation3 + $0x28] sm:$0xff] %vm29, 0.0
      %44 = vst.msk [vmem:[#allocation3 + $0x30] sm:$0xff] %vm29, 0.0
      %45 = vst.msk [vmem:[#allocation3 + $0x38] sm:$0xff] %vm29, 0.0
      %46 = vst [vmem:[#allocation4] sm:$0xff] 0.0
      %47 = vst [vmem:[#allocation4 + $0x8] sm:$0xff] 0.0
      %48 = vst [vmem:[#allocation4 + $0x10] sm:$0xff] 0.0
      %49 = vst [vmem:[#allocation4 + $0x18] sm:$0xff] 0.0
      %50 = vst [vmem:[#allocation4 + $0x20] sm:$0xff] 0.0
      %51 = vst [vmem:[#allocation4 + $0x28] sm:$0xff] 0.0
      %52 = vst [vmem:[#allocation4 + $0x30] sm:$0xff] 0.0
      %53 = vst [vmem:[#allocation4 + $0x38] sm:$0xff] 0.0
    $region29: #{_lambda_.5} parent=1 // pred_fallthru
      _
    %v54 = vld [vmem:[%s0] sm:$0xf]
    %v55 = vld [vmem:[%s0 + $0x4] sm:$0xf]
    %v56 = vld [vmem:[%s0 + $0x8] sm:$0xf]
    %v57 = vld [vmem:[%s0 + $0xc] sm:$0xf]
    %v58 = vld [vmem:[%s0 + $0x10] sm:$0xf]
    %v59 = vld [vmem:[%s0 + $0x14] sm:$0xf]
    %v60 = vld [vmem:[%s0 + $0x18] sm:$0xf]
    %v61 = vld [vmem:[%s0 + $0x1c] sm:$0xf]
    %v62 = vld [vmem:[%s1] sm:$0xf]
    %v63 = vld [vmem:[%s1 + $0x4] sm:$0xf]
    %v64 = vld [vmem:[%s1 + $0x8] sm:$0xf]
    %v65 = vld [vmem:[%s1 + $0xc] sm:$0xf]
    %v66 = vld [vmem:[%s1 + $0x10] sm:$0xf]
    %v67 = vld [vmem:[%s1 + $0x14] sm:$0xf]
    %v68 = vld [vmem:[%s1 + $0x18] sm:$0xf]
    %v69 = vld [vmem:[%s1 + $0x1c] sm:$0xf]
    %v70 = vld [vmem:[%s1 + $0x20] sm:$0xf]
    %v71 = vld [vmem:[%s1 + $0x24] sm:$0xf]
    %v72 = vld [vmem:[%s1 + $0x28] sm:$0xf]
    %v73 = vld [vmem:[%s1 + $0x2c] sm:$0xf]
    %v74 = vld [vmem:[%s1 + $0x30] sm:$0xf]
    %v75 = vld [vmem:[%s1 + $0x34] sm:$0xf]
    %v76 = vld [vmem:[%s1 + $0x38] sm:$0xf]
    %v77 = vld [vmem:[%s1 + $0x3c] sm:$0xf]
    %v78 = vld [vmem:[%s1 + $0x40] sm:$0xf]
    %v79 = vld [vmem:[%s1 + $0x44] sm:$0xf]
    %v80 = vld [vmem:[%s1 + $0x48] sm:$0xf]
    %v81 = vld [vmem:[%s1 + $0x4c] sm:$0xf]
    %v82 = vld [vmem:[%s1 + $0x50] sm:$0xf]
    %v83 = vld [vmem:[%s1 + $0x54] sm:$0xf]
    %v84 = vld [vmem:[%s1 + $0x58] sm:$0xf]
    %v85 = vld [vmem:[%s1 + $0x5c] sm:$0xf]
    %v86 = vld [vmem:[%s1 + $0x60] sm:$0xf]
    %v87 = vld [vmem:[%s1 + $0x64] sm:$0xf]
    %v88 = vld [vmem:[%s1 + $0x68] sm:$0xf]
    %v89 = vld [vmem:[%s1 + $0x6c] sm:$0xf]
    %v90 = vld [vmem:[%s1 + $0x70] sm:$0xf]
    %v91 = vld [vmem:[%s1 + $0x74] sm:$0xf]
    %v92 = vld [vmem:[%s1 + $0x78] sm:$0xf]
    %v93 = vld [vmem:[%s1 + $0x7c] sm:$0xf]
    %v94 = vld [vmem:[%s1 + $0x80] sm:$0xf]
    %v95 = vld [vmem:[%s1 + $0x84] sm:$0xf]
    %v96 = vld [vmem:[%s1 + $0x88] sm:$0xf]
    %v97 = vld [vmem:[%s1 + $0x8c] sm:$0xf]
    %v98 = vld [vmem:[%s1 + $0x90] sm:$0xf]
    %v99 = vld [vmem:[%s1 + $0x94] sm:$0xf]
    %v100 = vld [vmem:[%s1 + $0x98] sm:$0xf]
    %v101 = vld [vmem:[%s1 + $0x9c] sm:$0xf]
    %v102 = vld [vmem:[%s1 + $0xa0] sm:$0xf]
    %v103 = vld [vmem:[%s1 + $0xa4] sm:$0xf]
    %v104 = vld [vmem:[%s1 + $0xa8] sm:$0xf]
    %v105 = vld [vmem:[%s1 + $0xac] sm:$0xf]
    %v106 = vld [vmem:[%s1 + $0xb0] sm:$0xf]
    %v107 = vld [vmem:[%s1 + $0xb4] sm:$0xf]
    %v108 = vld [vmem:[%s1 + $0xb8] sm:$0xf]
    %v109 = vld [vmem:[%s1 + $0xbc] sm:$0xf]
    %v110 = vld [vmem:[%s1 + $0xc0] sm:$0xf]
    %v111 = vld [vmem:[%s1 + $0xc4] sm:$0xf]
    %v112 = vld [vmem:[%s1 + $0xc8] sm:$0xf]
    %v113 = vld [vmem:[%s1 + $0xcc] sm:$0xf]
    %v114 = vld [vmem:[%s1 + $0xd0] sm:$0xf]
    %v115 = vld [vmem:[%s1 + $0xd4] sm:$0xf]
    %v116 = vld [vmem:[%s1 + $0xd8] sm:$0xf]
    %v117 = vld [vmem:[%s1 + $0xdc] sm:$0xf]
    %v118 = vld [vmem:[%s1 + $0xe0] sm:$0xf]
    %v119 = vld [vmem:[%s1 + $0xe4] sm:$0xf]
    %v120 = vld [vmem:[%s1 + $0xe8] sm:$0xf]
    %v121 = vld [vmem:[%s1 + $0xec] sm:$0xf]
    %v122 = vld [vmem:[%s1 + $0xf0] sm:$0xf]
    %v123 = vld [vmem:[%s1 + $0xf4] sm:$0xf]
    %v124 = vld [vmem:[%s1 + $0xf8] sm:$0xf]
    %v125 = vld [vmem:[%s1 + $0xfc] sm:$0xf]
    %v126 = vld [vmem:[%s1 + $0x100] sm:$0xf]
    %v127 = vld [vmem:[%s1 + $0x104] sm:$0xf]
    %v128 = vld [vmem:[%s1 + $0x108] sm:$0xf]
    %v129 = vld [vmem:[%s1 + $0x10c] sm:$0xf]
    %v130 = vld [vmem:[%s1 + $0x110] sm:$0xf]
    %v131 = vld [vmem:[%s1 + $0x114] sm:$0xf]
    %v132 = vld [vmem:[%s1 + $0x118] sm:$0xf]
    %v133 = vld [vmem:[%s1 + $0x11c] sm:$0xf]
    %v134 = vld [vmem:[%s1 + $0x120] sm:$0xf]
    %v135 = vld [vmem:[%s1 + $0x124] sm:$0xf]
    %v136 = vld [vmem:[%s1 + $0x128] sm:$0xf]
    %v137 = vld [vmem:[%s1 + $0x12c] sm:$0xf]
    %v138 = vld [vmem:[%s1 + $0x130] sm:$0xf]
    %v139 = vld [vmem:[%s1 + $0x134] sm:$0xf]
    %v140 = vld [vmem:[%s1 + $0x138] sm:$0xf]
    %v141 = vld [vmem:[%s1 + $0x13c] sm:$0xf]
    %v142 = vld [vmem:[%s1 + $0x140] sm:$0xf]
    %v143 = vld [vmem:[%s1 + $0x144] sm:$0xf]
    %v144 = vld [vmem:[%s1 + $0x148] sm:$0xf]
    %v145 = vld [vmem:[%s1 + $0x14c] sm:$0xf]
    %v146 = vld [vmem:[%s1 + $0x150] sm:$0xf]
    %v147 = vld [vmem:[%s1 + $0x154] sm:$0xf]
    %v148 = vld [vmem:[%s1 + $0x158] sm:$0xf]
    %v149 = vld [vmem:[%s1 + $0x15c] sm:$0xf]
    %v150 = vld [vmem:[%s1 + $0x160] sm:$0xf]
    %v151 = vld [vmem:[%s1 + $0x164] sm:$0xf]
    %v152 = vld [vmem:[%s1 + $0x168] sm:$0xf]
    %v153 = vld [vmem:[%s1 + $0x16c] sm:$0xf]
    %v154 = vld [vmem:[%s1 + $0x170] sm:$0xf]
    %v155 = vld [vmem:[%s1 + $0x174] sm:$0xf]
    %v156 = vld [vmem:[%s1 + $0x178] sm:$0xf]
    %v157 = vld [vmem:[%s1 + $0x17c] sm:$0xf]
    %v158 = vld [vmem:[%s1 + $0x180] sm:$0xf]
    %v159 = vld [vmem:[%s1 + $0x184] sm:$0xf]
    %v160 = vld [vmem:[%s1 + $0x188] sm:$0xf]
    %v161 = vld [vmem:[%s1 + $0x18c] sm:$0xf]
    %v162 = vld [vmem:[%s1 + $0x190] sm:$0xf]
    %v163 = vld [vmem:[%s1 + $0x194] sm:$0xf]
    %v164 = vld [vmem:[%s1 + $0x198] sm:$0xf]
    %v165 = vld [vmem:[%s1 + $0x19c] sm:$0xf]
    %v166 = vld [vmem:[%s1 + $0x1a0] sm:$0xf]
    %v167 = vld [vmem:[%s1 + $0x1a4] sm:$0xf]
    %v168 = vld [vmem:[%s1 + $0x1a8] sm:$0xf]
    %v169 = vld [vmem:[%s1 + $0x1ac] sm:$0xf]
    %v170 = vld [vmem:[%s1 + $0x1b0] sm:$0xf]
    %v171 = vld [vmem:[%s1 + $0x1b4] sm:$0xf]
    %v172 = vld [vmem:[%s1 + $0x1b8] sm:$0xf]
    %v173 = vld [vmem:[%s1 + $0x1bc] sm:$0xf]
    %v174 = vld [vmem:[%s1 + $0x1c0] sm:$0xf]
    %v175 = vld [vmem:[%s1 + $0x1c4] sm:$0xf]
    %v176 = vld [vmem:[%s1 + $0x1c8] sm:$0xf]
    %v177 = vld [vmem:[%s1 + $0x1cc] sm:$0xf]
    %v178 = vld [vmem:[%s1 + $0x1d0] sm:$0xf]
    %v179 = vld [vmem:[%s1 + $0x1d4] sm:$0xf]
    %v180 = vld [vmem:[%s1 + $0x1d8] sm:$0xf]
    %v181 = vld [vmem:[%s1 + $0x1dc] sm:$0xf]
    %v182 = vld [vmem:[%s1 + $0x1e0] sm:$0xf]
    %v183 = vld [vmem:[%s1 + $0x1e4] sm:$0xf]
    %v184 = vld [vmem:[%s1 + $0x1e8] sm:$0xf]
    %v185 = vld [vmem:[%s1 + $0x1ec] sm:$0xf]
    %v186 = vld [vmem:[%s1 + $0x1f0] sm:$0xf]
    %v187 = vld [vmem:[%s1 + $0x1f4] sm:$0xf]
    %v188 = vld [vmem:[%s1 + $0x1f8] sm:$0xf]
    %v189 = vld [vmem:[%s1 + $0x1fc] sm:$0xf]
    %v190 = vld [vmem:[%s2] sm:$0xf]
    %v191 = vld [vmem:[%s2 + $0x4] sm:$0xf]
    %v192 = vld [vmem:[%s2 + $0x8] sm:$0xf]
    %v193 = vld [vmem:[%s2 + $0xc] sm:$0xf]
    %v194 = vld [vmem:[%s2 + $0x10] sm:$0xf]
    %v195 = vld [vmem:[%s2 + $0x14] sm:$0xf]
    %v196 = vld [vmem:[%s2 + $0x18] sm:$0xf]
    %v197 = vld [vmem:[%s2 + $0x1c] sm:$0xf]
    %v198 = vld [vmem:[%s2 + $0x20] sm:$0xf]
    %v199 = vld [vmem:[%s2 + $0x24] sm:$0xf]
    %v200 = vld [vmem:[%s2 + $0x28] sm:$0xf]
    %v201 = vld [vmem:[%s2 + $0x2c] sm:$0xf]
    %v202 = vld [vmem:[%s2 + $0x30] sm:$0xf]
    %v203 = vld [vmem:[%s2 + $0x34] sm:$0xf]
    %v204 = vld [vmem:[%s2 + $0x38] sm:$0xf]
    %v205 = vld [vmem:[%s2 + $0x3c] sm:$0xf]
    %v206 = vld [vmem:[%s3] sm:$0x1]
    %v207 = vld [vmem:[%s3 + $0x1] sm:$0x1]
    %v208 = vld [vmem:[%s3 + $0x2] sm:$0x1]
    %v209 = vld [vmem:[%s3 + $0x3] sm:$0x1]
    %v210 = vld [vmem:[%s3 + $0x4] sm:$0x1]
    %v211 = vld [vmem:[%s3 + $0x5] sm:$0x1]
    %v212 = vld [vmem:[%s3 + $0x6] sm:$0x1]
    %v213 = vld [vmem:[%s3 + $0x7] sm:$0x1]
    %v230 = vunpack.c.l.b16 %v62
    %v231 = vunpack.c.l.b16 %v63
    %v232 = vunpack.c.l.b16 %v64
    %v233 = vunpack.c.l.b16 %v65
    %v234 = vunpack.c.l.b16 %v66
    %v235 = vunpack.c.l.b16 %v67
    %v236 = vunpack.c.l.b16 %v68
    %v237 = vunpack.c.l.b16 %v69
    %v238 = vunpack.c.l.b16 %v70
    %v239 = vunpack.c.l.b16 %v71
    %v240 = vunpack.c.l.b16 %v72
    %v241 = vunpack.c.l.b16 %v73
    %v242 = vunpack.c.l.b16 %v74
    %v243 = vunpack.c.l.b16 %v75
    %v244 = vunpack.c.l.b16 %v76
    %v245 = vunpack.c.l.b16 %v77
    %v246 = vpack.c.b16 %v231, %v230
    %v247 = vpack.c.b16 %v233, %v232
    %v248 = vpack.c.b16 %v235, %v234
    %v249 = vpack.c.b16 %v237, %v236
    %v250 = vpack.c.b16 %v239, %v238
    %v251 = vpack.c.b16 %v241, %v240
    %v252 = vpack.c.b16 %v243, %v242
    %v253 = vpack.c.b16 %v245, %v244
    %262 = vmatprep.subr.bf16.mxu0 0
    %263 = vmatpush1.bf16.msra.mxu0 %v253
    %264 = vmatprep.subr.bf16.mxu0 0
    %265 = vmatpush1.bf16.msra.mxu0 %v252
    %266 = vmatprep.subr.bf16.mxu0 0
    %267 = vmatpush1.bf16.msra.mxu0 %v251
    %268 = vmatprep.subr.bf16.mxu0 0
    %269 = vmatpush1.bf16.msra.mxu0 %v250
    %270 = vmatprep.subr.bf16.mxu0 0
    %271 = vmatpush1.bf16.msra.mxu0 %v249
    %272 = vmatprep.subr.bf16.mxu0 0
    %273 = vmatpush1.bf16.msra.mxu0 %v248
    %274 = vmatprep.subr.bf16.mxu0 0
    %275 = vmatpush1.bf16.msra.mxu0 %v247
    %276 = vmatprep.subr.bf16.mxu0 0
    %277 = vmatpush1.bf16.msra.mxu0 %v246
    %278 = vmatprep.subr.bf16.mxu0 0
    %279 = vmatpush2.bf16.msra.mxu0 0
    %280 = vmatprep.subr.bf16.mxu0 0
    %281 = vmatpush2.bf16.msra.mxu0 0
    %282 = vmatprep.subr.bf16.mxu0 0
    %283 = vmatpush2.bf16.msra.mxu0 0
    %284 = vmatprep.subr.bf16.mxu0 0
    %285 = vmatpush2.bf16.msra.mxu0 0
    %286 = vmatprep.subr.bf16.mxu0 0
    %287 = vmatpush2.bf16.msra.mxu0 0
    %288 = vmatprep.subr.bf16.mxu0 0
    %289 = vmatpush2.bf16.msra.mxu0 0
    %290 = vmatprep.subr.bf16.mxu0 0
    %291 = vmatpush2.bf16.msra.mxu0 0
    %292 = vmatprep.subr.bf16.mxu0 0
    %293 = vmatpush2.bf16.msra.mxu0 0
    %294 = vmatprep.mubr.bf16.mxu0 0
    %295 = vmatmul.mubr.bf16.gmra.mxu0 %v54
    %v296 = vpop.f32.mrf.mxu0
    %v297 = vadd.f32 0.0, %v296
    %v298 = vpop.f32.mrf.mxu0
    %v299 = vpop.f32.mrf.mxu0
    %v300 = vpop.f32.mrf.mxu0
    %301 = vdwg.mxu0
    %v318 = vunpack.c.l.b16 %v78
    %v319 = vunpack.c.l.b16 %v79
    %v320 = vunpack.c.l.b16 %v80
    %v321 = vunpack.c.l.b16 %v81
    %v322 = vunpack.c.l.b16 %v82
    %v323 = vunpack.c.l.b16 %v83
    %v324 = vunpack.c.l.b16 %v84
    %v325 = vunpack.c.l.b16 %v85
    %v326 = vunpack.c.l.b16 %v86
    %v327 = vunpack.c.l.b16 %v87
    %v328 = vunpack.c.l.b16 %v88
    %v329 = vunpack.c.l.b16 %v89
    %v330 = vunpack.c.l.b16 %v90
    %v331 = vunpack.c.l.b16 %v91
    %v332 = vunpack.c.l.b16 %v92
    %v333 = vunpack.c.l.b16 %v93
    %v334 = vpack.c.b16 %v319, %v318
    %v335 = vpack.c.b16 %v321, %v320
    %v336 = vpack.c.b16 %v323, %v322
    %v337 = vpack.c.b16 %v325, %v324
    %v338 = vpack.c.b16 %v327, %v326
    %v339 = vpack.c.b16 %v329, %v328
    %v340 = vpack.c.b16 %v331, %v330
    %v341 = vpack.c.b16 %v333, %v332
    %350 = vmatprep.subr.bf16.mxu0 0
    %351 = vmatpush1.bf16.msra.mxu0 %v341
    %352 = vmatprep.subr.bf16.mxu0 0
    %353 = vmatpush1.bf16.msra.mxu0 %v340
    %354 = vmatprep.subr.bf16.mxu0 0
    %355 = vmatpush1.bf16.msra.mxu0 %v339
    %356 = vmatprep.subr.bf16.mxu0 0
    %357 = vmatpush1.bf16.msra.mxu0 %v338
    %358 = vmatprep.subr.bf16.mxu0 0
    %359 = vmatpush1.bf16.msra.mxu0 %v337
    %360 = vmatprep.subr.bf16.mxu0 0
    %361 = vmatpush1.bf16.msra.mxu0 %v336
    %362 = vmatprep.subr.bf16.mxu0 0
    %363 = vmatpush1.bf16.msra.mxu0 %v335
    %364 = vmatprep.subr.bf16.mxu0 0
    %365 = vmatpush1.bf16.msra.mxu0 %v334
    %366 = vmatprep.subr.bf16.mxu0 0
    %367 = vmatpush2.bf16.msra.mxu0 0
    %368 = vmatprep.subr.bf16.mxu0 0
    %369 = vmatpush2.bf16.msra.mxu0 0
    %370 = vmatprep.subr.bf16.mxu0 0
    %371 = vmatpush2.bf16.msra.mxu0 0
    %372 = vmatprep.subr.bf16.mxu0 0
    %373 = vmatpush2.bf16.msra.mxu0 0
    %374 = vmatprep.subr.bf16.mxu0 0
    %375 = vmatpush2.bf16.msra.mxu0 0
    %376 = vmatprep.subr.bf16.mxu0 0
    %377 = vmatpush2.bf16.msra.mxu0 0
    %378 = vmatprep.subr.bf16.mxu0 0
    %379 = vmatpush2.bf16.msra.mxu0 0
    %380 = vmatprep.subr.bf16.mxu0 0
    %381 = vmatpush2.bf16.msra.mxu0 0
    %382 = vmatprep.mubr.bf16.mxu0 0
    %383 = vmatmul.mubr.bf16.gmra.mxu0 %v55
    %v384 = vpop.f32.mrf.mxu0
    %v385 = vadd.f32 0.0, %v384
    %v386 = vpop.f32.mrf.mxu0
    %v387 = vpop.f32.mrf.mxu0
    %v388 = vpop.f32.mrf.mxu0
    %389 = vdwg.mxu0
    %v406 = vunpack.c.l.b16 %v94
    %v407 = vunpack.c.l.b16 %v95
    %v408 = vunpack.c.l.b16 %v96
    %v409 = vunpack.c.l.b16 %v97
    %v410 = vunpack.c.l.b16 %v98
    %v411 = vunpack.c.l.b16 %v99
    %v412 = vunpack.c.l.b16 %v100
    %v413 = vunpack.c.l.b16 %v101
    %v414 = vunpack.c.l.b16 %v102
    %v415 = vunpack.c.l.b16 %v103
    %v416 = vunpack.c.l.b16 %v104
    %v417 = vunpack.c.l.b16 %v105
    %v418 = vunpack.c.l.b16 %v106
    %v419 = vunpack.c.l.b16 %v107
    %v420 = vunpack.c.l.b16 %v108
    %v421 = vunpack.c.l.b16 %v109
    %v422 = vpack.c.b16 %v407, %v406
    %v423 = vpack.c.b16 %v409, %v408
    %v424 = vpack.c.b16 %v411, %v410
    %v425 = vpack.c.b16 %v413, %v412
    %v426 = vpack.c.b16 %v415, %v414
    %v427 = vpack.c.b16 %v417, %v416
    %v428 = vpack.c.b16 %v419, %v418
    %v429 = vpack.c.b16 %v421, %v420
    %438 = vmatprep.subr.bf16.mxu0 0
    %439 = vmatpush1.bf16.msra.mxu0 %v429
    %440 = vmatprep.subr.bf16.mxu0 0
    %441 = vmatpush1.bf16.msra.mxu0 %v428
    %442 = vmatprep.subr.bf16.mxu0 0
    %443 = vmatpush1.bf16.msra.mxu0 %v427
    %444 = vmatprep.subr.bf16.mxu0 0
    %445 = vmatpush1.bf16.msra.mxu0 %v426
    %446 = vmatprep.subr.bf16.mxu0 0
    %447 = vmatpush1.bf16.msra.mxu0 %v425
    %448 = vmatprep.subr.bf16.mxu0 0
    %449 = vmatpush1.bf16.msra.mxu0 %v424
    %450 = vmatprep.subr.bf16.mxu0 0
    %451 = vmatpush1.bf16.msra.mxu0 %v423
    %452 = vmatprep.subr.bf16.mxu0 0
    %453 = vmatpush1.bf16.msra.mxu0 %v422
    %454 = vmatprep.subr.bf16.mxu0 0
    %455 = vmatpush2.bf16.msra.mxu0 0
    %456 = vmatprep.subr.bf16.mxu0 0
    %457 = vmatpush2.bf16.msra.mxu0 0
    %458 = vmatprep.subr.bf16.mxu0 0
    %459 = vmatpush2.bf16.msra.mxu0 0
    %460 = vmatprep.subr.bf16.mxu0 0
    %461 = vmatpush2.bf16.msra.mxu0 0
    %462 = vmatprep.subr.bf16.mxu0 0
    %463 = vmatpush2.bf16.msra.mxu0 0
    %464 = vmatprep.subr.bf16.mxu0 0
    %465 = vmatpush2.bf16.msra.mxu0 0
    %466 = vmatprep.subr.bf16.mxu0 0
    %467 = vmatpush2.bf16.msra.mxu0 0
    %468 = vmatprep.subr.bf16.mxu0 0
    %469 = vmatpush2.bf16.msra.mxu0 0
    %470 = vmatprep.mubr.bf16.mxu0 0
    %471 = vmatmul.mubr.bf16.gmra.mxu0 %v56
    %v472 = vpop.f32.mrf.mxu0
    %v473 = vadd.f32 0.0, %v472
    %v474 = vpop.f32.mrf.mxu0
    %v475 = vpop.f32.mrf.mxu0
    %v476 = vpop.f32.mrf.mxu0
    %477 = vdwg.mxu0
    %v494 = vunpack.c.l.b16 %v110
    %v495 = vunpack.c.l.b16 %v111
    %v496 = vunpack.c.l.b16 %v112
    %v497 = vunpack.c.l.b16 %v113
    %v498 = vunpack.c.l.b16 %v114
    %v499 = vunpack.c.l.b16 %v115
    %v500 = vunpack.c.l.b16 %v116
    %v501 = vunpack.c.l.b16 %v117
    %v502 = vunpack.c.l.b16 %v118
    %v503 = vunpack.c.l.b16 %v119
    %v504 = vunpack.c.l.b16 %v120
    %v505 = vunpack.c.l.b16 %v121
    %v506 = vunpack.c.l.b16 %v122
    %v507 = vunpack.c.l.b16 %v123
    %v508 = vunpack.c.l.b16 %v124
    %v509 = vunpack.c.l.b16 %v125
    %v510 = vpack.c.b16 %v495, %v494
    %v511 = vpack.c.b16 %v497, %v496
    %v512 = vpack.c.b16 %v499, %v498
    %v513 = vpack.c.b16 %v501, %v500
    %v514 = vpack.c.b16 %v503, %v502
    %v515 = vpack.c.b16 %v505, %v504
    %v516 = vpack.c.b16 %v507, %v506
    %v517 = vpack.c.b16 %v509, %v508
    %526 = vmatprep.subr.bf16.mxu0 0
    %527 = vmatpush1.bf16.msra.mxu0 %v517
    %528 = vmatprep.subr.bf16.mxu0 0
    %529 = vmatpush1.bf16.msra.mxu0 %v516
    %530 = vmatprep.subr.bf16.mxu0 0
    %531 = vmatpush1.bf16.msra.mxu0 %v515
    %532 = vmatprep.subr.bf16.mxu0 0
    %533 = vmatpush1.bf16.msra.mxu0 %v514
    %534 = vmatprep.subr.bf16.mxu0 0
    %535 = vmatpush1.bf16.msra.mxu0 %v513
    %536 = vmatprep.subr.bf16.mxu0 0
    %537 = vmatpush1.bf16.msra.mxu0 %v512
    %538 = vmatprep.subr.bf16.mxu0 0
    %539 = vmatpush1.bf16.msra.mxu0 %v511
    %540 = vmatprep.subr.bf16.mxu0 0
    %541 = vmatpush1.bf16.msra.mxu0 %v510
    %542 = vmatprep.subr.bf16.mxu0 0
    %543 = vmatpush2.bf16.msra.mxu0 0
    %544 = vmatprep.subr.bf16.mxu0 0
    %545 = vmatpush2.bf16.msra.mxu0 0
    %546 = vmatprep.subr.bf16.mxu0 0
    %547 = vmatpush2.bf16.msra.mxu0 0
    %548 = vmatprep.subr.bf16.mxu0 0
    %549 = vmatpush2.bf16.msra.mxu0 0
    %550 = vmatprep.subr.bf16.mxu0 0
    %551 = vmatpush2.bf16.msra.mxu0 0
    %552 = vmatprep.subr.bf16.mxu0 0
    %553 = vmatpush2.bf16.msra.mxu0 0
    %554 = vmatprep.subr.bf16.mxu0 0
    %555 = vmatpush2.bf16.msra.mxu0 0
    %556 = vmatprep.subr.bf16.mxu0 0
    %557 = vmatpush2.bf16.msra.mxu0 0
    %558 = vmatprep.mubr.bf16.mxu0 0
    %559 = vmatmul.mubr.bf16.gmra.mxu0 %v57
    %v560 = vpop.f32.mrf.mxu0
    %v561 = vadd.f32 0.0, %v560
    %v562 = vpop.f32.mrf.mxu0
    %v563 = vpop.f32.mrf.mxu0
    %v564 = vpop.f32.mrf.mxu0
    %565 = vdwg.mxu0
    %v582 = vunpack.c.l.b16 %v126
    %v583 = vunpack.c.l.b16 %v127
    %v584 = vunpack.c.l.b16 %v128
    %v585 = vunpack.c.l.b16 %v129
    %v586 = vunpack.c.l.b16 %v130
    %v587 = vunpack.c.l.b16 %v131
    %v588 = vunpack.c.l.b16 %v132
    %v589 = vunpack.c.l.b16 %v133
    %v590 = vunpack.c.l.b16 %v134
    %v591 = vunpack.c.l.b16 %v135
    %v592 = vunpack.c.l.b16 %v136
    %v593 = vunpack.c.l.b16 %v137
    %v594 = vunpack.c.l.b16 %v138
    %v595 = vunpack.c.l.b16 %v139
    %v596 = vunpack.c.l.b16 %v140
    %v597 = vunpack.c.l.b16 %v141
    %v598 = vpack.c.b16 %v583, %v582
    %v599 = vpack.c.b16 %v585, %v584
    %v600 = vpack.c.b16 %v587, %v586
    %v601 = vpack.c.b16 %v589, %v588
    %v602 = vpack.c.b16 %v591, %v590
    %v603 = vpack.c.b16 %v593, %v592
    %v604 = vpack.c.b16 %v595, %v594
    %v605 = vpack.c.b16 %v597, %v596
    %614 = vmatprep.subr.bf16.mxu0 0
    %615 = vmatpush1.bf16.msra.mxu0 %v605
    %616 = vmatprep.subr.bf16.mxu0 0
    %617 = vmatpush1.bf16.msra.mxu0 %v604
    %618 = vmatprep.subr.bf16.mxu0 0
    %619 = vmatpush1.bf16.msra.mxu0 %v603
    %620 = vmatprep.subr.bf16.mxu0 0
    %621 = vmatpush1.bf16.msra.mxu0 %v602
    %622 = vmatprep.subr.bf16.mxu0 0
    %623 = vmatpush1.bf16.msra.mxu0 %v601
    %624 = vmatprep.subr.bf16.mxu0 0
    %625 = vmatpush1.bf16.msra.mxu0 %v600
    %626 = vmatprep.subr.bf16.mxu0 0
    %627 = vmatpush1.bf16.msra.mxu0 %v599
    %628 = vmatprep.subr.bf16.mxu0 0
    %629 = vmatpush1.bf16.msra.mxu0 %v598
    %630 = vmatprep.subr.bf16.mxu0 0
    %631 = vmatpush2.bf16.msra.mxu0 0
    %632 = vmatprep.subr.bf16.mxu0 0
    %633 = vmatpush2.bf16.msra.mxu0 0
    %634 = vmatprep.subr.bf16.mxu0 0
    %635 = vmatpush2.bf16.msra.mxu0 0
    %636 = vmatprep.subr.bf16.mxu0 0
    %637 = vmatpush2.bf16.msra.mxu0 0
    %638 = vmatprep.subr.bf16.mxu0 0
    %639 = vmatpush2.bf16.msra.mxu0 0
    %640 = vmatprep.subr.bf16.mxu0 0
    %641 = vmatpush2.bf16.msra.mxu0 0
    %642 = vmatprep.subr.bf16.mxu0 0
    %643 = vmatpush2.bf16.msra.mxu0 0
    %644 = vmatprep.subr.bf16.mxu0 0
    %645 = vmatpush2.bf16.msra.mxu0 0
    %646 = vmatprep.mubr.bf16.mxu0 0
    %647 = vmatmul.mubr.bf16.gmra.mxu0 %v58
    %v648 = vpop.f32.mrf.mxu0
    %v649 = vadd.f32 0.0, %v648
    %v650 = vpop.f32.mrf.mxu0
    %v651 = vpop.f32.mrf.mxu0
    %v652 = vpop.f32.mrf.mxu0
    %653 = vdwg.mxu0
    %v670 = vunpack.c.l.b16 %v142
    %v671 = vunpack.c.l.b16 %v143
    %v672 = vunpack.c.l.b16 %v144
    %v673 = vunpack.c.l.b16 %v145
    %v674 = vunpack.c.l.b16 %v146
    %v675 = vunpack.c.l.b16 %v147
    %v676 = vunpack.c.l.b16 %v148
    %v677 = vunpack.c.l.b16 %v149
    %v678 = vunpack.c.l.b16 %v150
    %v679 = vunpack.c.l.b16 %v151
    %v680 = vunpack.c.l.b16 %v152
    %v681 = vunpack.c.l.b16 %v153
    %v682 = vunpack.c.l.b16 %v154
    %v683 = vunpack.c.l.b16 %v155
    %v684 = vunpack.c.l.b16 %v156
    %v685 = vunpack.c.l.b16 %v157
    %v686 = vpack.c.b16 %v671, %v670
    %v687 = vpack.c.b16 %v673, %v672
    %v688 = vpack.c.b16 %v675, %v674
    %v689 = vpack.c.b16 %v677, %v676
    %v690 = vpack.c.b16 %v679, %v678
    %v691 = vpack.c.b16 %v681, %v680
    %v692 = vpack.c.b16 %v683, %v682
    %v693 = vpack.c.b16 %v685, %v684
    %702 = vmatprep.subr.bf16.mxu0 0
    %703 = vmatpush1.bf16.msra.mxu0 %v693
    %704 = vmatprep.subr.bf16.mxu0 0
    %705 = vmatpush1.bf16.msra.mxu0 %v692
    %706 = vmatprep.subr.bf16.mxu0 0
    %707 = vmatpush1.bf16.msra.mxu0 %v691
    %708 = vmatprep.subr.bf16.mxu0 0
    %709 = vmatpush1.bf16.msra.mxu0 %v690
    %710 = vmatprep.subr.bf16.mxu0 0
    %711 = vmatpush1.bf16.msra.mxu0 %v689
    %712 = vmatprep.subr.bf16.mxu0 0
    %713 = vmatpush1.bf16.msra.mxu0 %v688
    %714 = vmatprep.subr.bf16.mxu0 0
    %715 = vmatpush1.bf16.msra.mxu0 %v687
    %716 = vmatprep.subr.bf16.mxu0 0
    %717 = vmatpush1.bf16.msra.mxu0 %v686
    %718 = vmatprep.subr.bf16.mxu0 0
    %719 = vmatpush2.bf16.msra.mxu0 0
    %720 = vmatprep.subr.bf16.mxu0 0
    %721 = vmatpush2.bf16.msra.mxu0 0
    %722 = vmatprep.subr.bf16.mxu0 0
    %723 = vmatpush2.bf16.msra.mxu0 0
    %724 = vmatprep.subr.bf16.mxu0 0
    %725 = vmatpush2.bf16.msra.mxu0 0
    %726 = vmatprep.subr.bf16.mxu0 0
    %727 = vmatpush2.bf16.msra.mxu0 0
    %728 = vmatprep.subr.bf16.mxu0 0
    %729 = vmatpush2.bf16.msra.mxu0 0
    %730 = vmatprep.subr.bf16.mxu0 0
    %731 = vmatpush2.bf16.msra.mxu0 0
    %732 = vmatprep.subr.bf16.mxu0 0
    %733 = vmatpush2.bf16.msra.mxu0 0
    %734 = vmatprep.mubr.bf16.mxu0 0
    %735 = vmatmul.mubr.bf16.gmra.mxu0 %v59
    %v736 = vpop.f32.mrf.mxu0
    %v737 = vadd.f32 0.0, %v736
    %v738 = vpop.f32.mrf.mxu0
    %v739 = vpop.f32.mrf.mxu0
    %v740 = vpop.f32.mrf.mxu0
    %741 = vdwg.mxu0
    %v758 = vunpack.c.l.b16 %v158
    %v759 = vunpack.c.l.b16 %v159
    %v760 = vunpack.c.l.b16 %v160
    %v761 = vunpack.c.l.b16 %v161
    %v762 = vunpack.c.l.b16 %v162
    %v763 = vunpack.c.l.b16 %v163
    %v764 = vunpack.c.l.b16 %v164
    %v765 = vunpack.c.l.b16 %v165
    %v766 = vunpack.c.l.b16 %v166
    %v767 = vunpack.c.l.b16 %v167
    %v768 = vunpack.c.l.b16 %v168
    %v769 = vunpack.c.l.b16 %v169
    %v770 = vunpack.c.l.b16 %v170
    %v771 = vunpack.c.l.b16 %v171
    %v772 = vunpack.c.l.b16 %v172
    %v773 = vunpack.c.l.b16 %v173
    %v774 = vpack.c.b16 %v759, %v758
    %v775 = vpack.c.b16 %v761, %v760
    %v776 = vpack.c.b16 %v763, %v762
    %v777 = vpack.c.b16 %v765, %v764
    %v778 = vpack.c.b16 %v767, %v766
    %v779 = vpack.c.b16 %v769, %v768
    %v780 = vpack.c.b16 %v771, %v770
    %v781 = vpack.c.b16 %v773, %v772
    %790 = vmatprep.subr.bf16.mxu0 0
    %791 = vmatpush1.bf16.msra.mxu0 %v781
    %792 = vmatprep.subr.bf16.mxu0 0
    %793 = vmatpush1.bf16.msra.mxu0 %v780
    %794 = vmatprep.subr.bf16.mxu0 0
    %795 = vmatpush1.bf16.msra.mxu0 %v779
    %796 = vmatprep.subr.bf16.mxu0 0
    %797 = vmatpush1.bf16.msra.mxu0 %v778
    %798 = vmatprep.subr.bf16.mxu0 0
    %799 = vmatpush1.bf16.msra.mxu0 %v777
    %800 = vmatprep.subr.bf16.mxu0 0
    %801 = vmatpush1.bf16.msra.mxu0 %v776
    %802 = vmatprep.subr.bf16.mxu0 0
    %803 = vmatpush1.bf16.msra.mxu0 %v775
    %804 = vmatprep.subr.bf16.mxu0 0
    %805 = vmatpush1.bf16.msra.mxu0 %v774
    %806 = vmatprep.subr.bf16.mxu0 0
    %807 = vmatpush2.bf16.msra.mxu0 0
    %808 = vmatprep.subr.bf16.mxu0 0
    %809 = vmatpush2.bf16.msra.mxu0 0
    %810 = vmatprep.subr.bf16.mxu0 0
    %811 = vmatpush2.bf16.msra.mxu0 0
    %812 = vmatprep.subr.bf16.mxu0 0
    %813 = vmatpush2.bf16.msra.mxu0 0
    %814 = vmatprep.subr.bf16.mxu0 0
    %815 = vmatpush2.bf16.msra.mxu0 0
    %816 = vmatprep.subr.bf16.mxu0 0
    %817 = vmatpush2.bf16.msra.mxu0 0
    %818 = vmatprep.subr.bf16.mxu0 0
    %819 = vmatpush2.bf16.msra.mxu0 0
    %820 = vmatprep.subr.bf16.mxu0 0
    %821 = vmatpush2.bf16.msra.mxu0 0
    %822 = vmatprep.mubr.bf16.mxu0 0
    %823 = vmatmul.mubr.bf16.gmra.mxu0 %v60
    %v824 = vpop.f32.mrf.mxu0
    %v825 = vadd.f32 0.0, %v824
    %v826 = vpop.f32.mrf.mxu0
    %v827 = vpop.f32.mrf.mxu0
    %v828 = vpop.f32.mrf.mxu0
    %829 = vdwg.mxu0
    %v846 = vunpack.c.l.b16 %v174
    %v847 = vunpack.c.l.b16 %v175
    %v848 = vunpack.c.l.b16 %v176
    %v849 = vunpack.c.l.b16 %v177
    %v850 = vunpack.c.l.b16 %v178
    %v851 = vunpack.c.l.b16 %v179
    %v852 = vunpack.c.l.b16 %v180
    %v853 = vunpack.c.l.b16 %v181
    %v854 = vunpack.c.l.b16 %v182
    %v855 = vunpack.c.l.b16 %v183
    %v856 = vunpack.c.l.b16 %v184
    %v857 = vunpack.c.l.b16 %v185
    %v858 = vunpack.c.l.b16 %v186
    %v859 = vunpack.c.l.b16 %v187
    %v860 = vunpack.c.l.b16 %v188
    %v861 = vunpack.c.l.b16 %v189
    %v862 = vpack.c.b16 %v847, %v846
    %v863 = vpack.c.b16 %v849, %v848
    %v864 = vpack.c.b16 %v851, %v850
    %v865 = vpack.c.b16 %v853, %v852
    %v866 = vpack.c.b16 %v855, %v854
    %v867 = vpack.c.b16 %v857, %v856
    %v868 = vpack.c.b16 %v859, %v858
    %v869 = vpack.c.b16 %v861, %v860
    %878 = vmatprep.subr.bf16.mxu0 0
    %879 = vmatpush1.bf16.msra.mxu0 %v869
    %880 = vmatprep.subr.bf16.mxu0 0
    %881 = vmatpush1.bf16.msra.mxu0 %v868
    %882 = vmatprep.subr.bf16.mxu0 0
    %883 = vmatpush1.bf16.msra.mxu0 %v867
    %884 = vmatprep.subr.bf16.mxu0 0
    %885 = vmatpush1.bf16.msra.mxu0 %v866
    %886 = vmatprep.subr.bf16.mxu0 0
    %887 = vmatpush1.bf16.msra.mxu0 %v865
    %888 = vmatprep.subr.bf16.mxu0 0
    %889 = vmatpush1.bf16.msra.mxu0 %v864
    %890 = vmatprep.subr.bf16.mxu0 0
    %891 = vmatpush1.bf16.msra.mxu0 %v863
    %892 = vmatprep.subr.bf16.mxu0 0
    %893 = vmatpush1.bf16.msra.mxu0 %v862
    %894 = vmatprep.subr.bf16.mxu0 0
    %895 = vmatpush2.bf16.msra.mxu0 0
    %896 = vmatprep.subr.bf16.mxu0 0
    %897 = vmatpush2.bf16.msra.mxu0 0
    %898 = vmatprep.subr.bf16.mxu0 0
    %899 = vmatpush2.bf16.msra.mxu0 0
    %900 = vmatprep.subr.bf16.mxu0 0
    %901 = vmatpush2.bf16.msra.mxu0 0
    %902 = vmatprep.subr.bf16.mxu0 0
    %903 = vmatpush2.bf16.msra.mxu0 0
    %904 = vmatprep.subr.bf16.mxu0 0
    %905 = vmatpush2.bf16.msra.mxu0 0
    %906 = vmatprep.subr.bf16.mxu0 0
    %907 = vmatpush2.bf16.msra.mxu0 0
    %908 = vmatprep.subr.bf16.mxu0 0
    %909 = vmatpush2.bf16.msra.mxu0 0
    %910 = vmatprep.mubr.bf16.mxu0 0
    %911 = vmatmul.mubr.bf16.gmra.mxu0 %v61
    %v912 = vpop.f32.mrf.mxu0
    %v913 = vadd.f32 0.0, %v912
    %v914 = vpop.f32.mrf.mxu0
    %v915 = vpop.f32.mrf.mxu0
    %v916 = vpop.f32.mrf.mxu0
    %917 = vdwg.mxu0
    %v918 = vmul.f32 %v297, 0.088388346
    %v919 = vmul.f32 %v385, 0.088388346
    %v920 = vmul.f32 %v473, 0.088388346
    %v921 = vmul.f32 %v561, 0.088388346
    %v922 = vmul.f32 %v649, 0.088388346
    %v923 = vmul.f32 %v737, 0.088388346
    %v924 = vmul.f32 %v825, 0.088388346
    %v925 = vmul.f32 %v913, 0.088388346
    %v926 = vsub.f32 1.0, %v206
    %v927 = vsub.f32 1.0, %v207
    %v928 = vsub.f32 1.0, %v208
    %v929 = vsub.f32 1.0, %v209
    %v930 = vsub.f32 1.0, %v210
    %v931 = vsub.f32 1.0, %v211
    %v932 = vsub.f32 1.0, %v212
    %v933 = vsub.f32 1.0, %v213
    %v934 = vmul.f32 %v926, 1e+30
    %v935 = vmul.f32 %v927, 1e+30
    %v936 = vmul.f32 %v928, 1e+30
    %v937 = vmul.f32 %v929, 1e+30
    %v938 = vmul.f32 %v930, 1e+30
    %v939 = vmul.f32 %v931, 1e+30
    %v940 = vmul.f32 %v932, 1e+30
    %v941 = vmul.f32 %v933, 1e+30
    %v950 = vlaneseq
    %v951 = vshrl.u32 %v950, 7
    %v952 = vsub.s32 0, %v951
    %v953 = vrot.slane %v934, %v952
    %v954 = vlaneseq
    %v955 = vshrl.u32 %v954, 7
    %v956 = vsub.s32 0, %v955
    %v957 = vrot.slane %v935, %v956
    %v958 = vlaneseq
    %v959 = vshrl.u32 %v958, 7
    %v960 = vsub.s32 0, %v959
    %v961 = vrot.slane %v936, %v960
    %v962 = vlaneseq
    %v963 = vshrl.u32 %v962, 7
    %v964 = vsub.s32 0, %v963
    %v965 = vrot.slane %v937, %v964
    %v966 = vlaneseq
    %v967 = vshrl.u32 %v966, 7
    %v968 = vsub.s32 0, %v967
    %v969 = vrot.slane %v938, %v968
    %v970 = vlaneseq
    %v971 = vshrl.u32 %v970, 7
    %v972 = vsub.s32 0, %v971
    %v973 = vrot.slane %v939, %v972
    %v974 = vlaneseq
    %v975 = vshrl.u32 %v974, 7
    %v976 = vsub.s32 0, %v975
    %v977 = vrot.slane %v940, %v976
    %v978 = vlaneseq
    %v979 = vshrl.u32 %v978, 7
    %v980 = vsub.s32 0, %v979
    %v981 = vrot.slane %v941, %v980
    %v990 = vsub.f32 %v918, %v953
    %v991 = vsub.f32 %v919, %v957
    %v992 = vsub.f32 %v920, %v961
    %v993 = vsub.f32 %v921, %v965
    %v994 = vsub.f32 %v922, %v969
    %v995 = vsub.f32 %v923, %v973
    %v996 = vsub.f32 %v924, %v977
    %v997 = vsub.f32 %v925, %v981
    %v998 = vld [vmem:[#allocation2] sm:$0xff]
    %v999 = vld [vmem:[#allocation2 + $0x8] sm:$0xff]
    %v1000 = vld [vmem:[#allocation2 + $0x10] sm:$0xff]
    %v1001 = vld [vmem:[#allocation2 + $0x18] sm:$0xff]
    %v1002 = vld [vmem:[#allocation2 + $0x20] sm:$0xff]
    %v1003 = vld [vmem:[#allocation2 + $0x28] sm:$0xff]
    %v1004 = vld [vmem:[#allocation2 + $0x30] sm:$0xff]
    %v1005 = vld [vmem:[#allocation2 + $0x38] sm:$0xff]
    %vm1006 = vcmask 130048
    %v1007 = vsel %vm1006, %v990, -inf
    %1008 = vmax.xlane.f32.xlu0 %v1007
    %v1009 = vpop.xlane.xlu0 %1008
    %v1010 = vsel %vm1006, %v991, -inf
    %1011 = vmax.xlane.f32.xlu0 %v1010
    %v1012 = vpop.xlane.xlu0 %1011
    %v1013 = vsel %vm1006, %v992, -inf
    %1014 = vmax.xlane.f32.xlu0 %v1013
    %v1015 = vpop.xlane.xlu0 %1014
    %v1016 = vsel %vm1006, %v993, -inf
    %1017 = vmax.xlane.f32.xlu0 %v1016
    %v1018 = vpop.xlane.xlu0 %1017
    %v1019 = vsel %vm1006, %v994, -inf
    %1020 = vmax.xlane.f32.xlu0 %v1019
    %v1021 = vpop.xlane.xlu0 %1020
    %v1022 = vsel %vm1006, %v995, -inf
    %1023 = vmax.xlane.f32.xlu0 %v1022
    %v1024 = vpop.xlane.xlu0 %1023
    %v1025 = vsel %vm1006, %v996, -inf
    %1026 = vmax.xlane.f32.xlu0 %v1025
    %v1027 = vpop.xlane.xlu0 %1026
    %v1028 = vsel %vm1006, %v997, -inf
    %1029 = vmax.xlane.f32.xlu0 %v1028
    %v1030 = vpop.xlane.xlu0 %1029
    %v1031 = vmax.f32 %v998, %v1009
    %v1032 = vmax.f32 %v999, %v1012
    %v1033 = vmax.f32 %v1000, %v1015
    %v1034 = vmax.f32 %v1001, %v1018
    %v1035 = vmax.f32 %v1002, %v1021
    %v1036 = vmax.f32 %v1003, %v1024
    %v1037 = vmax.f32 %v1004, %v1027
    %v1038 = vmax.f32 %v1005, %v1030
    %v1039 = vsub.f32 %v998, %v1031
    %v1040 = vsub.f32 %v999, %v1032
    %v1041 = vsub.f32 %v1000, %v1033
    %v1042 = vsub.f32 %v1001, %v1034
    %v1043 = vsub.f32 %v1002, %v1035
    %v1044 = vsub.f32 %v1003, %v1036
    %v1045 = vsub.f32 %v1004, %v1037
    %v1046 = vsub.f32 %v1005, %v1038
    %v1047 = vmul.f32 %v1039, 1.442695
    %v1048 = vpow.pop %v1047
    %v1049 = vmul.f32 %v1040, 1.442695
    %v1050 = vpow.pop %v1049
    %v1051 = vmul.f32 %v1041, 1.442695
    %v1052 = vpow.pop %v1051
    %v1053 = vmul.f32 %v1042, 1.442695
    %v1054 = vpow.pop %v1053
    %v1055 = vmul.f32 %v1043, 1.442695
    %v1056 = vpow.pop %v1055
    %v1057 = vmul.f32 %v1044, 1.442695
    %v1058 = vpow.pop %v1057
    %v1059 = vmul.f32 %v1045, 1.442695
    %v1060 = vpow.pop %v1059
    %v1061 = vmul.f32 %v1046, 1.442695
    %v1062 = vpow.pop %v1061
    %1064 = vset.pattern.permute.xlu0 0
    %1065 = vperm.xlu0 %1064, %v1031
    %v1066 = vpop.permute.xlu0 %1065
    %1069 = vset.pattern.permute.xlu0 0
    %1070 = vperm.xlu0 %1069, %v1032
    %v1071 = vpop.permute.xlu0 %1070
    %1074 = vset.pattern.permute.xlu0 0
    %1075 = vperm.xlu0 %1074, %v1033
    %v1076 = vpop.permute.xlu0 %1075
    %1079 = vset.pattern.permute.xlu0 0
    %1080 = vperm.xlu0 %1079, %v1034
    %v1081 = vpop.permute.xlu0 %1080
    %1084 = vset.pattern.permute.xlu0 0
    %1085 = vperm.xlu0 %1084, %v1035
    %v1086 = vpop.permute.xlu0 %1085
    %1089 = vset.pattern.permute.xlu0 0
    %1090 = vperm.xlu0 %1089, %v1036
    %v1091 = vpop.permute.xlu0 %1090
    %1094 = vset.pattern.permute.xlu0 0
    %1095 = vperm.xlu0 %1094, %v1037
    %v1096 = vpop.permute.xlu0 %1095
    %1099 = vset.pattern.permute.xlu0 0
    %1100 = vperm.xlu0 %1099, %v1038
    %v1101 = vpop.permute.xlu0 %1100
    %v1103 = vsub.f32 %v990, %v1066
    %v1104 = vsub.f32 %v991, %v1071
    %v1105 = vsub.f32 %v992, %v1076
    %v1106 = vsub.f32 %v993, %v1081
    %v1107 = vsub.f32 %v994, %v1086
    %v1108 = vsub.f32 %v995, %v1091
    %v1109 = vsub.f32 %v996, %v1096
    %v1110 = vsub.f32 %v997, %v1101
    %v1111 = vmul.f32 %v1103, 1.442695
    %v1112 = vpow.pop %v1111
    %v1113 = vmul.f32 %v1104, 1.442695
    %v1114 = vpow.pop %v1113
    %v1115 = vmul.f32 %v1105, 1.442695
    %v1116 = vpow.pop %v1115
    %v1117 = vmul.f32 %v1106, 1.442695
    %v1118 = vpow.pop %v1117
    %v1119 = vmul.f32 %v1107, 1.442695
    %v1120 = vpow.pop %v1119
    %v1121 = vmul.f32 %v1108, 1.442695
    %v1122 = vpow.pop %v1121
    %v1123 = vmul.f32 %v1109, 1.442695
    %v1124 = vpow.pop %v1123
    %v1125 = vmul.f32 %v1110, 1.442695
    %v1126 = vpow.pop %v1125
    %v1127 = vld [vmem:[#allocation3] sm:$0xff]
    %v1128 = vld [vmem:[#allocation3 + $0x8] sm:$0xff]
    %v1129 = vld [vmem:[#allocation3 + $0x10] sm:$0xff]
    %v1130 = vld [vmem:[#allocation3 + $0x18] sm:$0xff]
    %v1131 = vld [vmem:[#allocation3 + $0x20] sm:$0xff]
    %v1132 = vld [vmem:[#allocation3 + $0x28] sm:$0xff]
    %v1133 = vld [vmem:[#allocation3 + $0x30] sm:$0xff]
    %v1134 = vld [vmem:[#allocation3 + $0x38] sm:$0xff]
    %v1135 = vmul.f32 %v1048, %v1127
    %v1136 = vmul.f32 %v1050, %v1128
    %v1137 = vmul.f32 %v1052, %v1129
    %v1138 = vmul.f32 %v1054, %v1130
    %v1139 = vmul.f32 %v1056, %v1131
    %v1140 = vmul.f32 %v1058, %v1132
    %v1141 = vmul.f32 %v1060, %v1133
    %v1142 = vmul.f32 %v1062, %v1134
    %v1143 = vsel %vm1006, %v1112, 0.0
    %1144 = vadd.xlane.f32.xlu0 %v1143
    %v1145 = vpop.xlane.xlu0 %1144
    %v1146 = vsel %vm1006, %v1114, 0.0
    %1147 = vadd.xlane.f32.xlu0 %v1146
    %v1148 = vpop.xlane.xlu0 %1147
    %v1149 = vsel %vm1006, %v1116, 0.0
    %1150 = vadd.xlane.f32.xlu0 %v1149
    %v1151 = vpop.xlane.xlu0 %1150
    %v1152 = vsel %vm1006, %v1118, 0.0
    %1153 = vadd.xlane.f32.xlu0 %v1152
    %v1154 = vpop.xlane.xlu0 %1153
    %v1155 = vsel %vm1006, %v1120, 0.0
    %1156 = vadd.xlane.f32.xlu0 %v1155
    %v1157 = vpop.xlane.xlu0 %1156
    %v1158 = vsel %vm1006, %v1122, 0.0
    %1159 = vadd.xlane.f32.xlu0 %v1158
    %v1160 = vpop.xlane.xlu0 %1159
    %v1161 = vsel %vm1006, %v1124, 0.0
    %1162 = vadd.xlane.f32.xlu0 %v1161
    %v1163 = vpop.xlane.xlu0 %1162
    %v1164 = vsel %vm1006, %v1126, 0.0
    %1165 = vadd.xlane.f32.xlu0 %v1164
    %v1166 = vpop.xlane.xlu0 %1165
    %v1167 = vadd.f32 %v1135, %v1145
    %v1168 = vadd.f32 %v1136, %v1148
    %v1169 = vadd.f32 %v1137, %v1151
    %v1170 = vadd.f32 %v1138, %v1154
    %v1171 = vadd.f32 %v1139, %v1157
    %v1172 = vadd.f32 %v1140, %v1160
    %v1173 = vadd.f32 %v1141, %v1163
    %v1174 = vadd.f32 %v1142, %v1166
    %vm1175 = vcmask 7168
    %1176 = vst.msk [vmem:[#allocation3] sm:$0xff] %vm1175, %v1167
    %1177 = vst.msk [vmem:[#allocation3 + $0x8] sm:$0xff] %vm1175, %v1168
    %1178 = vst.msk [vmem:[#allocation3 + $0x10] sm:$0xff] %vm1175, %v1169
    %1179 = vst.msk [vmem:[#allocation3 + $0x18] sm:$0xff] %vm1175, %v1170
    %1180 = vst.msk [vmem:[#allocation3 + $0x20] sm:$0xff] %vm1175, %v1171
    %1181 = vst.msk [vmem:[#allocation3 + $0x28] sm:$0xff] %vm1175, %v1172
    %1182 = vst.msk [vmem:[#allocation3 + $0x30] sm:$0xff] %vm1175, %v1173
    %1183 = vst.msk [vmem:[#allocation3 + $0x38] sm:$0xff] %vm1175, %v1174
    %v1184 = vld [vmem:[#allocation4] sm:$0xff]
    %v1185 = vld [vmem:[#allocation4 + $0x8] sm:$0xff]
    %v1186 = vld [vmem:[#allocation4 + $0x10] sm:$0xff]
    %v1187 = vld [vmem:[#allocation4 + $0x18] sm:$0xff]
    %v1188 = vld [vmem:[#allocation4 + $0x20] sm:$0xff]
    %v1189 = vld [vmem:[#allocation4 + $0x28] sm:$0xff]
    %v1190 = vld [vmem:[#allocation4 + $0x30] sm:$0xff]
    %v1191 = vld [vmem:[#allocation4 + $0x38] sm:$0xff]
    %1193 = vset.pattern.permute.xlu0 0
    %1194 = vperm.xlu0 %1193, %v1048
    %v1195 = vpop.permute.xlu0 %1194
    %1198 = vset.pattern.permute.xlu0 0
    %1199 = vperm.xlu0 %1198, %v1050
    %v1200 = vpop.permute.xlu0 %1199
    %1203 = vset.pattern.permute.xlu0 0
    %1204 = vperm.xlu0 %1203, %v1052
    %v1205 = vpop.permute.xlu0 %1204
    %1208 = vset.pattern.permute.xlu0 0
    %1209 = vperm.xlu0 %1208, %v1054
    %v1210 = vpop.permute.xlu0 %1209
    %1213 = vset.pattern.permute.xlu0 0
    %1214 = vperm.xlu0 %1213, %v1056
    %v1215 = vpop.permute.xlu0 %1214
    %1218 = vset.pattern.permute.xlu0 0
    %1219 = vperm.xlu0 %1218, %v1058
    %v1220 = vpop.permute.xlu0 %1219
    %1223 = vset.pattern.permute.xlu0 0
    %1224 = vperm.xlu0 %1223, %v1060
    %v1225 = vpop.permute.xlu0 %1224
    %1228 = vset.pattern.permute.xlu0 0
    %1229 = vperm.xlu0 %1228, %v1062
    %v1230 = vpop.permute.xlu0 %1229
    %v1232 = vmul.f32 %v1195, %v1184
    %v1233 = vmul.f32 %v1200, %v1185
    %v1234 = vmul.f32 %v1205, %v1186
    %v1235 = vmul.f32 %v1210, %v1187
    %v1236 = vmul.f32 %v1215, %v1188
    %v1237 = vmul.f32 %v1220, %v1189
    %v1238 = vmul.f32 %v1225, %v1190
    %v1239 = vmul.f32 %v1230, %v1191
    %v1240 = vpack.c.bf16 %v1112, %v1112
    %v1241 = vpack.c.bf16 %v1114, %v1114
    %v1242 = vpack.c.bf16 %v1116, %v1116
    %v1243 = vpack.c.bf16 %v1118, %v1118
    %v1244 = vpack.c.bf16 %v1120, %v1120
    %v1245 = vpack.c.bf16 %v1122, %v1122
    %v1246 = vpack.c.bf16 %v1124, %v1124
    %v1247 = vpack.c.bf16 %v1126, %v1126
    %v1250 = vunpack.c.l.b16 %v190
    %v1251 = vunpack.c.l.b16 %v191
    %v1252 = vpack.c.b16 %v1251, %v1250
    %v1255 = vsel %vm1006, %v1240, 0
    %1257 = vmatprep.subr.bf16.mxu0 0
    %1258 = vmatpush1.bf16.msra.mxu0 0
    %1259 = vmatprep.subr.bf16.mxu0 0
    %1260 = vmatpush1.bf16.msra.mxu0 0
    %1261 = vmatprep.subr.bf16.mxu0 0
    %1262 = vmatpush1.bf16.msra.mxu0 0
    %1263 = vmatprep.subr.bf16.mxu0 0
    %1264 = vmatpush1.bf16.msra.mxu0 0
    %1265 = vmatprep.subr.bf16.mxu0 0
    %1266 = vmatpush1.bf16.msra.mxu0 0
    %1267 = vmatprep.subr.bf16.mxu0 0
    %1268 = vmatpush1.bf16.msra.mxu0 0
    %1269 = vmatprep.subr.bf16.mxu0 0
    %1270 = vmatpush1.bf16.msra.mxu0 0
    %1271 = vmatprep.subr.bf16.mxu0 0
    %1272 = vmatpush1.bf16.msra.mxu0 %v1252
    %1273 = vmatprep.subr.bf16.mxu0 0
    %1274 = vmatpush2.bf16.msra.mxu0 0
    %1275 = vmatprep.subr.bf16.mxu0 0
    %1276 = vmatpush2.bf16.msra.mxu0 0
    %1277 = vmatprep.subr.bf16.mxu0 0
    %1278 = vmatpush2.bf16.msra.mxu0 0
    %1279 = vmatprep.subr.bf16.mxu0 0
    %1280 = vmatpush2.bf16.msra.mxu0 0
    %1281 = vmatprep.subr.bf16.mxu0 0
    %1282 = vmatpush2.bf16.msra.mxu0 0
    %1283 = vmatprep.subr.bf16.mxu0 0
    %1284 = vmatpush2.bf16.msra.mxu0 0
    %1285 = vmatprep.subr.bf16.mxu0 0
    %1286 = vmatpush2.bf16.msra.mxu0 0
    %1287 = vmatprep.subr.bf16.mxu0 0
    %1288 = vmatpush2.bf16.msra.mxu0 0
    %1289 = vmatprep.mubr.bf16.mxu0 0
    %1290 = vmatmul.mubr.bf16.gmra.mxu0 %v1255
    %v1291 = vpop.f32.mrf.mxu0
    %v1292 = vadd.f32 0.0, %v1291
    %v1293 = vpop.f32.mrf.mxu0
    %v1294 = vpop.f32.mrf.mxu0
    %v1295 = vpop.f32.mrf.mxu0
    %1296 = vdwg.mxu0
    %v1299 = vunpack.c.l.b16 %v192
    %v1300 = vunpack.c.l.b16 %v193
    %v1301 = vpack.c.b16 %v1300, %v1299
    %v1304 = vsel %vm1006, %v1241, 0
    %1306 = vmatprep.subr.bf16.mxu0 0
    %1307 = vmatpush1.bf16.msra.mxu0 0
    %1308 = vmatprep.subr.bf16.mxu0 0
    %1309 = vmatpush1.bf16.msra.mxu0 0
    %1310 = vmatprep.subr.bf16.mxu0 0
    %1311 = vmatpush1.bf16.msra.mxu0 0
    %1312 = vmatprep.subr.bf16.mxu0 0
    %1313 = vmatpush1.bf16.msra.mxu0 0
    %1314 = vmatprep.subr.bf16.mxu0 0
    %1315 = vmatpush1.bf16.msra.mxu0 0
    %1316 = vmatprep.subr.bf16.mxu0 0
    %1317 = vmatpush1.bf16.msra.mxu0 0
    %1318 = vmatprep.subr.bf16.mxu0 0
    %1319 = vmatpush1.bf16.msra.mxu0 0
    %1320 = vmatprep.subr.bf16.mxu0 0
    %1321 = vmatpush1.bf16.msra.mxu0 %v1301
    %1322 = vmatprep.subr.bf16.mxu0 0
    %1323 = vmatpush2.bf16.msra.mxu0 0
    %1324 = vmatprep.subr.bf16.mxu0 0
    %1325 = vmatpush2.bf16.msra.mxu0 0
    %1326 = vmatprep.subr.bf16.mxu0 0
    %1327 = vmatpush2.bf16.msra.mxu0 0
    %1328 = vmatprep.subr.bf16.mxu0 0
    %1329 = vmatpush2.bf16.msra.mxu0 0
    %1330 = vmatprep.subr.bf16.mxu0 0
    %1331 = vmatpush2.bf16.msra.mxu0 0
    %1332 = vmatprep.subr.bf16.mxu0 0
    %1333 = vmatpush2.bf16.msra.mxu0 0
    %1334 = vmatprep.subr.bf16.mxu0 0
    %1335 = vmatpush2.bf16.msra.mxu0 0
    %1336 = vmatprep.subr.bf16.mxu0 0
    %1337 = vmatpush2.bf16.msra.mxu0 0
    %1338 = vmatprep.mubr.bf16.mxu0 0
    %1339 = vmatmul.mubr.bf16.gmra.mxu0 %v1304
    %v1340 = vpop.f32.mrf.mxu0
    %v1341 = vadd.f32 0.0, %v1340
    %v1342 = vpop.f32.mrf.mxu0
    %v1343 = vpop.f32.mrf.mxu0
    %v1344 = vpop.f32.mrf.mxu0
    %1345 = vdwg.mxu0
    %v1348 = vunpack.c.l.b16 %v194
    %v1349 = vunpack.c.l.b16 %v195
    %v1350 = vpack.c.b16 %v1349, %v1348
    %v1353 = vsel %vm1006, %v1242, 0
    %1355 = vmatprep.subr.bf16.mxu0 0
    %1356 = vmatpush1.bf16.msra.mxu0 0
    %1357 = vmatprep.subr.bf16.mxu0 0
    %1358 = vmatpush1.bf16.msra.mxu0 0
    %1359 = vmatprep.subr.bf16.mxu0 0
    %1360 = vmatpush1.bf16.msra.mxu0 0
    %1361 = vmatprep.subr.bf16.mxu0 0
    %1362 = vmatpush1.bf16.msra.mxu0 0
    %1363 = vmatprep.subr.bf16.mxu0 0
    %1364 = vmatpush1.bf16.msra.mxu0 0
    %1365 = vmatprep.subr.bf16.mxu0 0
    %1366 = vmatpush1.bf16.msra.mxu0 0
    %1367 = vmatprep.subr.bf16.mxu0 0
    %1368 = vmatpush1.bf16.msra.mxu0 0
    %1369 = vmatprep.subr.bf16.mxu0 0
    %1370 = vmatpush1.bf16.msra.mxu0 %v1350
    %1371 = vmatprep.subr.bf16.mxu0 0
    %1372 = vmatpush2.bf16.msra.mxu0 0
    %1373 = vmatprep.subr.bf16.mxu0 0
    %1374 = vmatpush2.bf16.msra.mxu0 0
    %1375 = vmatprep.subr.bf16.mxu0 0
    %1376 = vmatpush2.bf16.msra.mxu0 0
    %1377 = vmatprep.subr.bf16.mxu0 0
    %1378 = vmatpush2.bf16.msra.mxu0 0
    %1379 = vmatprep.subr.bf16.mxu0 0
    %1380 = vmatpush2.bf16.msra.mxu0 0
    %1381 = vmatprep.subr.bf16.mxu0 0
    %1382 = vmatpush2.bf16.msra.mxu0 0
    %1383 = vmatprep.subr.bf16.mxu0 0
    %1384 = vmatpush2.bf16.msra.mxu0 0
    %1385 = vmatprep.subr.bf16.mxu0 0
    %1386 = vmatpush2.bf16.msra.mxu0 0
    %1387 = vmatprep.mubr.bf16.mxu0 0
    %1388 = vmatmul.mubr.bf16.gmra.mxu0 %v1353
    %v1389 = vpop.f32.mrf.mxu0
    %v1390 = vadd.f32 0.0, %v1389
    %v1391 = vpop.f32.mrf.mxu0
    %v1392 = vpop.f32.mrf.mxu0
    %v1393 = vpop.f32.mrf.mxu0
    %1394 = vdwg.mxu0
    %v1397 = vunpack.c.l.b16 %v196
    %v1398 = vunpack.c.l.b16 %v197
    %v1399 = vpack.c.b16 %v1398, %v1397
    %v1402 = vsel %vm1006, %v1243, 0
    %1404 = vmatprep.subr.bf16.mxu0 0
    %1405 = vmatpush1.bf16.msra.mxu0 0
    %1406 = vmatprep.subr.bf16.mxu0 0
    %1407 = vmatpush1.bf16.msra.mxu0 0
    %1408 = vmatprep.subr.bf16.mxu0 0
    %1409 = vmatpush1.bf16.msra.mxu0 0
    %1410 = vmatprep.subr.bf16.mxu0 0
    %1411 = vmatpush1.bf16.msra.mxu0 0
    %1412 = vmatprep.subr.bf16.mxu0 0
    %1413 = vmatpush1.bf16.msra.mxu0 0
    %1414 = vmatprep.subr.bf16.mxu0 0
    %1415 = vmatpush1.bf16.msra.mxu0 0
    %1416 = vmatprep.subr.bf16.mxu0 0
    %1417 = vmatpush1.bf16.msra.mxu0 0
    %1418 = vmatprep.subr.bf16.mxu0 0
    %1419 = vmatpush1.bf16.msra.mxu0 %v1399
    %1420 = vmatprep.subr.bf16.mxu0 0
    %1421 = vmatpush2.bf16.msra.mxu0 0
    %1422 = vmatprep.subr.bf16.mxu0 0
    %1423 = vmatpush2.bf16.msra.mxu0 0
    %1424 = vmatprep.subr.bf16.mxu0 0
    %1425 = vmatpush2.bf16.msra.mxu0 0
    %1426 = vmatprep.subr.bf16.mxu0 0
    %1427 = vmatpush2.bf16.msra.mxu0 0
    %1428 = vmatprep.subr.bf16.mxu0 0
    %1429 = vmatpush2.bf16.msra.mxu0 0
    %1430 = vmatprep.subr.bf16.mxu0 0
    %1431 = vmatpush2.bf16.msra.mxu0 0
    %1432 = vmatprep.subr.bf16.mxu0 0
    %1433 = vmatpush2.bf16.msra.mxu0 0
    %1434 = vmatprep.subr.bf16.mxu0 0
    %1435 = vmatpush2.bf16.msra.mxu0 0
    %1436 = vmatprep.mubr.bf16.mxu0 0
    %1437 = vmatmul.mubr.bf16.gmra.mxu0 %v1402
    %v1438 = vpop.f32.mrf.mxu0
    %v1439 = vadd.f32 0.0, %v1438
    %v1440 = vpop.f32.mrf.mxu0
    %v1441 = vpop.f32.mrf.mxu0
    %v1442 = vpop.f32.mrf.mxu0
    %1443 = vdwg.mxu0
    %v1446 = vunpack.c.l.b16 %v198
    %v1447 = vunpack.c.l.b16 %v199
    %v1448 = vpack.c.b16 %v1447, %v1446
    %v1451 = vsel %vm1006, %v1244, 0
    %1453 = vmatprep.subr.bf16.mxu0 0
    %1454 = vmatpush1.bf16.msra.mxu0 0
    %1455 = vmatprep.subr.bf16.mxu0 0
    %1456 = vmatpush1.bf16.msra.mxu0 0
    %1457 = vmatprep.subr.bf16.mxu0 0
    %1458 = vmatpush1.bf16.msra.mxu0 0
    %1459 = vmatprep.subr.bf16.mxu0 0
    %1460 = vmatpush1.bf16.msra.mxu0 0
    %1461 = vmatprep.subr.bf16.mxu0 0
    %1462 = vmatpush1.bf16.msra.mxu0 0
    %1463 = vmatprep.subr.bf16.mxu0 0
    %1464 = vmatpush1.bf16.msra.mxu0 0
    %1465 = vmatprep.subr.bf16.mxu0 0
    %1466 = vmatpush1.bf16.msra.mxu0 0
    %1467 = vmatprep.subr.bf16.mxu0 0
    %1468 = vmatpush1.bf16.msra.mxu0 %v1448
    %1469 = vmatprep.subr.bf16.mxu0 0
    %1470 = vmatpush2.bf16.msra.mxu0 0
    %1471 = vmatprep.subr.bf16.mxu0 0
    %1472 = vmatpush2.bf16.msra.mxu0 0
    %1473 = vmatprep.subr.bf16.mxu0 0
    %1474 = vmatpush2.bf16.msra.mxu0 0
    %1475 = vmatprep.subr.bf16.mxu0 0
    %1476 = vmatpush2.bf16.msra.mxu0 0
    %1477 = vmatprep.subr.bf16.mxu0 0
    %1478 = vmatpush2.bf16.msra.mxu0 0
    %1479 = vmatprep.subr.bf16.mxu0 0
    %1480 = vmatpush2.bf16.msra.mxu0 0
    %1481 = vmatprep.subr.bf16.mxu0 0
    %1482 = vmatpush2.bf16.msra.mxu0 0
    %1483 = vmatprep.subr.bf16.mxu0 0
    %1484 = vmatpush2.bf16.msra.mxu0 0
    %1485 = vmatprep.mubr.bf16.mxu0 0
    %1486 = vmatmul.mubr.bf16.gmra.mxu0 %v1451
    %v1487 = vpop.f32.mrf.mxu0
    %v1488 = vadd.f32 0.0, %v1487
    %v1489 = vpop.f32.mrf.mxu0
    %v1490 = vpop.f32.mrf.mxu0
    %v1491 = vpop.f32.mrf.mxu0
    %1492 = vdwg.mxu0
    %v1495 = vunpack.c.l.b16 %v200
    %v1496 = vunpack.c.l.b16 %v201
    %v1497 = vpack.c.b16 %v1496, %v1495
    %v1500 = vsel %vm1006, %v1245, 0
    %1502 = vmatprep.subr.bf16.mxu0 0
    %1503 = vmatpush1.bf16.msra.mxu0 0
    %1504 = vmatprep.subr.bf16.mxu0 0
    %1505 = vmatpush1.bf16.msra.mxu0 0
    %1506 = vmatprep.subr.bf16.mxu0 0
    %1507 = vmatpush1.bf16.msra.mxu0 0
    %1508 = vmatprep.subr.bf16.mxu0 0
    %1509 = vmatpush1.bf16.msra.mxu0 0
    %1510 = vmatprep.subr.bf16.mxu0 0
    %1511 = vmatpush1.bf16.msra.mxu0 0
    %1512 = vmatprep.subr.bf16.mxu0 0
    %1513 = vmatpush1.bf16.msra.mxu0 0
    %1514 = vmatprep.subr.bf16.mxu0 0
    %1515 = vmatpush1.bf16.msra.mxu0 0
    %1516 = vmatprep.subr.bf16.mxu0 0
    %1517 = vmatpush1.bf16.msra.mxu0 %v1497
    %1518 = vmatprep.subr.bf16.mxu0 0
    %1519 = vmatpush2.bf16.msra.mxu0 0
    %1520 = vmatprep.subr.bf16.mxu0 0
    %1521 = vmatpush2.bf16.msra.mxu0 0
    %1522 = vmatprep.subr.bf16.mxu0 0
    %1523 = vmatpush2.bf16.msra.mxu0 0
    %1524 = vmatprep.subr.bf16.mxu0 0
    %1525 = vmatpush2.bf16.msra.mxu0 0
    %1526 = vmatprep.subr.bf16.mxu0 0
    %1527 = vmatpush2.bf16.msra.mxu0 0
    %1528 = vmatprep.subr.bf16.mxu0 0
    %1529 = vmatpush2.bf16.msra.mxu0 0
    %1530 = vmatprep.subr.bf16.mxu0 0
    %1531 = vmatpush2.bf16.msra.mxu0 0
    %1532 = vmatprep.subr.bf16.mxu0 0
    %1533 = vmatpush2.bf16.msra.mxu0 0
    %1534 = vmatprep.mubr.bf16.mxu0 0
    %1535 = vmatmul.mubr.bf16.gmra.mxu0 %v1500
    %v1536 = vpop.f32.mrf.mxu0
    %v1537 = vadd.f32 0.0, %v1536
    %v1538 = vpop.f32.mrf.mxu0
    %v1539 = vpop.f32.mrf.mxu0
    %v1540 = vpop.f32.mrf.mxu0
    %1541 = vdwg.mxu0
    %v1544 = vunpack.c.l.b16 %v202
    %v1545 = vunpack.c.l.b16 %v203
    %v1546 = vpack.c.b16 %v1545, %v1544
    %v1549 = vsel %vm1006, %v1246, 0
    %1551 = vmatprep.subr.bf16.mxu0 0
    %1552 = vmatpush1.bf16.msra.mxu0 0
    %1553 = vmatprep.subr.bf16.mxu0 0
    %1554 = vmatpush1.bf16.msra.mxu0 0
    %1555 = vmatprep.subr.bf16.mxu0 0
    %1556 = vmatpush1.bf16.msra.mxu0 0
    %1557 = vmatprep.subr.bf16.mxu0 0
    %1558 = vmatpush1.bf16.msra.mxu0 0
    %1559 = vmatprep.subr.bf16.mxu0 0
    %1560 = vmatpush1.bf16.msra.mxu0 0
    %1561 = vmatprep.subr.bf16.mxu0 0
    %1562 = vmatpush1.bf16.msra.mxu0 0
    %1563 = vmatprep.subr.bf16.mxu0 0
    %1564 = vmatpush1.bf16.msra.mxu0 0
    %1565 = vmatprep.subr.bf16.mxu0 0
    %1566 = vmatpush1.bf16.msra.mxu0 %v1546
    %1567 = vmatprep.subr.bf16.mxu0 0
    %1568 = vmatpush2.bf16.msra.mxu0 0
    %1569 = vmatprep.subr.bf16.mxu0 0
    %1570 = vmatpush2.bf16.msra.mxu0 0
    %1571 = vmatprep.subr.bf16.mxu0 0
    %1572 = vmatpush2.bf16.msra.mxu0 0
    %1573 = vmatprep.subr.bf16.mxu0 0
    %1574 = vmatpush2.bf16.msra.mxu0 0
    %1575 = vmatprep.subr.bf16.mxu0 0
    %1576 = vmatpush2.bf16.msra.mxu0 0
    %1577 = vmatprep.subr.bf16.mxu0 0
    %1578 = vmatpush2.bf16.msra.mxu0 0
    %1579 = vmatprep.subr.bf16.mxu0 0
    %1580 = vmatpush2.bf16.msra.mxu0 0
    %1581 = vmatprep.subr.bf16.mxu0 0
    %1582 = vmatpush2.bf16.msra.mxu0 0
    %1583 = vmatprep.mubr.bf16.mxu0 0
    %1584 = vmatmul.mubr.bf16.gmra.mxu0 %v1549
    %v1585 = vpop.f32.mrf.mxu0
    %v1586 = vadd.f32 0.0, %v1585
    %v1587 = vpop.f32.mrf.mxu0
    %v1588 = vpop.f32.mrf.mxu0
    %v1589 = vpop.f32.mrf.mxu0
    %1590 = vdwg.mxu0
    %v1593 = vunpack.c.l.b16 %v204
    %v1594 = vunpack.c.l.b16 %v205
    %v1595 = vpack.c.b16 %v1594, %v1593
    %v1598 = vsel %vm1006, %v1247, 0
    %1600 = vmatprep.subr.bf16.mxu0 0
    %1601 = vmatpush1.bf16.msra.mxu0 0
    %1602 = vmatprep.subr.bf16.mxu0 0
    %1603 = vmatpush1.bf16.msra.mxu0 0
    %1604 = vmatprep.subr.bf16.mxu0 0
    %1605 = vmatpush1.bf16.msra.mxu0 0
    %1606 = vmatprep.subr.bf16.mxu0 0
    %1607 = vmatpush1.bf16.msra.mxu0 0
    %1608 = vmatprep.subr.bf16.mxu0 0
    %1609 = vmatpush1.bf16.msra.mxu0 0
    %1610 = vmatprep.subr.bf16.mxu0 0
    %1611 = vmatpush1.bf16.msra.mxu0 0
    %1612 = vmatprep.subr.bf16.mxu0 0
    %1613 = vmatpush1.bf16.msra.mxu0 0
    %1614 = vmatprep.subr.bf16.mxu0 0
    %1615 = vmatpush1.bf16.msra.mxu0 %v1595
    %1616 = vmatprep.subr.bf16.mxu0 0
    %1617 = vmatpush2.bf16.msra.mxu0 0
    %1618 = vmatprep.subr.bf16.mxu0 0
    %1619 = vmatpush2.bf16.msra.mxu0 0
    %1620 = vmatprep.subr.bf16.mxu0 0
    %1621 = vmatpush2.bf16.msra.mxu0 0
    %1622 = vmatprep.subr.bf16.mxu0 0
    %1623 = vmatpush2.bf16.msra.mxu0 0
    %1624 = vmatprep.subr.bf16.mxu0 0
    %1625 = vmatpush2.bf16.msra.mxu0 0
    %1626 = vmatprep.subr.bf16.mxu0 0
    %1627 = vmatpush2.bf16.msra.mxu0 0
    %1628 = vmatprep.subr.bf16.mxu0 0
    %1629 = vmatpush2.bf16.msra.mxu0 0
    %1630 = vmatprep.subr.bf16.mxu0 0
    %1631 = vmatpush2.bf16.msra.mxu0 0
    %1632 = vmatprep.mubr.bf16.mxu0 0
    %1633 = vmatmul.mubr.bf16.gmra.mxu0 %v1598
    %v1634 = vpop.f32.mrf.mxu0
    %v1635 = vadd.f32 0.0, %v1634
    %v1636 = vpop.f32.mrf.mxu0
    %v1637 = vpop.f32.mrf.mxu0
    %v1638 = vpop.f32.mrf.mxu0
    %1639 = vdwg.mxu0
    %v1640 = vadd.f32 %v1232, %v1292
    %v1641 = vadd.f32 %v1233, %v1341
    %v1642 = vadd.f32 %v1234, %v1390
    %v1643 = vadd.f32 %v1235, %v1439
    %v1644 = vadd.f32 %v1236, %v1488
    %v1645 = vadd.f32 %v1237, %v1537
    %v1646 = vadd.f32 %v1238, %v1586
    %v1647 = vadd.f32 %v1239, %v1635
    %1648 = vst [vmem:[#allocation4] sm:$0xff] %v1640
    %1649 = vst [vmem:[#allocation4 + $0x8] sm:$0xff] %v1641
    %1650 = vst [vmem:[#allocation4 + $0x10] sm:$0xff] %v1642
    %1651 = vst [vmem:[#allocation4 + $0x18] sm:$0xff] %v1643
    %1652 = vst [vmem:[#allocation4 + $0x20] sm:$0xff] %v1644
    %1653 = vst [vmem:[#allocation4 + $0x28] sm:$0xff] %v1645
    %1654 = vst [vmem:[#allocation4 + $0x30] sm:$0xff] %v1646
    %1655 = vst [vmem:[#allocation4 + $0x38] sm:$0xff] %v1647
    %1656 = vst.msk [vmem:[#allocation2] sm:$0xff] %vm1175, %v1031
    %1657 = vst.msk [vmem:[#allocation2 + $0x8] sm:$0xff] %vm1175, %v1032
    %1658 = vst.msk [vmem:[#allocation2 + $0x10] sm:$0xff] %vm1175, %v1033
    %1659 = vst.msk [vmem:[#allocation2 + $0x18] sm:$0xff] %vm1175, %v1034
    %1660 = vst.msk [vmem:[#allocation2 + $0x20] sm:$0xff] %vm1175, %v1035
    %1661 = vst.msk [vmem:[#allocation2 + $0x28] sm:$0xff] %vm1175, %v1036
    %1662 = vst.msk [vmem:[#allocation2 + $0x30] sm:$0xff] %vm1175, %v1037
    %1663 = vst.msk [vmem:[#allocation2 + $0x38] sm:$0xff] %vm1175, %v1038
    // Predicated region
    $region30: #{_lambda_.5} parent=1 // pred_check
      %p1664 = pneg %p25
    $region31: #{_lambda_.5} parent=1 // pred_check_branch
      %1666 = sbr.rel (%p1664) target = $region33
    $region32: #{_lambda_.5} parent=1 // pred_region
      %v1667 = vld [vmem:[#allocation4] sm:$0xff]
      %v1668 = vld [vmem:[#allocation4 + $0x8] sm:$0xff]
      %v1669 = vld [vmem:[#allocation4 + $0x10] sm:$0xff]
      %v1670 = vld [vmem:[#allocation4 + $0x18] sm:$0xff]
      %v1671 = vld [vmem:[#allocation4 + $0x20] sm:$0xff]
      %v1672 = vld [vmem:[#allocation4 + $0x28] sm:$0xff]
      %v1673 = vld [vmem:[#allocation4 + $0x30] sm:$0xff]
      %v1674 = vld [vmem:[#allocation4 + $0x38] sm:$0xff]
      %v1675 = vld [vmem:[#allocation3] sm:$0xff]
      %v1676 = vld [vmem:[#allocation3 + $0x8] sm:$0xff]
      %v1677 = vld [vmem:[#allocation3 + $0x10] sm:$0xff]
      %v1678 = vld [vmem:[#allocation3 + $0x18] sm:$0xff]
      %v1679 = vld [vmem:[#allocation3 + $0x20] sm:$0xff]
      %v1680 = vld [vmem:[#allocation3 + $0x28] sm:$0xff]
      %v1681 = vld [vmem:[#allocation3 + $0x30] sm:$0xff]
      %v1682 = vld [vmem:[#allocation3 + $0x38] sm:$0xff]
      %v1683 = vrcp.pop %v1675
      %v1684 = vrcp.pop %v1676
      %v1685 = vrcp.pop %v1677
      %v1686 = vrcp.pop %v1678
      %v1687 = vrcp.pop %v1679
      %v1688 = vrcp.pop %v1680
      %v1689 = vrcp.pop %v1681
      %v1690 = vrcp.pop %v1682
      %1692 = vset.pattern.permute.xlu0 0
      %1693 = vperm.xlu0 %1692, %v1683
      %v1694 = vpop.permute.xlu0 %1693
      %1697 = vset.pattern.permute.xlu0 0
      %1698 = vperm.xlu0 %1697, %v1684
      %v1699 = vpop.permute.xlu0 %1698
      %1702 = vset.pattern.permute.xlu0 0
      %1703 = vperm.xlu0 %1702, %v1685
      %v1704 = vpop.permute.xlu0 %1703
      %1707 = vset.pattern.permute.xlu0 0
      %1708 = vperm.xlu0 %1707, %v1686
      %v1709 = vpop.permute.xlu0 %1708
      %1712 = vset.pattern.permute.xlu0 0
      %1713 = vperm.xlu0 %1712, %v1687
      %v1714 = vpop.permute.xlu0 %1713
      %1717 = vset.pattern.permute.xlu0 0
      %1718 = vperm.xlu0 %1717, %v1688
      %v1719 = vpop.permute.xlu0 %1718
      %1722 = vset.pattern.permute.xlu0 0
      %1723 = vperm.xlu0 %1722, %v1689
      %v1724 = vpop.permute.xlu0 %1723
      %1727 = vset.pattern.permute.xlu0 0
      %1728 = vperm.xlu0 %1727, %v1690
      %v1729 = vpop.permute.xlu0 %1728
      %v1731 = vmul.f32 %v1667, %v1694
      %v1732 = vmul.f32 %v1668, %v1699
      %v1733 = vmul.f32 %v1669, %v1704
      %v1734 = vmul.f32 %v1670, %v1709
      %v1735 = vmul.f32 %v1671, %v1714
      %v1736 = vmul.f32 %v1672, %v1719
      %v1737 = vmul.f32 %v1673, %v1724
      %v1738 = vmul.f32 %v1674, %v1729
      %v1739 = vunpack.c.l.bf16 %v54
      %v1740 = vunpack.c.l.bf16 %v55
      %v1741 = vunpack.c.l.bf16 %v56
      %v1742 = vunpack.c.l.bf16 %v57
      %v1743 = vunpack.c.l.bf16 %v58
      %v1744 = vunpack.c.l.bf16 %v59
      %v1745 = vunpack.c.l.bf16 %v60
      %v1746 = vunpack.c.l.bf16 %v61
      %v1747 = vtanh.pop %v1739
      %v1748 = vtanh.pop %v1740
      %v1749 = vtanh.pop %v1741
      %v1750 = vtanh.pop %v1742
      %v1751 = vtanh.pop %v1743
      %v1752 = vtanh.pop %v1744
      %v1753 = vtanh.pop %v1745
      %v1754 = vtanh.pop %v1746
      %v1755 = vtanh.pop %v1731
      %v1756 = vtanh.pop %v1732
      %v1757 = vtanh.pop %v1733
      %v1758 = vtanh.pop %v1734
      %v1759 = vtanh.pop %v1735
      %v1760 = vtanh.pop %v1736
      %v1761 = vtanh.pop %v1737
      %v1762 = vtanh.pop %v1738
      %v1763 = vpack.c.bf16 %v1748, %v1747
      %v1764 = vpack.c.bf16 %v1756, %v1755
      %v1765 = vpack.c.bf16 %v1750, %v1749
      %v1766 = vpack.c.bf16 %v1758, %v1757
      %v1767 = vpack.c.bf16 %v1752, %v1751
      %v1768 = vpack.c.bf16 %v1760, %v1759
      %v1769 = vpack.c.bf16 %v1754, %v1753
      %v1770 = vpack.c.bf16 %v1762, %v1761
      %v1771 = vld [vmem:[%s4] sm:$0xf]
      %v1772 = vld [vmem:[%s4 + $0x4] sm:$0xf]
      %v1773 = vld [vmem:[%s4 + $0x8] sm:$0xf]
      %v1774 = vld [vmem:[%s4 + $0xc] sm:$0xf]
      %v1775 = vld [vmem:[%s4 + $0x10] sm:$0xf]
      %v1776 = vld [vmem:[%s4 + $0x14] sm:$0xf]
      %v1777 = vld [vmem:[%s4 + $0x18] sm:$0xf]
      %v1778 = vld [vmem:[%s4 + $0x1c] sm:$0xf]
      %v1779 = vld [vmem:[%s4 + $0x20] sm:$0xf]
      %v1780 = vld [vmem:[%s4 + $0x24] sm:$0xf]
      %v1781 = vld [vmem:[%s4 + $0x28] sm:$0xf]
      %v1782 = vld [vmem:[%s4 + $0x2c] sm:$0xf]
      %v1783 = vld [vmem:[%s4 + $0x30] sm:$0xf]
      %v1784 = vld [vmem:[%s4 + $0x34] sm:$0xf]
      %v1785 = vld [vmem:[%s4 + $0x38] sm:$0xf]
      %v1786 = vld [vmem:[%s4 + $0x3c] sm:$0xf]
      %v1787 = vld [vmem:[%s4 + $0x40] sm:$0xf]
      %v1788 = vld [vmem:[%s4 + $0x44] sm:$0xf]
      %v1789 = vld [vmem:[%s4 + $0x48] sm:$0xf]
      %v1790 = vld [vmem:[%s4 + $0x4c] sm:$0xf]
      %v1791 = vld [vmem:[%s4 + $0x50] sm:$0xf]
      %v1792 = vld [vmem:[%s4 + $0x54] sm:$0xf]
      %v1793 = vld [vmem:[%s4 + $0x58] sm:$0xf]
      %v1794 = vld [vmem:[%s4 + $0x5c] sm:$0xf]
      %v1795 = vld [vmem:[%s4 + $0x60] sm:$0xf]
      %v1796 = vld [vmem:[%s4 + $0x64] sm:$0xf]
      %v1797 = vld [vmem:[%s4 + $0x68] sm:$0xf]
      %v1798 = vld [vmem:[%s4 + $0x6c] sm:$0xf]
      %v1799 = vld [vmem:[%s4 + $0x70] sm:$0xf]
      %v1800 = vld [vmem:[%s4 + $0x74] sm:$0xf]
      %v1801 = vld [vmem:[%s4 + $0x78] sm:$0xf]
      %v1802 = vld [vmem:[%s4 + $0x7c] sm:$0xf]
      %v1803 = vld [vmem:[%s5] sm:$0x1]
      %v1805 = vlaneseq
      %v1806 = vshrl.u32 %v1805, 7
      %v1807 = vsub.s32 0, %v1806
      %v1808 = vrot.slane %v1803, %v1807
      %v1842 = vunpack.c.l.b16 %v1771
      %v1843 = vunpack.c.l.b16 %v1772
      %v1844 = vunpack.c.l.b16 %v1773
      %v1845 = vunpack.c.l.b16 %v1774
      %v1846 = vunpack.c.l.b16 %v1775
      %v1847 = vunpack.c.l.b16 %v1776
      %v1848 = vunpack.c.l.b16 %v1777
      %v1849 = vunpack.c.l.b16 %v1778
      %v1850 = vunpack.c.l.b16 %v1779
      %v1851 = vunpack.c.l.b16 %v1780
      %v1852 = vunpack.c.l.b16 %v1781
      %v1853 = vunpack.c.l.b16 %v1782
      %v1854 = vunpack.c.l.b16 %v1783
      %v1855 = vunpack.c.l.b16 %v1784
      %v1856 = vunpack.c.l.b16 %v1785
      %v1857 = vunpack.c.l.b16 %v1786
      %v1858 = vunpack.c.l.b16 %v1787
      %v1859 = vunpack.c.l.b16 %v1788
      %v1860 = vunpack.c.l.b16 %v1789
      %v1861 = vunpack.c.l.b16 %v1790
      %v1862 = vunpack.c.l.b16 %v1791
      %v1863 = vunpack.c.l.b16 %v1792
      %v1864 = vunpack.c.l.b16 %v1793
      %v1865 = vunpack.c.l.b16 %v1794
      %v1866 = vunpack.c.l.b16 %v1795
      %v1867 = vunpack.c.l.b16 %v1796
      %v1868 = vunpack.c.l.b16 %v1797
      %v1869 = vunpack.c.l.b16 %v1798
      %v1870 = vunpack.c.l.b16 %v1799
      %v1871 = vunpack.c.l.b16 %v1800
      %v1872 = vunpack.c.l.b16 %v1801
      %v1873 = vunpack.c.l.b16 %v1802
      %v1874 = vpack.c.b16 %v1843, %v1842
      %v1875 = vpack.c.b16 %v1845, %v1844
      %v1876 = vpack.c.b16 %v1847, %v1846
      %v1877 = vpack.c.b16 %v1849, %v1848
      %v1878 = vpack.c.b16 %v1851, %v1850
      %v1879 = vpack.c.b16 %v1853, %v1852
      %v1880 = vpack.c.b16 %v1855, %v1854
      %v1881 = vpack.c.b16 %v1857, %v1856
      %v1882 = vpack.c.b16 %v1859, %v1858
      %v1883 = vpack.c.b16 %v1861, %v1860
      %v1884 = vpack.c.b16 %v1863, %v1862
      %v1885 = vpack.c.b16 %v1865, %v1864
      %v1886 = vpack.c.b16 %v1867, %v1866
      %v1887 = vpack.c.b16 %v1869, %v1868
      %v1888 = vpack.c.b16 %v1871, %v1870
      %v1889 = vpack.c.b16 %v1873, %v1872
      %1906 = vmatprep.subr.bf16.mxu0 0
      %1907 = vmatpush1.bf16.msra.mxu0 %v1881
      %1908 = vmatprep.subr.bf16.mxu0 0
      %1909 = vmatpush1.bf16.msra.mxu0 %v1880
      %1910 = vmatprep.subr.bf16.mxu0 0
      %1911 = vmatpush1.bf16.msra.mxu0 %v1879
      %1912 = vmatprep.subr.bf16.mxu0 0
      %1913 = vmatpush1.bf16.msra.mxu0 %v1878
      %1914 = vmatprep.subr.bf16.mxu0 0
      %1915 = vmatpush1.bf16.msra.mxu0 %v1877
      %1916 = vmatprep.subr.bf16.mxu0 0
      %1917 = vmatpush1.bf16.msra.mxu0 %v1876
      %1918 = vmatprep.subr.bf16.mxu0 0
      %1919 = vmatpush1.bf16.msra.mxu0 %v1875
      %1920 = vmatprep.subr.bf16.mxu0 0
      %1921 = vmatpush1.bf16.msra.mxu0 %v1874
      %1922 = vmatprep.subr.bf16.mxu0 0
      %1923 = vmatpush2.bf16.msra.mxu0 %v1889
      %1924 = vmatprep.subr.bf16.mxu0 0
      %1925 = vmatpush2.bf16.msra.mxu0 %v1888
      %1926 = vmatprep.subr.bf16.mxu0 0
      %1927 = vmatpush2.bf16.msra.mxu0 %v1887
      %1928 = vmatprep.subr.bf16.mxu0 0
      %1929 = vmatpush2.bf16.msra.mxu0 %v1886
      %1930 = vmatprep.subr.bf16.mxu0 0
      %1931 = vmatpush2.bf16.msra.mxu0 %v1885
      %1932 = vmatprep.subr.bf16.mxu0 0
      %1933 = vmatpush2.bf16.msra.mxu0 %v1884
      %1934 = vmatprep.subr.bf16.mxu0 0
      %1935 = vmatpush2.bf16.msra.mxu0 %v1883
      %1936 = vmatprep.subr.bf16.mxu0 0
      %1937 = vmatpush2.bf16.msra.mxu0 %v1882
      %1938 = vmatprep.mubr.bf16.mxu0 %v1764
      %1939 = vmatmul.mubr.bf16.gmra.mxu0 %v1763
      %v1940 = vpop.f32.mrf.mxu0
      %v1941 = vadd.f32 %v1808, %v1940
      %v1942 = vpop.f32.mrf.mxu0
      %v1943 = vpop.f32.mrf.mxu0
      %v1944 = vadd.f32 %v1808, %v1943
      %v1945 = vpop.f32.mrf.mxu0
      %1946 = vmatprep.mubr.bf16.mxu0 %v1766
      %1947 = vmatmul.mubr.bf16.gmra.mxu0 %v1765
      %v1948 = vpop.f32.mrf.mxu0
      %v1949 = vadd.f32 %v1808, %v1948
      %v1950 = vpop.f32.mrf.mxu0
      %v1951 = vpop.f32.mrf.mxu0
      %v1952 = vadd.f32 %v1808, %v1951
      %v1953 = vpop.f32.mrf.mxu0
      %1954 = vmatprep.mubr.bf16.mxu0 %v1768
      %1955 = vmatmul.mubr.bf16.gmra.mxu0 %v1767
      %v1956 = vpop.f32.mrf.mxu0
      %v1957 = vadd.f32 %v1808, %v1956
      %v1958 = vpop.f32.mrf.mxu0
      %v1959 = vpop.f32.mrf.mxu0
      %v1960 = vadd.f32 %v1808, %v1959
      %v1961 = vpop.f32.mrf.mxu0
      %1962 = vmatprep.mubr.bf16.mxu0 %v1770
      %1963 = vmatmul.mubr.bf16.gmra.mxu0 %v1769
      %v1964 = vpop.f32.mrf.mxu0
      %v1965 = vadd.f32 %v1808, %v1964
      %v1966 = vpop.f32.mrf.mxu0
      %v1967 = vpop.f32.mrf.mxu0
      %v1968 = vadd.f32 %v1808, %v1967
      %v1969 = vpop.f32.mrf.mxu0
      %1970 = vdwg.mxu0
      %1971 = vmax.xlane.f32.xlu0 %v1941
      %v1972 = vpop.xlane.xlu0 %1971
      %1973 = vmax.xlane.f32.xlu0 %v1944
      %v1974 = vpop.xlane.xlu0 %1973
      %1975 = vmax.xlane.f32.xlu0 %v1949
      %v1976 = vpop.xlane.xlu0 %1975
      %1977 = vmax.xlane.f32.xlu0 %v1952
      %v1978 = vpop.xlane.xlu0 %1977
      %1979 = vmax.xlane.f32.xlu0 %v1957
      %v1980 = vpop.xlane.xlu0 %1979
      %1981 = vmax.xlane.f32.xlu0 %v1960
      %v1982 = vpop.xlane.xlu0 %1981
      %1983 = vmax.xlane.f32.xlu0 %v1965
      %v1984 = vpop.xlane.xlu0 %1983
      %1985 = vmax.xlane.f32.xlu0 %v1968
      %v1986 = vpop.xlane.xlu0 %1985
      %v1987 = vsub.f32 %v1941, %v1972
      %v1988 = vsub.f32 %v1944, %v1974
      %v1989 = vsub.f32 %v1949, %v1976
      %v1990 = vsub.f32 %v1952, %v1978
      %v1991 = vsub.f32 %v1957, %v1980
      %v1992 = vsub.f32 %v1960, %v1982
      %v1993 = vsub.f32 %v1965, %v1984
      %v1994 = vsub.f32 %v1968, %v1986
      %v1995 = vmul.f32 %v1987, 1.442695
      %v1996 = vpow.pop %v1995
      %v1997 = vmul.f32 %v1988, 1.442695
      %v1998 = vpow.pop %v1997
      %v1999 = vmul.f32 %v1989, 1.442695
      %v2000 = vpow.pop %v1999
      %v2001 = vmul.f32 %v1990, 1.442695
      %v2002 = vpow.pop %v2001
      %v2003 = vmul.f32 %v1991, 1.442695
      %v2004 = vpow.pop %v2003
      %v2005 = vmul.f32 %v1992, 1.442695
      %v2006 = vpow.pop %v2005
      %v2007 = vmul.f32 %v1993, 1.442695
      %v2008 = vpow.pop %v2007
      %v2009 = vmul.f32 %v1994, 1.442695
      %v2010 = vpow.pop %v2009
      %2011 = vadd.xlane.f32.xlu0 %v1996
      %v2012 = vpop.xlane.xlu0 %2011
      %2013 = vadd.xlane.f32.xlu0 %v1998
      %v2014 = vpop.xlane.xlu0 %2013
      %2015 = vadd.xlane.f32.xlu0 %v2000
      %v2016 = vpop.xlane.xlu0 %2015
      %2017 = vadd.xlane.f32.xlu0 %v2002
      %v2018 = vpop.xlane.xlu0 %2017
      %2019 = vadd.xlane.f32.xlu0 %v2004
      %v2020 = vpop.xlane.xlu0 %2019
      %2021 = vadd.xlane.f32.xlu0 %v2006
      %v2022 = vpop.xlane.xlu0 %2021
      %2023 = vadd.xlane.f32.xlu0 %v2008
      %v2024 = vpop.xlane.xlu0 %2023
      %2025 = vadd.xlane.f32.xlu0 %v2010
      %v2026 = vpop.xlane.xlu0 %2025
      %v2027 = vlog2.pop %v2012
      %v2028 = vmul.f32 %v2027, 0.6931472
      %v2029 = vlog2.pop %v2014
      %v2030 = vmul.f32 %v2029, 0.6931472
      %v2031 = vlog2.pop %v2016
      %v2032 = vmul.f32 %v2031, 0.6931472
      %v2033 = vlog2.pop %v2018
      %v2034 = vmul.f32 %v2033, 0.6931472
      %v2035 = vlog2.pop %v2020
      %v2036 = vmul.f32 %v2035, 0.6931472
      %v2037 = vlog2.pop %v2022
      %v2038 = vmul.f32 %v2037, 0.6931472
      %v2039 = vlog2.pop %v2024
      %v2040 = vmul.f32 %v2039, 0.6931472
      %v2041 = vlog2.pop %v2026
      %v2042 = vmul.f32 %v2041, 0.6931472
      %v2043 = vadd.f32 %v2028, %v1972
      %v2044 = vadd.f32 %v2030, %v1974
      %v2045 = vadd.f32 %v2032, %v1976
      %v2046 = vadd.f32 %v2034, %v1978
      %v2047 = vadd.f32 %v2036, %v1980
      %v2048 = vadd.f32 %v2038, %v1982
      %v2049 = vadd.f32 %v2040, %v1984
      %v2050 = vadd.f32 %v2042, %v1986
      %v2051 = vsub.f32 %v1941, %v2043
      %v2052 = vsub.f32 %v1944, %v2044
      %v2053 = vsub.f32 %v1949, %v2045
      %v2054 = vsub.f32 %v1952, %v2046
      %v2055 = vsub.f32 %v1957, %v2047
      %v2056 = vsub.f32 %v1960, %v2048
      %v2057 = vsub.f32 %v1965, %v2049
      %v2058 = vsub.f32 %v1968, %v2050
      %2059 = vst [vmem:[#allocation5] sm:$0xff] %v2051
      %2060 = vst [vmem:[#allocation5 + $0x8] sm:$0xff] %v2052
      %2061 = vst [vmem:[#allocation5 + $0x10] sm:$0xff] %v2053
      %2062 = vst [vmem:[#allocation5 + $0x18] sm:$0xff] %v2054
      %2063 = vst [vmem:[#allocation5 + $0x20] sm:$0xff] %v2055
      %2064 = vst [vmem:[#allocation5 + $0x28] sm:$0xff] %v2056
      %2065 = vst [vmem:[#allocation5 + $0x30] sm:$0xff] %v2057
      %2066 = vst [vmem:[#allocation5 + $0x38] sm:$0xff] %v2058
    $region33: #{_lambda_.5} parent=1 // pred_fallthru
      _
    // Predicated region
    $region34: #{_lambda_.5} parent=1 // pred_check
      _
    $region35: #{_lambda_.5} parent=1 // pred_check_branch
      %2068 = sbr.rel (0) target = $region37
    $region36: #{_lambda_.5} parent=1 // pred_region
      %s2070 = ssub.s32 1024, 1024
      %2071 = vsyncadd [#allocation6], %s2070
      %s2072 = sshll.u32 [#allocation5], 4
      %s2073 = int_to_ptr.vmem [resolvable:$true] %s2072
      %2078 = dma.vmem_to_hbm [thread:$0]  %s2073, 1024, %s6, [#allocation6], 128, 128, 8
    $region37: #{_lambda_.5} parent=1 // pred_fallthru
      _
    // Predicated region
    $region38: #{_lambda_.5} parent=1 // pred_check
      _
    $region39: #{_lambda_.5} parent=1 // pred_check_branch
      %2080 = sbr.rel (0) target = $region41
    $region40: #{_lambda_.5} parent=1 // pred_region
      %2081 = dma.done [#allocation6], 1024
    $region41: #{_lambda_.5} parent=1 // pred_fallthru
      _
    %2082 = vsyncpa [#allocation6], 1

// kernel: _lambda_.3
$region0: #{_lambda_.3}
  #allocation0 [shape = 'u32[]', space=smem, size = 0x4, offset = 0x4, fixed_abs, tag = 'smem constant byte address 0x4 - core index']
  #allocation1 [shape = 'u32[144,128]{1,0:T(1,128)}', space=vmem, size = 0x12000, scoped, tag = 'internal scratch']
  #allocation2 [shape = 'f32[8,128]{1,0:T(8,128)}', space=vmem, size = 0x1000, scoped, tag = 'scratch operand']
  %s0 = inlined_call_operand.vmem [shape: bf16[8,16,384], index: 0, kind: input, shape index: {}]
  %s1 = inlined_call_operand.vmem [shape: bf16[128,384], index: 1, kind: input, shape index: {}]
  %s2 = inlined_call_operand.vmem [shape: f32[1,384], index: 2, kind: input, shape index: {}]
  %s3 = inlined_call_operand.vmem [shape: bf16[8,16,128], index: 3, kind: output, shape index: {}]
  %s4 = sld [smem:[#allocation0]]
  $region26: #{_lambda_.3} parent=0
    _
  %s6 = ssub.s32 1, %s4
  %s7 = scalar_select 0, %s6, %s4
  // Predicated region
  $region2: #{_lambda_.3} parent=0 // pred_check
    _
  $region3: #{_lambda_.3} parent=0 // pred_check_branch
    %9 = sbr.rel (0) target = $region5
  $region4: #{_lambda_.3} parent=0 // pred_region
    _
  $region5: #{_lambda_.3} parent=0 // pred_fallthru
    _
  // Predicated region
  $region6: #{_lambda_.3} parent=0 // pred_check
    _
  $region7: #{_lambda_.3} parent=0 // pred_check_branch
    %11 = sbr.rel (0) target = $region9
  $region8: #{_lambda_.3} parent=0 // pred_region
    _
  $region9: #{_lambda_.3} parent=0 // pred_fallthru
    _
  // Predicated region
  $region10: #{_lambda_.3} parent=0 // pred_check
    _
  $region11: #{_lambda_.3} parent=0 // pred_check_branch
    %13 = sbr.rel (0) target = $region13
  $region12: #{_lambda_.3} parent=0 // pred_region
    _
  $region13: #{_lambda_.3} parent=0 // pred_fallthru
    _
  %p15 = scmp.eq.s32.totalorder 0, 0
  // Predicated region
  $region14: #{_lambda_.3} parent=0 // pred_check
    %p16 = pneg %p15
  $region15: #{_lambda_.3} parent=0 // pred_check_branch
    %18 = sbr.rel (%p16) target = $region17
  $region16: #{_lambda_.3} parent=0 // pred_region
    %19 = vst [vmem:[#allocation2] sm:$0xff] 0.0
  $region17: #{_lambda_.3} parent=0 // pred_fallthru
    _
  %v20 = vld [vmem:[%s1] sm:$0xff]
  %v21 = vld [vmem:[%s1 + $0x8] sm:$0xf]
  %v22 = vld [vmem:[%s1 + $0xc] sm:$0xff]
  %v23 = vld [vmem:[%s1 + $0x14] sm:$0xf]
  %v24 = vld [vmem:[%s1 + $0x18] sm:$0xff]
  %v25 = vld [vmem:[%s1 + $0x20] sm:$0xf]
  %v26 = vld [vmem:[%s1 + $0x24] sm:$0xff]
  %v27 = vld [vmem:[%s1 + $0x2c] sm:$0xf]
  %v28 = vld [vmem:[%s1 + $0x30] sm:$0xff]
  %v29 = vld [vmem:[%s1 + $0x38] sm:$0xf]
  %v30 = vld [vmem:[%s1 + $0x3c] sm:$0xff]
  %v31 = vld [vmem:[%s1 + $0x44] sm:$0xf]
  %v32 = vld [vmem:[%s1 + $0x48] sm:$0xff]
  %v33 = vld [vmem:[%s1 + $0x50] sm:$0xf]
  %v34 = vld [vmem:[%s1 + $0x54] sm:$0xff]
  %v35 = vld [vmem:[%s1 + $0x5c] sm:$0xf]
  %v36 = vld [vmem:[%s1 + $0x60] sm:$0xff]
  %v37 = vld [vmem:[%s1 + $0x68] sm:$0xf]
  %v38 = vld [vmem:[%s1 + $0x6c] sm:$0xff]
  %v39 = vld [vmem:[%s1 + $0x74] sm:$0xf]
  %v40 = vld [vmem:[%s1 + $0x78] sm:$0xff]
  %v41 = vld [vmem:[%s1 + $0x80] sm:$0xf]
  %v42 = vld [vmem:[%s1 + $0x84] sm:$0xff]
  %v43 = vld [vmem:[%s1 + $0x8c] sm:$0xf]
  %v44 = vld [vmem:[%s1 + $0x90] sm:$0xff]
  %v45 = vld [vmem:[%s1 + $0x98] sm:$0xf]
  %v46 = vld [vmem:[%s1 + $0x9c] sm:$0xff]
  %v47 = vld [vmem:[%s1 + $0xa4] sm:$0xf]
  %v48 = vld [vmem:[%s1 + $0xa8] sm:$0xff]
  %v49 = vld [vmem:[%s1 + $0xb0] sm:$0xf]
  %v50 = vld [vmem:[%s1 + $0xb4] sm:$0xff]
  %v51 = vld [vmem:[%s1 + $0xbc] sm:$0xf]
  %v52 = vld [vmem:[%s2] sm:$0x7]
  %v54 = vlaneseq
  %v55 = vshrl.u32 %v54, 7
  %v56 = vsub.s32 0, %v55
  %v57 = vrot.slane %v52, %v56
  %v58 = vlaneseq
  %v59 = vshrl.u32 %v58, 7
  %v60 = vsub.s32 1, %v59
  %v61 = vrot.slane %v52, %v60
  %v62 = vlaneseq
  %v63 = vshrl.u32 %v62, 7
  %v64 = vsub.s32 2, %v63
  %v65 = vrot.slane %v52, %v64
  %v69 = vld [vmem:[#allocation2] sm:$0xff]
  %v70 = vpack.c.bf16 %v69, %v69
  %v103 = vunpack.c.l.b16 %v20
  %v104 = vunpack.c.h.b16 %v20
  %v105 = vunpack.c.l.b16 %v21
  %v106 = vunpack.c.l.b16 %v22
  %v107 = vunpack.c.h.b16 %v22
  %v108 = vunpack.c.l.b16 %v23
  %v109 = vunpack.c.l.b16 %v24
  %v110 = vunpack.c.h.b16 %v24
  %v111 = vunpack.c.l.b16 %v25
  %v112 = vunpack.c.l.b16 %v26
  %v113 = vunpack.c.h.b16 %v26
  %v114 = vunpack.c.l.b16 %v27
  %v115 = vunpack.c.l.b16 %v28
  %v116 = vunpack.c.h.b16 %v28
  %v117 = vunpack.c.l.b16 %v29
  %v118 = vunpack.c.l.b16 %v30
  %v119 = vunpack.c.h.b16 %v30
  %v120 = vunpack.c.l.b16 %v31
  %v121 = vunpack.c.l.b16 %v32
  %v122 = vunpack.c.h.b16 %v32
  %v123 = vunpack.c.l.b16 %v33
  %v124 = vunpack.c.l.b16 %v34
  %v125 = vunpack.c.h.b16 %v34
  %v126 = vunpack.c.l.b16 %v35
  %v127 = vunpack.c.l.b16 %v36
  %v128 = vunpack.c.h.b16 %v36
  %v129 = vunpack.c.l.b16 %v37
  %v130 = vunpack.c.l.b16 %v38
  %v131 = vunpack.c.h.b16 %v38
  %v132 = vunpack.c.l.b16 %v39
  %v133 = vunpack.c.l.b16 %v40
  %v134 = vunpack.c.h.b16 %v40
  %v135 = vunpack.c.l.b16 %v41
  %v136 = vunpack.c.l.b16 %v42
  %v137 = vunpack.c.h.b16 %v42
  %v138 = vunpack.c.l.b16 %v43
  %v139 = vunpack.c.l.b16 %v44
  %v140 = vunpack.c.h.b16 %v44
  %v141 = vunpack.c.l.b16 %v45
  %v142 = vunpack.c.l.b16 %v46
  %v143 = vunpack.c.h.b16 %v46
  %v144 = vunpack.c.l.b16 %v47
  %v145 = vunpack.c.l.b16 %v48
  %v146 = vunpack.c.h.b16 %v48
  %v147 = vunpack.c.l.b16 %v49
  %v148 = vunpack.c.l.b16 %v50
  %v149 = vunpack.c.h.b16 %v50
  %v150 = vunpack.c.l.b16 %v51
  %v151 = vpack.c.b16 %v106, %v103
  %v152 = vpack.c.b16 %v107, %v104
  %v153 = vpack.c.b16 %v108, %v105
  %v154 = vpack.c.b16 %v112, %v109
  %v155 = vpack.c.b16 %v113, %v110
  %v156 = vpack.c.b16 %v114, %v111
  %v157 = vpack.c.b16 %v118, %v115
  %v158 = vpack.c.b16 %v119, %v116
  %v159 = vpack.c.b16 %v120, %v117
  %v160 = vpack.c.b16 %v124, %v121
  %v161 = vpack.c.b16 %v125, %v122
  %v162 = vpack.c.b16 %v126, %v123
  %v163 = vpack.c.b16 %v130, %v127
  %v164 = vpack.c.b16 %v131, %v128
  %v165 = vpack.c.b16 %v132, %v129
  %v166 = vpack.c.b16 %v136, %v133
  %v167 = vpack.c.b16 %v137, %v134
  %v168 = vpack.c.b16 %v138, %v135
  %v169 = vpack.c.b16 %v142, %v139
  %v170 = vpack.c.b16 %v143, %v140
  %v171 = vpack.c.b16 %v144, %v141
  %v172 = vpack.c.b16 %v148, %v145
  %v173 = vpack.c.b16 %v149, %v146
  %v174 = vpack.c.b16 %v150, %v147
  %199 = vmatprep.subr.bf16.mxu0 %v173
  %200 = vmatpush1.bf16.msra.mxu0 %v172
  %201 = vmatprep.subr.bf16.mxu0 %v170
  %202 = vmatpush1.bf16.msra.mxu0 %v169
  %203 = vmatprep.subr.bf16.mxu0 %v167
  %204 = vmatpush1.bf16.msra.mxu0 %v166
  %205 = vmatprep.subr.bf16.mxu0 %v164
  %206 = vmatpush1.bf16.msra.mxu0 %v163
  %207 = vmatprep.subr.bf16.mxu0 %v161
  %208 = vmatpush1.bf16.msra.mxu0 %v160
  %209 = vmatprep.subr.bf16.mxu0 %v158
  %210 = vmatpush1.bf16.msra.mxu0 %v157
  %211 = vmatprep.subr.bf16.mxu0 %v155
  %212 = vmatpush1.bf16.msra.mxu0 %v154
  %213 = vmatprep.subr.bf16.mxu0 %v152
  %214 = vmatpush1.bf16.msra.mxu0 %v151
  %215 = vmatprep.subr.bf16.mxu0 0
  %216 = vmatpush2.bf16.msra.mxu0 0
  %217 = vmatprep.subr.bf16.mxu0 0
  %218 = vmatpush2.bf16.msra.mxu0 0
  %219 = vmatprep.subr.bf16.mxu0 0
  %220 = vmatpush2.bf16.msra.mxu0 0
  %221 = vmatprep.subr.bf16.mxu0 0
  %222 = vmatpush2.bf16.msra.mxu0 0
  %223 = vmatprep.subr.bf16.mxu0 0
  %224 = vmatpush2.bf16.msra.mxu0 0
  %225 = vmatprep.subr.bf16.mxu0 0
  %226 = vmatpush2.bf16.msra.mxu0 0
  %227 = vmatprep.subr.bf16.mxu0 0
  %228 = vmatpush2.bf16.msra.mxu0 0
  %229 = vmatprep.subr.bf16.mxu0 0
  %230 = vmatpush2.bf16.msra.mxu0 0
  %231 = vmatprep.mubr.bf16.mxu0 0
  %232 = vmatmul.mubr.bf16.gmra.mxu0 %v70
  %v233 = vpop.f32.mrf.mxu0
  %v234 = vadd.f32 %v57, %v233
  %v235 = vpop.f32.mrf.mxu0
  %v236 = vadd.f32 %v61, %v235
  %v237 = vpop.f32.mrf.mxu0
  %v238 = vpop.f32.mrf.mxu0
  %239 = vdwg.mxu0
  %240 = vmatprep.subr.bf16.mxu0 0
  %241 = vmatpush1.bf16.msra.mxu0 %v174
  %242 = vmatprep.subr.bf16.mxu0 0
  %243 = vmatpush1.bf16.msra.mxu0 %v171
  %244 = vmatprep.subr.bf16.mxu0 0
  %245 = vmatpush1.bf16.msra.mxu0 %v168
  %246 = vmatprep.subr.bf16.mxu0 0
  %247 = vmatpush1.bf16.msra.mxu0 %v165
  %248 = vmatprep.subr.bf16.mxu0 0
  %249 = vmatpush1.bf16.msra.mxu0 %v162
  %250 = vmatprep.subr.bf16.mxu0 0
  %251 = vmatpush1.bf16.msra.mxu0 %v159
  %252 = vmatprep.subr.bf16.mxu0 0
  %253 = vmatpush1.bf16.msra.mxu0 %v156
  %254 = vmatprep.subr.bf16.mxu0 0
  %255 = vmatpush1.bf16.msra.mxu0 %v153
  %256 = vmatprep.subr.bf16.mxu0 0
  %257 = vmatpush2.bf16.msra.mxu0 0
  %258 = vmatprep.subr.bf16.mxu0 0
  %259 = vmatpush2.bf16.msra.mxu0 0
  %260 = vmatprep.subr.bf16.mxu0 0
  %261 = vmatpush2.bf16.msra.mxu0 0
  %262 = vmatprep.subr.bf16.mxu0 0
  %263 = vmatpush2.bf16.msra.mxu0 0
  %264 = vmatprep.subr.bf16.mxu0 0
  %265 = vmatpush2.bf16.msra.mxu0 0
  %266 = vmatprep.subr.bf16.mxu0 0
  %267 = vmatpush2.bf16.msra.mxu0 0
  %268 = vmatprep.subr.bf16.mxu0 0
  %269 = vmatpush2.bf16.msra.mxu0 0
  %270 = vmatprep.subr.bf16.mxu0 0
  %271 = vmatpush2.bf16.msra.mxu0 0
  %272 = vmatprep.mubr.bf16.mxu0 0
  %273 = vmatmul.mubr.bf16.gmra.mxu0 %v70
  %v274 = vpop.f32.mrf.mxu0
  %v275 = vadd.f32 %v65, %v274
  %v276 = vpop.f32.mrf.mxu0
  %v277 = vpop.f32.mrf.mxu0
  %v278 = vpop.f32.mrf.mxu0
  %279 = vdwg.mxu0
  %v280 = vld [vmem:[%s0] sm:$0x11]
  %v281 = vld [vmem:[%s0 + $0x8] sm:$0x1]
  %v282 = vld [vmem:[%s0 + $0x18] sm:$0x11]
  %v283 = vld [vmem:[%s0 + $0x20] sm:$0x1]
  %v284 = vld [vmem:[%s0 + $0x30] sm:$0x11]
  %v285 = vld [vmem:[%s0 + $0x38] sm:$0x1]
  %v286 = vld [vmem:[%s0 + $0x48] sm:$0x11]
  %v287 = vld [vmem:[%s0 + $0x50] sm:$0x1]
  %v288 = vld [vmem:[%s0 + $0x60] sm:$0x11]
  %v289 = vld [vmem:[%s0 + $0x68] sm:$0x1]
  %v290 = vld [vmem:[%s0 + $0x78] sm:$0x11]
  %v291 = vld [vmem:[%s0 + $0x80] sm:$0x1]
  %v292 = vld [vmem:[%s0 + $0x90] sm:$0x11]
  %v293 = vld [vmem:[%s0 + $0x98] sm:$0x1]
  %v294 = vld [vmem:[%s0 + $0xa8] sm:$0x11]
  %v295 = vld [vmem:[%s0 + $0xb0] sm:$0x1]
  %v296 = vunpack.c.l.bf16 %v280
  %v297 = vunpack.c.h.bf16 %v280
  %v298 = vunpack.c.l.bf16 %v281
  %v299 = vunpack.c.l.bf16 %v282
  %v300 = vunpack.c.h.bf16 %v282
  %v301 = vunpack.c.l.bf16 %v283
  %v302 = vunpack.c.l.bf16 %v284
  %v303 = vunpack.c.h.bf16 %v284
  %v304 = vunpack.c.l.bf16 %v285
  %v305 = vunpack.c.l.bf16 %v286
  %v306 = vunpack.c.h.bf16 %v286
  %v307 = vunpack.c.l.bf16 %v287
  %v308 = vunpack.c.l.bf16 %v288
  %v309 = vunpack.c.h.bf16 %v288
  %v310 = vunpack.c.l.bf16 %v289
  %v311 = vunpack.c.l.bf16 %v290
  %v312 = vunpack.c.h.bf16 %v290
  %v313 = vunpack.c.l.bf16 %v291
  %v314 = vunpack.c.l.bf16 %v292
  %v315 = vunpack.c.h.bf16 %v292
  %v316 = vunpack.c.l.bf16 %v293
  %v317 = vunpack.c.l.bf16 %v294
  %v318 = vunpack.c.h.bf16 %v294
  %v319 = vunpack.c.l.bf16 %v295
  %v321 = vrot.slane %v234, 1
  %v322 = vrot.slane %v234, 2
  %v323 = vrot.slane %v234, 3
  %v324 = vrot.slane %v234, 4
  %v325 = vrot.slane %v234, 5
  %v326 = vrot.slane %v234, 6
  %v327 = vrot.slane %v234, 7
  %v336 = vadd.f32 %v296, %v234
  %v337 = vadd.f32 %v299, %v321
  %v338 = vadd.f32 %v302, %v322
  %v339 = vadd.f32 %v305, %v323
  %v340 = vadd.f32 %v308, %v324
  %v341 = vadd.f32 %v311, %v325
  %v342 = vadd.f32 %v314, %v326
  %v343 = vadd.f32 %v317, %v327
  %v344 = vxor.u32 %v336, 2147483648
  %v345 = vxor.u32 %v337, 2147483648
  %v346 = vxor.u32 %v338, 2147483648
  %v347 = vxor.u32 %v339, 2147483648
  %v348 = vxor.u32 %v340, 2147483648
  %v349 = vxor.u32 %v341, 2147483648
  %v350 = vxor.u32 %v342, 2147483648
  %v351 = vxor.u32 %v343, 2147483648
  %v352 = vmul.f32 %v344, 1.442695
  %v353 = vpow.pop %v352
  %v354 = vmul.f32 %v345, 1.442695
  %v355 = vpow.pop %v354
  %v356 = vmul.f32 %v346, 1.442695
  %v357 = vpow.pop %v356
  %v358 = vmul.f32 %v347, 1.442695
  %v359 = vpow.pop %v358
  %v360 = vmul.f32 %v348, 1.442695
  %v361 = vpow.pop %v360
  %v362 = vmul.f32 %v349, 1.442695
  %v363 = vpow.pop %v362
  %v364 = vmul.f32 %v350, 1.442695
  %v365 = vpow.pop %v364
  %v366 = vmul.f32 %v351, 1.442695
  %v367 = vpow.pop %v366
  %v368 = vadd.f32 %v353, 1.0
  %v369 = vadd.f32 %v355, 1.0
  %v370 = vadd.f32 %v357, 1.0
  %v371 = vadd.f32 %v359, 1.0
  %v372 = vadd.f32 %v361, 1.0
  %v373 = vadd.f32 %v363, 1.0
  %v374 = vadd.f32 %v365, 1.0
  %v375 = vadd.f32 %v367, 1.0
  %v376 = vrcp.pop %v368
  %v377 = vmul.f32 1.0, %v376
  %v378 = vrcp.pop %v369
  %v379 = vmul.f32 1.0, %v378
  %v380 = vrcp.pop %v370
  %v381 = vmul.f32 1.0, %v380
  %v382 = vrcp.pop %v371
  %v383 = vmul.f32 1.0, %v382
  %v384 = vrcp.pop %v372
  %v385 = vmul.f32 1.0, %v384
  %v386 = vrcp.pop %v373
  %v387 = vmul.f32 1.0, %v386
  %v388 = vrcp.pop %v374
  %v389 = vmul.f32 1.0, %v388
  %v390 = vrcp.pop %v375
  %v391 = vmul.f32 1.0, %v390
  %v393 = vrot.slane %v236, 1
  %v394 = vrot.slane %v236, 2
  %v395 = vrot.slane %v236, 3
  %v396 = vrot.slane %v236, 4
  %v397 = vrot.slane %v236, 5
  %v398 = vrot.slane %v236, 6
  %v399 = vrot.slane %v236, 7
  %v408 = vadd.f32 %v297, %v236
  %v409 = vadd.f32 %v300, %v393
  %v410 = vadd.f32 %v303, %v394
  %v411 = vadd.f32 %v306, %v395
  %v412 = vadd.f32 %v309, %v396
  %v413 = vadd.f32 %v312, %v397
  %v414 = vadd.f32 %v315, %v398
  %v415 = vadd.f32 %v318, %v399
  %v416 = vxor.u32 %v408, 2147483648
  %v417 = vxor.u32 %v409, 2147483648
  %v418 = vxor.u32 %v410, 2147483648
  %v419 = vxor.u32 %v411, 2147483648
  %v420 = vxor.u32 %v412, 2147483648
  %v421 = vxor.u32 %v413, 2147483648
  %v422 = vxor.u32 %v414, 2147483648
  %v423 = vxor.u32 %v415, 2147483648
  %v424 = vmul.f32 %v416, 1.442695
  %v425 = vpow.pop %v424
  %v426 = vmul.f32 %v417, 1.442695
  %v427 = vpow.pop %v426
  %v428 = vmul.f32 %v418, 1.442695
  %v429 = vpow.pop %v428
  %v430 = vmul.f32 %v419, 1.442695
  %v431 = vpow.pop %v430
  %v432 = vmul.f32 %v420, 1.442695
  %v433 = vpow.pop %v432
  %v434 = vmul.f32 %v421, 1.442695
  %v435 = vpow.pop %v434
  %v436 = vmul.f32 %v422, 1.442695
  %v437 = vpow.pop %v436
  %v438 = vmul.f32 %v423, 1.442695
  %v439 = vpow.pop %v438
  %v440 = vadd.f32 %v425, 1.0
  %v441 = vadd.f32 %v427, 1.0
  %v442 = vadd.f32 %v429, 1.0
  %v443 = vadd.f32 %v431, 1.0
  %v444 = vadd.f32 %v433, 1.0
  %v445 = vadd.f32 %v435, 1.0
  %v446 = vadd.f32 %v437, 1.0
  %v447 = vadd.f32 %v439, 1.0
  %v448 = vrcp.pop %v440
  %v449 = vmul.f32 1.0, %v448
  %v450 = vrcp.pop %v441
  %v451 = vmul.f32 1.0, %v450
  %v452 = vrcp.pop %v442
  %v453 = vmul.f32 1.0, %v452
  %v454 = vrcp.pop %v443
  %v455 = vmul.f32 1.0, %v454
  %v456 = vrcp.pop %v444
  %v457 = vmul.f32 1.0, %v456
  %v458 = vrcp.pop %v445
  %v459 = vmul.f32 1.0, %v458
  %v460 = vrcp.pop %v446
  %v461 = vmul.f32 1.0, %v460
  %v462 = vrcp.pop %v447
  %v463 = vmul.f32 1.0, %v462
  %v465 = vrot.slane %v275, 1
  %v466 = vrot.slane %v275, 2
  %v467 = vrot.slane %v275, 3
  %v468 = vrot.slane %v275, 4
  %v469 = vrot.slane %v275, 5
  %v470 = vrot.slane %v275, 6
  %v471 = vrot.slane %v275, 7
  %v480 = vmul.f32 %v377, %v275
  %v481 = vmul.f32 %v379, %v465
  %v482 = vmul.f32 %v381, %v466
  %v483 = vmul.f32 %v383, %v467
  %v484 = vmul.f32 %v385, %v468
  %v485 = vmul.f32 %v387, %v469
  %v486 = vmul.f32 %v389, %v470
  %v487 = vmul.f32 %v391, %v471
  %v488 = vadd.f32 %v298, %v480
  %v489 = vadd.f32 %v301, %v481
  %v490 = vadd.f32 %v304, %v482
  %v491 = vadd.f32 %v307, %v483
  %v492 = vadd.f32 %v310, %v484
  %v493 = vadd.f32 %v313, %v485
  %v494 = vadd.f32 %v316, %v486
  %v495 = vadd.f32 %v319, %v487
  %v496 = vtanh.pop %v488
  %v497 = vtanh.pop %v489
  %v498 = vtanh.pop %v490
  %v499 = vtanh.pop %v491
  %v500 = vtanh.pop %v492
  %v501 = vtanh.pop %v493
  %v502 = vtanh.pop %v494
  %v503 = vtanh.pop %v495
  %v504 = vsub.f32 1.0, %v449
  %v505 = vsub.f32 1.0, %v451
  %v506 = vsub.f32 1.0, %v453
  %v507 = vsub.f32 1.0, %v455
  %v508 = vsub.f32 1.0, %v457
  %v509 = vsub.f32 1.0, %v459
  %v510 = vsub.f32 1.0, %v461
  %v511 = vsub.f32 1.0, %v463
  %v512 = vmul.f32 %v504, %v496
  %v513 = vmul.f32 %v505, %v497
  %v514 = vmul.f32 %v506, %v498
  %v515 = vmul.f32 %v507, %v499
  %v516 = vmul.f32 %v508, %v500
  %v517 = vmul.f32 %v509, %v501
  %v518 = vmul.f32 %v510, %v502
  %v519 = vmul.f32 %v511, %v503
  %v521 = vrot.slane %v69, 1
  %v522 = vrot.slane %v69, 2
  %v523 = vrot.slane %v69, 3
  %v524 = vrot.slane %v69, 4
  %v525 = vrot.slane %v69, 5
  %v526 = vrot.slane %v69, 6
  %v527 = vrot.slane %v69, 7
  %v536 = vmul.f32 %v449, %v69
  %v537 = vmul.f32 %v451, %v521
  %v538 = vmul.f32 %v453, %v522
  %v539 = vmul.f32 %v455, %v523
  %v540 = vmul.f32 %v457, %v524
  %v541 = vmul.f32 %v459, %v525
  %v542 = vmul.f32 %v461, %v526
  %v543 = vmul.f32 %v463, %v527
  %v544 = vadd.f32 %v512, %v536
  %v545 = vadd.f32 %v513, %v537
  %v546 = vadd.f32 %v514, %v538
  %v547 = vadd.f32 %v515, %v539
  %v548 = vadd.f32 %v516, %v540
  %v549 = vadd.f32 %v517, %v541
  %v550 = vadd.f32 %v518, %v542
  %v551 = vadd.f32 %v519, %v543
  %v552 = vpack.c.bf16 %v544, %v544
  %v553 = vpack.c.bf16 %v545, %v545
  %v554 = vpack.c.bf16 %v546, %v546
  %v555 = vpack.c.bf16 %v547, %v547
  %v556 = vpack.c.bf16 %v548, %v548
  %v557 = vpack.c.bf16 %v549, %v549
  %v558 = vpack.c.bf16 %v550, %v550
  %v559 = vpack.c.bf16 %v551, %v551
  %v568 = vunpack.c.l.b16 %v552
  %v569 = vunpack.c.l.b16 %v553
  %v570 = vunpack.c.l.b16 %v554
  %v571 = vunpack.c.l.b16 %v555
  %v572 = vunpack.c.l.b16 %v556
  %v573 = vunpack.c.l.b16 %v557
  %v574 = vunpack.c.l.b16 %v558
  %v575 = vunpack.c.l.b16 %v559
  %v576 = vrot.slane %v569, 7
  %vm577 = vcmask 1041409
  %v578 = vsel %vm577, %v576, %v568
  %v579 = vrot.slane %v570, 6
  %vm580 = vcmask 1042434
  %v581 = vsel %vm580, %v579, %v578
  %v582 = vrot.slane %v571, 5
  %vm583 = vcmask 1043459
  %v584 = vsel %vm583, %v582, %v581
  %v585 = vrot.slane %v572, 4
  %vm586 = vcmask 1044484
  %v587 = vsel %vm586, %v585, %v584
  %v588 = vrot.slane %v573, 3
  %vm589 = vcmask 1045509
  %v590 = vsel %vm589, %v588, %v587
  %v591 = vrot.slane %v574, 2
  %vm592 = vcmask 1046534
  %v593 = vsel %vm592, %v591, %v590
  %v594 = vrot.slane %v575, 1
  %vm595 = vcmask 1047559
  %v596 = vsel %vm595, %v594, %v593
  %v597 = vpack.c.b16 %v596, %v596
  %599 = vmatprep.subr.bf16.mxu0 %v173
  %600 = vmatpush1.bf16.msra.mxu0 %v172
  %601 = vmatprep.subr.bf16.mxu0 %v170
  %602 = vmatpush1.bf16.msra.mxu0 %v169
  %603 = vmatprep.subr.bf16.mxu0 %v167
  %604 = vmatpush1.bf16.msra.mxu0 %v166
  %605 = vmatprep.subr.bf16.mxu0 %v164
  %606 = vmatpush1.bf16.msra.mxu0 %v163
  %607 = vmatprep.subr.bf16.mxu0 %v161
  %608 = vmatpush1.bf16.msra.mxu0 %v160
  %609 = vmatprep.subr.bf16.mxu0 %v158
  %610 = vmatpush1.bf16.msra.mxu0 %v157
  %611 = vmatprep.subr.bf16.mxu0 %v155
  %612 = vmatpush1.bf16.msra.mxu0 %v154
  %613 = vmatprep.subr.bf16.mxu0 %v152
  %614 = vmatpush1.bf16.msra.mxu0 %v151
  %615 = vmatprep.subr.bf16.mxu0 0
  %616 = vmatpush2.bf16.msra.mxu0 0
  %617 = vmatprep.subr.bf16.mxu0 0
  %618 = vmatpush2.bf16.msra.mxu0 0
  %619 = vmatprep.subr.bf16.mxu0 0
  %620 = vmatpush2.bf16.msra.mxu0 0
  %621 = vmatprep.subr.bf16.mxu0 0
  %622 = vmatpush2.bf16.msra.mxu0 0
  %623 = vmatprep.subr.bf16.mxu0 0
  %624 = vmatpush2.bf16.msra.mxu0 0
  %625 = vmatprep.subr.bf16.mxu0 0
  %626 = vmatpush2.bf16.msra.mxu0 0
  %627 = vmatprep.subr.bf16.mxu0 0
  %628 = vmatpush2.bf16.msra.mxu0 0
  %629 = vmatprep.subr.bf16.mxu0 0
  %630 = vmatpush2.bf16.msra.mxu0 0
  %631 = vmatprep.mubr.bf16.mxu0 0
  %632 = vmatmul.mubr.bf16.gmra.mxu0 %v597
  %v633 = vpop.f32.mrf.mxu0
  %v634 = vadd.f32 %v57, %v633
  %v635 = vpop.f32.mrf.mxu0
  %v636 = vadd.f32 %v61, %v635
  %v637 = vpop.f32.mrf.mxu0
  %v638 = vpop.f32.mrf.mxu0
  %639 = vdwg.mxu0
  %640 = vmatprep.subr.bf16.mxu0 0
  %641 = vmatpush1.bf16.msra.mxu0 %v174
  %642 = vmatprep.subr.bf16.mxu0 0
  %643 = vmatpush1.bf16.msra.mxu0 %v171
  %644 = vmatprep.subr.bf16.mxu0 0
  %645 = vmatpush1.bf16.msra.mxu0 %v168
  %646 = vmatprep.subr.bf16.mxu0 0
  %647 = vmatpush1.bf16.msra.mxu0 %v165
  %648 = vmatprep.subr.bf16.mxu0 0
  %649 = vmatpush1.bf16.msra.mxu0 %v162
  %650 = vmatprep.subr.bf16.mxu0 0
  %651 = vmatpush1.bf16.msra.mxu0 %v159
  %652 = vmatprep.subr.bf16.mxu0 0
  %653 = vmatpush1.bf16.msra.mxu0 %v156
  %654 = vmatprep.subr.bf16.mxu0 0
  %655 = vmatpush1.bf16.msra.mxu0 %v153
  %656 = vmatprep.subr.bf16.mxu0 0
  %657 = vmatpush2.bf16.msra.mxu0 0
  %658 = vmatprep.subr.bf16.mxu0 0
  %659 = vmatpush2.bf16.msra.mxu0 0
  %660 = vmatprep.subr.bf16.mxu0 0
  %661 = vmatpush2.bf16.msra.mxu0 0
  %662 = vmatprep.subr.bf16.mxu0 0
  %663 = vmatpush2.bf16.msra.mxu0 0
  %664 = vmatprep.subr.bf16.mxu0 0
  %665 = vmatpush2.bf16.msra.mxu0 0
  %666 = vmatprep.subr.bf16.mxu0 0
  %667 = vmatpush2.bf16.msra.mxu0 0
  %668 = vmatprep.subr.bf16.mxu0 0
  %669 = vmatpush2.bf16.msra.mxu0 0
  %670 = vmatprep.subr.bf16.mxu0 0
  %671 = vmatpush2.bf16.msra.mxu0 0
  %672 = vmatprep.mubr.bf16.mxu0 0
  %673 = vmatmul.mubr.bf16.gmra.mxu0 %v597
  %v674 = vpop.f32.mrf.mxu0
  %v675 = vadd.f32 %v65, %v674
  %v676 = vpop.f32.mrf.mxu0
  %v677 = vpop.f32.mrf.mxu0
  %v678 = vpop.f32.mrf.mxu0
  %679 = vdwg.mxu0
  %v681 = vrot.slane %v634, 7
  %v682 = vrot.slane %v634, 1
  %v683 = vrot.slane %v634, 2
  %v684 = vrot.slane %v634, 3
  %v685 = vrot.slane %v634, 4
  %v686 = vrot.slane %v634, 5
  %v687 = vrot.slane %v634, 6
  %v696 = vadd.f32 %v296, %v681
  %v697 = vadd.f32 %v299, %v634
  %v698 = vadd.f32 %v302, %v682
  %v699 = vadd.f32 %v305, %v683
  %v700 = vadd.f32 %v308, %v684
  %v701 = vadd.f32 %v311, %v685
  %v702 = vadd.f32 %v314, %v686
  %v703 = vadd.f32 %v317, %v687
  %v704 = vxor.u32 %v696, 2147483648
  %v705 = vxor.u32 %v697, 2147483648
  %v706 = vxor.u32 %v698, 2147483648
  %v707 = vxor.u32 %v699, 2147483648
  %v708 = vxor.u32 %v700, 2147483648
  %v709 = vxor.u32 %v701, 2147483648
  %v710 = vxor.u32 %v702, 2147483648
  %v711 = vxor.u32 %v703, 2147483648
  %v712 = vmul.f32 %v704, 1.442695
  %v713 = vpow.pop %v712
  %v714 = vmul.f32 %v705, 1.442695
  %v715 = vpow.pop %v714
  %v716 = vmul.f32 %v706, 1.442695
  %v717 = vpow.pop %v716
  %v718 = vmul.f32 %v707, 1.442695
  %v719 = vpow.pop %v718
  %v720 = vmul.f32 %v708, 1.442695
  %v721 = vpow.pop %v720
  %v722 = vmul.f32 %v709, 1.442695
  %v723 = vpow.pop %v722
  %v724 = vmul.f32 %v710, 1.442695
  %v725 = vpow.pop %v724
  %v726 = vmul.f32 %v711, 1.442695
  %v727 = vpow.pop %v726
  %v728 = vadd.f32 %v713, 1.0
  %v729 = vadd.f32 %v715, 1.0
  %v730 = vadd.f32 %v717, 1.0
  %v731 = vadd.f32 %v719, 1.0
  %v732 = vadd.f32 %v721, 1.0
  %v733 = vadd.f32 %v723, 1.0
  %v734 = vadd.f32 %v725, 1.0
  %v735 = vadd.f32 %v727, 1.0
  %v736 = vrcp.pop %v728
  %v737 = vmul.f32 1.0, %v736
  %v738 = vrcp.pop %v729
  %v739 = vmul.f32 1.0, %v738
  %v740 = vrcp.pop %v730
  %v741 = vmul.f32 1.0, %v740
  %v742 = vrcp.pop %v731
  %v743 = vmul.f32 1.0, %v742
  %v744 = vrcp.pop %v732
  %v745 = vmul.f32 1.0, %v744
  %v746 = vrcp.pop %v733
  %v747 = vmul.f32 1.0, %v746
  %v748 = vrcp.pop %v734
  %v749 = vmul.f32 1.0, %v748
  %v750 = vrcp.pop %v735
  %v751 = vmul.f32 1.0, %v750
  %v753 = vrot.slane %v636, 7
  %v754 = vrot.slane %v636, 1
  %v755 = vrot.slane %v636, 2
  %v756 = vrot.slane %v636, 3
  %v757 = vrot.slane %v636, 4
  %v758 = vrot.slane %v636, 5
  %v759 = vrot.slane %v636, 6
  %v768 = vadd.f32 %v297, %v753
  %v769 = vadd.f32 %v300, %v636
  %v770 = vadd.f32 %v303, %v754
  %v771 = vadd.f32 %v306, %v755
  %v772 = vadd.f32 %v309, %v756
  %v773 = vadd.f32 %v312, %v757
  %v774 = vadd.f32 %v315, %v758
  %v775 = vadd.f32 %v318, %v759
  %v776 = vxor.u32 %v768, 2147483648
  %v777 = vxor.u32 %v769, 2147483648
  %v778 = vxor.u32 %v770, 2147483648
  %v779 = vxor.u32 %v771, 2147483648
  %v780 = vxor.u32 %v772, 2147483648
  %v781 = vxor.u32 %v773, 2147483648
  %v782 = vxor.u32 %v774, 2147483648
  %v783 = vxor.u32 %v775, 2147483648
  %v784 = vmul.f32 %v776, 1.442695
  %v785 = vpow.pop %v784
  %v786 = vmul.f32 %v777, 1.442695
  %v787 = vpow.pop %v786
  %v788 = vmul.f32 %v778, 1.442695
  %v789 = vpow.pop %v788
  %v790 = vmul.f32 %v779, 1.442695
  %v791 = vpow.pop %v790
  %v792 = vmul.f32 %v780, 1.442695
  %v793 = vpow.pop %v792
  %v794 = vmul.f32 %v781, 1.442695
  %v795 = vpow.pop %v794
  %v796 = vmul.f32 %v782, 1.442695
  %v797 = vpow.pop %v796
  %v798 = vmul.f32 %v783, 1.442695
  %v799 = vpow.pop %v798
  %v800 = vadd.f32 %v785, 1.0
  %v801 = vadd.f32 %v787, 1.0
  %v802 = vadd.f32 %v789, 1.0
  %v803 = vadd.f32 %v791, 1.0
  %v804 = vadd.f32 %v793, 1.0
  %v805 = vadd.f32 %v795, 1.0
  %v806 = vadd.f32 %v797, 1.0
  %v807 = vadd.f32 %v799, 1.0
  %v808 = vrcp.pop %v800
  %v809 = vmul.f32 1.0, %v808
  %v810 = vrcp.pop %v801
  %v811 = vmul.f32 1.0, %v810
  %v812 = vrcp.pop %v802
  %v813 = vmul.f32 1.0, %v812
  %v814 = vrcp.pop %v803
  %v815 = vmul.f32 1.0, %v814
  %v816 = vrcp.pop %v804
  %v817 = vmul.f32 1.0, %v816
  %v818 = vrcp.pop %v805
  %v819 = vmul.f32 1.0, %v818
  %v820 = vrcp.pop %v806
  %v821 = vmul.f32 1.0, %v820
  %v822 = vrcp.pop %v807
  %v823 = vmul.f32 1.0, %v822
  %v825 = vrot.slane %v675, 7
  %v826 = vrot.slane %v675, 1
  %v827 = vrot.slane %v675, 2
  %v828 = vrot.slane %v675, 3
  %v829 = vrot.slane %v675, 4
  %v830 = vrot.slane %v675, 5
  %v831 = vrot.slane %v675, 6
  %v840 = vmul.f32 %v737, %v825
  %v841 = vmul.f32 %v739, %v675
  %v842 = vmul.f32 %v741, %v826
  %v843 = vmul.f32 %v743, %v827
  %v844 = vmul.f32 %v745, %v828
  %v845 = vmul.f32 %v747, %v829
  %v846 = vmul.f32 %v749, %v830
  %v847 = vmul.f32 %v751, %v831
  %v848 = vadd.f32 %v298, %v840
  %v849 = vadd.f32 %v301, %v841
  %v850 = vadd.f32 %v304, %v842
  %v851 = vadd.f32 %v307, %v843
  %v852 = vadd.f32 %v310, %v844
  %v853 = vadd.f32 %v313, %v845
  %v854 = vadd.f32 %v316, %v846
  %v855 = vadd.f32 %v319, %v847
  %v856 = vtanh.pop %v848
  %v857 = vtanh.pop %v849
  %v858 = vtanh.pop %v850
  %v859 = vtanh.pop %v851
  %v860 = vtanh.pop %v852
  %v861 = vtanh.pop %v853
  %v862 = vtanh.pop %v854
  %v863 = vtanh.pop %v855
  %v864 = vsub.f32 1.0, %v809
  %v865 = vsub.f32 1.0, %v811
  %v866 = vsub.f32 1.0, %v813
  %v867 = vsub.f32 1.0, %v815
  %v868 = vsub.f32 1.0, %v817
  %v869 = vsub.f32 1.0, %v819
  %v870 = vsub.f32 1.0, %v821
  %v871 = vsub.f32 1.0, %v823
  %v872 = vmul.f32 %v864, %v856
  %v873 = vmul.f32 %v865, %v857
  %v874 = vmul.f32 %v866, %v858
  %v875 = vmul.f32 %v867, %v859
  %v876 = vmul.f32 %v868, %v860
  %v877 = vmul.f32 %v869, %v861
  %v878 = vmul.f32 %v870, %v862
  %v879 = vmul.f32 %v871, %v863
  %v888 = vrot.slane %v544, 7
  %v889 = vrot.slane %v545, 7
  %v890 = vrot.slane %v546, 7
  %v891 = vrot.slane %v547, 7
  %v892 = vrot.slane %v548, 7
  %v893 = vrot.slane %v549, 7
  %v894 = vrot.slane %v550, 7
  %v895 = vrot.slane %v551, 7
  %v904 = vmul.f32 %v809, %v888
  %v905 = vmul.f32 %v811, %v889
  %v906 = vmul.f32 %v813, %v890
  %v907 = vmul.f32 %v815, %v891
  %v908 = vmul.f32 %v817, %v892
  %v909 = vmul.f32 %v819, %v893
  %v910 = vmul.f32 %v821, %v894
  %v911 = vmul.f32 %v823, %v895
  %v912 = vadd.f32 %v872, %v904
  %v913 = vadd.f32 %v873, %v905
  %v914 = vadd.f32 %v874, %v906
  %v915 = vadd.f32 %v875, %v907
  %v916 = vadd.f32 %v876, %v908
  %v917 = vadd.f32 %v877, %v909
  %v918 = vadd.f32 %v878, %v910
  %v919 = vadd.f32 %v879, %v911
  %v920 = vpack.c.bf16 %v912, %v912
  %v921 = vpack.c.bf16 %v913, %v913
  %v922 = vpack.c.bf16 %v914, %v914
  %v923 = vpack.c.bf16 %v915, %v915
  %v924 = vpack.c.bf16 %v916, %v916
  %v925 = vpack.c.bf16 %v917, %v917
  %v926 = vpack.c.bf16 %v918, %v918
  %v927 = vpack.c.bf16 %v919, %v919
  %v936 = vunpack.c.l.b16 %v920
  %v937 = vunpack.c.l.b16 %v921
  %v938 = vunpack.c.l.b16 %v922
  %v939 = vunpack.c.l.b16 %v923
  %v940 = vunpack.c.l.b16 %v924
  %v941 = vunpack.c.l.b16 %v925
  %v942 = vunpack.c.l.b16 %v926
  %v943 = vunpack.c.l.b16 %v927
  %v944 = vrot.slane %v936, 1
  %v945 = vsel %vm577, %v937, %v944
  %v946 = vrot.slane %v938, 7
  %v947 = vsel %vm580, %v946, %v945
  %v948 = vrot.slane %v939, 6
  %v949 = vsel %vm583, %v948, %v947
  %v950 = vrot.slane %v940, 5
  %v951 = vsel %vm586, %v950, %v949
  %v952 = vrot.slane %v941, 4
  %v953 = vsel %vm589, %v952, %v951
  %v954 = vrot.slane %v942, 3
  %v955 = vsel %vm592, %v954, %v953
  %v956 = vrot.slane %v943, 2
  %v957 = vsel %vm595, %v956, %v955
  %v958 = vpack.c.b16 %v957, %v957
  %960 = vmatprep.subr.bf16.mxu0 %v173
  %961 = vmatpush1.bf16.msra.mxu0 %v172
  %962 = vmatprep.subr.bf16.mxu0 %v170
  %963 = vmatpush1.bf16.msra.mxu0 %v169
  %964 = vmatprep.subr.bf16.mxu0 %v167
  %965 = vmatpush1.bf16.msra.mxu0 %v166
  %966 = vmatprep.subr.bf16.mxu0 %v164
  %967 = vmatpush1.bf16.msra.mxu0 %v163
  %968 = vmatprep.subr.bf16.mxu0 %v161
  %969 = vmatpush1.bf16.msra.mxu0 %v160
  %970 = vmatprep.subr.bf16.mxu0 %v158
  %971 = vmatpush1.bf16.msra.mxu0 %v157
  %972 = vmatprep.subr.bf16.mxu0 %v155
  %973 = vmatpush1.bf16.msra.mxu0 %v154
  %974 = vmatprep.subr.bf16.mxu0 %v152
  %975 = vmatpush1.bf16.msra.mxu0 %v151
  %976 = vmatprep.subr.bf16.mxu0 0
  %977 = vmatpush2.bf16.msra.mxu0 0
  %978 = vmatprep.subr.bf16.mxu0 0
  %979 = vmatpush2.bf16.msra.mxu0 0
  %980 = vmatprep.subr.bf16.mxu0 0
  %981 = vmatpush2.bf16.msra.mxu0 0
  %982 = vmatprep.subr.bf16.mxu0 0
  %983 = vmatpush2.bf16.msra.mxu0 0
  %984 = vmatprep.subr.bf16.mxu0 0
  %985 = vmatpush2.bf16.msra.mxu0 0
  %986 = vmatprep.subr.bf16.mxu0 0
  %987 = vmatpush2.bf16.msra.mxu0 0
  %988 = vmatprep.subr.bf16.mxu0 0
  %989 = vmatpush2.bf16.msra.mxu0 0
  %990 = vmatprep.subr.bf16.mxu0 0
  %991 = vmatpush2.bf16.msra.mxu0 0
  %992 = vmatprep.mubr.bf16.mxu0 0
  %993 = vmatmul.mubr.bf16.gmra.mxu0 %v958
  %v994 = vpop.f32.mrf.mxu0
  %v995 = vadd.f32 %v57, %v994
  %v996 = vpop.f32.mrf.mxu0
  %v997 = vadd.f32 %v61, %v996
  %v998 = vpop.f32.mrf.mxu0
  %v999 = vpop.f32.mrf.mxu0
  %1000 = vdwg.mxu0
  %1001 = vmatprep.subr.bf16.mxu0 0
  %1002 = vmatpush1.bf16.msra.mxu0 %v174
  %1003 = vmatprep.subr.bf16.mxu0 0
  %1004 = vmatpush1.bf16.msra.mxu0 %v171
  %1005 = vmatprep.subr.bf16.mxu0 0
  %1006 = vmatpush1.bf16.msra.mxu0 %v168
  %1007 = vmatprep.subr.bf16.mxu0 0
  %1008 = vmatpush1.bf16.msra.mxu0 %v165
  %1009 = vmatprep.subr.bf16.mxu0 0
  %1010 = vmatpush1.bf16.msra.mxu0 %v162
  %1011 = vmatprep.subr.bf16.mxu0 0
  %1012 = vmatpush1.bf16.msra.mxu0 %v159
  %1013 = vmatprep.subr.bf16.mxu0 0
  %1014 = vmatpush1.bf16.msra.mxu0 %v156
  %1015 = vmatprep.subr.bf16.mxu0 0
  %1016 = vmatpush1.bf16.msra.mxu0 %v153
  %1017 = vmatprep.subr.bf16.mxu0 0
  %1018 = vmatpush2.bf16.msra.mxu0 0
  %1019 = vmatprep.subr.bf16.mxu0 0
  %1020 = vmatpush2.bf16.msra.mxu0 0
  %1021 = vmatprep.subr.bf16.mxu0 0
  %1022 = vmatpush2.bf16.msra.mxu0 0
  %1023 = vmatprep.subr.bf16.mxu0 0
  %1024 = vmatpush2.bf16.msra.mxu0 0
  %1025 = vmatprep.subr.bf16.mxu0 0
  %1026 = vmatpush2.bf16.msra.mxu0 0
  %1027 = vmatprep.subr.bf16.mxu0 0
  %1028 = vmatpush2.bf16.msra.mxu0 0
  %1029 = vmatprep.subr.bf16.mxu0 0
  %1030 = vmatpush2.bf16.msra.mxu0 0
  %1031 = vmatprep.subr.bf16.mxu0 0
  %1032 = vmatpush2.bf16.msra.mxu0 0
  %1033 = vmatprep.mubr.bf16.mxu0 0
  %1034 = vmatmul.mubr.bf16.gmra.mxu0 %v958
  %v1035 = vpop.f32.mrf.mxu0
  %v1036 = vadd.f32 %v65, %v1035
  %v1037 = vpop.f32.mrf.mxu0
  %v1038 = vpop.f32.mrf.mxu0
  %v1039 = vpop.f32.mrf.mxu0
  %1040 = vdwg.mxu0
  %v1041 = vld [vmem:[%s0] sm:$0x22]
  %v1042 = vld [vmem:[%s0 + $0x8] sm:$0x2]
  %v1043 = vld [vmem:[%s0 + $0x18] sm:$0x22]
  %v1044 = vld [vmem:[%s0 + $0x20] sm:$0x2]
  %v1045 = vld [vmem:[%s0 + $0x30] sm:$0x22]
  %v1046 = vld [vmem:[%s0 + $0x38] sm:$0x2]
  %v1047 = vld [vmem:[%s0 + $0x48] sm:$0x22]
  %v1048 = vld [vmem:[%s0 + $0x50] sm:$0x2]
  %v1049 = vld [vmem:[%s0 + $0x60] sm:$0x22]
  %v1050 = vld [vmem:[%s0 + $0x68] sm:$0x2]
  %v1051 = vld [vmem:[%s0 + $0x78] sm:$0x22]
  %v1052 = vld [vmem:[%s0 + $0x80] sm:$0x2]
  %v1053 = vld [vmem:[%s0 + $0x90] sm:$0x22]
  %v1054 = vld [vmem:[%s0 + $0x98] sm:$0x2]
  %v1055 = vld [vmem:[%s0 + $0xa8] sm:$0x22]
  %v1056 = vld [vmem:[%s0 + $0xb0] sm:$0x2]
  %v1057 = vunpack.c.l.bf16 %v1041
  %v1058 = vunpack.c.h.bf16 %v1041
  %v1059 = vunpack.c.l.bf16 %v1042
  %v1060 = vunpack.c.l.bf16 %v1043
  %v1061 = vunpack.c.h.bf16 %v1043
  %v1062 = vunpack.c.l.bf16 %v1044
  %v1063 = vunpack.c.l.bf16 %v1045
  %v1064 = vunpack.c.h.bf16 %v1045
  %v1065 = vunpack.c.l.bf16 %v1046
  %v1066 = vunpack.c.l.bf16 %v1047
  %v1067 = vunpack.c.h.bf16 %v1047
  %v1068 = vunpack.c.l.bf16 %v1048
  %v1069 = vunpack.c.l.bf16 %v1049
  %v1070 = vunpack.c.h.bf16 %v1049
  %v1071 = vunpack.c.l.bf16 %v1050
  %v1072 = vunpack.c.l.bf16 %v1051
  %v1073 = vunpack.c.h.bf16 %v1051
  %v1074 = vunpack.c.l.bf16 %v1052
  %v1075 = vunpack.c.l.bf16 %v1053
  %v1076 = vunpack.c.h.bf16 %v1053
  %v1077 = vunpack.c.l.bf16 %v1054
  %v1078 = vunpack.c.l.bf16 %v1055
  %v1079 = vunpack.c.h.bf16 %v1055
  %v1080 = vunpack.c.l.bf16 %v1056
  %v1082 = vrot.slane %v995, 6
  %v1083 = vrot.slane %v995, 7
  %v1084 = vrot.slane %v995, 1
  %v1085 = vrot.slane %v995, 2
  %v1086 = vrot.slane %v995, 3
  %v1087 = vrot.slane %v995, 4
  %v1088 = vrot.slane %v995, 5
  %v1097 = vadd.f32 %v1057, %v1082
  %v1098 = vadd.f32 %v1060, %v1083
  %v1099 = vadd.f32 %v1063, %v995
  %v1100 = vadd.f32 %v1066, %v1084
  %v1101 = vadd.f32 %v1069, %v1085
  %v1102 = vadd.f32 %v1072, %v1086
  %v1103 = vadd.f32 %v1075, %v1087
  %v1104 = vadd.f32 %v1078, %v1088
  %v1105 = vxor.u32 %v1097, 2147483648
  %v1106 = vxor.u32 %v1098, 2147483648
  %v1107 = vxor.u32 %v1099, 2147483648
  %v1108 = vxor.u32 %v1100, 2147483648
  %v1109 = vxor.u32 %v1101, 2147483648
  %v1110 = vxor.u32 %v1102, 2147483648
  %v1111 = vxor.u32 %v1103, 2147483648
  %v1112 = vxor.u32 %v1104, 2147483648
  %v1113 = vmul.f32 %v1105, 1.442695
  %v1114 = vpow.pop %v1113
  %v1115 = vmul.f32 %v1106, 1.442695
  %v1116 = vpow.pop %v1115
  %v1117 = vmul.f32 %v1107, 1.442695
  %v1118 = vpow.pop %v1117
  %v1119 = vmul.f32 %v1108, 1.442695
  %v1120 = vpow.pop %v1119
  %v1121 = vmul.f32 %v1109, 1.442695
  %v1122 = vpow.pop %v1121
  %v1123 = vmul.f32 %v1110, 1.442695
  %v1124 = vpow.pop %v1123
  %v1125 = vmul.f32 %v1111, 1.442695
  %v1126 = vpow.pop %v1125
  %v1127 = vmul.f32 %v1112, 1.442695
  %v1128 = vpow.pop %v1127
  %v1129 = vadd.f32 %v1114, 1.0
  %v1130 = vadd.f32 %v1116, 1.0
  %v1131 = vadd.f32 %v1118, 1.0
  %v1132 = vadd.f32 %v1120, 1.0
  %v1133 = vadd.f32 %v1122, 1.0
  %v1134 = vadd.f32 %v1124, 1.0
  %v1135 = vadd.f32 %v1126, 1.0
  %v1136 = vadd.f32 %v1128, 1.0
  %v1137 = vrcp.pop %v1129
  %v1138 = vmul.f32 1.0, %v1137
  %v1139 = vrcp.pop %v1130
  %v1140 = vmul.f32 1.0, %v1139
  %v1141 = vrcp.pop %v1131
  %v1142 = vmul.f32 1.0, %v1141
  %v1143 = vrcp.pop %v1132
  %v1144 = vmul.f32 1.0, %v1143
  %v1145 = vrcp.pop %v1133
  %v1146 = vmul.f32 1.0, %v1145
  %v1147 = vrcp.pop %v1134
  %v1148 = vmul.f32 1.0, %v1147
  %v1149 = vrcp.pop %v1135
  %v1150 = vmul.f32 1.0, %v1149
  %v1151 = vrcp.pop %v1136
  %v1152 = vmul.f32 1.0, %v1151
  %v1154 = vrot.slane %v997, 6
  %v1155 = vrot.slane %v997, 7
  %v1156 = vrot.slane %v997, 1
  %v1157 = vrot.slane %v997, 2
  %v1158 = vrot.slane %v997, 3
  %v1159 = vrot.slane %v997, 4
  %v1160 = vrot.slane %v997, 5
  %v1169 = vadd.f32 %v1058, %v1154
  %v1170 = vadd.f32 %v1061, %v1155
  %v1171 = vadd.f32 %v1064, %v997
  %v1172 = vadd.f32 %v1067, %v1156
  %v1173 = vadd.f32 %v1070, %v1157
  %v1174 = vadd.f32 %v1073, %v1158
  %v1175 = vadd.f32 %v1076, %v1159
  %v1176 = vadd.f32 %v1079, %v1160
  %v1177 = vxor.u32 %v1169, 2147483648
  %v1178 = vxor.u32 %v1170, 2147483648
  %v1179 = vxor.u32 %v1171, 2147483648
  %v1180 = vxor.u32 %v1172, 2147483648
  %v1181 = vxor.u32 %v1173, 2147483648
  %v1182 = vxor.u32 %v1174, 2147483648
  %v1183 = vxor.u32 %v1175, 2147483648
  %v1184 = vxor.u32 %v1176, 2147483648
  %v1185 = vmul.f32 %v1177, 1.442695
  %v1186 = vpow.pop %v1185
  %v1187 = vmul.f32 %v1178, 1.442695
  %v1188 = vpow.pop %v1187
  %v1189 = vmul.f32 %v1179, 1.442695
  %v1190 = vpow.pop %v1189
  %v1191 = vmul.f32 %v1180, 1.442695
  %v1192 = vpow.pop %v1191
  %v1193 = vmul.f32 %v1181, 1.442695
  %v1194 = vpow.pop %v1193
  %v1195 = vmul.f32 %v1182, 1.442695
  %v1196 = vpow.pop %v1195
  %v1197 = vmul.f32 %v1183, 1.442695
  %v1198 = vpow.pop %v1197
  %v1199 = vmul.f32 %v1184, 1.442695
  %v1200 = vpow.pop %v1199
  %v1201 = vadd.f32 %v1186, 1.0
  %v1202 = vadd.f32 %v1188, 1.0
  %v1203 = vadd.f32 %v1190, 1.0
  %v1204 = vadd.f32 %v1192, 1.0
  %v1205 = vadd.f32 %v1194, 1.0
  %v1206 = vadd.f32 %v1196, 1.0
  %v1207 = vadd.f32 %v1198, 1.0
  %v1208 = vadd.f32 %v1200, 1.0
  %v1209 = vrcp.pop %v1201
  %v1210 = vmul.f32 1.0, %v1209
  %v1211 = vrcp.pop %v1202
  %v1212 = vmul.f32 1.0, %v1211
  %v1213 = vrcp.pop %v1203
  %v1214 = vmul.f32 1.0, %v1213
  %v1215 = vrcp.pop %v1204
  %v1216 = vmul.f32 1.0, %v1215
  %v1217 = vrcp.pop %v1205
  %v1218 = vmul.f32 1.0, %v1217
  %v1219 = vrcp.pop %v1206
  %v1220 = vmul.f32 1.0, %v1219
  %v1221 = vrcp.pop %v1207
  %v1222 = vmul.f32 1.0, %v1221
  %v1223 = vrcp.pop %v1208
  %v1224 = vmul.f32 1.0, %v1223
  %v1226 = vrot.slane %v1036, 6
  %v1227 = vrot.slane %v1036, 7
  %v1228 = vrot.slane %v1036, 1
  %v1229 = vrot.slane %v1036, 2
  %v1230 = vrot.slane %v1036, 3
  %v1231 = vrot.slane %v1036, 4
  %v1232 = vrot.slane %v1036, 5
  %v1241 = vmul.f32 %v1138, %v1226
  %v1242 = vmul.f32 %v1140, %v1227
  %v1243 = vmul.f32 %v1142, %v1036
  %v1244 = vmul.f32 %v1144, %v1228
  %v1245 = vmul.f32 %v1146, %v1229
  %v1246 = vmul.f32 %v1148, %v1230
  %v1247 = vmul.f32 %v1150, %v1231
  %v1248 = vmul.f32 %v1152, %v1232
  %v1249 = vadd.f32 %v1059, %v1241
  %v1250 = vadd.f32 %v1062, %v1242
  %v1251 = vadd.f32 %v1065, %v1243
  %v1252 = vadd.f32 %v1068, %v1244
  %v1253 = vadd.f32 %v1071, %v1245
  %v1254 = vadd.f32 %v1074, %v1246
  %v1255 = vadd.f32 %v1077, %v1247
  %v1256 = vadd.f32 %v1080, %v1248
  %v1257 = vtanh.pop %v1249
  %v1258 = vtanh.pop %v1250
  %v1259 = vtanh.pop %v1251
  %v1260 = vtanh.pop %v1252
  %v1261 = vtanh.pop %v1253
  %v1262 = vtanh.pop %v1254
  %v1263 = vtanh.pop %v1255
  %v1264 = vtanh.pop %v1256
  %v1265 = vsub.f32 1.0, %v1210
  %v1266 = vsub.f32 1.0, %v1212
  %v1267 = vsub.f32 1.0, %v1214
  %v1268 = vsub.f32 1.0, %v1216
  %v1269 = vsub.f32 1.0, %v1218
  %v1270 = vsub.f32 1.0, %v1220
  %v1271 = vsub.f32 1.0, %v1222
  %v1272 = vsub.f32 1.0, %v1224
  %v1273 = vmul.f32 %v1265, %v1257
  %v1274 = vmul.f32 %v1266, %v1258
  %v1275 = vmul.f32 %v1267, %v1259
  %v1276 = vmul.f32 %v1268, %v1260
  %v1277 = vmul.f32 %v1269, %v1261
  %v1278 = vmul.f32 %v1270, %v1262
  %v1279 = vmul.f32 %v1271, %v1263
  %v1280 = vmul.f32 %v1272, %v1264
  %v1289 = vrot.slane %v912, 7
  %v1290 = vrot.slane %v913, 7
  %v1291 = vrot.slane %v914, 7
  %v1292 = vrot.slane %v915, 7
  %v1293 = vrot.slane %v916, 7
  %v1294 = vrot.slane %v917, 7
  %v1295 = vrot.slane %v918, 7
  %v1296 = vrot.slane %v919, 7
  %v1305 = vmul.f32 %v1210, %v1289
  %v1306 = vmul.f32 %v1212, %v1290
  %v1307 = vmul.f32 %v1214, %v1291
  %v1308 = vmul.f32 %v1216, %v1292
  %v1309 = vmul.f32 %v1218, %v1293
  %v1310 = vmul.f32 %v1220, %v1294
  %v1311 = vmul.f32 %v1222, %v1295
  %v1312 = vmul.f32 %v1224, %v1296
  %v1313 = vadd.f32 %v1273, %v1305
  %v1314 = vadd.f32 %v1274, %v1306
  %v1315 = vadd.f32 %v1275, %v1307
  %v1316 = vadd.f32 %v1276, %v1308
  %v1317 = vadd.f32 %v1277, %v1309
  %v1318 = vadd.f32 %v1278, %v1310
  %v1319 = vadd.f32 %v1279, %v1311
  %v1320 = vadd.f32 %v1280, %v1312
  %v1321 = vpack.c.bf16 %v1313, %v1313
  %v1322 = vpack.c.bf16 %v1314, %v1314
  %v1323 = vpack.c.bf16 %v1315, %v1315
  %v1324 = vpack.c.bf16 %v1316, %v1316
  %v1325 = vpack.c.bf16 %v1317, %v1317
  %v1326 = vpack.c.bf16 %v1318, %v1318
  %v1327 = vpack.c.bf16 %v1319, %v1319
  %v1328 = vpack.c.bf16 %v1320, %v1320
  %v1337 = vunpack.c.l.b16 %v1321
  %v1338 = vunpack.c.l.b16 %v1322
  %v1339 = vunpack.c.l.b16 %v1323
  %v1340 = vunpack.c.l.b16 %v1324
  %v1341 = vunpack.c.l.b16 %v1325
  %v1342 = vunpack.c.l.b16 %v1326
  %v1343 = vunpack.c.l.b16 %v1327
  %v1344 = vunpack.c.l.b16 %v1328
  %v1345 = vrot.slane %v1337, 2
  %v1346 = vrot.slane %v1338, 1
  %v1347 = vsel %vm577, %v1346, %v1345
  %v1348 = vsel %vm580, %v1339, %v1347
  %v1349 = vrot.slane %v1340, 7
  %v1350 = vsel %vm583, %v1349, %v1348
  %v1351 = vrot.slane %v1341, 6
  %v1352 = vsel %vm586, %v1351, %v1350
  %v1353 = vrot.slane %v1342, 5
  %v1354 = vsel %vm589, %v1353, %v1352
  %v1355 = vrot.slane %v1343, 4
  %v1356 = vsel %vm592, %v1355, %v1354
  %v1357 = vrot.slane %v1344, 3
  %v1358 = vsel %vm595, %v1357, %v1356
  %v1359 = vpack.c.b16 %v1358, %v1358
  %1361 = vmatprep.subr.bf16.mxu0 %v173
  %1362 = vmatpush1.bf16.msra.mxu0 %v172
  %1363 = vmatprep.subr.bf16.mxu0 %v170
  %1364 = vmatpush1.bf16.msra.mxu0 %v169
  %1365 = vmatprep.subr.bf16.mxu0 %v167
  %1366 = vmatpush1.bf16.msra.mxu0 %v166
  %1367 = vmatprep.subr.bf16.mxu0 %v164
  %1368 = vmatpush1.bf16.msra.mxu0 %v163
  %1369 = vmatprep.subr.bf16.mxu0 %v161
  %1370 = vmatpush1.bf16.msra.mxu0 %v160
  %1371 = vmatprep.subr.bf16.mxu0 %v158
  %1372 = vmatpush1.bf16.msra.mxu0 %v157
  %1373 = vmatprep.subr.bf16.mxu0 %v155
  %1374 = vmatpush1.bf16.msra.mxu0 %v154
  %1375 = vmatprep.subr.bf16.mxu0 %v152
  %1376 = vmatpush1.bf16.msra.mxu0 %v151
  %1377 = vmatprep.subr.bf16.mxu0 0
  %1378 = vmatpush2.bf16.msra.mxu0 0
  %1379 = vmatprep.subr.bf16.mxu0 0
  %1380 = vmatpush2.bf16.msra.mxu0 0
  %1381 = vmatprep.subr.bf16.mxu0 0
  %1382 = vmatpush2.bf16.msra.mxu0 0
  %1383 = vmatprep.subr.bf16.mxu0 0
  %1384 = vmatpush2.bf16.msra.mxu0 0
  %1385 = vmatprep.subr.bf16.mxu0 0
  %1386 = vmatpush2.bf16.msra.mxu0 0
  %1387 = vmatprep.subr.bf16.mxu0 0
  %1388 = vmatpush2.bf16.msra.mxu0 0
  %1389 = vmatprep.subr.bf16.mxu0 0
  %1390 = vmatpush2.bf16.msra.mxu0 0
  %1391 = vmatprep.subr.bf16.mxu0 0
  %1392 = vmatpush2.bf16.msra.mxu0 0
  %1393 = vmatprep.mubr.bf16.mxu0 0
  %1394 = vmatmul.mubr.bf16.gmra.mxu0 %v1359
  %v1395 = vpop.f32.mrf.mxu0
  %v1396 = vadd.f32 %v57, %v1395
  %v1397 = vpop.f32.mrf.mxu0
  %v1398 = vadd.f32 %v61, %v1397
  %v1399 = vpop.f32.mrf.mxu0
  %v1400 = vpop.f32.mrf.mxu0
  %1401 = vdwg.mxu0
  %1402 = vmatprep.subr.bf16.mxu0 0
  %1403 = vmatpush1.bf16.msra.mxu0 %v174
  %1404 = vmatprep.subr.bf16.mxu0 0
  %1405 = vmatpush1.bf16.msra.mxu0 %v171
  %1406 = vmatprep.subr.bf16.mxu0 0
  %1407 = vmatpush1.bf16.msra.mxu0 %v168
  %1408 = vmatprep.subr.bf16.mxu0 0
  %1409 = vmatpush1.bf16.msra.mxu0 %v165
  %1410 = vmatprep.subr.bf16.mxu0 0
  %1411 = vmatpush1.bf16.msra.mxu0 %v162
  %1412 = vmatprep.subr.bf16.mxu0 0
  %1413 = vmatpush1.bf16.msra.mxu0 %v159
  %1414 = vmatprep.subr.bf16.mxu0 0
  %1415 = vmatpush1.bf16.msra.mxu0 %v156
  %1416 = vmatprep.subr.bf16.mxu0 0
  %1417 = vmatpush1.bf16.msra.mxu0 %v153
  %1418 = vmatprep.subr.bf16.mxu0 0
  %1419 = vmatpush2.bf16.msra.mxu0 0
  %1420 = vmatprep.subr.bf16.mxu0 0
  %1421 = vmatpush2.bf16.msra.mxu0 0
  %1422 = vmatprep.subr.bf16.mxu0 0
  %1423 = vmatpush2.bf16.msra.mxu0 0
  %1424 = vmatprep.subr.bf16.mxu0 0
  %1425 = vmatpush2.bf16.msra.mxu0 0
  %1426 = vmatprep.subr.bf16.mxu0 0
  %1427 = vmatpush2.bf16.msra.mxu0 0
  %1428 = vmatprep.subr.bf16.mxu0 0
  %1429 = vmatpush2.bf16.msra.mxu0 0
  %1430 = vmatprep.subr.bf16.mxu0 0
  %1431 = vmatpush2.bf16.msra.mxu0 0
  %1432 = vmatprep.subr.bf16.mxu0 0
  %1433 = vmatpush2.bf16.msra.mxu0 0
  %1434 = vmatprep.mubr.bf16.mxu0 0
  %1435 = vmatmul.mubr.bf16.gmra.mxu0 %v1359
  %v1436 = vpop.f32.mrf.mxu0
  %v1437 = vadd.f32 %v65, %v1436
  %v1438 = vpop.f32.mrf.mxu0
  %v1439 = vpop.f32.mrf.mxu0
  %v1440 = vpop.f32.mrf.mxu0
  %1441 = vdwg.mxu0
  %v1443 = vrot.slane %v1396, 5
  %v1444 = vrot.slane %v1396, 6
  %v1445 = vrot.slane %v1396, 7
  %v1446 = vrot.slane %v1396, 1
  %v1447 = vrot.slane %v1396, 2
  %v1448 = vrot.slane %v1396, 3
  %v1449 = vrot.slane %v1396, 4
  %v1458 = vadd.f32 %v1057, %v1443
  %v1459 = vadd.f32 %v1060, %v1444
  %v1460 = vadd.f32 %v1063, %v1445
  %v1461 = vadd.f32 %v1066, %v1396
  %v1462 = vadd.f32 %v1069, %v1446
  %v1463 = vadd.f32 %v1072, %v1447
  %v1464 = vadd.f32 %v1075, %v1448
  %v1465 = vadd.f32 %v1078, %v1449
  %v1466 = vxor.u32 %v1458, 2147483648
  %v1467 = vxor.u32 %v1459, 2147483648
  %v1468 = vxor.u32 %v1460, 2147483648
  %v1469 = vxor.u32 %v1461, 2147483648
  %v1470 = vxor.u32 %v1462, 2147483648
  %v1471 = vxor.u32 %v1463, 2147483648
  %v1472 = vxor.u32 %v1464, 2147483648
  %v1473 = vxor.u32 %v1465, 2147483648
  %v1474 = vmul.f32 %v1466, 1.442695
  %v1475 = vpow.pop %v1474
  %v1476 = vmul.f32 %v1467, 1.442695
  %v1477 = vpow.pop %v1476
  %v1478 = vmul.f32 %v1468, 1.442695
  %v1479 = vpow.pop %v1478
  %v1480 = vmul.f32 %v1469, 1.442695
  %v1481 = vpow.pop %v1480
  %v1482 = vmul.f32 %v1470, 1.442695
  %v1483 = vpow.pop %v1482
  %v1484 = vmul.f32 %v1471, 1.442695
  %v1485 = vpow.pop %v1484
  %v1486 = vmul.f32 %v1472, 1.442695
  %v1487 = vpow.pop %v1486
  %v1488 = vmul.f32 %v1473, 1.442695
  %v1489 = vpow.pop %v1488
  %v1490 = vadd.f32 %v1475, 1.0
  %v1491 = vadd.f32 %v1477, 1.0
  %v1492 = vadd.f32 %v1479, 1.0
  %v1493 = vadd.f32 %v1481, 1.0
  %v1494 = vadd.f32 %v1483, 1.0
  %v1495 = vadd.f32 %v1485, 1.0
  %v1496 = vadd.f32 %v1487, 1.0
  %v1497 = vadd.f32 %v1489, 1.0
  %v1498 = vrcp.pop %v1490
  %v1499 = vmul.f32 1.0, %v1498
  %v1500 = vrcp.pop %v1491
  %v1501 = vmul.f32 1.0, %v1500
  %v1502 = vrcp.pop %v1492
  %v1503 = vmul.f32 1.0, %v1502
  %v1504 = vrcp.pop %v1493
  %v1505 = vmul.f32 1.0, %v1504
  %v1506 = vrcp.pop %v1494
  %v1507 = vmul.f32 1.0, %v1506
  %v1508 = vrcp.pop %v1495
  %v1509 = vmul.f32 1.0, %v1508
  %v1510 = vrcp.pop %v1496
  %v1511 = vmul.f32 1.0, %v1510
  %v1512 = vrcp.pop %v1497
  %v1513 = vmul.f32 1.0, %v1512
  %v1515 = vrot.slane %v1398, 5
  %v1516 = vrot.slane %v1398, 6
  %v1517 = vrot.slane %v1398, 7
  %v1518 = vrot.slane %v1398, 1
  %v1519 = vrot.slane %v1398, 2
  %v1520 = vrot.slane %v1398, 3
  %v1521 = vrot.slane %v1398, 4
  %v1530 = vadd.f32 %v1058, %v1515
  %v1531 = vadd.f32 %v1061, %v1516
  %v1532 = vadd.f32 %v1064, %v1517
  %v1533 = vadd.f32 %v1067, %v1398
  %v1534 = vadd.f32 %v1070, %v1518
  %v1535 = vadd.f32 %v1073, %v1519
  %v1536 = vadd.f32 %v1076, %v1520
  %v1537 = vadd.f32 %v1079, %v1521
  %v1538 = vxor.u32 %v1530, 2147483648
  %v1539 = vxor.u32 %v1531, 2147483648
  %v1540 = vxor.u32 %v1532, 2147483648
  %v1541 = vxor.u32 %v1533, 2147483648
  %v1542 = vxor.u32 %v1534, 2147483648
  %v1543 = vxor.u32 %v1535, 2147483648
  %v1544 = vxor.u32 %v1536, 2147483648
  %v1545 = vxor.u32 %v1537, 2147483648
  %v1546 = vmul.f32 %v1538, 1.442695
  %v1547 = vpow.pop %v1546
  %v1548 = vmul.f32 %v1539, 1.442695
  %v1549 = vpow.pop %v1548
  %v1550 = vmul.f32 %v1540, 1.442695
  %v1551 = vpow.pop %v1550
  %v1552 = vmul.f32 %v1541, 1.442695
  %v1553 = vpow.pop %v1552
  %v1554 = vmul.f32 %v1542, 1.442695
  %v1555 = vpow.pop %v1554
  %v1556 = vmul.f32 %v1543, 1.442695
  %v1557 = vpow.pop %v1556
  %v1558 = vmul.f32 %v1544, 1.442695
  %v1559 = vpow.pop %v1558
  %v1560 = vmul.f32 %v1545, 1.442695
  %v1561 = vpow.pop %v1560
  %v1562 = vadd.f32 %v1547, 1.0
  %v1563 = vadd.f32 %v1549, 1.0
  %v1564 = vadd.f32 %v1551, 1.0
  %v1565 = vadd.f32 %v1553, 1.0
  %v1566 = vadd.f32 %v1555, 1.0
  %v1567 = vadd.f32 %v1557, 1.0
  %v1568 = vadd.f32 %v1559, 1.0
  %v1569 = vadd.f32 %v1561, 1.0
  %v1570 = vrcp.pop %v1562
  %v1571 = vmul.f32 1.0, %v1570
  %v1572 = vrcp.pop %v1563
  %v1573 = vmul.f32 1.0, %v1572
  %v1574 = vrcp.pop %v1564
  %v1575 = vmul.f32 1.0, %v1574
  %v1576 = vrcp.pop %v1565
  %v1577 = vmul.f32 1.0, %v1576
  %v1578 = vrcp.pop %v1566
  %v1579 = vmul.f32 1.0, %v1578
  %v1580 = vrcp.pop %v1567
  %v1581 = vmul.f32 1.0, %v1580
  %v1582 = vrcp.pop %v1568
  %v1583 = vmul.f32 1.0, %v1582
  %v1584 = vrcp.pop %v1569
  %v1585 = vmul.f32 1.0, %v1584
  %v1587 = vrot.slane %v1437, 5
  %v1588 = vrot.slane %v1437, 6
  %v1589 = vrot.slane %v1437, 7
  %v1590 = vrot.slane %v1437, 1
  %v1591 = vrot.slane %v1437, 2
  %v1592 = vrot.slane %v1437, 3
  %v1593 = vrot.slane %v1437, 4
  %v1602 = vmul.f32 %v1499, %v1587
  %v1603 = vmul.f32 %v1501, %v1588
  %v1604 = vmul.f32 %v1503, %v1589
  %v1605 = vmul.f32 %v1505, %v1437
  %v1606 = vmul.f32 %v1507, %v1590
  %v1607 = vmul.f32 %v1509, %v1591
  %v1608 = vmul.f32 %v1511, %v1592
  %v1609 = vmul.f32 %v1513, %v1593
  %v1610 = vadd.f32 %v1059, %v1602
  %v1611 = vadd.f32 %v1062, %v1603
  %v1612 = vadd.f32 %v1065, %v1604
  %v1613 = vadd.f32 %v1068, %v1605
  %v1614 = vadd.f32 %v1071, %v1606
  %v1615 = vadd.f32 %v1074, %v1607
  %v1616 = vadd.f32 %v1077, %v1608
  %v1617 = vadd.f32 %v1080, %v1609
  %v1618 = vtanh.pop %v1610
  %v1619 = vtanh.pop %v1611
  %v1620 = vtanh.pop %v1612
  %v1621 = vtanh.pop %v1613
  %v1622 = vtanh.pop %v1614
  %v1623 = vtanh.pop %v1615
  %v1624 = vtanh.pop %v1616
  %v1625 = vtanh.pop %v1617
  %v1626 = vsub.f32 1.0, %v1571
  %v1627 = vsub.f32 1.0, %v1573
  %v1628 = vsub.f32 1.0, %v1575
  %v1629 = vsub.f32 1.0, %v1577
  %v1630 = vsub.f32 1.0, %v1579
  %v1631 = vsub.f32 1.0, %v1581
  %v1632 = vsub.f32 1.0, %v1583
  %v1633 = vsub.f32 1.0, %v1585
  %v1634 = vmul.f32 %v1626, %v1618
  %v1635 = vmul.f32 %v1627, %v1619
  %v1636 = vmul.f32 %v1628, %v1620
  %v1637 = vmul.f32 %v1629, %v1621
  %v1638 = vmul.f32 %v1630, %v1622
  %v1639 = vmul.f32 %v1631, %v1623
  %v1640 = vmul.f32 %v1632, %v1624
  %v1641 = vmul.f32 %v1633, %v1625
  %v1650 = vrot.slane %v1313, 7
  %v1651 = vrot.slane %v1314, 7
  %v1652 = vrot.slane %v1315, 7
  %v1653 = vrot.slane %v1316, 7
  %v1654 = vrot.slane %v1317, 7
  %v1655 = vrot.slane %v1318, 7
  %v1656 = vrot.slane %v1319, 7
  %v1657 = vrot.slane %v1320, 7
  %v1666 = vmul.f32 %v1571, %v1650
  %v1667 = vmul.f32 %v1573, %v1651
  %v1668 = vmul.f32 %v1575, %v1652
  %v1669 = vmul.f32 %v1577, %v1653
  %v1670 = vmul.f32 %v1579, %v1654
  %v1671 = vmul.f32 %v1581, %v1655
  %v1672 = vmul.f32 %v1583, %v1656
  %v1673 = vmul.f32 %v1585, %v1657
  %v1674 = vadd.f32 %v1634, %v1666
  %v1675 = vadd.f32 %v1635, %v1667
  %v1676 = vadd.f32 %v1636, %v1668
  %v1677 = vadd.f32 %v1637, %v1669
  %v1678 = vadd.f32 %v1638, %v1670
  %v1679 = vadd.f32 %v1639, %v1671
  %v1680 = vadd.f32 %v1640, %v1672
  %v1681 = vadd.f32 %v1641, %v1673
  %v1682 = vpack.c.bf16 %v1674, %v1674
  %v1683 = vpack.c.bf16 %v1675, %v1675
  %v1684 = vpack.c.bf16 %v1676, %v1676
  %v1685 = vpack.c.bf16 %v1677, %v1677
  %v1686 = vpack.c.bf16 %v1678, %v1678
  %v1687 = vpack.c.bf16 %v1679, %v1679
  %v1688 = vpack.c.bf16 %v1680, %v1680
  %v1689 = vpack.c.bf16 %v1681, %v1681
  %v1698 = vunpack.c.l.b16 %v1682
  %v1699 = vunpack.c.l.b16 %v1683
  %v1700 = vunpack.c.l.b16 %v1684
  %v1701 = vunpack.c.l.b16 %v1685
  %v1702 = vunpack.c.l.b16 %v1686
  %v1703 = vunpack.c.l.b16 %v1687
  %v1704 = vunpack.c.l.b16 %v1688
  %v1705 = vunpack.c.l.b16 %v1689
  %v1706 = vrot.slane %v1698, 3
  %v1707 = vrot.slane %v1699, 2
  %v1708 = vsel %vm577, %v1707, %v1706
  %v1709 = vrot.slane %v1700, 1
  %v1710 = vsel %vm580, %v1709, %v1708
  %v1711 = vsel %vm583, %v1701, %v1710
  %v1712 = vrot.slane %v1702, 7
  %v1713 = vsel %vm586, %v1712, %v1711
  %v1714 = vrot.slane %v1703, 6
  %v1715 = vsel %vm589, %v1714, %v1713
  %v1716 = vrot.slane %v1704, 5
  %v1717 = vsel %vm592, %v1716, %v1715
  %v1718 = vrot.slane %v1705, 4
  %v1719 = vsel %vm595, %v1718, %v1717
  %v1720 = vpack.c.b16 %v1719, %v1719
  %1722 = vmatprep.subr.bf16.mxu0 %v173
  %1723 = vmatpush1.bf16.msra.mxu0 %v172
  %1724 = vmatprep.subr.bf16.mxu0 %v170
  %1725 = vmatpush1.bf16.msra.mxu0 %v169
  %1726 = vmatprep.subr.bf16.mxu0 %v167
  %1727 = vmatpush1.bf16.msra.mxu0 %v166
  %1728 = vmatprep.subr.bf16.mxu0 %v164
  %1729 = vmatpush1.bf16.msra.mxu0 %v163
  %1730 = vmatprep.subr.bf16.mxu0 %v161
  %1731 = vmatpush1.bf16.msra.mxu0 %v160
  %1732 = vmatprep.subr.bf16.mxu0 %v158
  %1733 = vmatpush1.bf16.msra.mxu0 %v157
  %1734 = vmatprep.subr.bf16.mxu0 %v155
  %1735 = vmatpush1.bf16.msra.mxu0 %v154
  %1736 = vmatprep.subr.bf16.mxu0 %v152
  %1737 = vmatpush1.bf16.msra.mxu0 %v151
  %1738 = vmatprep.subr.bf16.mxu0 0
  %1739 = vmatpush2.bf16.msra.mxu0 0
  %1740 = vmatprep.subr.bf16.mxu0 0
  %1741 = vmatpush2.bf16.msra.mxu0 0
  %1742 = vmatprep.subr.bf16.mxu0 0
  %1743 = vmatpush2.bf16.msra.mxu0 0
  %1744 = vmatprep.subr.bf16.mxu0 0
  %1745 = vmatpush2.bf16.msra.mxu0 0
  %1746 = vmatprep.subr.bf16.mxu0 0
  %1747 = vmatpush2.bf16.msra.mxu0 0
  %1748 = vmatprep.subr.bf16.mxu0 0
  %1749 = vmatpush2.bf16.msra.mxu0 0
  %1750 = vmatprep.subr.bf16.mxu0 0
  %1751 = vmatpush2.bf16.msra.mxu0 0
  %1752 = vmatprep.subr.bf16.mxu0 0
  %1753 = vmatpush2.bf16.msra.mxu0 0
  %1754 = vmatprep.mubr.bf16.mxu0 0
  %1755 = vmatmul.mubr.bf16.gmra.mxu0 %v1720
  %v1756 = vpop.f32.mrf.mxu0
  %v1757 = vadd.f32 %v57, %v1756
  %v1758 = vpop.f32.mrf.mxu0
  %v1759 = vadd.f32 %v61, %v1758
  %v1760 = vpop.f32.mrf.mxu0
  %v1761 = vpop.f32.mrf.mxu0
  %1762 = vdwg.mxu0
  %1763 = vmatprep.subr.bf16.mxu0 0
  %1764 = vmatpush1.bf16.msra.mxu0 %v174
  %1765 = vmatprep.subr.bf16.mxu0 0
  %1766 = vmatpush1.bf16.msra.mxu0 %v171
  %1767 = vmatprep.subr.bf16.mxu0 0
  %1768 = vmatpush1.bf16.msra.mxu0 %v168
  %1769 = vmatprep.subr.bf16.mxu0 0
  %1770 = vmatpush1.bf16.msra.mxu0 %v165
  %1771 = vmatprep.subr.bf16.mxu0 0
  %1772 = vmatpush1.bf16.msra.mxu0 %v162
  %1773 = vmatprep.subr.bf16.mxu0 0
  %1774 = vmatpush1.bf16.msra.mxu0 %v159
  %1775 = vmatprep.subr.bf16.mxu0 0
  %1776 = vmatpush1.bf16.msra.mxu0 %v156
  %1777 = vmatprep.subr.bf16.mxu0 0
  %1778 = vmatpush1.bf16.msra.mxu0 %v153
  %1779 = vmatprep.subr.bf16.mxu0 0
  %1780 = vmatpush2.bf16.msra.mxu0 0
  %1781 = vmatprep.subr.bf16.mxu0 0
  %1782 = vmatpush2.bf16.msra.mxu0 0
  %1783 = vmatprep.subr.bf16.mxu0 0
  %1784 = vmatpush2.bf16.msra.mxu0 0
  %1785 = vmatprep.subr.bf16.mxu0 0
  %1786 = vmatpush2.bf16.msra.mxu0 0
  %1787 = vmatprep.subr.bf16.mxu0 0
  %1788 = vmatpush2.bf16.msra.mxu0 0
  %1789 = vmatprep.subr.bf16.mxu0 0
  %1790 = vmatpush2.bf16.msra.mxu0 0
  %1791 = vmatprep.subr.bf16.mxu0 0
  %1792 = vmatpush2.bf16.msra.mxu0 0
  %1793 = vmatprep.subr.bf16.mxu0 0
  %1794 = vmatpush2.bf16.msra.mxu0 0
  %1795 = vmatprep.mubr.bf16.mxu0 0
  %1796 = vmatmul.mubr.bf16.gmra.mxu0 %v1720
  %v1797 = vpop.f32.mrf.mxu0
  %v1798 = vadd.f32 %v65, %v1797
  %v1799 = vpop.f32.mrf.mxu0
  %v1800 = vpop.f32.mrf.mxu0
  %v1801 = vpop.f32.mrf.mxu0
  %1802 = vdwg.mxu0
  %v1803 = vld [vmem:[%s0] sm:$0x44]
  %v1804 = vld [vmem:[%s0 + $0x8] sm:$0x4]
  %v1805 = vld [vmem:[%s0 + $0x18] sm:$0x44]
  %v1806 = vld [vmem:[%s0 + $0x20] sm:$0x4]
  %v1807 = vld [vmem:[%s0 + $0x30] sm:$0x44]
  %v1808 = vld [vmem:[%s0 + $0x38] sm:$0x4]
  %v1809 = vld [vmem:[%s0 + $0x48] sm:$0x44]
  %v1810 = vld [vmem:[%s0 + $0x50] sm:$0x4]
  %v1811 = vld [vmem:[%s0 + $0x60] sm:$0x44]
  %v1812 = vld [vmem:[%s0 + $0x68] sm:$0x4]
  %v1813 = vld [vmem:[%s0 + $0x78] sm:$0x44]
  %v1814 = vld [vmem:[%s0 + $0x80] sm:$0x4]
  %v1815 = vld [vmem:[%s0 + $0x90] sm:$0x44]
  %v1816 = vld [vmem:[%s0 + $0x98] sm:$0x4]
  %v1817 = vld [vmem:[%s0 + $0xa8] sm:$0x44]
  %v1818 = vld [vmem:[%s0 + $0xb0] sm:$0x4]
  %v1819 = vunpack.c.l.bf16 %v1803
  %v1820 = vunpack.c.h.bf16 %v1803
  %v1821 = vunpack.c.l.bf16 %v1804
  %v1822 = vunpack.c.l.bf16 %v1805
  %v1823 = vunpack.c.h.bf16 %v1805
  %v1824 = vunpack.c.l.bf16 %v1806
  %v1825 = vunpack.c.l.bf16 %v1807
  %v1826 = vunpack.c.h.bf16 %v1807
  %v1827 = vunpack.c.l.bf16 %v1808
  %v1828 = vunpack.c.l.bf16 %v1809
  %v1829 = vunpack.c.h.bf16 %v1809
  %v1830 = vunpack.c.l.bf16 %v1810
  %v1831 = vunpack.c.l.bf16 %v1811
  %v1832 = vunpack.c.h.bf16 %v1811
  %v1833 = vunpack.c.l.bf16 %v1812
  %v1834 = vunpack.c.l.bf16 %v1813
  %v1835 = vunpack.c.h.bf16 %v1813
  %v1836 = vunpack.c.l.bf16 %v1814
  %v1837 = vunpack.c.l.bf16 %v1815
  %v1838 = vunpack.c.h.bf16 %v1815
  %v1839 = vunpack.c.l.bf16 %v1816
  %v1840 = vunpack.c.l.bf16 %v1817
  %v1841 = vunpack.c.h.bf16 %v1817
  %v1842 = vunpack.c.l.bf16 %v1818
  %v1844 = vrot.slane %v1757, 4
  %v1845 = vrot.slane %v1757, 5
  %v1846 = vrot.slane %v1757, 6
  %v1847 = vrot.slane %v1757, 7
  %v1848 = vrot.slane %v1757, 1
  %v1849 = vrot.slane %v1757, 2
  %v1850 = vrot.slane %v1757, 3
  %v1859 = vadd.f32 %v1819, %v1844
  %v1860 = vadd.f32 %v1822, %v1845
  %v1861 = vadd.f32 %v1825, %v1846
  %v1862 = vadd.f32 %v1828, %v1847
  %v1863 = vadd.f32 %v1831, %v1757
  %v1864 = vadd.f32 %v1834, %v1848
  %v1865 = vadd.f32 %v1837, %v1849
  %v1866 = vadd.f32 %v1840, %v1850
  %v1867 = vxor.u32 %v1859, 2147483648
  %v1868 = vxor.u32 %v1860, 2147483648
  %v1869 = vxor.u32 %v1861, 2147483648
  %v1870 = vxor.u32 %v1862, 2147483648
  %v1871 = vxor.u32 %v1863, 2147483648
  %v1872 = vxor.u32 %v1864, 2147483648
  %v1873 = vxor.u32 %v1865, 2147483648
  %v1874 = vxor.u32 %v1866, 2147483648
  %v1875 = vmul.f32 %v1867, 1.442695
  %v1876 = vpow.pop %v1875
  %v1877 = vmul.f32 %v1868, 1.442695
  %v1878 = vpow.pop %v1877
  %v1879 = vmul.f32 %v1869, 1.442695
  %v1880 = vpow.pop %v1879
  %v1881 = vmul.f32 %v1870, 1.442695
  %v1882 = vpow.pop %v1881
  %v1883 = vmul.f32 %v1871, 1.442695
  %v1884 = vpow.pop %v1883
  %v1885 = vmul.f32 %v1872, 1.442695
  %v1886 = vpow.pop %v1885
  %v1887 = vmul.f32 %v1873, 1.442695
  %v1888 = vpow.pop %v1887
  %v1889 = vmul.f32 %v1874, 1.442695
  %v1890 = vpow.pop %v1889
  %v1891 = vadd.f32 %v1876, 1.0
  %v1892 = vadd.f32 %v1878, 1.0
  %v1893 = vadd.f32 %v1880, 1.0
  %v1894 = vadd.f32 %v1882, 1.0
  %v1895 = vadd.f32 %v1884, 1.0
  %v1896 = vadd.f32 %v1886, 1.0
  %v1897 = vadd.f32 %v1888, 1.0
  %v1898 = vadd.f32 %v1890, 1.0
  %v1899 = vrcp.pop %v1891
  %v1900 = vmul.f32 1.0, %v1899
  %v1901 = vrcp.pop %v1892
  %v1902 = vmul.f32 1.0, %v1901
  %v1903 = vrcp.pop %v1893
  %v1904 = vmul.f32 1.0, %v1903
  %v1905 = vrcp.pop %v1894
  %v1906 = vmul.f32 1.0, %v1905
  %v1907 = vrcp.pop %v1895
  %v1908 = vmul.f32 1.0, %v1907
  %v1909 = vrcp.pop %v1896
  %v1910 = vmul.f32 1.0, %v1909
  %v1911 = vrcp.pop %v1897
  %v1912 = vmul.f32 1.0, %v1911
  %v1913 = vrcp.pop %v1898
  %v1914 = vmul.f32 1.0, %v1913
  %v1916 = vrot.slane %v1759, 4
  %v1917 = vrot.slane %v1759, 5
  %v1918 = vrot.slane %v1759, 6
  %v1919 = vrot.slane %v1759, 7
  %v1920 = vrot.slane %v1759, 1
  %v1921 = vrot.slane %v1759, 2
  %v1922 = vrot.slane %v1759, 3
  %v1931 = vadd.f32 %v1820, %v1916
  %v1932 = vadd.f32 %v1823, %v1917
  %v1933 = vadd.f32 %v1826, %v1918
  %v1934 = vadd.f32 %v1829, %v1919
  %v1935 = vadd.f32 %v1832, %v1759
  %v1936 = vadd.f32 %v1835, %v1920
  %v1937 = vadd.f32 %v1838, %v1921
  %v1938 = vadd.f32 %v1841, %v1922
  %v1939 = vxor.u32 %v1931, 2147483648
  %v1940 = vxor.u32 %v1932, 2147483648
  %v1941 = vxor.u32 %v1933, 2147483648
  %v1942 = vxor.u32 %v1934, 2147483648
  %v1943 = vxor.u32 %v1935, 2147483648
  %v1944 = vxor.u32 %v1936, 2147483648
  %v1945 = vxor.u32 %v1937, 2147483648
  %v1946 = vxor.u32 %v1938, 2147483648
  %v1947 = vmul.f32 %v1939, 1.442695
  %v1948 = vpow.pop %v1947
  %v1949 = vmul.f32 %v1940, 1.442695
  %v1950 = vpow.pop %v1949
  %v1951 = vmul.f32 %v1941, 1.442695
  %v1952 = vpow.pop %v1951
  %v1953 = vmul.f32 %v1942, 1.442695
  %v1954 = vpow.pop %v1953
  %v1955 = vmul.f32 %v1943, 1.442695
  %v1956 = vpow.pop %v1955
  %v1957 = vmul.f32 %v1944, 1.442695
  %v1958 = vpow.pop %v1957
  %v1959 = vmul.f32 %v1945, 1.442695
  %v1960 = vpow.pop %v1959
  %v1961 = vmul.f32 %v1946, 1.442695
  %v1962 = vpow.pop %v1961
  %v1963 = vadd.f32 %v1948, 1.0
  %v1964 = vadd.f32 %v1950, 1.0
  %v1965 = vadd.f32 %v1952, 1.0
  %v1966 = vadd.f32 %v1954, 1.0
  %v1967 = vadd.f32 %v1956, 1.0
  %v1968 = vadd.f32 %v1958, 1.0
  %v1969 = vadd.f32 %v1960, 1.0
  %v1970 = vadd.f32 %v1962, 1.0
  %v1971 = vrcp.pop %v1963
  %v1972 = vmul.f32 1.0, %v1971
  %v1973 = vrcp.pop %v1964
  %v1974 = vmul.f32 1.0, %v1973
  %v1975 = vrcp.pop %v1965
  %v1976 = vmul.f32 1.0, %v1975
  %v1977 = vrcp.pop %v1966
  %v1978 = vmul.f32 1.0, %v1977
  %v1979 = vrcp.pop %v1967
  %v1980 = vmul.f32 1.0, %v1979
  %v1981 = vrcp.pop %v1968
  %v1982 = vmul.f32 1.0, %v1981
  %v1983 = vrcp.pop %v1969
  %v1984 = vmul.f32 1.0, %v1983
  %v1985 = vrcp.pop %v1970
  %v1986 = vmul.f32 1.0, %v1985
  %v1988 = vrot.slane %v1798, 4
  %v1989 = vrot.slane %v1798, 5
  %v1990 = vrot.slane %v1798, 6
  %v1991 = vrot.slane %v1798, 7
  %v1992 = vrot.slane %v1798, 1
  %v1993 = vrot.slane %v1798, 2
  %v1994 = vrot.slane %v1798, 3
  %v2003 = vmul.f32 %v1900, %v1988
  %v2004 = vmul.f32 %v1902, %v1989
  %v2005 = vmul.f32 %v1904, %v1990
  %v2006 = vmul.f32 %v1906, %v1991
  %v2007 = vmul.f32 %v1908, %v1798
  %v2008 = vmul.f32 %v1910, %v1992
  %v2009 = vmul.f32 %v1912, %v1993
  %v2010 = vmul.f32 %v1914, %v1994
  %v2011 = vadd.f32 %v1821, %v2003
  %v2012 = vadd.f32 %v1824, %v2004
  %v2013 = vadd.f32 %v1827, %v2005
  %v2014 = vadd.f32 %v1830, %v2006
  %v2015 = vadd.f32 %v1833, %v2007
  %v2016 = vadd.f32 %v1836, %v2008
  %v2017 = vadd.f32 %v1839, %v2009
  %v2018 = vadd.f32 %v1842, %v2010
  %v2019 = vtanh.pop %v2011
  %v2020 = vtanh.pop %v2012
  %v2021 = vtanh.pop %v2013
  %v2022 = vtanh.pop %v2014
  %v2023 = vtanh.pop %v2015
  %v2024 = vtanh.pop %v2016
  %v2025 = vtanh.pop %v2017
  %v2026 = vtanh.pop %v2018
  %v2027 = vsub.f32 1.0, %v1972
  %v2028 = vsub.f32 1.0, %v1974
  %v2029 = vsub.f32 1.0, %v1976
  %v2030 = vsub.f32 1.0, %v1978
  %v2031 = vsub.f32 1.0, %v1980
  %v2032 = vsub.f32 1.0, %v1982
  %v2033 = vsub.f32 1.0, %v1984
  %v2034 = vsub.f32 1.0, %v1986
  %v2035 = vmul.f32 %v2027, %v2019
  %v2036 = vmul.f32 %v2028, %v2020
  %v2037 = vmul.f32 %v2029, %v2021
  %v2038 = vmul.f32 %v2030, %v2022
  %v2039 = vmul.f32 %v2031, %v2023
  %v2040 = vmul.f32 %v2032, %v2024
  %v2041 = vmul.f32 %v2033, %v2025
  %v2042 = vmul.f32 %v2034, %v2026
  %v2051 = vrot.slane %v1674, 7
  %v2052 = vrot.slane %v1675, 7
  %v2053 = vrot.slane %v1676, 7
  %v2054 = vrot.slane %v1677, 7
  %v2055 = vrot.slane %v1678, 7
  %v2056 = vrot.slane %v1679, 7
  %v2057 = vrot.slane %v1680, 7
  %v2058 = vrot.slane %v1681, 7
  %v2067 = vmul.f32 %v1972, %v2051
  %v2068 = vmul.f32 %v1974, %v2052
  %v2069 = vmul.f32 %v1976, %v2053
  %v2070 = vmul.f32 %v1978, %v2054
  %v2071 = vmul.f32 %v1980, %v2055
  %v2072 = vmul.f32 %v1982, %v2056
  %v2073 = vmul.f32 %v1984, %v2057
  %v2074 = vmul.f32 %v1986, %v2058
  %v2075 = vadd.f32 %v2035, %v2067
  %v2076 = vadd.f32 %v2036, %v2068
  %v2077 = vadd.f32 %v2037, %v2069
  %v2078 = vadd.f32 %v2038, %v2070
  %v2079 = vadd.f32 %v2039, %v2071
  %v2080 = vadd.f32 %v2040, %v2072
  %v2081 = vadd.f32 %v2041, %v2073
  %v2082 = vadd.f32 %v2042, %v2074
  %v2083 = vpack.c.bf16 %v2075, %v2075
  %v2084 = vpack.c.bf16 %v2076, %v2076
  %v2085 = vpack.c.bf16 %v2077, %v2077
  %v2086 = vpack.c.bf16 %v2078, %v2078
  %v2087 = vpack.c.bf16 %v2079, %v2079
  %v2088 = vpack.c.bf16 %v2080, %v2080
  %v2089 = vpack.c.bf16 %v2081, %v2081
  %v2090 = vpack.c.bf16 %v2082, %v2082
  %v2099 = vunpack.c.l.b16 %v2083
  %v2100 = vunpack.c.l.b16 %v2084
  %v2101 = vunpack.c.l.b16 %v2085
  %v2102 = vunpack.c.l.b16 %v2086
  %v2103 = vunpack.c.l.b16 %v2087
  %v2104 = vunpack.c.l.b16 %v2088
  %v2105 = vunpack.c.l.b16 %v2089
  %v2106 = vunpack.c.l.b16 %v2090
  %v2107 = vrot.slane %v2099, 4
  %v2108 = vrot.slane %v2100, 3
  %v2109 = vsel %vm577, %v2108, %v2107
  %v2110 = vrot.slane %v2101, 2
  %v2111 = vsel %vm580, %v2110, %v2109
  %v2112 = vrot.slane %v2102, 1
  %v2113 = vsel %vm583, %v2112, %v2111
  %v2114 = vsel %vm586, %v2103, %v2113
  %v2115 = vrot.slane %v2104, 7
  %v2116 = vsel %vm589, %v2115, %v2114
  %v2117 = vrot.slane %v2105, 6
  %v2118 = vsel %vm592, %v2117, %v2116
  %v2119 = vrot.slane %v2106, 5
  %v2120 = vsel %vm595, %v2119, %v2118
  %v2121 = vpack.c.b16 %v2120, %v2120
  %2123 = vmatprep.subr.bf16.mxu0 %v173
  %2124 = vmatpush1.bf16.msra.mxu0 %v172
  %2125 = vmatprep.subr.bf16.mxu0 %v170
  %2126 = vmatpush1.bf16.msra.mxu0 %v169
  %2127 = vmatprep.subr.bf16.mxu0 %v167
  %2128 = vmatpush1.bf16.msra.mxu0 %v166
  %2129 = vmatprep.subr.bf16.mxu0 %v164
  %2130 = vmatpush1.bf16.msra.mxu0 %v163
  %2131 = vmatprep.subr.bf16.mxu0 %v161
  %2132 = vmatpush1.bf16.msra.mxu0 %v160
  %2133 = vmatprep.subr.bf16.mxu0 %v158
  %2134 = vmatpush1.bf16.msra.mxu0 %v157
  %2135 = vmatprep.subr.bf16.mxu0 %v155
  %2136 = vmatpush1.bf16.msra.mxu0 %v154
  %2137 = vmatprep.subr.bf16.mxu0 %v152
  %2138 = vmatpush1.bf16.msra.mxu0 %v151
  %2139 = vmatprep.subr.bf16.mxu0 0
  %2140 = vmatpush2.bf16.msra.mxu0 0
  %2141 = vmatprep.subr.bf16.mxu0 0
  %2142 = vmatpush2.bf16.msra.mxu0 0
  %2143 = vmatprep.subr.bf16.mxu0 0
  %2144 = vmatpush2.bf16.msra.mxu0 0
  %2145 = vmatprep.subr.bf16.mxu0 0
  %2146 = vmatpush2.bf16.msra.mxu0 0
  %2147 = vmatprep.subr.bf16.mxu0 0
  %2148 = vmatpush2.bf16.msra.mxu0 0
  %2149 = vmatprep.subr.bf16.mxu0 0
  %2150 = vmatpush2.bf16.msra.mxu0 0
  %2151 = vmatprep.subr.bf16.mxu0 0
  %2152 = vmatpush2.bf16.msra.mxu0 0
  %2153 = vmatprep.subr.bf16.mxu0 0
  %2154 = vmatpush2.bf16.msra.mxu0 0
  %2155 = vmatprep.mubr.bf16.mxu0 0
  %2156 = vmatmul.mubr.bf16.gmra.mxu0 %v2121
  %v2157 = vpop.f32.mrf.mxu0
  %v2158 = vadd.f32 %v57, %v2157
  %v2159 = vpop.f32.mrf.mxu0
  %v2160 = vadd.f32 %v61, %v2159
  %v2161 = vpop.f32.mrf.mxu0
  %v2162 = vpop.f32.mrf.mxu0
  %2163 = vdwg.mxu0
  %2164 = vmatprep.subr.bf16.mxu0 0
  %2165 = vmatpush1.bf16.msra.mxu0 %v174
  %2166 = vmatprep.subr.bf16.mxu0 0
  %2167 = vmatpush1.bf16.msra.mxu0 %v171
  %2168 = vmatprep.subr.bf16.mxu0 0
  %2169 = vmatpush1.bf16.msra.mxu0 %v168
  %2170 = vmatprep.subr.bf16.mxu0 0
  %2171 = vmatpush1.bf16.msra.mxu0 %v165
  %2172 = vmatprep.subr.bf16.mxu0 0
  %2173 = vmatpush1.bf16.msra.mxu0 %v162
  %2174 = vmatprep.subr.bf16.mxu0 0
  %2175 = vmatpush1.bf16.msra.mxu0 %v159
  %2176 = vmatprep.subr.bf16.mxu0 0
  %2177 = vmatpush1.bf16.msra.mxu0 %v156
  %2178 = vmatprep.subr.bf16.mxu0 0
  %2179 = vmatpush1.bf16.msra.mxu0 %v153
  %2180 = vmatprep.subr.bf16.mxu0 0
  %2181 = vmatpush2.bf16.msra.mxu0 0
  %2182 = vmatprep.subr.bf16.mxu0 0
  %2183 = vmatpush2.bf16.msra.mxu0 0
  %2184 = vmatprep.subr.bf16.mxu0 0
  %2185 = vmatpush2.bf16.msra.mxu0 0
  %2186 = vmatprep.subr.bf16.mxu0 0
  %2187 = vmatpush2.bf16.msra.mxu0 0
  %2188 = vmatprep.subr.bf16.mxu0 0
  %2189 = vmatpush2.bf16.msra.mxu0 0
  %2190 = vmatprep.subr.bf16.mxu0 0
  %2191 = vmatpush2.bf16.msra.mxu0 0
  %2192 = vmatprep.subr.bf16.mxu0 0
  %2193 = vmatpush2.bf16.msra.mxu0 0
  %2194 = vmatprep.subr.bf16.mxu0 0
  %2195 = vmatpush2.bf16.msra.mxu0 0
  %2196 = vmatprep.mubr.bf16.mxu0 0
  %2197 = vmatmul.mubr.bf16.gmra.mxu0 %v2121
  %v2198 = vpop.f32.mrf.mxu0
  %v2199 = vadd.f32 %v65, %v2198
  %v2200 = vpop.f32.mrf.mxu0
  %v2201 = vpop.f32.mrf.mxu0
  %v2202 = vpop.f32.mrf.mxu0
  %2203 = vdwg.mxu0
  %v2205 = vrot.slane %v2158, 3
  %v2206 = vrot.slane %v2158, 4
  %v2207 = vrot.slane %v2158, 5
  %v2208 = vrot.slane %v2158, 6
  %v2209 = vrot.slane %v2158, 7
  %v2210 = vrot.slane %v2158, 1
  %v2211 = vrot.slane %v2158, 2
  %v2220 = vadd.f32 %v1819, %v2205
  %v2221 = vadd.f32 %v1822, %v2206
  %v2222 = vadd.f32 %v1825, %v2207
  %v2223 = vadd.f32 %v1828, %v2208
  %v2224 = vadd.f32 %v1831, %v2209
  %v2225 = vadd.f32 %v1834, %v2158
  %v2226 = vadd.f32 %v1837, %v2210
  %v2227 = vadd.f32 %v1840, %v2211
  %v2228 = vxor.u32 %v2220, 2147483648
  %v2229 = vxor.u32 %v2221, 2147483648
  %v2230 = vxor.u32 %v2222, 2147483648
  %v2231 = vxor.u32 %v2223, 2147483648
  %v2232 = vxor.u32 %v2224, 2147483648
  %v2233 = vxor.u32 %v2225, 2147483648
  %v2234 = vxor.u32 %v2226, 2147483648
  %v2235 = vxor.u32 %v2227, 2147483648
  %v2236 = vmul.f32 %v2228, 1.442695
  %v2237 = vpow.pop %v2236
  %v2238 = vmul.f32 %v2229, 1.442695
  %v2239 = vpow.pop %v2238
  %v2240 = vmul.f32 %v2230, 1.442695
  %v2241 = vpow.pop %v2240
  %v2242 = vmul.f32 %v2231, 1.442695
  %v2243 = vpow.pop %v2242
  %v2244 = vmul.f32 %v2232, 1.442695
  %v2245 = vpow.pop %v2244
  %v2246 = vmul.f32 %v2233, 1.442695
  %v2247 = vpow.pop %v2246
  %v2248 = vmul.f32 %v2234, 1.442695
  %v2249 = vpow.pop %v2248
  %v2250 = vmul.f32 %v2235, 1.442695
  %v2251 = vpow.pop %v2250
  %v2252 = vadd.f32 %v2237, 1.0
  %v2253 = vadd.f32 %v2239, 1.0
  %v2254 = vadd.f32 %v2241, 1.0
  %v2255 = vadd.f32 %v2243, 1.0
  %v2256 = vadd.f32 %v2245, 1.0
  %v2257 = vadd.f32 %v2247, 1.0
  %v2258 = vadd.f32 %v2249, 1.0
  %v2259 = vadd.f32 %v2251, 1.0
  %v2260 = vrcp.pop %v2252
  %v2261 = vmul.f32 1.0, %v2260
  %v2262 = vrcp.pop %v2253
  %v2263 = vmul.f32 1.0, %v2262
  %v2264 = vrcp.pop %v2254
  %v2265 = vmul.f32 1.0, %v2264
  %v2266 = vrcp.pop %v2255
  %v2267 = vmul.f32 1.0, %v2266
  %v2268 = vrcp.pop %v2256
  %v2269 = vmul.f32 1.0, %v2268
  %v2270 = vrcp.pop %v2257
  %v2271 = vmul.f32 1.0, %v2270
  %v2272 = vrcp.pop %v2258
  %v2273 = vmul.f32 1.0, %v2272
  %v2274 = vrcp.pop %v2259
  %v2275 = vmul.f32 1.0, %v2274
  %v2277 = vrot.slane %v2160, 3
  %v2278 = vrot.slane %v2160, 4
  %v2279 = vrot.slane %v2160, 5
  %v2280 = vrot.slane %v2160, 6
  %v2281 = vrot.slane %v2160, 7
  %v2282 = vrot.slane %v2160, 1
  %v2283 = vrot.slane %v2160, 2
  %v2292 = vadd.f32 %v1820, %v2277
  %v2293 = vadd.f32 %v1823, %v2278
  %v2294 = vadd.f32 %v1826, %v2279
  %v2295 = vadd.f32 %v1829, %v2280
  %v2296 = vadd.f32 %v1832, %v2281
  %v2297 = vadd.f32 %v1835, %v2160
  %v2298 = vadd.f32 %v1838, %v2282
  %v2299 = vadd.f32 %v1841, %v2283
  %v2300 = vxor.u32 %v2292, 2147483648
  %v2301 = vxor.u32 %v2293, 2147483648
  %v2302 = vxor.u32 %v2294, 2147483648
  %v2303 = vxor.u32 %v2295, 2147483648
  %v2304 = vxor.u32 %v2296, 2147483648
  %v2305 = vxor.u32 %v2297, 2147483648
  %v2306 = vxor.u32 %v2298, 2147483648
  %v2307 = vxor.u32 %v2299, 2147483648
  %v2308 = vmul.f32 %v2300, 1.442695
  %v2309 = vpow.pop %v2308
  %v2310 = vmul.f32 %v2301, 1.442695
  %v2311 = vpow.pop %v2310
  %v2312 = vmul.f32 %v2302, 1.442695
  %v2313 = vpow.pop %v2312
  %v2314 = vmul.f32 %v2303, 1.442695
  %v2315 = vpow.pop %v2314
  %v2316 = vmul.f32 %v2304, 1.442695
  %v2317 = vpow.pop %v2316
  %v2318 = vmul.f32 %v2305, 1.442695
  %v2319 = vpow.pop %v2318
  %v2320 = vmul.f32 %v2306, 1.442695
  %v2321 = vpow.pop %v2320
  %v2322 = vmul.f32 %v2307, 1.442695
  %v2323 = vpow.pop %v2322
  %v2324 = vadd.f32 %v2309, 1.0
  %v2325 = vadd.f32 %v2311, 1.0
  %v2326 = vadd.f32 %v2313, 1.0
  %v2327 = vadd.f32 %v2315, 1.0
  %v2328 = vadd.f32 %v2317, 1.0
  %v2329 = vadd.f32 %v2319, 1.0
  %v2330 = vadd.f32 %v2321, 1.0
  %v2331 = vadd.f32 %v2323, 1.0
  %v2332 = vrcp.pop %v2324
  %v2333 = vmul.f32 1.0, %v2332
  %v2334 = vrcp.pop %v2325
  %v2335 = vmul.f32 1.0, %v2334
  %v2336 = vrcp.pop %v2326
  %v2337 = vmul.f32 1.0, %v2336
  %v2338 = vrcp.pop %v2327
  %v2339 = vmul.f32 1.0, %v2338
  %v2340 = vrcp.pop %v2328
  %v2341 = vmul.f32 1.0, %v2340
  %v2342 = vrcp.pop %v2329
  %v2343 = vmul.f32 1.0, %v2342
  %v2344 = vrcp.pop %v2330
  %v2345 = vmul.f32 1.0, %v2344
  %v2346 = vrcp.pop %v2331
  %v2347 = vmul.f32 1.0, %v2346
  %v2349 = vrot.slane %v2199, 3
  %v2350 = vrot.slane %v2199, 4
  %v2351 = vrot.slane %v2199, 5
  %v2352 = vrot.slane %v2199, 6
  %v2353 = vrot.slane %v2199, 7
  %v2354 = vrot.slane %v2199, 1
  %v2355 = vrot.slane %v2199, 2
  %v2364 = vmul.f32 %v2261, %v2349
  %v2365 = vmul.f32 %v2263, %v2350
  %v2366 = vmul.f32 %v2265, %v2351
  %v2367 = vmul.f32 %v2267, %v2352
  %v2368 = vmul.f32 %v2269, %v2353
  %v2369 = vmul.f32 %v2271, %v2199
  %v2370 = vmul.f32 %v2273, %v2354
  %v2371 = vmul.f32 %v2275, %v2355
  %v2372 = vadd.f32 %v1821, %v2364
  %v2373 = vadd.f32 %v1824, %v2365
  %v2374 = vadd.f32 %v1827, %v2366
  %v2375 = vadd.f32 %v1830, %v2367
  %v2376 = vadd.f32 %v1833, %v2368
  %v2377 = vadd.f32 %v1836, %v2369
  %v2378 = vadd.f32 %v1839, %v2370
  %v2379 = vadd.f32 %v1842, %v2371
  %v2380 = vtanh.pop %v2372
  %v2381 = vtanh.pop %v2373
  %v2382 = vtanh.pop %v2374
  %v2383 = vtanh.pop %v2375
  %v2384 = vtanh.pop %v2376
  %v2385 = vtanh.pop %v2377
  %v2386 = vtanh.pop %v2378
  %v2387 = vtanh.pop %v2379
  %v2388 = vsub.f32 1.0, %v2333
  %v2389 = vsub.f32 1.0, %v2335
  %v2390 = vsub.f32 1.0, %v2337
  %v2391 = vsub.f32 1.0, %v2339
  %v2392 = vsub.f32 1.0, %v2341
  %v2393 = vsub.f32 1.0, %v2343
  %v2394 = vsub.f32 1.0, %v2345
  %v2395 = vsub.f32 1.0, %v2347
  %v2396 = vmul.f32 %v2388, %v2380
  %v2397 = vmul.f32 %v2389, %v2381
  %v2398 = vmul.f32 %v2390, %v2382
  %v2399 = vmul.f32 %v2391, %v2383
  %v2400 = vmul.f32 %v2392, %v2384
  %v2401 = vmul.f32 %v2393, %v2385
  %v2402 = vmul.f32 %v2394, %v2386
  %v2403 = vmul.f32 %v2395, %v2387
  %v2412 = vrot.slane %v2075, 7
  %v2413 = vrot.slane %v2076, 7
  %v2414 = vrot.slane %v2077, 7
  %v2415 = vrot.slane %v2078, 7
  %v2416 = vrot.slane %v2079, 7
  %v2417 = vrot.slane %v2080, 7
  %v2418 = vrot.slane %v2081, 7
  %v2419 = vrot.slane %v2082, 7
  %v2428 = vmul.f32 %v2333, %v2412
  %v2429 = vmul.f32 %v2335, %v2413
  %v2430 = vmul.f32 %v2337, %v2414
  %v2431 = vmul.f32 %v2339, %v2415
  %v2432 = vmul.f32 %v2341, %v2416
  %v2433 = vmul.f32 %v2343, %v2417
  %v2434 = vmul.f32 %v2345, %v2418
  %v2435 = vmul.f32 %v2347, %v2419
  %v2436 = vadd.f32 %v2396, %v2428
  %v2437 = vadd.f32 %v2397, %v2429
  %v2438 = vadd.f32 %v2398, %v2430
  %v2439 = vadd.f32 %v2399, %v2431
  %v2440 = vadd.f32 %v2400, %v2432
  %v2441 = vadd.f32 %v2401, %v2433
  %v2442 = vadd.f32 %v2402, %v2434
  %v2443 = vadd.f32 %v2403, %v2435
  %v2444 = vpack.c.bf16 %v2436, %v2436
  %v2445 = vpack.c.bf16 %v2437, %v2437
  %v2446 = vpack.c.bf16 %v2438, %v2438
  %v2447 = vpack.c.bf16 %v2439, %v2439
  %v2448 = vpack.c.bf16 %v2440, %v2440
  %v2449 = vpack.c.bf16 %v2441, %v2441
  %v2450 = vpack.c.bf16 %v2442, %v2442
  %v2451 = vpack.c.bf16 %v2443, %v2443
  %v2460 = vunpack.c.l.b16 %v2444
  %v2461 = vunpack.c.l.b16 %v2445
  %v2462 = vunpack.c.l.b16 %v2446
  %v2463 = vunpack.c.l.b16 %v2447
  %v2464 = vunpack.c.l.b16 %v2448
  %v2465 = vunpack.c.l.b16 %v2449
  %v2466 = vunpack.c.l.b16 %v2450
  %v2467 = vunpack.c.l.b16 %v2451
  %v2468 = vrot.slane %v2460, 5
  %v2469 = vrot.slane %v2461, 4
  %v2470 = vsel %vm577, %v2469, %v2468
  %v2471 = vrot.slane %v2462, 3
  %v2472 = vsel %vm580, %v2471, %v2470
  %v2473 = vrot.slane %v2463, 2
  %v2474 = vsel %vm583, %v2473, %v2472
  %v2475 = vrot.slane %v2464, 1
  %v2476 = vsel %vm586, %v2475, %v2474
  %v2477 = vsel %vm589, %v2465, %v2476
  %v2478 = vrot.slane %v2466, 7
  %v2479 = vsel %vm592, %v2478, %v2477
  %v2480 = vrot.slane %v2467, 6
  %v2481 = vsel %vm595, %v2480, %v2479
  %v2482 = vpack.c.b16 %v2481, %v2481
  %2484 = vmatprep.subr.bf16.mxu0 %v173
  %2485 = vmatpush1.bf16.msra.mxu0 %v172
  %2486 = vmatprep.subr.bf16.mxu0 %v170
  %2487 = vmatpush1.bf16.msra.mxu0 %v169
  %2488 = vmatprep.subr.bf16.mxu0 %v167
  %2489 = vmatpush1.bf16.msra.mxu0 %v166
  %2490 = vmatprep.subr.bf16.mxu0 %v164
  %2491 = vmatpush1.bf16.msra.mxu0 %v163
  %2492 = vmatprep.subr.bf16.mxu0 %v161
  %2493 = vmatpush1.bf16.msra.mxu0 %v160
  %2494 = vmatprep.subr.bf16.mxu0 %v158
  %2495 = vmatpush1.bf16.msra.mxu0 %v157
  %2496 = vmatprep.subr.bf16.mxu0 %v155
  %2497 = vmatpush1.bf16.msra.mxu0 %v154
  %2498 = vmatprep.subr.bf16.mxu0 %v152
  %2499 = vmatpush1.bf16.msra.mxu0 %v151
  %2500 = vmatprep.subr.bf16.mxu0 0
  %2501 = vmatpush2.bf16.msra.mxu0 0
  %2502 = vmatprep.subr.bf16.mxu0 0
  %2503 = vmatpush2.bf16.msra.mxu0 0
  %2504 = vmatprep.subr.bf16.mxu0 0
  %2505 = vmatpush2.bf16.msra.mxu0 0
  %2506 = vmatprep.subr.bf16.mxu0 0
  %2507 = vmatpush2.bf16.msra.mxu0 0
  %2508 = vmatprep.subr.bf16.mxu0 0
  %2509 = vmatpush2.bf16.msra.mxu0 0
  %2510 = vmatprep.subr.bf16.mxu0 0
  %2511 = vmatpush2.bf16.msra.mxu0 0
  %2512 = vmatprep.subr.bf16.mxu0 0
  %2513 = vmatpush2.bf16.msra.mxu0 0
  %2514 = vmatprep.subr.bf16.mxu0 0
  %2515 = vmatpush2.bf16.msra.mxu0 0
  %2516 = vmatprep.mubr.bf16.mxu0 0
  %2517 = vmatmul.mubr.bf16.gmra.mxu0 %v2482
  %v2518 = vpop.f32.mrf.mxu0
  %v2519 = vadd.f32 %v57, %v2518
  %v2520 = vpop.f32.mrf.mxu0
  %v2521 = vadd.f32 %v61, %v2520
  %v2522 = vpop.f32.mrf.mxu0
  %v2523 = vpop.f32.mrf.mxu0
  %2524 = vdwg.mxu0
  %2525 = vmatprep.subr.bf16.mxu0 0
  %2526 = vmatpush1.bf16.msra.mxu0 %v174
  %2527 = vmatprep.subr.bf16.mxu0 0
  %2528 = vmatpush1.bf16.msra.mxu0 %v171
  %2529 = vmatprep.subr.bf16.mxu0 0
  %2530 = vmatpush1.bf16.msra.mxu0 %v168
  %2531 = vmatprep.subr.bf16.mxu0 0
  %2532 = vmatpush1.bf16.msra.mxu0 %v165
  %2533 = vmatprep.subr.bf16.mxu0 0
  %2534 = vmatpush1.bf16.msra.mxu0 %v162
  %2535 = vmatprep.subr.bf16.mxu0 0
  %2536 = vmatpush1.bf16.msra.mxu0 %v159
  %2537 = vmatprep.subr.bf16.mxu0 0
  %2538 = vmatpush1.bf16.msra.mxu0 %v156
  %2539 = vmatprep.subr.bf16.mxu0 0
  %2540 = vmatpush1.bf16.msra.mxu0 %v153
  %2541 = vmatprep.subr.bf16.mxu0 0
  %2542 = vmatpush2.bf16.msra.mxu0 0
  %2543 = vmatprep.subr.bf16.mxu0 0
  %2544 = vmatpush2.bf16.msra.mxu0 0
  %2545 = vmatprep.subr.bf16.mxu0 0
  %2546 = vmatpush2.bf16.msra.mxu0 0
  %2547 = vmatprep.subr.bf16.mxu0 0
  %2548 = vmatpush2.bf16.msra.mxu0 0
  %2549 = vmatprep.subr.bf16.mxu0 0
  %2550 = vmatpush2.bf16.msra.mxu0 0
  %2551 = vmatprep.subr.bf16.mxu0 0
  %2552 = vmatpush2.bf16.msra.mxu0 0
  %2553 = vmatprep.subr.bf16.mxu0 0
  %2554 = vmatpush2.bf16.msra.mxu0 0
  %2555 = vmatprep.subr.bf16.mxu0 0
  %2556 = vmatpush2.bf16.msra.mxu0 0
  %2557 = vmatprep.mubr.bf16.mxu0 0
  %2558 = vmatmul.mubr.bf16.gmra.mxu0 %v2482
  %v2559 = vpop.f32.mrf.mxu0
  %v2560 = vadd.f32 %v65, %v2559
  %v2561 = vpop.f32.mrf.mxu0
  %v2562 = vpop.f32.mrf.mxu0
  %v2563 = vpop.f32.mrf.mxu0
  %2564 = vdwg.mxu0
  %v2565 = vld [vmem:[%s0] sm:$0x88]
  %v2566 = vld [vmem:[%s0 + $0x8] sm:$0x8]
  %v2567 = vld [vmem:[%s0 + $0x18] sm:$0x88]
  %v2568 = vld [vmem:[%s0 + $0x20] sm:$0x8]
  %v2569 = vld [vmem:[%s0 + $0x30] sm:$0x88]
  %v2570 = vld [vmem:[%s0 + $0x38] sm:$0x8]
  %v2571 = vld [vmem:[%s0 + $0x48] sm:$0x88]
  %v2572 = vld [vmem:[%s0 + $0x50] sm:$0x8]
  %v2573 = vld [vmem:[%s0 + $0x60] sm:$0x88]
  %v2574 = vld [vmem:[%s0 + $0x68] sm:$0x8]
  %v2575 = vld [vmem:[%s0 + $0x78] sm:$0x88]
  %v2576 = vld [vmem:[%s0 + $0x80] sm:$0x8]
  %v2577 = vld [vmem:[%s0 + $0x90] sm:$0x88]
  %v2578 = vld [vmem:[%s0 + $0x98] sm:$0x8]
  %v2579 = vld [vmem:[%s0 + $0xa8] sm:$0x88]
  %v2580 = vld [vmem:[%s0 + $0xb0] sm:$0x8]
  %v2581 = vunpack.c.l.bf16 %v2565
  %v2582 = vunpack.c.h.bf16 %v2565
  %v2583 = vunpack.c.l.bf16 %v2566
  %v2584 = vunpack.c.l.bf16 %v2567
  %v2585 = vunpack.c.h.bf16 %v2567
  %v2586 = vunpack.c.l.bf16 %v2568
  %v2587 = vunpack.c.l.bf16 %v2569
  %v2588 = vunpack.c.h.bf16 %v2569
  %v2589 = vunpack.c.l.bf16 %v2570
  %v2590 = vunpack.c.l.bf16 %v2571
  %v2591 = vunpack.c.h.bf16 %v2571
  %v2592 = vunpack.c.l.bf16 %v2572
  %v2593 = vunpack.c.l.bf16 %v2573
  %v2594 = vunpack.c.h.bf16 %v2573
  %v2595 = vunpack.c.l.bf16 %v2574
  %v2596 = vunpack.c.l.bf16 %v2575
  %v2597 = vunpack.c.h.bf16 %v2575
  %v2598 = vunpack.c.l.bf16 %v2576
  %v2599 = vunpack.c.l.bf16 %v2577
  %v2600 = vunpack.c.h.bf16 %v2577
  %v2601 = vunpack.c.l.bf16 %v2578
  %v2602 = vunpack.c.l.bf16 %v2579
  %v2603 = vunpack.c.h.bf16 %v2579
  %v2604 = vunpack.c.l.bf16 %v2580
  %v2606 = vrot.slane %v2519, 2
  %v2607 = vrot.slane %v2519, 3
  %v2608 = vrot.slane %v2519, 4
  %v2609 = vrot.slane %v2519, 5
  %v2610 = vrot.slane %v2519, 6
  %v2611 = vrot.slane %v2519, 7
  %v2612 = vrot.slane %v2519, 1
  %v2621 = vadd.f32 %v2581, %v2606
  %v2622 = vadd.f32 %v2584, %v2607
  %v2623 = vadd.f32 %v2587, %v2608
  %v2624 = vadd.f32 %v2590, %v2609
  %v2625 = vadd.f32 %v2593, %v2610
  %v2626 = vadd.f32 %v2596, %v2611
  %v2627 = vadd.f32 %v2599, %v2519
  %v2628 = vadd.f32 %v2602, %v2612
  %v2629 = vxor.u32 %v2621, 2147483648
  %v2630 = vxor.u32 %v2622, 2147483648
  %v2631 = vxor.u32 %v2623, 2147483648
  %v2632 = vxor.u32 %v2624, 2147483648
  %v2633 = vxor.u32 %v2625, 2147483648
  %v2634 = vxor.u32 %v2626, 2147483648
  %v2635 = vxor.u32 %v2627, 2147483648
  %v2636 = vxor.u32 %v2628, 2147483648
  %v2637 = vmul.f32 %v2629, 1.442695
  %v2638 = vpow.pop %v2637
  %v2639 = vmul.f32 %v2630, 1.442695
  %v2640 = vpow.pop %v2639
  %v2641 = vmul.f32 %v2631, 1.442695
  %v2642 = vpow.pop %v2641
  %v2643 = vmul.f32 %v2632, 1.442695
  %v2644 = vpow.pop %v2643
  %v2645 = vmul.f32 %v2633, 1.442695
  %v2646 = vpow.pop %v2645
  %v2647 = vmul.f32 %v2634, 1.442695
  %v2648 = vpow.pop %v2647
  %v2649 = vmul.f32 %v2635, 1.442695
  %v2650 = vpow.pop %v2649
  %v2651 = vmul.f32 %v2636, 1.442695
  %v2652 = vpow.pop %v2651
  %v2653 = vadd.f32 %v2638, 1.0
  %v2654 = vadd.f32 %v2640, 1.0
  %v2655 = vadd.f32 %v2642, 1.0
  %v2656 = vadd.f32 %v2644, 1.0
  %v2657 = vadd.f32 %v2646, 1.0
  %v2658 = vadd.f32 %v2648, 1.0
  %v2659 = vadd.f32 %v2650, 1.0
  %v2660 = vadd.f32 %v2652, 1.0
  %v2661 = vrcp.pop %v2653
  %v2662 = vmul.f32 1.0, %v2661
  %v2663 = vrcp.pop %v2654
  %v2664 = vmul.f32 1.0, %v2663
  %v2665 = vrcp.pop %v2655
  %v2666 = vmul.f32 1.0, %v2665
  %v2667 = vrcp.pop %v2656
  %v2668 = vmul.f32 1.0, %v2667
  %v2669 = vrcp.pop %v2657
  %v2670 = vmul.f32 1.0, %v2669
  %v2671 = vrcp.pop %v2658
  %v2672 = vmul.f32 1.0, %v2671
  %v2673 = vrcp.pop %v2659
  %v2674 = vmul.f32 1.0, %v2673
  %v2675 = vrcp.pop %v2660
  %v2676 = vmul.f32 1.0, %v2675
  %v2678 = vrot.slane %v2521, 2
  %v2679 = vrot.slane %v2521, 3
  %v2680 = vrot.slane %v2521, 4
  %v2681 = vrot.slane %v2521, 5
  %v2682 = vrot.slane %v2521, 6
  %v2683 = vrot.slane %v2521, 7
  %v2684 = vrot.slane %v2521, 1
  %v2693 = vadd.f32 %v2582, %v2678
  %v2694 = vadd.f32 %v2585, %v2679
  %v2695 = vadd.f32 %v2588, %v2680
  %v2696 = vadd.f32 %v2591, %v2681
  %v2697 = vadd.f32 %v2594, %v2682
  %v2698 = vadd.f32 %v2597, %v2683
  %v2699 = vadd.f32 %v2600, %v2521
  %v2700 = vadd.f32 %v2603, %v2684
  %v2701 = vxor.u32 %v2693, 2147483648
  %v2702 = vxor.u32 %v2694, 2147483648
  %v2703 = vxor.u32 %v2695, 2147483648
  %v2704 = vxor.u32 %v2696, 2147483648
  %v2705 = vxor.u32 %v2697, 2147483648
  %v2706 = vxor.u32 %v2698, 2147483648
  %v2707 = vxor.u32 %v2699, 2147483648
  %v2708 = vxor.u32 %v2700, 2147483648
  %v2709 = vmul.f32 %v2701, 1.442695
  %v2710 = vpow.pop %v2709
  %v2711 = vmul.f32 %v2702, 1.442695
  %v2712 = vpow.pop %v2711
  %v2713 = vmul.f32 %v2703, 1.442695
  %v2714 = vpow.pop %v2713
  %v2715 = vmul.f32 %v2704, 1.442695
  %v2716 = vpow.pop %v2715
  %v2717 = vmul.f32 %v2705, 1.442695
  %v2718 = vpow.pop %v2717
  %v2719 = vmul.f32 %v2706, 1.442695
  %v2720 = vpow.pop %v2719
  %v2721 = vmul.f32 %v2707, 1.442695
  %v2722 = vpow.pop %v2721
  %v2723 = vmul.f32 %v2708, 1.442695
  %v2724 = vpow.pop %v2723
  %v2725 = vadd.f32 %v2710, 1.0
  %v2726 = vadd.f32 %v2712, 1.0
  %v2727 = vadd.f32 %v2714, 1.0
  %v2728 = vadd.f32 %v2716, 1.0
  %v2729 = vadd.f32 %v2718, 1.0
  %v2730 = vadd.f32 %v2720, 1.0
  %v2731 = vadd.f32 %v2722, 1.0
  %v2732 = vadd.f32 %v2724, 1.0
  %v2733 = vrcp.pop %v2725
  %v2734 = vmul.f32 1.0, %v2733
  %v2735 = vrcp.pop %v2726
  %v2736 = vmul.f32 1.0, %v2735
  %v2737 = vrcp.pop %v2727
  %v2738 = vmul.f32 1.0, %v2737
  %v2739 = vrcp.pop %v2728
  %v2740 = vmul.f32 1.0, %v2739
  %v2741 = vrcp.pop %v2729
  %v2742 = vmul.f32 1.0, %v2741
  %v2743 = vrcp.pop %v2730
  %v2744 = vmul.f32 1.0, %v2743
  %v2745 = vrcp.pop %v2731
  %v2746 = vmul.f32 1.0, %v2745
  %v2747 = vrcp.pop %v2732
  %v2748 = vmul.f32 1.0, %v2747
  %v2750 = vrot.slane %v2560, 2
  %v2751 = vrot.slane %v2560, 3
  %v2752 = vrot.slane %v2560, 4
  %v2753 = vrot.slane %v2560, 5
  %v2754 = vrot.slane %v2560, 6
  %v2755 = vrot.slane %v2560, 7
  %v2756 = vrot.slane %v2560, 1
  %v2765 = vmul.f32 %v2662, %v2750
  %v2766 = vmul.f32 %v2664, %v2751
  %v2767 = vmul.f32 %v2666, %v2752
  %v2768 = vmul.f32 %v2668, %v2753
  %v2769 = vmul.f32 %v2670, %v2754
  %v2770 = vmul.f32 %v2672, %v2755
  %v2771 = vmul.f32 %v2674, %v2560
  %v2772 = vmul.f32 %v2676, %v2756
  %v2773 = vadd.f32 %v2583, %v2765
  %v2774 = vadd.f32 %v2586, %v2766
  %v2775 = vadd.f32 %v2589, %v2767
  %v2776 = vadd.f32 %v2592, %v2768
  %v2777 = vadd.f32 %v2595, %v2769
  %v2778 = vadd.f32 %v2598, %v2770
  %v2779 = vadd.f32 %v2601, %v2771
  %v2780 = vadd.f32 %v2604, %v2772
  %v2781 = vtanh.pop %v2773
  %v2782 = vtanh.pop %v2774
  %v2783 = vtanh.pop %v2775
  %v2784 = vtanh.pop %v2776
  %v2785 = vtanh.pop %v2777
  %v2786 = vtanh.pop %v2778
  %v2787 = vtanh.pop %v2779
  %v2788 = vtanh.pop %v2780
  %v2789 = vsub.f32 1.0, %v2734
  %v2790 = vsub.f32 1.0, %v2736
  %v2791 = vsub.f32 1.0, %v2738
  %v2792 = vsub.f32 1.0, %v2740
  %v2793 = vsub.f32 1.0, %v2742
  %v2794 = vsub.f32 1.0, %v2744
  %v2795 = vsub.f32 1.0, %v2746
  %v2796 = vsub.f32 1.0, %v2748
  %v2797 = vmul.f32 %v2789, %v2781
  %v2798 = vmul.f32 %v2790, %v2782
  %v2799 = vmul.f32 %v2791, %v2783
  %v2800 = vmul.f32 %v2792, %v2784
  %v2801 = vmul.f32 %v2793, %v2785
  %v2802 = vmul.f32 %v2794, %v2786
  %v2803 = vmul.f32 %v2795, %v2787
  %v2804 = vmul.f32 %v2796, %v2788
  %v2813 = vrot.slane %v2436, 7
  %v2814 = vrot.slane %v2437, 7
  %v2815 = vrot.slane %v2438, 7
  %v2816 = vrot.slane %v2439, 7
  %v2817 = vrot.slane %v2440, 7
  %v2818 = vrot.slane %v2441, 7
  %v2819 = vrot.slane %v2442, 7
  %v2820 = vrot.slane %v2443, 7
  %v2829 = vmul.f32 %v2734, %v2813
  %v2830 = vmul.f32 %v2736, %v2814
  %v2831 = vmul.f32 %v2738, %v2815
  %v2832 = vmul.f32 %v2740, %v2816
  %v2833 = vmul.f32 %v2742, %v2817
  %v2834 = vmul.f32 %v2744, %v2818
  %v2835 = vmul.f32 %v2746, %v2819
  %v2836 = vmul.f32 %v2748, %v2820
  %v2837 = vadd.f32 %v2797, %v2829
  %v2838 = vadd.f32 %v2798, %v2830
  %v2839 = vadd.f32 %v2799, %v2831
  %v2840 = vadd.f32 %v2800, %v2832
  %v2841 = vadd.f32 %v2801, %v2833
  %v2842 = vadd.f32 %v2802, %v2834
  %v2843 = vadd.f32 %v2803, %v2835
  %v2844 = vadd.f32 %v2804, %v2836
  %v2845 = vpack.c.bf16 %v2837, %v2837
  %v2846 = vpack.c.bf16 %v2838, %v2838
  %v2847 = vpack.c.bf16 %v2839, %v2839
  %v2848 = vpack.c.bf16 %v2840, %v2840
  %v2849 = vpack.c.bf16 %v2841, %v2841
  %v2850 = vpack.c.bf16 %v2842, %v2842
  %v2851 = vpack.c.bf16 %v2843, %v2843
  %v2852 = vpack.c.bf16 %v2844, %v2844
  %v2861 = vunpack.c.l.b16 %v2845
  %v2862 = vunpack.c.l.b16 %v2846
  %v2863 = vunpack.c.l.b16 %v2847
  %v2864 = vunpack.c.l.b16 %v2848
  %v2865 = vunpack.c.l.b16 %v2849
  %v2866 = vunpack.c.l.b16 %v2850
  %v2867 = vunpack.c.l.b16 %v2851
  %v2868 = vunpack.c.l.b16 %v2852
  %v2869 = vrot.slane %v2861, 6
  %v2870 = vrot.slane %v2862, 5
  %v2871 = vsel %vm577, %v2870, %v2869
  %v2872 = vrot.slane %v2863, 4
  %v2873 = vsel %vm580, %v2872, %v2871
  %v2874 = vrot.slane %v2864, 3
  %v2875 = vsel %vm583, %v2874, %v2873
  %v2876 = vrot.slane %v2865, 2
  %v2877 = vsel %vm586, %v2876, %v2875
  %v2878 = vrot.slane %v2866, 1
  %v2879 = vsel %vm589, %v2878, %v2877
  %v2880 = vsel %vm592, %v2867, %v2879
  %v2881 = vrot.slane %v2868, 7
  %v2882 = vsel %vm595, %v2881, %v2880
  %v2883 = vpack.c.b16 %v2882, %v2882
  %2885 = vmatprep.subr.bf16.mxu0 %v173
  %2886 = vmatpush1.bf16.msra.mxu0 %v172
  %2887 = vmatprep.subr.bf16.mxu0 %v170
  %2888 = vmatpush1.bf16.msra.mxu0 %v169
  %2889 = vmatprep.subr.bf16.mxu0 %v167
  %2890 = vmatpush1.bf16.msra.mxu0 %v166
  %2891 = vmatprep.subr.bf16.mxu0 %v164
  %2892 = vmatpush1.bf16.msra.mxu0 %v163
  %2893 = vmatprep.subr.bf16.mxu0 %v161
  %2894 = vmatpush1.bf16.msra.mxu0 %v160
  %2895 = vmatprep.subr.bf16.mxu0 %v158
  %2896 = vmatpush1.bf16.msra.mxu0 %v157
  %2897 = vmatprep.subr.bf16.mxu0 %v155
  %2898 = vmatpush1.bf16.msra.mxu0 %v154
  %2899 = vmatprep.subr.bf16.mxu0 %v152
  %2900 = vmatpush1.bf16.msra.mxu0 %v151
  %2901 = vmatprep.subr.bf16.mxu0 0
  %2902 = vmatpush2.bf16.msra.mxu0 0
  %2903 = vmatprep.subr.bf16.mxu0 0
  %2904 = vmatpush2.bf16.msra.mxu0 0
  %2905 = vmatprep.subr.bf16.mxu0 0
  %2906 = vmatpush2.bf16.msra.mxu0 0
  %2907 = vmatprep.subr.bf16.mxu0 0
  %2908 = vmatpush2.bf16.msra.mxu0 0
  %2909 = vmatprep.subr.bf16.mxu0 0
  %2910 = vmatpush2.bf16.msra.mxu0 0
  %2911 = vmatprep.subr.bf16.mxu0 0
  %2912 = vmatpush2.bf16.msra.mxu0 0
  %2913 = vmatprep.subr.bf16.mxu0 0
  %2914 = vmatpush2.bf16.msra.mxu0 0
  %2915 = vmatprep.subr.bf16.mxu0 0
  %2916 = vmatpush2.bf16.msra.mxu0 0
  %2917 = vmatprep.mubr.bf16.mxu0 0
  %2918 = vmatmul.mubr.bf16.gmra.mxu0 %v2883
  %v2919 = vpop.f32.mrf.mxu0
  %v2920 = vadd.f32 %v57, %v2919
  %v2921 = vpop.f32.mrf.mxu0
  %v2922 = vadd.f32 %v61, %v2921
  %v2923 = vpop.f32.mrf.mxu0
  %v2924 = vpop.f32.mrf.mxu0
  %2925 = vdwg.mxu0
  %2926 = vmatprep.subr.bf16.mxu0 0
  %2927 = vmatpush1.bf16.msra.mxu0 %v174
  %2928 = vmatprep.subr.bf16.mxu0 0
  %2929 = vmatpush1.bf16.msra.mxu0 %v171
  %2930 = vmatprep.subr.bf16.mxu0 0
  %2931 = vmatpush1.bf16.msra.mxu0 %v168
  %2932 = vmatprep.subr.bf16.mxu0 0
  %2933 = vmatpush1.bf16.msra.mxu0 %v165
  %2934 = vmatprep.subr.bf16.mxu0 0
  %2935 = vmatpush1.bf16.msra.mxu0 %v162
  %2936 = vmatprep.subr.bf16.mxu0 0
  %2937 = vmatpush1.bf16.msra.mxu0 %v159
  %2938 = vmatprep.subr.bf16.mxu0 0
  %2939 = vmatpush1.bf16.msra.mxu0 %v156
  %2940 = vmatprep.subr.bf16.mxu0 0
  %2941 = vmatpush1.bf16.msra.mxu0 %v153
  %2942 = vmatprep.subr.bf16.mxu0 0
  %2943 = vmatpush2.bf16.msra.mxu0 0
  %2944 = vmatprep.subr.bf16.mxu0 0
  %2945 = vmatpush2.bf16.msra.mxu0 0
  %2946 = vmatprep.subr.bf16.mxu0 0
  %2947 = vmatpush2.bf16.msra.mxu0 0
  %2948 = vmatprep.subr.bf16.mxu0 0
  %2949 = vmatpush2.bf16.msra.mxu0 0
  %2950 = vmatprep.subr.bf16.mxu0 0
  %2951 = vmatpush2.bf16.msra.mxu0 0
  %2952 = vmatprep.subr.bf16.mxu0 0
  %2953 = vmatpush2.bf16.msra.mxu0 0
  %2954 = vmatprep.subr.bf16.mxu0 0
  %2955 = vmatpush2.bf16.msra.mxu0 0
  %2956 = vmatprep.subr.bf16.mxu0 0
  %2957 = vmatpush2.bf16.msra.mxu0 0
  %2958 = vmatprep.mubr.bf16.mxu0 0
  %2959 = vmatmul.mubr.bf16.gmra.mxu0 %v2883
  %v2960 = vpop.f32.mrf.mxu0
  %v2961 = vadd.f32 %v65, %v2960
  %v2962 = vpop.f32.mrf.mxu0
  %v2963 = vpop.f32.mrf.mxu0
  %v2964 = vpop.f32.mrf.mxu0
  %2965 = vdwg.mxu0
  %v2967 = vrot.slane %v2920, 1
  %v2968 = vrot.slane %v2920, 2
  %v2969 = vrot.slane %v2920, 3
  %v2970 = vrot.slane %v2920, 4
  %v2971 = vrot.slane %v2920, 5
  %v2972 = vrot.slane %v2920, 6
  %v2973 = vrot.slane %v2920, 7
  %v2982 = vadd.f32 %v2581, %v2967
  %v2983 = vadd.f32 %v2584, %v2968
  %v2984 = vadd.f32 %v2587, %v2969
  %v2985 = vadd.f32 %v2590, %v2970
  %v2986 = vadd.f32 %v2593, %v2971
  %v2987 = vadd.f32 %v2596, %v2972
  %v2988 = vadd.f32 %v2599, %v2973
  %v2989 = vadd.f32 %v2602, %v2920
  %v2990 = vxor.u32 %v2982, 2147483648
  %v2991 = vxor.u32 %v2983, 2147483648
  %v2992 = vxor.u32 %v2984, 2147483648
  %v2993 = vxor.u32 %v2985, 2147483648
  %v2994 = vxor.u32 %v2986, 2147483648
  %v2995 = vxor.u32 %v2987, 2147483648
  %v2996 = vxor.u32 %v2988, 2147483648
  %v2997 = vxor.u32 %v2989, 2147483648
  %v2998 = vmul.f32 %v2990, 1.442695
  %v2999 = vpow.pop %v2998
  %v3000 = vmul.f32 %v2991, 1.442695
  %v3001 = vpow.pop %v3000
  %v3002 = vmul.f32 %v2992, 1.442695
  %v3003 = vpow.pop %v3002
  %v3004 = vmul.f32 %v2993, 1.442695
  %v3005 = vpow.pop %v3004
  %v3006 = vmul.f32 %v2994, 1.442695
  %v3007 = vpow.pop %v3006
  %v3008 = vmul.f32 %v2995, 1.442695
  %v3009 = vpow.pop %v3008
  %v3010 = vmul.f32 %v2996, 1.442695
  %v3011 = vpow.pop %v3010
  %v3012 = vmul.f32 %v2997, 1.442695
  %v3013 = vpow.pop %v3012
  %v3014 = vadd.f32 %v2999, 1.0
  %v3015 = vadd.f32 %v3001, 1.0
  %v3016 = vadd.f32 %v3003, 1.0
  %v3017 = vadd.f32 %v3005, 1.0
  %v3018 = vadd.f32 %v3007, 1.0
  %v3019 = vadd.f32 %v3009, 1.0
  %v3020 = vadd.f32 %v3011, 1.0
  %v3021 = vadd.f32 %v3013, 1.0
  %v3022 = vrcp.pop %v3014
  %v3023 = vmul.f32 1.0, %v3022
  %v3024 = vrcp.pop %v3015
  %v3025 = vmul.f32 1.0, %v3024
  %v3026 = vrcp.pop %v3016
  %v3027 = vmul.f32 1.0, %v3026
  %v3028 = vrcp.pop %v3017
  %v3029 = vmul.f32 1.0, %v3028
  %v3030 = vrcp.pop %v3018
  %v3031 = vmul.f32 1.0, %v3030
  %v3032 = vrcp.pop %v3019
  %v3033 = vmul.f32 1.0, %v3032
  %v3034 = vrcp.pop %v3020
  %v3035 = vmul.f32 1.0, %v3034
  %v3036 = vrcp.pop %v3021
  %v3037 = vmul.f32 1.0, %v3036
  %v3039 = vrot.slane %v2922, 1
  %v3040 = vrot.slane %v2922, 2
  %v3041 = vrot.slane %v2922, 3
  %v3042 = vrot.slane %v2922, 4
  %v3043 = vrot.slane %v2922, 5
  %v3044 = vrot.slane %v2922, 6
  %v3045 = vrot.slane %v2922, 7
  %v3054 = vadd.f32 %v2582, %v3039
  %v3055 = vadd.f32 %v2585, %v3040
  %v3056 = vadd.f32 %v2588, %v3041
  %v3057 = vadd.f32 %v2591, %v3042
  %v3058 = vadd.f32 %v2594, %v3043
  %v3059 = vadd.f32 %v2597, %v3044
  %v3060 = vadd.f32 %v2600, %v3045
  %v3061 = vadd.f32 %v2603, %v2922
  %v3062 = vxor.u32 %v3054, 2147483648
  %v3063 = vxor.u32 %v3055, 2147483648
  %v3064 = vxor.u32 %v3056, 2147483648
  %v3065 = vxor.u32 %v3057, 2147483648
  %v3066 = vxor.u32 %v3058, 2147483648
  %v3067 = vxor.u32 %v3059, 2147483648
  %v3068 = vxor.u32 %v3060, 2147483648
  %v3069 = vxor.u32 %v3061, 2147483648
  %v3070 = vmul.f32 %v3062, 1.442695
  %v3071 = vpow.pop %v3070
  %v3072 = vmul.f32 %v3063, 1.442695
  %v3073 = vpow.pop %v3072
  %v3074 = vmul.f32 %v3064, 1.442695
  %v3075 = vpow.pop %v3074
  %v3076 = vmul.f32 %v3065, 1.442695
  %v3077 = vpow.pop %v3076
  %v3078 = vmul.f32 %v3066, 1.442695
  %v3079 = vpow.pop %v3078
  %v3080 = vmul.f32 %v3067, 1.442695
  %v3081 = vpow.pop %v3080
  %v3082 = vmul.f32 %v3068, 1.442695
  %v3083 = vpow.pop %v3082
  %v3084 = vmul.f32 %v3069, 1.442695
  %v3085 = vpow.pop %v3084
  %v3086 = vadd.f32 %v3071, 1.0
  %v3087 = vadd.f32 %v3073, 1.0
  %v3088 = vadd.f32 %v3075, 1.0
  %v3089 = vadd.f32 %v3077, 1.0
  %v3090 = vadd.f32 %v3079, 1.0
  %v3091 = vadd.f32 %v3081, 1.0
  %v3092 = vadd.f32 %v3083, 1.0
  %v3093 = vadd.f32 %v3085, 1.0
  %v3094 = vrcp.pop %v3086
  %v3095 = vmul.f32 1.0, %v3094
  %v3096 = vrcp.pop %v3087
  %v3097 = vmul.f32 1.0, %v3096
  %v3098 = vrcp.pop %v3088
  %v3099 = vmul.f32 1.0, %v3098
  %v3100 = vrcp.pop %v3089
  %v3101 = vmul.f32 1.0, %v3100
  %v3102 = vrcp.pop %v3090
  %v3103 = vmul.f32 1.0, %v3102
  %v3104 = vrcp.pop %v3091
  %v3105 = vmul.f32 1.0, %v3104
  %v3106 = vrcp.pop %v3092
  %v3107 = vmul.f32 1.0, %v3106
  %v3108 = vrcp.pop %v3093
  %v3109 = vmul.f32 1.0, %v3108
  %v3111 = vrot.slane %v2961, 1
  %v3112 = vrot.slane %v2961, 2
  %v3113 = vrot.slane %v2961, 3
  %v3114 = vrot.slane %v2961, 4
  %v3115 = vrot.slane %v2961, 5
  %v3116 = vrot.slane %v2961, 6
  %v3117 = vrot.slane %v2961, 7
  %v3126 = vmul.f32 %v3023, %v3111
  %v3127 = vmul.f32 %v3025, %v3112
  %v3128 = vmul.f32 %v3027, %v3113
  %v3129 = vmul.f32 %v3029, %v3114
  %v3130 = vmul.f32 %v3031, %v3115
  %v3131 = vmul.f32 %v3033, %v3116
  %v3132 = vmul.f32 %v3035, %v3117
  %v3133 = vmul.f32 %v3037, %v2961
  %v3134 = vadd.f32 %v2583, %v3126
  %v3135 = vadd.f32 %v2586, %v3127
  %v3136 = vadd.f32 %v2589, %v3128
  %v3137 = vadd.f32 %v2592, %v3129
  %v3138 = vadd.f32 %v2595, %v3130
  %v3139 = vadd.f32 %v2598, %v3131
  %v3140 = vadd.f32 %v2601, %v3132
  %v3141 = vadd.f32 %v2604, %v3133
  %v3142 = vtanh.pop %v3134
  %v3143 = vtanh.pop %v3135
  %v3144 = vtanh.pop %v3136
  %v3145 = vtanh.pop %v3137
  %v3146 = vtanh.pop %v3138
  %v3147 = vtanh.pop %v3139
  %v3148 = vtanh.pop %v3140
  %v3149 = vtanh.pop %v3141
  %v3150 = vsub.f32 1.0, %v3095
  %v3151 = vsub.f32 1.0, %v3097
  %v3152 = vsub.f32 1.0, %v3099
  %v3153 = vsub.f32 1.0, %v3101
  %v3154 = vsub.f32 1.0, %v3103
  %v3155 = vsub.f32 1.0, %v3105
  %v3156 = vsub.f32 1.0, %v3107
  %v3157 = vsub.f32 1.0, %v3109
  %v3158 = vmul.f32 %v3150, %v3142
  %v3159 = vmul.f32 %v3151, %v3143
  %v3160 = vmul.f32 %v3152, %v3144
  %v3161 = vmul.f32 %v3153, %v3145
  %v3162 = vmul.f32 %v3154, %v3146
  %v3163 = vmul.f32 %v3155, %v3147
  %v3164 = vmul.f32 %v3156, %v3148
  %v3165 = vmul.f32 %v3157, %v3149
  %v3174 = vrot.slane %v2837, 7
  %v3175 = vrot.slane %v2838, 7
  %v3176 = vrot.slane %v2839, 7
  %v3177 = vrot.slane %v2840, 7
  %v3178 = vrot.slane %v2841, 7
  %v3179 = vrot.slane %v2842, 7
  %v3180 = vrot.slane %v2843, 7
  %v3181 = vrot.slane %v2844, 7
  %v3190 = vmul.f32 %v3095, %v3174
  %v3191 = vmul.f32 %v3097, %v3175
  %v3192 = vmul.f32 %v3099, %v3176
  %v3193 = vmul.f32 %v3101, %v3177
  %v3194 = vmul.f32 %v3103, %v3178
  %v3195 = vmul.f32 %v3105, %v3179
  %v3196 = vmul.f32 %v3107, %v3180
  %v3197 = vmul.f32 %v3109, %v3181
  %v3198 = vadd.f32 %v3158, %v3190
  %v3199 = vadd.f32 %v3159, %v3191
  %v3200 = vadd.f32 %v3160, %v3192
  %v3201 = vadd.f32 %v3161, %v3193
  %v3202 = vadd.f32 %v3162, %v3194
  %v3203 = vadd.f32 %v3163, %v3195
  %v3204 = vadd.f32 %v3164, %v3196
  %v3205 = vadd.f32 %v3165, %v3197
  %v3206 = vpack.c.bf16 %v3198, %v3198
  %v3207 = vpack.c.bf16 %v3199, %v3199
  %v3208 = vpack.c.bf16 %v3200, %v3200
  %v3209 = vpack.c.bf16 %v3201, %v3201
  %v3210 = vpack.c.bf16 %v3202, %v3202
  %v3211 = vpack.c.bf16 %v3203, %v3203
  %v3212 = vpack.c.bf16 %v3204, %v3204
  %v3213 = vpack.c.bf16 %v3205, %v3205
  %v3222 = vunpack.c.l.b16 %v3206
  %v3223 = vunpack.c.l.b16 %v3207
  %v3224 = vunpack.c.l.b16 %v3208
  %v3225 = vunpack.c.l.b16 %v3209
  %v3226 = vunpack.c.l.b16 %v3210
  %v3227 = vunpack.c.l.b16 %v3211
  %v3228 = vunpack.c.l.b16 %v3212
  %v3229 = vunpack.c.l.b16 %v3213
  %v3230 = vrot.slane %v3222, 7
  %v3231 = vrot.slane %v3223, 6
  %v3232 = vsel %vm577, %v3231, %v3230
  %v3233 = vrot.slane %v3224, 5
  %v3234 = vsel %vm580, %v3233, %v3232
  %v3235 = vrot.slane %v3225, 4
  %v3236 = vsel %vm583, %v3235, %v3234
  %v3237 = vrot.slane %v3226, 3
  %v3238 = vsel %vm586, %v3237, %v3236
  %v3239 = vrot.slane %v3227, 2
  %v3240 = vsel %vm589, %v3239, %v3238
  %v3241 = vrot.slane %v3228, 1
  %v3242 = vsel %vm592, %v3241, %v3240
  %v3243 = vsel %vm595, %v3229, %v3242
  %v3244 = vpack.c.b16 %v3243, %v3243
  %3246 = vmatprep.subr.bf16.mxu0 %v173
  %3247 = vmatpush1.bf16.msra.mxu0 %v172
  %3248 = vmatprep.subr.bf16.mxu0 %v170
  %3249 = vmatpush1.bf16.msra.mxu0 %v169
  %3250 = vmatprep.subr.bf16.mxu0 %v167
  %3251 = vmatpush1.bf16.msra.mxu0 %v166
  %3252 = vmatprep.subr.bf16.mxu0 %v164
  %3253 = vmatpush1.bf16.msra.mxu0 %v163
  %3254 = vmatprep.subr.bf16.mxu0 %v161
  %3255 = vmatpush1.bf16.msra.mxu0 %v160
  %3256 = vmatprep.subr.bf16.mxu0 %v158
  %3257 = vmatpush1.bf16.msra.mxu0 %v157
  %3258 = vmatprep.subr.bf16.mxu0 %v155
  %3259 = vmatpush1.bf16.msra.mxu0 %v154
  %3260 = vmatprep.subr.bf16.mxu0 %v152
  %3261 = vmatpush1.bf16.msra.mxu0 %v151
  %3262 = vmatprep.subr.bf16.mxu0 0
  %3263 = vmatpush2.bf16.msra.mxu0 0
  %3264 = vmatprep.subr.bf16.mxu0 0
  %3265 = vmatpush2.bf16.msra.mxu0 0
  %3266 = vmatprep.subr.bf16.mxu0 0
  %3267 = vmatpush2.bf16.msra.mxu0 0
  %3268 = vmatprep.subr.bf16.mxu0 0
  %3269 = vmatpush2.bf16.msra.mxu0 0
  %3270 = vmatprep.subr.bf16.mxu0 0
  %3271 = vmatpush2.bf16.msra.mxu0 0
  %3272 = vmatprep.subr.bf16.mxu0 0
  %3273 = vmatpush2.bf16.msra.mxu0 0
  %3274 = vmatprep.subr.bf16.mxu0 0
  %3275 = vmatpush2.bf16.msra.mxu0 0
  %3276 = vmatprep.subr.bf16.mxu0 0
  %3277 = vmatpush2.bf16.msra.mxu0 0
  %3278 = vmatprep.mubr.bf16.mxu0 0
  %3279 = vmatmul.mubr.bf16.gmra.mxu0 %v3244
  %v3280 = vpop.f32.mrf.mxu0
  %v3281 = vadd.f32 %v57, %v3280
  %v3282 = vpop.f32.mrf.mxu0
  %v3283 = vadd.f32 %v61, %v3282
  %v3284 = vpop.f32.mrf.mxu0
  %v3285 = vpop.f32.mrf.mxu0
  %3286 = vdwg.mxu0
  %3287 = vmatprep.subr.bf16.mxu0 0
  %3288 = vmatpush1.bf16.msra.mxu0 %v174
  %3289 = vmatprep.subr.bf16.mxu0 0
  %3290 = vmatpush1.bf16.msra.mxu0 %v171
  %3291 = vmatprep.subr.bf16.mxu0 0
  %3292 = vmatpush1.bf16.msra.mxu0 %v168
  %3293 = vmatprep.subr.bf16.mxu0 0
  %3294 = vmatpush1.bf16.msra.mxu0 %v165
  %3295 = vmatprep.subr.bf16.mxu0 0
  %3296 = vmatpush1.bf16.msra.mxu0 %v162
  %3297 = vmatprep.subr.bf16.mxu0 0
  %3298 = vmatpush1.bf16.msra.mxu0 %v159
  %3299 = vmatprep.subr.bf16.mxu0 0
  %3300 = vmatpush1.bf16.msra.mxu0 %v156
  %3301 = vmatprep.subr.bf16.mxu0 0
  %3302 = vmatpush1.bf16.msra.mxu0 %v153
  %3303 = vmatprep.subr.bf16.mxu0 0
  %3304 = vmatpush2.bf16.msra.mxu0 0
  %3305 = vmatprep.subr.bf16.mxu0 0
  %3306 = vmatpush2.bf16.msra.mxu0 0
  %3307 = vmatprep.subr.bf16.mxu0 0
  %3308 = vmatpush2.bf16.msra.mxu0 0
  %3309 = vmatprep.subr.bf16.mxu0 0
  %3310 = vmatpush2.bf16.msra.mxu0 0
  %3311 = vmatprep.subr.bf16.mxu0 0
  %3312 = vmatpush2.bf16.msra.mxu0 0
  %3313 = vmatprep.subr.bf16.mxu0 0
  %3314 = vmatpush2.bf16.msra.mxu0 0
  %3315 = vmatprep.subr.bf16.mxu0 0
  %3316 = vmatpush2.bf16.msra.mxu0 0
  %3317 = vmatprep.subr.bf16.mxu0 0
  %3318 = vmatpush2.bf16.msra.mxu0 0
  %3319 = vmatprep.mubr.bf16.mxu0 0
  %3320 = vmatmul.mubr.bf16.gmra.mxu0 %v3244
  %v3321 = vpop.f32.mrf.mxu0
  %v3322 = vadd.f32 %v65, %v3321
  %v3323 = vpop.f32.mrf.mxu0
  %v3324 = vpop.f32.mrf.mxu0
  %v3325 = vpop.f32.mrf.mxu0
  %3326 = vdwg.mxu0
  %v3327 = vld [vmem:[%s0 + $0xc] sm:$0x11]
  %v3328 = vld [vmem:[%s0 + $0x14] sm:$0x1]
  %v3329 = vld [vmem:[%s0 + $0x24] sm:$0x11]
  %v3330 = vld [vmem:[%s0 + $0x2c] sm:$0x1]
  %v3331 = vld [vmem:[%s0 + $0x3c] sm:$0x11]
  %v3332 = vld [vmem:[%s0 + $0x44] sm:$0x1]
  %v3333 = vld [vmem:[%s0 + $0x54] sm:$0x11]
  %v3334 = vld [vmem:[%s0 + $0x5c] sm:$0x1]
  %v3335 = vld [vmem:[%s0 + $0x6c] sm:$0x11]
  %v3336 = vld [vmem:[%s0 + $0x74] sm:$0x1]
  %v3337 = vld [vmem:[%s0 + $0x84] sm:$0x11]
  %v3338 = vld [vmem:[%s0 + $0x8c] sm:$0x1]
  %v3339 = vld [vmem:[%s0 + $0x9c] sm:$0x11]
  %v3340 = vld [vmem:[%s0 + $0xa4] sm:$0x1]
  %v3341 = vld [vmem:[%s0 + $0xb4] sm:$0x11]
  %v3342 = vld [vmem:[%s0 + $0xbc] sm:$0x1]
  %v3343 = vunpack.c.l.bf16 %v3327
  %v3344 = vunpack.c.h.bf16 %v3327
  %v3345 = vunpack.c.l.bf16 %v3328
  %v3346 = vunpack.c.l.bf16 %v3329
  %v3347 = vunpack.c.h.bf16 %v3329
  %v3348 = vunpack.c.l.bf16 %v3330
  %v3349 = vunpack.c.l.bf16 %v3331
  %v3350 = vunpack.c.h.bf16 %v3331
  %v3351 = vunpack.c.l.bf16 %v3332
  %v3352 = vunpack.c.l.bf16 %v3333
  %v3353 = vunpack.c.h.bf16 %v3333
  %v3354 = vunpack.c.l.bf16 %v3334
  %v3355 = vunpack.c.l.bf16 %v3335
  %v3356 = vunpack.c.h.bf16 %v3335
  %v3357 = vunpack.c.l.bf16 %v3336
  %v3358 = vunpack.c.l.bf16 %v3337
  %v3359 = vunpack.c.h.bf16 %v3337
  %v3360 = vunpack.c.l.bf16 %v3338
  %v3361 = vunpack.c.l.bf16 %v3339
  %v3362 = vunpack.c.h.bf16 %v3339
  %v3363 = vunpack.c.l.bf16 %v3340
  %v3364 = vunpack.c.l.bf16 %v3341
  %v3365 = vunpack.c.h.bf16 %v3341
  %v3366 = vunpack.c.l.bf16 %v3342
  %v3368 = vrot.slane %v3281, 1
  %v3369 = vrot.slane %v3281, 2
  %v3370 = vrot.slane %v3281, 3
  %v3371 = vrot.slane %v3281, 4
  %v3372 = vrot.slane %v3281, 5
  %v3373 = vrot.slane %v3281, 6
  %v3374 = vrot.slane %v3281, 7
  %v3383 = vadd.f32 %v3343, %v3281
  %v3384 = vadd.f32 %v3346, %v3368
  %v3385 = vadd.f32 %v3349, %v3369
  %v3386 = vadd.f32 %v3352, %v3370
  %v3387 = vadd.f32 %v3355, %v3371
  %v3388 = vadd.f32 %v3358, %v3372
  %v3389 = vadd.f32 %v3361, %v3373
  %v3390 = vadd.f32 %v3364, %v3374
  %v3391 = vxor.u32 %v3383, 2147483648
  %v3392 = vxor.u32 %v3384, 2147483648
  %v3393 = vxor.u32 %v3385, 2147483648
  %v3394 = vxor.u32 %v3386, 2147483648
  %v3395 = vxor.u32 %v3387, 2147483648
  %v3396 = vxor.u32 %v3388, 2147483648
  %v3397 = vxor.u32 %v3389, 2147483648
  %v3398 = vxor.u32 %v3390, 2147483648
  %v3399 = vmul.f32 %v3391, 1.442695
  %v3400 = vpow.pop %v3399
  %v3401 = vmul.f32 %v3392, 1.442695
  %v3402 = vpow.pop %v3401
  %v3403 = vmul.f32 %v3393, 1.442695
  %v3404 = vpow.pop %v3403
  %v3405 = vmul.f32 %v3394, 1.442695
  %v3406 = vpow.pop %v3405
  %v3407 = vmul.f32 %v3395, 1.442695
  %v3408 = vpow.pop %v3407
  %v3409 = vmul.f32 %v3396, 1.442695
  %v3410 = vpow.pop %v3409
  %v3411 = vmul.f32 %v3397, 1.442695
  %v3412 = vpow.pop %v3411
  %v3413 = vmul.f32 %v3398, 1.442695
  %v3414 = vpow.pop %v3413
  %v3415 = vadd.f32 %v3400, 1.0
  %v3416 = vadd.f32 %v3402, 1.0
  %v3417 = vadd.f32 %v3404, 1.0
  %v3418 = vadd.f32 %v3406, 1.0
  %v3419 = vadd.f32 %v3408, 1.0
  %v3420 = vadd.f32 %v3410, 1.0
  %v3421 = vadd.f32 %v3412, 1.0
  %v3422 = vadd.f32 %v3414, 1.0
  %v3423 = vrcp.pop %v3415
  %v3424 = vmul.f32 1.0, %v3423
  %v3425 = vrcp.pop %v3416
  %v3426 = vmul.f32 1.0, %v3425
  %v3427 = vrcp.pop %v3417
  %v3428 = vmul.f32 1.0, %v3427
  %v3429 = vrcp.pop %v3418
  %v3430 = vmul.f32 1.0, %v3429
  %v3431 = vrcp.pop %v3419
  %v3432 = vmul.f32 1.0, %v3431
  %v3433 = vrcp.pop %v3420
  %v3434 = vmul.f32 1.0, %v3433
  %v3435 = vrcp.pop %v3421
  %v3436 = vmul.f32 1.0, %v3435
  %v3437 = vrcp.pop %v3422
  %v3438 = vmul.f32 1.0, %v3437
  %v3440 = vrot.slane %v3283, 1
  %v3441 = vrot.slane %v3283, 2
  %v3442 = vrot.slane %v3283, 3
  %v3443 = vrot.slane %v3283, 4
  %v3444 = vrot.slane %v3283, 5
  %v3445 = vrot.slane %v3283, 6
  %v3446 = vrot.slane %v3283, 7
  %v3455 = vadd.f32 %v3344, %v3283
  %v3456 = vadd.f32 %v3347, %v3440
  %v3457 = vadd.f32 %v3350, %v3441
  %v3458 = vadd.f32 %v3353, %v3442
  %v3459 = vadd.f32 %v3356, %v3443
  %v3460 = vadd.f32 %v3359, %v3444
  %v3461 = vadd.f32 %v3362, %v3445
  %v3462 = vadd.f32 %v3365, %v3446
  %v3463 = vxor.u32 %v3455, 2147483648
  %v3464 = vxor.u32 %v3456, 2147483648
  %v3465 = vxor.u32 %v3457, 2147483648
  %v3466 = vxor.u32 %v3458, 2147483648
  %v3467 = vxor.u32 %v3459, 2147483648
  %v3468 = vxor.u32 %v3460, 2147483648
  %v3469 = vxor.u32 %v3461, 2147483648
  %v3470 = vxor.u32 %v3462, 2147483648
  %v3471 = vmul.f32 %v3463, 1.442695
  %v3472 = vpow.pop %v3471
  %v3473 = vmul.f32 %v3464, 1.442695
  %v3474 = vpow.pop %v3473
  %v3475 = vmul.f32 %v3465, 1.442695
  %v3476 = vpow.pop %v3475
  %v3477 = vmul.f32 %v3466, 1.442695
  %v3478 = vpow.pop %v3477
  %v3479 = vmul.f32 %v3467, 1.442695
  %v3480 = vpow.pop %v3479
  %v3481 = vmul.f32 %v3468, 1.442695
  %v3482 = vpow.pop %v3481
  %v3483 = vmul.f32 %v3469, 1.442695
  %v3484 = vpow.pop %v3483
  %v3485 = vmul.f32 %v3470, 1.442695
  %v3486 = vpow.pop %v3485
  %v3487 = vadd.f32 %v3472, 1.0
  %v3488 = vadd.f32 %v3474, 1.0
  %v3489 = vadd.f32 %v3476, 1.0
  %v3490 = vadd.f32 %v3478, 1.0
  %v3491 = vadd.f32 %v3480, 1.0
  %v3492 = vadd.f32 %v3482, 1.0
  %v3493 = vadd.f32 %v3484, 1.0
  %v3494 = vadd.f32 %v3486, 1.0
  %v3495 = vrcp.pop %v3487
  %v3496 = vmul.f32 1.0, %v3495
  %v3497 = vrcp.pop %v3488
  %v3498 = vmul.f32 1.0, %v3497
  %v3499 = vrcp.pop %v3489
  %v3500 = vmul.f32 1.0, %v3499
  %v3501 = vrcp.pop %v3490
  %v3502 = vmul.f32 1.0, %v3501
  %v3503 = vrcp.pop %v3491
  %v3504 = vmul.f32 1.0, %v3503
  %v3505 = vrcp.pop %v3492
  %v3506 = vmul.f32 1.0, %v3505
  %v3507 = vrcp.pop %v3493
  %v3508 = vmul.f32 1.0, %v3507
  %v3509 = vrcp.pop %v3494
  %v3510 = vmul.f32 1.0, %v3509
  %v3512 = vrot.slane %v3322, 1
  %v3513 = vrot.slane %v3322, 2
  %v3514 = vrot.slane %v3322, 3
  %v3515 = vrot.slane %v3322, 4
  %v3516 = vrot.slane %v3322, 5
  %v3517 = vrot.slane %v3322, 6
  %v3518 = vrot.slane %v3322, 7
  %v3527 = vmul.f32 %v3424, %v3322
  %v3528 = vmul.f32 %v3426, %v3512
  %v3529 = vmul.f32 %v3428, %v3513
  %v3530 = vmul.f32 %v3430, %v3514
  %v3531 = vmul.f32 %v3432, %v3515
  %v3532 = vmul.f32 %v3434, %v3516
  %v3533 = vmul.f32 %v3436, %v3517
  %v3534 = vmul.f32 %v3438, %v3518
  %v3535 = vadd.f32 %v3345, %v3527
  %v3536 = vadd.f32 %v3348, %v3528
  %v3537 = vadd.f32 %v3351, %v3529
  %v3538 = vadd.f32 %v3354, %v3530
  %v3539 = vadd.f32 %v3357, %v3531
  %v3540 = vadd.f32 %v3360, %v3532
  %v3541 = vadd.f32 %v3363, %v3533
  %v3542 = vadd.f32 %v3366, %v3534
  %v3543 = vtanh.pop %v3535
  %v3544 = vtanh.pop %v3536
  %v3545 = vtanh.pop %v3537
  %v3546 = vtanh.pop %v3538
  %v3547 = vtanh.pop %v3539
  %v3548 = vtanh.pop %v3540
  %v3549 = vtanh.pop %v3541
  %v3550 = vtanh.pop %v3542
  %v3551 = vsub.f32 1.0, %v3496
  %v3552 = vsub.f32 1.0, %v3498
  %v3553 = vsub.f32 1.0, %v3500
  %v3554 = vsub.f32 1.0, %v3502
  %v3555 = vsub.f32 1.0, %v3504
  %v3556 = vsub.f32 1.0, %v3506
  %v3557 = vsub.f32 1.0, %v3508
  %v3558 = vsub.f32 1.0, %v3510
  %v3559 = vmul.f32 %v3551, %v3543
  %v3560 = vmul.f32 %v3552, %v3544
  %v3561 = vmul.f32 %v3553, %v3545
  %v3562 = vmul.f32 %v3554, %v3546
  %v3563 = vmul.f32 %v3555, %v3547
  %v3564 = vmul.f32 %v3556, %v3548
  %v3565 = vmul.f32 %v3557, %v3549
  %v3566 = vmul.f32 %v3558, %v3550
  %v3575 = vrot.slane %v3198, 7
  %v3576 = vrot.slane %v3199, 7
  %v3577 = vrot.slane %v3200, 7
  %v3578 = vrot.slane %v3201, 7
  %v3579 = vrot.slane %v3202, 7
  %v3580 = vrot.slane %v3203, 7
  %v3581 = vrot.slane %v3204, 7
  %v3582 = vrot.slane %v3205, 7
  %v3591 = vmul.f32 %v3496, %v3575
  %v3592 = vmul.f32 %v3498, %v3576
  %v3593 = vmul.f32 %v3500, %v3577
  %v3594 = vmul.f32 %v3502, %v3578
  %v3595 = vmul.f32 %v3504, %v3579
  %v3596 = vmul.f32 %v3506, %v3580
  %v3597 = vmul.f32 %v3508, %v3581
  %v3598 = vmul.f32 %v3510, %v3582
  %v3599 = vadd.f32 %v3559, %v3591
  %v3600 = vadd.f32 %v3560, %v3592
  %v3601 = vadd.f32 %v3561, %v3593
  %v3602 = vadd.f32 %v3562, %v3594
  %v3603 = vadd.f32 %v3563, %v3595
  %v3604 = vadd.f32 %v3564, %v3596
  %v3605 = vadd.f32 %v3565, %v3597
  %v3606 = vadd.f32 %v3566, %v3598
  %v3607 = vpack.c.bf16 %v3599, %v3599
  %v3608 = vpack.c.bf16 %v3600, %v3600
  %v3609 = vpack.c.bf16 %v3601, %v3601
  %v3610 = vpack.c.bf16 %v3602, %v3602
  %v3611 = vpack.c.bf16 %v3603, %v3603
  %v3612 = vpack.c.bf16 %v3604, %v3604
  %v3613 = vpack.c.bf16 %v3605, %v3605
  %v3614 = vpack.c.bf16 %v3606, %v3606
  %v3623 = vunpack.c.l.b16 %v3607
  %v3624 = vunpack.c.l.b16 %v3608
  %v3625 = vunpack.c.l.b16 %v3609
  %v3626 = vunpack.c.l.b16 %v3610
  %v3627 = vunpack.c.l.b16 %v3611
  %v3628 = vunpack.c.l.b16 %v3612
  %v3629 = vunpack.c.l.b16 %v3613
  %v3630 = vunpack.c.l.b16 %v3614
  %v3631 = vrot.slane %v3624, 7
  %v3632 = vsel %vm577, %v3631, %v3623
  %v3633 = vrot.slane %v3625, 6
  %v3634 = vsel %vm580, %v3633, %v3632
  %v3635 = vrot.slane %v3626, 5
  %v3636 = vsel %vm583, %v3635, %v3634
  %v3637 = vrot.slane %v3627, 4
  %v3638 = vsel %vm586, %v3637, %v3636
  %v3639 = vrot.slane %v3628, 3
  %v3640 = vsel %vm589, %v3639, %v3638
  %v3641 = vrot.slane %v3629, 2
  %v3642 = vsel %vm592, %v3641, %v3640
  %v3643 = vrot.slane %v3630, 1
  %v3644 = vsel %vm595, %v3643, %v3642
  %v3645 = vpack.c.b16 %v3644, %v3644
  %3647 = vmatprep.subr.bf16.mxu0 %v173
  %3648 = vmatpush1.bf16.msra.mxu0 %v172
  %3649 = vmatprep.subr.bf16.mxu0 %v170
  %3650 = vmatpush1.bf16.msra.mxu0 %v169
  %3651 = vmatprep.subr.bf16.mxu0 %v167
  %3652 = vmatpush1.bf16.msra.mxu0 %v166
  %3653 = vmatprep.subr.bf16.mxu0 %v164
  %3654 = vmatpush1.bf16.msra.mxu0 %v163
  %3655 = vmatprep.subr.bf16.mxu0 %v161
  %3656 = vmatpush1.bf16.msra.mxu0 %v160
  %3657 = vmatprep.subr.bf16.mxu0 %v158
  %3658 = vmatpush1.bf16.msra.mxu0 %v157
  %3659 = vmatprep.subr.bf16.mxu0 %v155
  %3660 = vmatpush1.bf16.msra.mxu0 %v154
  %3661 = vmatprep.subr.bf16.mxu0 %v152
  %3662 = vmatpush1.bf16.msra.mxu0 %v151
  %3663 = vmatprep.subr.bf16.mxu0 0
  %3664 = vmatpush2.bf16.msra.mxu0 0
  %3665 = vmatprep.subr.bf16.mxu0 0
  %3666 = vmatpush2.bf16.msra.mxu0 0
  %3667 = vmatprep.subr.bf16.mxu0 0
  %3668 = vmatpush2.bf16.msra.mxu0 0
  %3669 = vmatprep.subr.bf16.mxu0 0
  %3670 = vmatpush2.bf16.msra.mxu0 0
  %3671 = vmatprep.subr.bf16.mxu0 0
  %3672 = vmatpush2.bf16.msra.mxu0 0
  %3673 = vmatprep.subr.bf16.mxu0 0
  %3674 = vmatpush2.bf16.msra.mxu0 0
  %3675 = vmatprep.subr.bf16.mxu0 0
  %3676 = vmatpush2.bf16.msra.mxu0 0
  %3677 = vmatprep.subr.bf16.mxu0 0
  %3678 = vmatpush2.bf16.msra.mxu0 0
  %3679 = vmatprep.mubr.bf16.mxu0 0
  %3680 = vmatmul.mubr.bf16.gmra.mxu0 %v3645
  %v3681 = vpop.f32.mrf.mxu0
  %v3682 = vadd.f32 %v57, %v3681
  %v3683 = vpop.f32.mrf.mxu0
  %v3684 = vadd.f32 %v61, %v3683
  %v3685 = vpop.f32.mrf.mxu0
  %v3686 = vpop.f32.mrf.mxu0
  %3687 = vdwg.mxu0
  %3688 = vmatprep.subr.bf16.mxu0 0
  %3689 = vmatpush1.bf16.msra.mxu0 %v174
  %3690 = vmatprep.subr.bf16.mxu0 0
  %3691 = vmatpush1.bf16.msra.mxu0 %v171
  %3692 = vmatprep.subr.bf16.mxu0 0
  %3693 = vmatpush1.bf16.msra.mxu0 %v168
  %3694 = vmatprep.subr.bf16.mxu0 0
  %3695 = vmatpush1.bf16.msra.mxu0 %v165
  %3696 = vmatprep.subr.bf16.mxu0 0
  %3697 = vmatpush1.bf16.msra.mxu0 %v162
  %3698 = vmatprep.subr.bf16.mxu0 0
  %3699 = vmatpush1.bf16.msra.mxu0 %v159
  %3700 = vmatprep.subr.bf16.mxu0 0
  %3701 = vmatpush1.bf16.msra.mxu0 %v156
  %3702 = vmatprep.subr.bf16.mxu0 0
  %3703 = vmatpush1.bf16.msra.mxu0 %v153
  %3704 = vmatprep.subr.bf16.mxu0 0
  %3705 = vmatpush2.bf16.msra.mxu0 0
  %3706 = vmatprep.subr.bf16.mxu0 0
  %3707 = vmatpush2.bf16.msra.mxu0 0
  %3708 = vmatprep.subr.bf16.mxu0 0
  %3709 = vmatpush2.bf16.msra.mxu0 0
  %3710 = vmatprep.subr.bf16.mxu0 0
  %3711 = vmatpush2.bf16.msra.mxu0 0
  %3712 = vmatprep.subr.bf16.mxu0 0
  %3713 = vmatpush2.bf16.msra.mxu0 0
  %3714 = vmatprep.subr.bf16.mxu0 0
  %3715 = vmatpush2.bf16.msra.mxu0 0
  %3716 = vmatprep.subr.bf16.mxu0 0
  %3717 = vmatpush2.bf16.msra.mxu0 0
  %3718 = vmatprep.subr.bf16.mxu0 0
  %3719 = vmatpush2.bf16.msra.mxu0 0
  %3720 = vmatprep.mubr.bf16.mxu0 0
  %3721 = vmatmul.mubr.bf16.gmra.mxu0 %v3645
  %v3722 = vpop.f32.mrf.mxu0
  %v3723 = vadd.f32 %v65, %v3722
  %v3724 = vpop.f32.mrf.mxu0
  %v3725 = vpop.f32.mrf.mxu0
  %v3726 = vpop.f32.mrf.mxu0
  %3727 = vdwg.mxu0
  %v3729 = vrot.slane %v3682, 7
  %v3730 = vrot.slane %v3682, 1
  %v3731 = vrot.slane %v3682, 2
  %v3732 = vrot.slane %v3682, 3
  %v3733 = vrot.slane %v3682, 4
  %v3734 = vrot.slane %v3682, 5
  %v3735 = vrot.slane %v3682, 6
  %v3744 = vadd.f32 %v3343, %v3729
  %v3745 = vadd.f32 %v3346, %v3682
  %v3746 = vadd.f32 %v3349, %v3730
  %v3747 = vadd.f32 %v3352, %v3731
  %v3748 = vadd.f32 %v3355, %v3732
  %v3749 = vadd.f32 %v3358, %v3733
  %v3750 = vadd.f32 %v3361, %v3734
  %v3751 = vadd.f32 %v3364, %v3735
  %v3752 = vxor.u32 %v3744, 2147483648
  %v3753 = vxor.u32 %v3745, 2147483648
  %v3754 = vxor.u32 %v3746, 2147483648
  %v3755 = vxor.u32 %v3747, 2147483648
  %v3756 = vxor.u32 %v3748, 2147483648
  %v3757 = vxor.u32 %v3749, 2147483648
  %v3758 = vxor.u32 %v3750, 2147483648
  %v3759 = vxor.u32 %v3751, 2147483648
  %v3760 = vmul.f32 %v3752, 1.442695
  %v3761 = vpow.pop %v3760
  %v3762 = vmul.f32 %v3753, 1.442695
  %v3763 = vpow.pop %v3762
  %v3764 = vmul.f32 %v3754, 1.442695
  %v3765 = vpow.pop %v3764
  %v3766 = vmul.f32 %v3755, 1.442695
  %v3767 = vpow.pop %v3766
  %v3768 = vmul.f32 %v3756, 1.442695
  %v3769 = vpow.pop %v3768
  %v3770 = vmul.f32 %v3757, 1.442695
  %v3771 = vpow.pop %v3770
  %v3772 = vmul.f32 %v3758, 1.442695
  %v3773 = vpow.pop %v3772
  %v3774 = vmul.f32 %v3759, 1.442695
  %v3775 = vpow.pop %v3774
  %v3776 = vadd.f32 %v3761, 1.0
  %v3777 = vadd.f32 %v3763, 1.0
  %v3778 = vadd.f32 %v3765, 1.0
  %v3779 = vadd.f32 %v3767, 1.0
  %v3780 = vadd.f32 %v3769, 1.0
  %v3781 = vadd.f32 %v3771, 1.0
  %v3782 = vadd.f32 %v3773, 1.0
  %v3783 = vadd.f32 %v3775, 1.0
  %v3784 = vrcp.pop %v3776
  %v3785 = vmul.f32 1.0, %v3784
  %v3786 = vrcp.pop %v3777
  %v3787 = vmul.f32 1.0, %v3786
  %v3788 = vrcp.pop %v3778
  %v3789 = vmul.f32 1.0, %v3788
  %v3790 = vrcp.pop %v3779
  %v3791 = vmul.f32 1.0, %v3790
  %v3792 = vrcp.pop %v3780
  %v3793 = vmul.f32 1.0, %v3792
  %v3794 = vrcp.pop %v3781
  %v3795 = vmul.f32 1.0, %v3794
  %v3796 = vrcp.pop %v3782
  %v3797 = vmul.f32 1.0, %v3796
  %v3798 = vrcp.pop %v3783
  %v3799 = vmul.f32 1.0, %v3798
  %v3801 = vrot.slane %v3684, 7
  %v3802 = vrot.slane %v3684, 1
  %v3803 = vrot.slane %v3684, 2
  %v3804 = vrot.slane %v3684, 3
  %v3805 = vrot.slane %v3684, 4
  %v3806 = vrot.slane %v3684, 5
  %v3807 = vrot.slane %v3684, 6
  %v3816 = vadd.f32 %v3344, %v3801
  %v3817 = vadd.f32 %v3347, %v3684
  %v3818 = vadd.f32 %v3350, %v3802
  %v3819 = vadd.f32 %v3353, %v3803
  %v3820 = vadd.f32 %v3356, %v3804
  %v3821 = vadd.f32 %v3359, %v3805
  %v3822 = vadd.f32 %v3362, %v3806
  %v3823 = vadd.f32 %v3365, %v3807
  %v3824 = vxor.u32 %v3816, 2147483648
  %v3825 = vxor.u32 %v3817, 2147483648
  %v3826 = vxor.u32 %v3818, 2147483648
  %v3827 = vxor.u32 %v3819, 2147483648
  %v3828 = vxor.u32 %v3820, 2147483648
  %v3829 = vxor.u32 %v3821, 2147483648
  %v3830 = vxor.u32 %v3822, 2147483648
  %v3831 = vxor.u32 %v3823, 2147483648
  %v3832 = vmul.f32 %v3824, 1.442695
  %v3833 = vpow.pop %v3832
  %v3834 = vmul.f32 %v3825, 1.442695
  %v3835 = vpow.pop %v3834
  %v3836 = vmul.f32 %v3826, 1.442695
  %v3837 = vpow.pop %v3836
  %v3838 = vmul.f32 %v3827, 1.442695
  %v3839 = vpow.pop %v3838
  %v3840 = vmul.f32 %v3828, 1.442695
  %v3841 = vpow.pop %v3840
  %v3842 = vmul.f32 %v3829, 1.442695
  %v3843 = vpow.pop %v3842
  %v3844 = vmul.f32 %v3830, 1.442695
  %v3845 = vpow.pop %v3844
  %v3846 = vmul.f32 %v3831, 1.442695
  %v3847 = vpow.pop %v3846
  %v3848 = vadd.f32 %v3833, 1.0
  %v3849 = vadd.f32 %v3835, 1.0
  %v3850 = vadd.f32 %v3837, 1.0
  %v3851 = vadd.f32 %v3839, 1.0
  %v3852 = vadd.f32 %v3841, 1.0
  %v3853 = vadd.f32 %v3843, 1.0
  %v3854 = vadd.f32 %v3845, 1.0
  %v3855 = vadd.f32 %v3847, 1.0
  %v3856 = vrcp.pop %v3848
  %v3857 = vmul.f32 1.0, %v3856
  %v3858 = vrcp.pop %v3849
  %v3859 = vmul.f32 1.0, %v3858
  %v3860 = vrcp.pop %v3850
  %v3861 = vmul.f32 1.0, %v3860
  %v3862 = vrcp.pop %v3851
  %v3863 = vmul.f32 1.0, %v3862
  %v3864 = vrcp.pop %v3852
  %v3865 = vmul.f32 1.0, %v3864
  %v3866 = vrcp.pop %v3853
  %v3867 = vmul.f32 1.0, %v3866
  %v3868 = vrcp.pop %v3854
  %v3869 = vmul.f32 1.0, %v3868
  %v3870 = vrcp.pop %v3855
  %v3871 = vmul.f32 1.0, %v3870
  %v3873 = vrot.slane %v3723, 7
  %v3874 = vrot.slane %v3723, 1
  %v3875 = vrot.slane %v3723, 2
  %v3876 = vrot.slane %v3723, 3
  %v3877 = vrot.slane %v3723, 4
  %v3878 = vrot.slane %v3723, 5
  %v3879 = vrot.slane %v3723, 6
  %v3888 = vmul.f32 %v3785, %v3873
  %v3889 = vmul.f32 %v3787, %v3723
  %v3890 = vmul.f32 %v3789, %v3874
  %v3891 = vmul.f32 %v3791, %v3875
  %v3892 = vmul.f32 %v3793, %v3876
  %v3893 = vmul.f32 %v3795, %v3877
  %v3894 = vmul.f32 %v3797, %v3878
  %v3895 = vmul.f32 %v3799, %v3879
  %v3896 = vadd.f32 %v3345, %v3888
  %v3897 = vadd.f32 %v3348, %v3889
  %v3898 = vadd.f32 %v3351, %v3890
  %v3899 = vadd.f32 %v3354, %v3891
  %v3900 = vadd.f32 %v3357, %v3892
  %v3901 = vadd.f32 %v3360, %v3893
  %v3902 = vadd.f32 %v3363, %v3894
  %v3903 = vadd.f32 %v3366, %v3895
  %v3904 = vtanh.pop %v3896
  %v3905 = vtanh.pop %v3897
  %v3906 = vtanh.pop %v3898
  %v3907 = vtanh.pop %v3899
  %v3908 = vtanh.pop %v3900
  %v3909 = vtanh.pop %v3901
  %v3910 = vtanh.pop %v3902
  %v3911 = vtanh.pop %v3903
  %v3912 = vsub.f32 1.0, %v3857
  %v3913 = vsub.f32 1.0, %v3859
  %v3914 = vsub.f32 1.0, %v3861
  %v3915 = vsub.f32 1.0, %v3863
  %v3916 = vsub.f32 1.0, %v3865
  %v3917 = vsub.f32 1.0, %v3867
  %v3918 = vsub.f32 1.0, %v3869
  %v3919 = vsub.f32 1.0, %v3871
  %v3920 = vmul.f32 %v3912, %v3904
  %v3921 = vmul.f32 %v3913, %v3905
  %v3922 = vmul.f32 %v3914, %v3906
  %v3923 = vmul.f32 %v3915, %v3907
  %v3924 = vmul.f32 %v3916, %v3908
  %v3925 = vmul.f32 %v3917, %v3909
  %v3926 = vmul.f32 %v3918, %v3910
  %v3927 = vmul.f32 %v3919, %v3911
  %v3936 = vrot.slane %v3599, 7
  %v3937 = vrot.slane %v3600, 7
  %v3938 = vrot.slane %v3601, 7
  %v3939 = vrot.slane %v3602, 7
  %v3940 = vrot.slane %v3603, 7
  %v3941 = vrot.slane %v3604, 7
  %v3942 = vrot.slane %v3605, 7
  %v3943 = vrot.slane %v3606, 7
  %v3952 = vmul.f32 %v3857, %v3936
  %v3953 = vmul.f32 %v3859, %v3937
  %v3954 = vmul.f32 %v3861, %v3938
  %v3955 = vmul.f32 %v3863, %v3939
  %v3956 = vmul.f32 %v3865, %v3940
  %v3957 = vmul.f32 %v3867, %v3941
  %v3958 = vmul.f32 %v3869, %v3942
  %v3959 = vmul.f32 %v3871, %v3943
  %v3960 = vadd.f32 %v3920, %v3952
  %v3961 = vadd.f32 %v3921, %v3953
  %v3962 = vadd.f32 %v3922, %v3954
  %v3963 = vadd.f32 %v3923, %v3955
  %v3964 = vadd.f32 %v3924, %v3956
  %v3965 = vadd.f32 %v3925, %v3957
  %v3966 = vadd.f32 %v3926, %v3958
  %v3967 = vadd.f32 %v3927, %v3959
  %v3968 = vpack.c.bf16 %v3960, %v3960
  %v3969 = vpack.c.bf16 %v3961, %v3961
  %v3970 = vpack.c.bf16 %v3962, %v3962
  %v3971 = vpack.c.bf16 %v3963, %v3963
  %v3972 = vpack.c.bf16 %v3964, %v3964
  %v3973 = vpack.c.bf16 %v3965, %v3965
  %v3974 = vpack.c.bf16 %v3966, %v3966
  %v3975 = vpack.c.bf16 %v3967, %v3967
  %v3984 = vunpack.c.l.b16 %v3968
  %v3985 = vunpack.c.l.b16 %v3969
  %v3986 = vunpack.c.l.b16 %v3970
  %v3987 = vunpack.c.l.b16 %v3971
  %v3988 = vunpack.c.l.b16 %v3972
  %v3989 = vunpack.c.l.b16 %v3973
  %v3990 = vunpack.c.l.b16 %v3974
  %v3991 = vunpack.c.l.b16 %v3975
  %v3992 = vrot.slane %v3984, 1
  %v3993 = vsel %vm577, %v3985, %v3992
  %v3994 = vrot.slane %v3986, 7
  %v3995 = vsel %vm580, %v3994, %v3993
  %v3996 = vrot.slane %v3987, 6
  %v3997 = vsel %vm583, %v3996, %v3995
  %v3998 = vrot.slane %v3988, 5
  %v3999 = vsel %vm586, %v3998, %v3997
  %v4000 = vrot.slane %v3989, 4
  %v4001 = vsel %vm589, %v4000, %v3999
  %v4002 = vrot.slane %v3990, 3
  %v4003 = vsel %vm592, %v4002, %v4001
  %v4004 = vrot.slane %v3991, 2
  %v4005 = vsel %vm595, %v4004, %v4003
  %v4006 = vpack.c.b16 %v4005, %v4005
  %4008 = vmatprep.subr.bf16.mxu0 %v173
  %4009 = vmatpush1.bf16.msra.mxu0 %v172
  %4010 = vmatprep.subr.bf16.mxu0 %v170
  %4011 = vmatpush1.bf16.msra.mxu0 %v169
  %4012 = vmatprep.subr.bf16.mxu0 %v167
  %4013 = vmatpush1.bf16.msra.mxu0 %v166
  %4014 = vmatprep.subr.bf16.mxu0 %v164
  %4015 = vmatpush1.bf16.msra.mxu0 %v163
  %4016 = vmatprep.subr.bf16.mxu0 %v161
  %4017 = vmatpush1.bf16.msra.mxu0 %v160
  %4018 = vmatprep.subr.bf16.mxu0 %v158
  %4019 = vmatpush1.bf16.msra.mxu0 %v157
  %4020 = vmatprep.subr.bf16.mxu0 %v155
  %4021 = vmatpush1.bf16.msra.mxu0 %v154
  %4022 = vmatprep.subr.bf16.mxu0 %v152
  %4023 = vmatpush1.bf16.msra.mxu0 %v151
  %4024 = vmatprep.subr.bf16.mxu0 0
  %4025 = vmatpush2.bf16.msra.mxu0 0
  %4026 = vmatprep.subr.bf16.mxu0 0
  %4027 = vmatpush2.bf16.msra.mxu0 0
  %4028 = vmatprep.subr.bf16.mxu0 0
  %4029 = vmatpush2.bf16.msra.mxu0 0
  %4030 = vmatprep.subr.bf16.mxu0 0
  %4031 = vmatpush2.bf16.msra.mxu0 0
  %4032 = vmatprep.subr.bf16.mxu0 0
  %4033 = vmatpush2.bf16.msra.mxu0 0
  %4034 = vmatprep.subr.bf16.mxu0 0
  %4035 = vmatpush2.bf16.msra.mxu0 0
  %4036 = vmatprep.subr.bf16.mxu0 0
  %4037 = vmatpush2.bf16.msra.mxu0 0
  %4038 = vmatprep.subr.bf16.mxu0 0
  %4039 = vmatpush2.bf16.msra.mxu0 0
  %4040 = vmatprep.mubr.bf16.mxu0 0
  %4041 = vmatmul.mubr.bf16.gmra.mxu0 %v4006
  %v4042 = vpop.f32.mrf.mxu0
  %v4043 = vadd.f32 %v57, %v4042
  %v4044 = vpop.f32.mrf.mxu0
  %v4045 = vadd.f32 %v61, %v4044
  %v4046 = vpop.f32.mrf.mxu0
  %v4047 = vpop.f32.mrf.mxu0
  %4048 = vdwg.mxu0
  %4049 = vmatprep.subr.bf16.mxu0 0
  %4050 = vmatpush1.bf16.msra.mxu0 %v174
  %4051 = vmatprep.subr.bf16.mxu0 0
  %4052 = vmatpush1.bf16.msra.mxu0 %v171
  %4053 = vmatprep.subr.bf16.mxu0 0
  %4054 = vmatpush1.bf16.msra.mxu0 %v168
  %4055 = vmatprep.subr.bf16.mxu0 0
  %4056 = vmatpush1.bf16.msra.mxu0 %v165
  %4057 = vmatprep.subr.bf16.mxu0 0
  %4058 = vmatpush1.bf16.msra.mxu0 %v162
  %4059 = vmatprep.subr.bf16.mxu0 0
  %4060 = vmatpush1.bf16.msra.mxu0 %v159
  %4061 = vmatprep.subr.bf16.mxu0 0
  %4062 = vmatpush1.bf16.msra.mxu0 %v156
  %4063 = vmatprep.subr.bf16.mxu0 0
  %4064 = vmatpush1.bf16.msra.mxu0 %v153
  %4065 = vmatprep.subr.bf16.mxu0 0
  %4066 = vmatpush2.bf16.msra.mxu0 0
  %4067 = vmatprep.subr.bf16.mxu0 0
  %4068 = vmatpush2.bf16.msra.mxu0 0
  %4069 = vmatprep.subr.bf16.mxu0 0
  %4070 = vmatpush2.bf16.msra.mxu0 0
  %4071 = vmatprep.subr.bf16.mxu0 0
  %4072 = vmatpush2.bf16.msra.mxu0 0
  %4073 = vmatprep.subr.bf16.mxu0 0
  %4074 = vmatpush2.bf16.msra.mxu0 0
  %4075 = vmatprep.subr.bf16.mxu0 0
  %4076 = vmatpush2.bf16.msra.mxu0 0
  %4077 = vmatprep.subr.bf16.mxu0 0
  %4078 = vmatpush2.bf16.msra.mxu0 0
  %4079 = vmatprep.subr.bf16.mxu0 0
  %4080 = vmatpush2.bf16.msra.mxu0 0
  %4081 = vmatprep.mubr.bf16.mxu0 0
  %4082 = vmatmul.mubr.bf16.gmra.mxu0 %v4006
  %v4083 = vpop.f32.mrf.mxu0
  %v4084 = vadd.f32 %v65, %v4083
  %v4085 = vpop.f32.mrf.mxu0
  %v4086 = vpop.f32.mrf.mxu0
  %v4087 = vpop.f32.mrf.mxu0
  %4088 = vdwg.mxu0
  %v4089 = vld [vmem:[%s0 + $0xc] sm:$0x22]
  %v4090 = vld [vmem:[%s0 + $0x14] sm:$0x2]
  %v4091 = vld [vmem:[%s0 + $0x24] sm:$0x22]
  %v4092 = vld [vmem:[%s0 + $0x2c] sm:$0x2]
  %v4093 = vld [vmem:[%s0 + $0x3c] sm:$0x22]
  %v4094 = vld [vmem:[%s0 + $0x44] sm:$0x2]
  %v4095 = vld [vmem:[%s0 + $0x54] sm:$0x22]
  %v4096 = vld [vmem:[%s0 + $0x5c] sm:$0x2]
  %v4097 = vld [vmem:[%s0 + $0x6c] sm:$0x22]
  %v4098 = vld [vmem:[%s0 + $0x74] sm:$0x2]
  %v4099 = vld [vmem:[%s0 + $0x84] sm:$0x22]
  %v4100 = vld [vmem:[%s0 + $0x8c] sm:$0x2]
  %v4101 = vld [vmem:[%s0 + $0x9c] sm:$0x22]
  %v4102 = vld [vmem:[%s0 + $0xa4] sm:$0x2]
  %v4103 = vld [vmem:[%s0 + $0xb4] sm:$0x22]
  %v4104 = vld [vmem:[%s0 + $0xbc] sm:$0x2]
  %v4105 = vunpack.c.l.bf16 %v4089
  %v4106 = vunpack.c.h.bf16 %v4089
  %v4107 = vunpack.c.l.bf16 %v4090
  %v4108 = vunpack.c.l.bf16 %v4091
  %v4109 = vunpack.c.h.bf16 %v4091
  %v4110 = vunpack.c.l.bf16 %v4092
  %v4111 = vunpack.c.l.bf16 %v4093
  %v4112 = vunpack.c.h.bf16 %v4093
  %v4113 = vunpack.c.l.bf16 %v4094
  %v4114 = vunpack.c.l.bf16 %v4095
  %v4115 = vunpack.c.h.bf16 %v4095
  %v4116 = vunpack.c.l.bf16 %v4096
  %v4117 = vunpack.c.l.bf16 %v4097
  %v4118 = vunpack.c.h.bf16 %v4097
  %v4119 = vunpack.c.l.bf16 %v4098
  %v4120 = vunpack.c.l.bf16 %v4099
  %v4121 = vunpack.c.h.bf16 %v4099
  %v4122 = vunpack.c.l.bf16 %v4100
  %v4123 = vunpack.c.l.bf16 %v4101
  %v4124 = vunpack.c.h.bf16 %v4101
  %v4125 = vunpack.c.l.bf16 %v4102
  %v4126 = vunpack.c.l.bf16 %v4103
  %v4127 = vunpack.c.h.bf16 %v4103
  %v4128 = vunpack.c.l.bf16 %v4104
  %v4130 = vrot.slane %v4043, 6
  %v4131 = vrot.slane %v4043, 7
  %v4132 = vrot.slane %v4043, 1
  %v4133 = vrot.slane %v4043, 2
  %v4134 = vrot.slane %v4043, 3
  %v4135 = vrot.slane %v4043, 4
  %v4136 = vrot.slane %v4043, 5
  %v4145 = vadd.f32 %v4105, %v4130
  %v4146 = vadd.f32 %v4108, %v4131
  %v4147 = vadd.f32 %v4111, %v4043
  %v4148 = vadd.f32 %v4114, %v4132
  %v4149 = vadd.f32 %v4117, %v4133
  %v4150 = vadd.f32 %v4120, %v4134
  %v4151 = vadd.f32 %v4123, %v4135
  %v4152 = vadd.f32 %v4126, %v4136
  %v4153 = vxor.u32 %v4145, 2147483648
  %v4154 = vxor.u32 %v4146, 2147483648
  %v4155 = vxor.u32 %v4147, 2147483648
  %v4156 = vxor.u32 %v4148, 2147483648
  %v4157 = vxor.u32 %v4149, 2147483648
  %v4158 = vxor.u32 %v4150, 2147483648
  %v4159 = vxor.u32 %v4151, 2147483648
  %v4160 = vxor.u32 %v4152, 2147483648
  %v4161 = vmul.f32 %v4153, 1.442695
  %v4162 = vpow.pop %v4161
  %v4163 = vmul.f32 %v4154, 1.442695
  %v4164 = vpow.pop %v4163
  %v4165 = vmul.f32 %v4155, 1.442695
  %v4166 = vpow.pop %v4165
  %v4167 = vmul.f32 %v4156, 1.442695
  %v4168 = vpow.pop %v4167
  %v4169 = vmul.f32 %v4157, 1.442695
  %v4170 = vpow.pop %v4169
  %v4171 = vmul.f32 %v4158, 1.442695
  %v4172 = vpow.pop %v4171
  %v4173 = vmul.f32 %v4159, 1.442695
  %v4174 = vpow.pop %v4173
  %v4175 = vmul.f32 %v4160, 1.442695
  %v4176 = vpow.pop %v4175
  %v4177 = vadd.f32 %v4162, 1.0
  %v4178 = vadd.f32 %v4164, 1.0
  %v4179 = vadd.f32 %v4166, 1.0
  %v4180 = vadd.f32 %v4168, 1.0
  %v4181 = vadd.f32 %v4170, 1.0
  %v4182 = vadd.f32 %v4172, 1.0
  %v4183 = vadd.f32 %v4174, 1.0
  %v4184 = vadd.f32 %v4176, 1.0
  %v4185 = vrcp.pop %v4177
  %v4186 = vmul.f32 1.0, %v4185
  %v4187 = vrcp.pop %v4178
  %v4188 = vmul.f32 1.0, %v4187
  %v4189 = vrcp.pop %v4179
  %v4190 = vmul.f32 1.0, %v4189
  %v4191 = vrcp.pop %v4180
  %v4192 = vmul.f32 1.0, %v4191
  %v4193 = vrcp.pop %v4181
  %v4194 = vmul.f32 1.0, %v4193
  %v4195 = vrcp.pop %v4182
  %v4196 = vmul.f32 1.0, %v4195
  %v4197 = vrcp.pop %v4183
  %v4198 = vmul.f32 1.0, %v4197
  %v4199 = vrcp.pop %v4184
  %v4200 = vmul.f32 1.0, %v4199
  %v4202 = vrot.slane %v4045, 6
  %v4203 = vrot.slane %v4045, 7
  %v4204 = vrot.slane %v4045, 1
  %v4205 = vrot.slane %v4045, 2
  %v4206 = vrot.slane %v4045, 3
  %v4207 = vrot.slane %v4045, 4
  %v4208 = vrot.slane %v4045, 5
  %v4217 = vadd.f32 %v4106, %v4202
  %v4218 = vadd.f32 %v4109, %v4203
  %v4219 = vadd.f32 %v4112, %v4045
  %v4220 = vadd.f32 %v4115, %v4204
  %v4221 = vadd.f32 %v4118, %v4205
  %v4222 = vadd.f32 %v4121, %v4206
  %v4223 = vadd.f32 %v4124, %v4207
  %v4224 = vadd.f32 %v4127, %v4208
  %v4225 = vxor.u32 %v4217, 2147483648
  %v4226 = vxor.u32 %v4218, 2147483648
  %v4227 = vxor.u32 %v4219, 2147483648
  %v4228 = vxor.u32 %v4220, 2147483648
  %v4229 = vxor.u32 %v4221, 2147483648
  %v4230 = vxor.u32 %v4222, 2147483648
  %v4231 = vxor.u32 %v4223, 2147483648
  %v4232 = vxor.u32 %v4224, 2147483648
  %v4233 = vmul.f32 %v4225, 1.442695
  %v4234 = vpow.pop %v4233
  %v4235 = vmul.f32 %v4226, 1.442695
  %v4236 = vpow.pop %v4235
  %v4237 = vmul.f32 %v4227, 1.442695
  %v4238 = vpow.pop %v4237
  %v4239 = vmul.f32 %v4228, 1.442695
  %v4240 = vpow.pop %v4239
  %v4241 = vmul.f32 %v4229, 1.442695
  %v4242 = vpow.pop %v4241
  %v4243 = vmul.f32 %v4230, 1.442695
  %v4244 = vpow.pop %v4243
  %v4245 = vmul.f32 %v4231, 1.442695
  %v4246 = vpow.pop %v4245
  %v4247 = vmul.f32 %v4232, 1.442695
  %v4248 = vpow.pop %v4247
  %v4249 = vadd.f32 %v4234, 1.0
  %v4250 = vadd.f32 %v4236, 1.0
  %v4251 = vadd.f32 %v4238, 1.0
  %v4252 = vadd.f32 %v4240, 1.0
  %v4253 = vadd.f32 %v4242, 1.0
  %v4254 = vadd.f32 %v4244, 1.0
  %v4255 = vadd.f32 %v4246, 1.0
  %v4256 = vadd.f32 %v4248, 1.0
  %v4257 = vrcp.pop %v4249
  %v4258 = vmul.f32 1.0, %v4257
  %v4259 = vrcp.pop %v4250
  %v4260 = vmul.f32 1.0, %v4259
  %v4261 = vrcp.pop %v4251
  %v4262 = vmul.f32 1.0, %v4261
  %v4263 = vrcp.pop %v4252
  %v4264 = vmul.f32 1.0, %v4263
  %v4265 = vrcp.pop %v4253
  %v4266 = vmul.f32 1.0, %v4265
  %v4267 = vrcp.pop %v4254
  %v4268 = vmul.f32 1.0, %v4267
  %v4269 = vrcp.pop %v4255
  %v4270 = vmul.f32 1.0, %v4269
  %v4271 = vrcp.pop %v4256
  %v4272 = vmul.f32 1.0, %v4271
  %v4274 = vrot.slane %v4084, 6
  %v4275 = vrot.slane %v4084, 7
  %v4276 = vrot.slane %v4084, 1
  %v4277 = vrot.slane %v4084, 2
  %v4278 = vrot.slane %v4084, 3
  %v4279 = vrot.slane %v4084, 4
  %v4280 = vrot.slane %v4084, 5
  %v4289 = vmul.f32 %v4186, %v4274
  %v4290 = vmul.f32 %v4188, %v4275
  %v4291 = vmul.f32 %v4190, %v4084
  %v4292 = vmul.f32 %v4192, %v4276
  %v4293 = vmul.f32 %v4194, %v4277
  %v4294 = vmul.f32 %v4196, %v4278
  %v4295 = vmul.f32 %v4198, %v4279
  %v4296 = vmul.f32 %v4200, %v4280
  %v4297 = vadd.f32 %v4107, %v4289
  %v4298 = vadd.f32 %v4110, %v4290
  %v4299 = vadd.f32 %v4113, %v4291
  %v4300 = vadd.f32 %v4116, %v4292
  %v4301 = vadd.f32 %v4119, %v4293
  %v4302 = vadd.f32 %v4122, %v4294
  %v4303 = vadd.f32 %v4125, %v4295
  %v4304 = vadd.f32 %v4128, %v4296
  %v4305 = vtanh.pop %v4297
  %v4306 = vtanh.pop %v4298
  %v4307 = vtanh.pop %v4299
  %v4308 = vtanh.pop %v4300
  %v4309 = vtanh.pop %v4301
  %v4310 = vtanh.pop %v4302
  %v4311 = vtanh.pop %v4303
  %v4312 = vtanh.pop %v4304
  %v4313 = vsub.f32 1.0, %v4258
  %v4314 = vsub.f32 1.0, %v4260
  %v4315 = vsub.f32 1.0, %v4262
  %v4316 = vsub.f32 1.0, %v4264
  %v4317 = vsub.f32 1.0, %v4266
  %v4318 = vsub.f32 1.0, %v4268
  %v4319 = vsub.f32 1.0, %v4270
  %v4320 = vsub.f32 1.0, %v4272
  %v4321 = vmul.f32 %v4313, %v4305
  %v4322 = vmul.f32 %v4314, %v4306
  %v4323 = vmul.f32 %v4315, %v4307
  %v4324 = vmul.f32 %v4316, %v4308
  %v4325 = vmul.f32 %v4317, %v4309
  %v4326 = vmul.f32 %v4318, %v4310
  %v4327 = vmul.f32 %v4319, %v4311
  %v4328 = vmul.f32 %v4320, %v4312
  %v4337 = vrot.slane %v3960, 7
  %v4338 = vrot.slane %v3961, 7
  %v4339 = vrot.slane %v3962, 7
  %v4340 = vrot.slane %v3963, 7
  %v4341 = vrot.slane %v3964, 7
  %v4342 = vrot.slane %v3965, 7
  %v4343 = vrot.slane %v3966, 7
  %v4344 = vrot.slane %v3967, 7
  %v4353 = vmul.f32 %v4258, %v4337
  %v4354 = vmul.f32 %v4260, %v4338
  %v4355 = vmul.f32 %v4262, %v4339
  %v4356 = vmul.f32 %v4264, %v4340
  %v4357 = vmul.f32 %v4266, %v4341
  %v4358 = vmul.f32 %v4268, %v4342
  %v4359 = vmul.f32 %v4270, %v4343
  %v4360 = vmul.f32 %v4272, %v4344
  %v4361 = vadd.f32 %v4321, %v4353
  %v4362 = vadd.f32 %v4322, %v4354
  %v4363 = vadd.f32 %v4323, %v4355
  %v4364 = vadd.f32 %v4324, %v4356
  %v4365 = vadd.f32 %v4325, %v4357
  %v4366 = vadd.f32 %v4326, %v4358
  %v4367 = vadd.f32 %v4327, %v4359
  %v4368 = vadd.f32 %v4328, %v4360
  %v4369 = vpack.c.bf16 %v4361, %v4361
  %v4370 = vpack.c.bf16 %v4362, %v4362
  %v4371 = vpack.c.bf16 %v4363, %v4363
  %v4372 = vpack.c.bf16 %v4364, %v4364
  %v4373 = vpack.c.bf16 %v4365, %v4365
  %v4374 = vpack.c.bf16 %v4366, %v4366
  %v4375 = vpack.c.bf16 %v4367, %v4367
  %v4376 = vpack.c.bf16 %v4368, %v4368
  %v4385 = vunpack.c.l.b16 %v4369
  %v4386 = vunpack.c.l.b16 %v4370
  %v4387 = vunpack.c.l.b16 %v4371
  %v4388 = vunpack.c.l.b16 %v4372
  %v4389 = vunpack.c.l.b16 %v4373
  %v4390 = vunpack.c.l.b16 %v4374
  %v4391 = vunpack.c.l.b16 %v4375
  %v4392 = vunpack.c.l.b16 %v4376
  %v4393 = vrot.slane %v4385, 2
  %v4394 = vrot.slane %v4386, 1
  %v4395 = vsel %vm577, %v4394, %v4393
  %v4396 = vsel %vm580, %v4387, %v4395
  %v4397 = vrot.slane %v4388, 7
  %v4398 = vsel %vm583, %v4397, %v4396
  %v4399 = vrot.slane %v4389, 6
  %v4400 = vsel %vm586, %v4399, %v4398
  %v4401 = vrot.slane %v4390, 5
  %v4402 = vsel %vm589, %v4401, %v4400
  %v4403 = vrot.slane %v4391, 4
  %v4404 = vsel %vm592, %v4403, %v4402
  %v4405 = vrot.slane %v4392, 3
  %v4406 = vsel %vm595, %v4405, %v4404
  %v4407 = vpack.c.b16 %v4406, %v4406
  %4409 = vmatprep.subr.bf16.mxu0 %v173
  %4410 = vmatpush1.bf16.msra.mxu0 %v172
  %4411 = vmatprep.subr.bf16.mxu0 %v170
  %4412 = vmatpush1.bf16.msra.mxu0 %v169
  %4413 = vmatprep.subr.bf16.mxu0 %v167
  %4414 = vmatpush1.bf16.msra.mxu0 %v166
  %4415 = vmatprep.subr.bf16.mxu0 %v164
  %4416 = vmatpush1.bf16.msra.mxu0 %v163
  %4417 = vmatprep.subr.bf16.mxu0 %v161
  %4418 = vmatpush1.bf16.msra.mxu0 %v160
  %4419 = vmatprep.subr.bf16.mxu0 %v158
  %4420 = vmatpush1.bf16.msra.mxu0 %v157
  %4421 = vmatprep.subr.bf16.mxu0 %v155
  %4422 = vmatpush1.bf16.msra.mxu0 %v154
  %4423 = vmatprep.subr.bf16.mxu0 %v152
  %4424 = vmatpush1.bf16.msra.mxu0 %v151
  %4425 = vmatprep.subr.bf16.mxu0 0
  %4426 = vmatpush2.bf16.msra.mxu0 0
  %4427 = vmatprep.subr.bf16.mxu0 0
  %4428 = vmatpush2.bf16.msra.mxu0 0
  %4429 = vmatprep.subr.bf16.mxu0 0
  %4430 = vmatpush2.bf16.msra.mxu0 0
  %4431 = vmatprep.subr.bf16.mxu0 0
  %4432 = vmatpush2.bf16.msra.mxu0 0
  %4433 = vmatprep.subr.bf16.mxu0 0
  %4434 = vmatpush2.bf16.msra.mxu0 0
  %4435 = vmatprep.subr.bf16.mxu0 0
  %4436 = vmatpush2.bf16.msra.mxu0 0
  %4437 = vmatprep.subr.bf16.mxu0 0
  %4438 = vmatpush2.bf16.msra.mxu0 0
  %4439 = vmatprep.subr.bf16.mxu0 0
  %4440 = vmatpush2.bf16.msra.mxu0 0
  %4441 = vmatprep.mubr.bf16.mxu0 0
  %4442 = vmatmul.mubr.bf16.gmra.mxu0 %v4407
  %v4443 = vpop.f32.mrf.mxu0
  %v4444 = vadd.f32 %v57, %v4443
  %v4445 = vpop.f32.mrf.mxu0
  %v4446 = vadd.f32 %v61, %v4445
  %v4447 = vpop.f32.mrf.mxu0
  %v4448 = vpop.f32.mrf.mxu0
  %4449 = vdwg.mxu0
  %4450 = vmatprep.subr.bf16.mxu0 0
  %4451 = vmatpush1.bf16.msra.mxu0 %v174
  %4452 = vmatprep.subr.bf16.mxu0 0
  %4453 = vmatpush1.bf16.msra.mxu0 %v171
  %4454 = vmatprep.subr.bf16.mxu0 0
  %4455 = vmatpush1.bf16.msra.mxu0 %v168
  %4456 = vmatprep.subr.bf16.mxu0 0
  %4457 = vmatpush1.bf16.msra.mxu0 %v165
  %4458 = vmatprep.subr.bf16.mxu0 0
  %4459 = vmatpush1.bf16.msra.mxu0 %v162
  %4460 = vmatprep.subr.bf16.mxu0 0
  %4461 = vmatpush1.bf16.msra.mxu0 %v159
  %4462 = vmatprep.subr.bf16.mxu0 0
  %4463 = vmatpush1.bf16.msra.mxu0 %v156
  %4464 = vmatprep.subr.bf16.mxu0 0
  %4465 = vmatpush1.bf16.msra.mxu0 %v153
  %4466 = vmatprep.subr.bf16.mxu0 0
  %4467 = vmatpush2.bf16.msra.mxu0 0
  %4468 = vmatprep.subr.bf16.mxu0 0
  %4469 = vmatpush2.bf16.msra.mxu0 0
  %4470 = vmatprep.subr.bf16.mxu0 0
  %4471 = vmatpush2.bf16.msra.mxu0 0
  %4472 = vmatprep.subr.bf16.mxu0 0
  %4473 = vmatpush2.bf16.msra.mxu0 0
  %4474 = vmatprep.subr.bf16.mxu0 0
  %4475 = vmatpush2.bf16.msra.mxu0 0
  %4476 = vmatprep.subr.bf16.mxu0 0
  %4477 = vmatpush2.bf16.msra.mxu0 0
  %4478 = vmatprep.subr.bf16.mxu0 0
  %4479 = vmatpush2.bf16.msra.mxu0 0
  %4480 = vmatprep.subr.bf16.mxu0 0
  %4481 = vmatpush2.bf16.msra.mxu0 0
  %4482 = vmatprep.mubr.bf16.mxu0 0
  %4483 = vmatmul.mubr.bf16.gmra.mxu0 %v4407
  %v4484 = vpop.f32.mrf.mxu0
  %v4485 = vadd.f32 %v65, %v4484
  %v4486 = vpop.f32.mrf.mxu0
  %v4487 = vpop.f32.mrf.mxu0
  %v4488 = vpop.f32.mrf.mxu0
  %4489 = vdwg.mxu0
  %v4491 = vrot.slane %v4444, 5
  %v4492 = vrot.slane %v4444, 6
  %v4493 = vrot.slane %v4444, 7
  %v4494 = vrot.slane %v4444, 1
  %v4495 = vrot.slane %v4444, 2
  %v4496 = vrot.slane %v4444, 3
  %v4497 = vrot.slane %v4444, 4
  %v4506 = vadd.f32 %v4105, %v4491
  %v4507 = vadd.f32 %v4108, %v4492
  %v4508 = vadd.f32 %v4111, %v4493
  %v4509 = vadd.f32 %v4114, %v4444
  %v4510 = vadd.f32 %v4117, %v4494
  %v4511 = vadd.f32 %v4120, %v4495
  %v4512 = vadd.f32 %v4123, %v4496
  %v4513 = vadd.f32 %v4126, %v4497
  %v4514 = vxor.u32 %v4506, 2147483648
  %v4515 = vxor.u32 %v4507, 2147483648
  %v4516 = vxor.u32 %v4508, 2147483648
  %v4517 = vxor.u32 %v4509, 2147483648
  %v4518 = vxor.u32 %v4510, 2147483648
  %v4519 = vxor.u32 %v4511, 2147483648
  %v4520 = vxor.u32 %v4512, 2147483648
  %v4521 = vxor.u32 %v4513, 2147483648
  %v4522 = vmul.f32 %v4514, 1.442695
  %v4523 = vpow.pop %v4522
  %v4524 = vmul.f32 %v4515, 1.442695
  %v4525 = vpow.pop %v4524
  %v4526 = vmul.f32 %v4516, 1.442695
  %v4527 = vpow.pop %v4526
  %v4528 = vmul.f32 %v4517, 1.442695
  %v4529 = vpow.pop %v4528
  %v4530 = vmul.f32 %v4518, 1.442695
  %v4531 = vpow.pop %v4530
  %v4532 = vmul.f32 %v4519, 1.442695
  %v4533 = vpow.pop %v4532
  %v4534 = vmul.f32 %v4520, 1.442695
  %v4535 = vpow.pop %v4534
  %v4536 = vmul.f32 %v4521, 1.442695
  %v4537 = vpow.pop %v4536
  %v4538 = vadd.f32 %v4523, 1.0
  %v4539 = vadd.f32 %v4525, 1.0
  %v4540 = vadd.f32 %v4527, 1.0
  %v4541 = vadd.f32 %v4529, 1.0
  %v4542 = vadd.f32 %v4531, 1.0
  %v4543 = vadd.f32 %v4533, 1.0
  %v4544 = vadd.f32 %v4535, 1.0
  %v4545 = vadd.f32 %v4537, 1.0
  %v4546 = vrcp.pop %v4538
  %v4547 = vmul.f32 1.0, %v4546
  %v4548 = vrcp.pop %v4539
  %v4549 = vmul.f32 1.0, %v4548
  %v4550 = vrcp.pop %v4540
  %v4551 = vmul.f32 1.0, %v4550
  %v4552 = vrcp.pop %v4541
  %v4553 = vmul.f32 1.0, %v4552
  %v4554 = vrcp.pop %v4542
  %v4555 = vmul.f32 1.0, %v4554
  %v4556 = vrcp.pop %v4543
  %v4557 = vmul.f32 1.0, %v4556
  %v4558 = vrcp.pop %v4544
  %v4559 = vmul.f32 1.0, %v4558
  %v4560 = vrcp.pop %v4545
  %v4561 = vmul.f32 1.0, %v4560
  %v4563 = vrot.slane %v4446, 5
  %v4564 = vrot.slane %v4446, 6
  %v4565 = vrot.slane %v4446, 7
  %v4566 = vrot.slane %v4446, 1
  %v4567 = vrot.slane %v4446, 2
  %v4568 = vrot.slane %v4446, 3
  %v4569 = vrot.slane %v4446, 4
  %v4578 = vadd.f32 %v4106, %v4563
  %v4579 = vadd.f32 %v4109, %v4564
  %v4580 = vadd.f32 %v4112, %v4565
  %v4581 = vadd.f32 %v4115, %v4446
  %v4582 = vadd.f32 %v4118, %v4566
  %v4583 = vadd.f32 %v4121, %v4567
  %v4584 = vadd.f32 %v4124, %v4568
  %v4585 = vadd.f32 %v4127, %v4569
  %v4586 = vxor.u32 %v4578, 2147483648
  %v4587 = vxor.u32 %v4579, 2147483648
  %v4588 = vxor.u32 %v4580, 2147483648
  %v4589 = vxor.u32 %v4581, 2147483648
  %v4590 = vxor.u32 %v4582, 2147483648
  %v4591 = vxor.u32 %v4583, 2147483648
  %v4592 = vxor.u32 %v4584, 2147483648
  %v4593 = vxor.u32 %v4585, 2147483648
  %v4594 = vmul.f32 %v4586, 1.442695
  %v4595 = vpow.pop %v4594
  %v4596 = vmul.f32 %v4587, 1.442695
  %v4597 = vpow.pop %v4596
  %v4598 = vmul.f32 %v4588, 1.442695
  %v4599 = vpow.pop %v4598
  %v4600 = vmul.f32 %v4589, 1.442695
  %v4601 = vpow.pop %v4600
  %v4602 = vmul.f32 %v4590, 1.442695
  %v4603 = vpow.pop %v4602
  %v4604 = vmul.f32 %v4591, 1.442695
  %v4605 = vpow.pop %v4604
  %v4606 = vmul.f32 %v4592, 1.442695
  %v4607 = vpow.pop %v4606
  %v4608 = vmul.f32 %v4593, 1.442695
  %v4609 = vpow.pop %v4608
  %v4610 = vadd.f32 %v4595, 1.0
  %v4611 = vadd.f32 %v4597, 1.0
  %v4612 = vadd.f32 %v4599, 1.0
  %v4613 = vadd.f32 %v4601, 1.0
  %v4614 = vadd.f32 %v4603, 1.0
  %v4615 = vadd.f32 %v4605, 1.0
  %v4616 = vadd.f32 %v4607, 1.0
  %v4617 = vadd.f32 %v4609, 1.0
  %v4618 = vrcp.pop %v4610
  %v4619 = vmul.f32 1.0, %v4618
  %v4620 = vrcp.pop %v4611
  %v4621 = vmul.f32 1.0, %v4620
  %v4622 = vrcp.pop %v4612
  %v4623 = vmul.f32 1.0, %v4622
  %v4624 = vrcp.pop %v4613
  %v4625 = vmul.f32 1.0, %v4624
  %v4626 = vrcp.pop %v4614
  %v4627 = vmul.f32 1.0, %v4626
  %v4628 = vrcp.pop %v4615
  %v4629 = vmul.f32 1.0, %v4628
  %v4630 = vrcp.pop %v4616
  %v4631 = vmul.f32 1.0, %v4630
  %v4632 = vrcp.pop %v4617
  %v4633 = vmul.f32 1.0, %v4632
  %v4635 = vrot.slane %v4485, 5
  %v4636 = vrot.slane %v4485, 6
  %v4637 = vrot.slane %v4485, 7
  %v4638 = vrot.slane %v4485, 1
  %v4639 = vrot.slane %v4485, 2
  %v4640 = vrot.slane %v4485, 3
  %v4641 = vrot.slane %v4485, 4
  %v4650 = vmul.f32 %v4547, %v4635
  %v4651 = vmul.f32 %v4549, %v4636
  %v4652 = vmul.f32 %v4551, %v4637
  %v4653 = vmul.f32 %v4553, %v4485
  %v4654 = vmul.f32 %v4555, %v4638
  %v4655 = vmul.f32 %v4557, %v4639
  %v4656 = vmul.f32 %v4559, %v4640
  %v4657 = vmul.f32 %v4561, %v4641
  %v4658 = vadd.f32 %v4107, %v4650
  %v4659 = vadd.f32 %v4110, %v4651
  %v4660 = vadd.f32 %v4113, %v4652
  %v4661 = vadd.f32 %v4116, %v4653
  %v4662 = vadd.f32 %v4119, %v4654
  %v4663 = vadd.f32 %v4122, %v4655
  %v4664 = vadd.f32 %v4125, %v4656
  %v4665 = vadd.f32 %v4128, %v4657
  %v4666 = vtanh.pop %v4658
  %v4667 = vtanh.pop %v4659
  %v4668 = vtanh.pop %v4660
  %v4669 = vtanh.pop %v4661
  %v4670 = vtanh.pop %v4662
  %v4671 = vtanh.pop %v4663
  %v4672 = vtanh.pop %v4664
  %v4673 = vtanh.pop %v4665
  %v4674 = vsub.f32 1.0, %v4619
  %v4675 = vsub.f32 1.0, %v4621
  %v4676 = vsub.f32 1.0, %v4623
  %v4677 = vsub.f32 1.0, %v4625
  %v4678 = vsub.f32 1.0, %v4627
  %v4679 = vsub.f32 1.0, %v4629
  %v4680 = vsub.f32 1.0, %v4631
  %v4681 = vsub.f32 1.0, %v4633
  %v4682 = vmul.f32 %v4674, %v4666
  %v4683 = vmul.f32 %v4675, %v4667
  %v4684 = vmul.f32 %v4676, %v4668
  %v4685 = vmul.f32 %v4677, %v4669
  %v4686 = vmul.f32 %v4678, %v4670
  %v4687 = vmul.f32 %v4679, %v4671
  %v4688 = vmul.f32 %v4680, %v4672
  %v4689 = vmul.f32 %v4681, %v4673
  %v4698 = vrot.slane %v4361, 7
  %v4699 = vrot.slane %v4362, 7
  %v4700 = vrot.slane %v4363, 7
  %v4701 = vrot.slane %v4364, 7
  %v4702 = vrot.slane %v4365, 7
  %v4703 = vrot.slane %v4366, 7
  %v4704 = vrot.slane %v4367, 7
  %v4705 = vrot.slane %v4368, 7
  %v4714 = vmul.f32 %v4619, %v4698
  %v4715 = vmul.f32 %v4621, %v4699
  %v4716 = vmul.f32 %v4623, %v4700
  %v4717 = vmul.f32 %v4625, %v4701
  %v4718 = vmul.f32 %v4627, %v4702
  %v4719 = vmul.f32 %v4629, %v4703
  %v4720 = vmul.f32 %v4631, %v4704
  %v4721 = vmul.f32 %v4633, %v4705
  %v4722 = vadd.f32 %v4682, %v4714
  %v4723 = vadd.f32 %v4683, %v4715
  %v4724 = vadd.f32 %v4684, %v4716
  %v4725 = vadd.f32 %v4685, %v4717
  %v4726 = vadd.f32 %v4686, %v4718
  %v4727 = vadd.f32 %v4687, %v4719
  %v4728 = vadd.f32 %v4688, %v4720
  %v4729 = vadd.f32 %v4689, %v4721
  %v4730 = vpack.c.bf16 %v4722, %v4722
  %v4731 = vpack.c.bf16 %v4723, %v4723
  %v4732 = vpack.c.bf16 %v4724, %v4724
  %v4733 = vpack.c.bf16 %v4725, %v4725
  %v4734 = vpack.c.bf16 %v4726, %v4726
  %v4735 = vpack.c.bf16 %v4727, %v4727
  %v4736 = vpack.c.bf16 %v4728, %v4728
  %v4737 = vpack.c.bf16 %v4729, %v4729
  %v4746 = vunpack.c.l.b16 %v4730
  %v4747 = vunpack.c.l.b16 %v4731
  %v4748 = vunpack.c.l.b16 %v4732
  %v4749 = vunpack.c.l.b16 %v4733
  %v4750 = vunpack.c.l.b16 %v4734
  %v4751 = vunpack.c.l.b16 %v4735
  %v4752 = vunpack.c.l.b16 %v4736
  %v4753 = vunpack.c.l.b16 %v4737
  %v4754 = vrot.slane %v4746, 3
  %v4755 = vrot.slane %v4747, 2
  %v4756 = vsel %vm577, %v4755, %v4754
  %v4757 = vrot.slane %v4748, 1
  %v4758 = vsel %vm580, %v4757, %v4756
  %v4759 = vsel %vm583, %v4749, %v4758
  %v4760 = vrot.slane %v4750, 7
  %v4761 = vsel %vm586, %v4760, %v4759
  %v4762 = vrot.slane %v4751, 6
  %v4763 = vsel %vm589, %v4762, %v4761
  %v4764 = vrot.slane %v4752, 5
  %v4765 = vsel %vm592, %v4764, %v4763
  %v4766 = vrot.slane %v4753, 4
  %v4767 = vsel %vm595, %v4766, %v4765
  %v4768 = vpack.c.b16 %v4767, %v4767
  %4770 = vmatprep.subr.bf16.mxu0 %v173
  %4771 = vmatpush1.bf16.msra.mxu0 %v172
  %4772 = vmatprep.subr.bf16.mxu0 %v170
  %4773 = vmatpush1.bf16.msra.mxu0 %v169
  %4774 = vmatprep.subr.bf16.mxu0 %v167
  %4775 = vmatpush1.bf16.msra.mxu0 %v166
  %4776 = vmatprep.subr.bf16.mxu0 %v164
  %4777 = vmatpush1.bf16.msra.mxu0 %v163
  %4778 = vmatprep.subr.bf16.mxu0 %v161
  %4779 = vmatpush1.bf16.msra.mxu0 %v160
  %4780 = vmatprep.subr.bf16.mxu0 %v158
  %4781 = vmatpush1.bf16.msra.mxu0 %v157
  %4782 = vmatprep.subr.bf16.mxu0 %v155
  %4783 = vmatpush1.bf16.msra.mxu0 %v154
  %4784 = vmatprep.subr.bf16.mxu0 %v152
  %4785 = vmatpush1.bf16.msra.mxu0 %v151
  %4786 = vmatprep.subr.bf16.mxu0 0
  %4787 = vmatpush2.bf16.msra.mxu0 0
  %4788 = vmatprep.subr.bf16.mxu0 0
  %4789 = vmatpush2.bf16.msra.mxu0 0
  %4790 = vmatprep.subr.bf16.mxu0 0
  %4791 = vmatpush2.bf16.msra.mxu0 0
  %4792 = vmatprep.subr.bf16.mxu0 0
  %4793 = vmatpush2.bf16.msra.mxu0 0
  %4794 = vmatprep.subr.bf16.mxu0 0
  %4795 = vmatpush2.bf16.msra.mxu0 0
  %4796 = vmatprep.subr.bf16.mxu0 0
  %4797 = vmatpush2.bf16.msra.mxu0 0
  %4798 = vmatprep.subr.bf16.mxu0 0
  %4799 = vmatpush2.bf16.msra.mxu0 0
  %4800 = vmatprep.subr.bf16.mxu0 0
  %4801 = vmatpush2.bf16.msra.mxu0 0
  %4802 = vmatprep.mubr.bf16.mxu0 0
  %4803 = vmatmul.mubr.bf16.gmra.mxu0 %v4768
  %v4804 = vpop.f32.mrf.mxu0
  %v4805 = vadd.f32 %v57, %v4804
  %v4806 = vpop.f32.mrf.mxu0
  %v4807 = vadd.f32 %v61, %v4806
  %v4808 = vpop.f32.mrf.mxu0
  %v4809 = vpop.f32.mrf.mxu0
  %4810 = vdwg.mxu0
  %4811 = vmatprep.subr.bf16.mxu0 0
  %4812 = vmatpush1.bf16.msra.mxu0 %v174
  %4813 = vmatprep.subr.bf16.mxu0 0
  %4814 = vmatpush1.bf16.msra.mxu0 %v171
  %4815 = vmatprep.subr.bf16.mxu0 0
  %4816 = vmatpush1.bf16.msra.mxu0 %v168
  %4817 = vmatprep.subr.bf16.mxu0 0
  %4818 = vmatpush1.bf16.msra.mxu0 %v165
  %4819 = vmatprep.subr.bf16.mxu0 0
  %4820 = vmatpush1.bf16.msra.mxu0 %v162
  %4821 = vmatprep.subr.bf16.mxu0 0
  %4822 = vmatpush1.bf16.msra.mxu0 %v159
  %4823 = vmatprep.subr.bf16.mxu0 0
  %4824 = vmatpush1.bf16.msra.mxu0 %v156
  %4825 = vmatprep.subr.bf16.mxu0 0
  %4826 = vmatpush1.bf16.msra.mxu0 %v153
  %4827 = vmatprep.subr.bf16.mxu0 0
  %4828 = vmatpush2.bf16.msra.mxu0 0
  %4829 = vmatprep.subr.bf16.mxu0 0
  %4830 = vmatpush2.bf16.msra.mxu0 0
  %4831 = vmatprep.subr.bf16.mxu0 0
  %4832 = vmatpush2.bf16.msra.mxu0 0
  %4833 = vmatprep.subr.bf16.mxu0 0
  %4834 = vmatpush2.bf16.msra.mxu0 0
  %4835 = vmatprep.subr.bf16.mxu0 0
  %4836 = vmatpush2.bf16.msra.mxu0 0
  %4837 = vmatprep.subr.bf16.mxu0 0
  %4838 = vmatpush2.bf16.msra.mxu0 0
  %4839 = vmatprep.subr.bf16.mxu0 0
  %4840 = vmatpush2.bf16.msra.mxu0 0
  %4841 = vmatprep.subr.bf16.mxu0 0
  %4842 = vmatpush2.bf16.msra.mxu0 0
  %4843 = vmatprep.mubr.bf16.mxu0 0
  %4844 = vmatmul.mubr.bf16.gmra.mxu0 %v4768
  %v4845 = vpop.f32.mrf.mxu0
  %v4846 = vadd.f32 %v65, %v4845
  %v4847 = vpop.f32.mrf.mxu0
  %v4848 = vpop.f32.mrf.mxu0
  %v4849 = vpop.f32.mrf.mxu0
  %4850 = vdwg.mxu0
  %v4851 = vld [vmem:[%s0 + $0xc] sm:$0x44]
  %v4852 = vld [vmem:[%s0 + $0x14] sm:$0x4]
  %v4853 = vld [vmem:[%s0 + $0x24] sm:$0x44]
  %v4854 = vld [vmem:[%s0 + $0x2c] sm:$0x4]
  %v4855 = vld [vmem:[%s0 + $0x3c] sm:$0x44]
  %v4856 = vld [vmem:[%s0 + $0x44] sm:$0x4]
  %v4857 = vld [vmem:[%s0 + $0x54] sm:$0x44]
  %v4858 = vld [vmem:[%s0 + $0x5c] sm:$0x4]
  %v4859 = vld [vmem:[%s0 + $0x6c] sm:$0x44]
  %v4860 = vld [vmem:[%s0 + $0x74] sm:$0x4]
  %v4861 = vld [vmem:[%s0 + $0x84] sm:$0x44]
  %v4862 = vld [vmem:[%s0 + $0x8c] sm:$0x4]
  %v4863 = vld [vmem:[%s0 + $0x9c] sm:$0x44]
  %v4864 = vld [vmem:[%s0 + $0xa4] sm:$0x4]
  %v4865 = vld [vmem:[%s0 + $0xb4] sm:$0x44]
  %v4866 = vld [vmem:[%s0 + $0xbc] sm:$0x4]
  %v4867 = vunpack.c.l.bf16 %v4851
  %v4868 = vunpack.c.h.bf16 %v4851
  %v4869 = vunpack.c.l.bf16 %v4852
  %v4870 = vunpack.c.l.bf16 %v4853
  %v4871 = vunpack.c.h.bf16 %v4853
  %v4872 = vunpack.c.l.bf16 %v4854
  %v4873 = vunpack.c.l.bf16 %v4855
  %v4874 = vunpack.c.h.bf16 %v4855
  %v4875 = vunpack.c.l.bf16 %v4856
  %v4876 = vunpack.c.l.bf16 %v4857
  %v4877 = vunpack.c.h.bf16 %v4857
  %v4878 = vunpack.c.l.bf16 %v4858
  %v4879 = vunpack.c.l.bf16 %v4859
  %v4880 = vunpack.c.h.bf16 %v4859
  %v4881 = vunpack.c.l.bf16 %v4860
  %v4882 = vunpack.c.l.bf16 %v4861
  %v4883 = vunpack.c.h.bf16 %v4861
  %v4884 = vunpack.c.l.bf16 %v4862
  %v4885 = vunpack.c.l.bf16 %v4863
  %v4886 = vunpack.c.h.bf16 %v4863
  %v4887 = vunpack.c.l.bf16 %v4864
  %v4888 = vunpack.c.l.bf16 %v4865
  %v4889 = vunpack.c.h.bf16 %v4865
  %v4890 = vunpack.c.l.bf16 %v4866
  %v4892 = vrot.slane %v4805, 4
  %v4893 = vrot.slane %v4805, 5
  %v4894 = vrot.slane %v4805, 6
  %v4895 = vrot.slane %v4805, 7
  %v4896 = vrot.slane %v4805, 1
  %v4897 = vrot.slane %v4805, 2
  %v4898 = vrot.slane %v4805, 3
  %v4907 = vadd.f32 %v4867, %v4892
  %v4908 = vadd.f32 %v4870, %v4893
  %v4909 = vadd.f32 %v4873, %v4894
  %v4910 = vadd.f32 %v4876, %v4895
  %v4911 = vadd.f32 %v4879, %v4805
  %v4912 = vadd.f32 %v4882, %v4896
  %v4913 = vadd.f32 %v4885, %v4897
  %v4914 = vadd.f32 %v4888, %v4898
  %v4915 = vxor.u32 %v4907, 2147483648
  %v4916 = vxor.u32 %v4908, 2147483648
  %v4917 = vxor.u32 %v4909, 2147483648
  %v4918 = vxor.u32 %v4910, 2147483648
  %v4919 = vxor.u32 %v4911, 2147483648
  %v4920 = vxor.u32 %v4912, 2147483648
  %v4921 = vxor.u32 %v4913, 2147483648
  %v4922 = vxor.u32 %v4914, 2147483648
  %v4923 = vmul.f32 %v4915, 1.442695
  %v4924 = vpow.pop %v4923
  %v4925 = vmul.f32 %v4916, 1.442695
  %v4926 = vpow.pop %v4925
  %v4927 = vmul.f32 %v4917, 1.442695
  %v4928 = vpow.pop %v4927
  %v4929 = vmul.f32 %v4918, 1.442695
  %v4930 = vpow.pop %v4929
  %v4931 = vmul.f32 %v4919, 1.442695
  %v4932 = vpow.pop %v4931
  %v4933 = vmul.f32 %v4920, 1.442695
  %v4934 = vpow.pop %v4933
  %v4935 = vmul.f32 %v4921, 1.442695
  %v4936 = vpow.pop %v4935
  %v4937 = vmul.f32 %v4922, 1.442695
  %v4938 = vpow.pop %v4937
  %v4939 = vadd.f32 %v4924, 1.0
  %v4940 = vadd.f32 %v4926, 1.0
  %v4941 = vadd.f32 %v4928, 1.0
  %v4942 = vadd.f32 %v4930, 1.0
  %v4943 = vadd.f32 %v4932, 1.0
  %v4944 = vadd.f32 %v4934, 1.0
  %v4945 = vadd.f32 %v4936, 1.0
  %v4946 = vadd.f32 %v4938, 1.0
  %v4947 = vrcp.pop %v4939
  %v4948 = vmul.f32 1.0, %v4947
  %v4949 = vrcp.pop %v4940
  %v4950 = vmul.f32 1.0, %v4949
  %v4951 = vrcp.pop %v4941
  %v4952 = vmul.f32 1.0, %v4951
  %v4953 = vrcp.pop %v4942
  %v4954 = vmul.f32 1.0, %v4953
  %v4955 = vrcp.pop %v4943
  %v4956 = vmul.f32 1.0, %v4955
  %v4957 = vrcp.pop %v4944
  %v4958 = vmul.f32 1.0, %v4957
  %v4959 = vrcp.pop %v4945
  %v4960 = vmul.f32 1.0, %v4959
  %v4961 = vrcp.pop %v4946
  %v4962 = vmul.f32 1.0, %v4961
  %v4964 = vrot.slane %v4807, 4
  %v4965 = vrot.slane %v4807, 5
  %v4966 = vrot.slane %v4807, 6
  %v4967 = vrot.slane %v4807, 7
  %v4968 = vrot.slane %v4807, 1
  %v4969 = vrot.slane %v4807, 2
  %v4970 = vrot.slane %v4807, 3
  %v4979 = vadd.f32 %v4868, %v4964
  %v4980 = vadd.f32 %v4871, %v4965
  %v4981 = vadd.f32 %v4874, %v4966
  %v4982 = vadd.f32 %v4877, %v4967
  %v4983 = vadd.f32 %v4880, %v4807
  %v4984 = vadd.f32 %v4883, %v4968
  %v4985 = vadd.f32 %v4886, %v4969
  %v4986 = vadd.f32 %v4889, %v4970
  %v4987 = vxor.u32 %v4979, 2147483648
  %v4988 = vxor.u32 %v4980, 2147483648
  %v4989 = vxor.u32 %v4981, 2147483648
  %v4990 = vxor.u32 %v4982, 2147483648
  %v4991 = vxor.u32 %v4983, 2147483648
  %v4992 = vxor.u32 %v4984, 2147483648
  %v4993 = vxor.u32 %v4985, 2147483648
  %v4994 = vxor.u32 %v4986, 2147483648
  %v4995 = vmul.f32 %v4987, 1.442695
  %v4996 = vpow.pop %v4995
  %v4997 = vmul.f32 %v4988, 1.442695
  %v4998 = vpow.pop %v4997
  %v4999 = vmul.f32 %v4989, 1.442695
  %v5000 = vpow.pop %v4999
  %v5001 = vmul.f32 %v4990, 1.442695
  %v5002 = vpow.pop %v5001
  %v5003 = vmul.f32 %v4991, 1.442695
  %v5004 = vpow.pop %v5003
  %v5005 = vmul.f32 %v4992, 1.442695
  %v5006 = vpow.pop %v5005
  %v5007 = vmul.f32 %v4993, 1.442695
  %v5008 = vpow.pop %v5007
  %v5009 = vmul.f32 %v4994, 1.442695
  %v5010 = vpow.pop %v5009
  %v5011 = vadd.f32 %v4996, 1.0
  %v5012 = vadd.f32 %v4998, 1.0
  %v5013 = vadd.f32 %v5000, 1.0
  %v5014 = vadd.f32 %v5002, 1.0
  %v5015 = vadd.f32 %v5004, 1.0
  %v5016 = vadd.f32 %v5006, 1.0
  %v5017 = vadd.f32 %v5008, 1.0
  %v5018 = vadd.f32 %v5010, 1.0
  %v5019 = vrcp.pop %v5011
  %v5020 = vmul.f32 1.0, %v5019
  %v5021 = vrcp.pop %v5012
  %v5022 = vmul.f32 1.0, %v5021
  %v5023 = vrcp.pop %v5013
  %v5024 = vmul.f32 1.0, %v5023
  %v5025 = vrcp.pop %v5014
  %v5026 = vmul.f32 1.0, %v5025
  %v5027 = vrcp.pop %v5015
  %v5028 = vmul.f32 1.0, %v5027
  %v5029 = vrcp.pop %v5016
  %v5030 = vmul.f32 1.0, %v5029
  %v5031 = vrcp.pop %v5017
  %v5032 = vmul.f32 1.0, %v5031
  %v5033 = vrcp.pop %v5018
  %v5034 = vmul.f32 1.0, %v5033
  %v5036 = vrot.slane %v4846, 4
  %v5037 = vrot.slane %v4846, 5
  %v5038 = vrot.slane %v4846, 6
  %v5039 = vrot.slane %v4846, 7
  %v5040 = vrot.slane %v4846, 1
  %v5041 = vrot.slane %v4846, 2
  %v5042 = vrot.slane %v4846, 3
  %v5051 = vmul.f32 %v4948, %v5036
  %v5052 = vmul.f32 %v4950, %v5037
  %v5053 = vmul.f32 %v4952, %v5038
  %v5054 = vmul.f32 %v4954, %v5039
  %v5055 = vmul.f32 %v4956, %v4846
  %v5056 = vmul.f32 %v4958, %v5040
  %v5057 = vmul.f32 %v4960, %v5041
  %v5058 = vmul.f32 %v4962, %v5042
  %v5059 = vadd.f32 %v4869, %v5051
  %v5060 = vadd.f32 %v4872, %v5052
  %v5061 = vadd.f32 %v4875, %v5053
  %v5062 = vadd.f32 %v4878, %v5054
  %v5063 = vadd.f32 %v4881, %v5055
  %v5064 = vadd.f32 %v4884, %v5056
  %v5065 = vadd.f32 %v4887, %v5057
  %v5066 = vadd.f32 %v4890, %v5058
  %v5067 = vtanh.pop %v5059
  %v5068 = vtanh.pop %v5060
  %v5069 = vtanh.pop %v5061
  %v5070 = vtanh.pop %v5062
  %v5071 = vtanh.pop %v5063
  %v5072 = vtanh.pop %v5064
  %v5073 = vtanh.pop %v5065
  %v5074 = vtanh.pop %v5066
  %v5075 = vsub.f32 1.0, %v5020
  %v5076 = vsub.f32 1.0, %v5022
  %v5077 = vsub.f32 1.0, %v5024
  %v5078 = vsub.f32 1.0, %v5026
  %v5079 = vsub.f32 1.0, %v5028
  %v5080 = vsub.f32 1.0, %v5030
  %v5081 = vsub.f32 1.0, %v5032
  %v5082 = vsub.f32 1.0, %v5034
  %v5083 = vmul.f32 %v5075, %v5067
  %v5084 = vmul.f32 %v5076, %v5068
  %v5085 = vmul.f32 %v5077, %v5069
  %v5086 = vmul.f32 %v5078, %v5070
  %v5087 = vmul.f32 %v5079, %v5071
  %v5088 = vmul.f32 %v5080, %v5072
  %v5089 = vmul.f32 %v5081, %v5073
  %v5090 = vmul.f32 %v5082, %v5074
  %v5099 = vrot.slane %v4722, 7
  %v5100 = vrot.slane %v4723, 7
  %v5101 = vrot.slane %v4724, 7
  %v5102 = vrot.slane %v4725, 7
  %v5103 = vrot.slane %v4726, 7
  %v5104 = vrot.slane %v4727, 7
  %v5105 = vrot.slane %v4728, 7
  %v5106 = vrot.slane %v4729, 7
  %v5115 = vmul.f32 %v5020, %v5099
  %v5116 = vmul.f32 %v5022, %v5100
  %v5117 = vmul.f32 %v5024, %v5101
  %v5118 = vmul.f32 %v5026, %v5102
  %v5119 = vmul.f32 %v5028, %v5103
  %v5120 = vmul.f32 %v5030, %v5104
  %v5121 = vmul.f32 %v5032, %v5105
  %v5122 = vmul.f32 %v5034, %v5106
  %v5123 = vadd.f32 %v5083, %v5115
  %v5124 = vadd.f32 %v5084, %v5116
  %v5125 = vadd.f32 %v5085, %v5117
  %v5126 = vadd.f32 %v5086, %v5118
  %v5127 = vadd.f32 %v5087, %v5119
  %v5128 = vadd.f32 %v5088, %v5120
  %v5129 = vadd.f32 %v5089, %v5121
  %v5130 = vadd.f32 %v5090, %v5122
  %v5131 = vpack.c.bf16 %v5123, %v5123
  %v5132 = vpack.c.bf16 %v5124, %v5124
  %v5133 = vpack.c.bf16 %v5125, %v5125
  %v5134 = vpack.c.bf16 %v5126, %v5126
  %v5135 = vpack.c.bf16 %v5127, %v5127
  %v5136 = vpack.c.bf16 %v5128, %v5128
  %v5137 = vpack.c.bf16 %v5129, %v5129
  %v5138 = vpack.c.bf16 %v5130, %v5130
  %v5147 = vunpack.c.l.b16 %v5131
  %v5148 = vunpack.c.l.b16 %v5132
  %v5149 = vunpack.c.l.b16 %v5133
  %v5150 = vunpack.c.l.b16 %v5134
  %v5151 = vunpack.c.l.b16 %v5135
  %v5152 = vunpack.c.l.b16 %v5136
  %v5153 = vunpack.c.l.b16 %v5137
  %v5154 = vunpack.c.l.b16 %v5138
  %v5155 = vrot.slane %v5147, 4
  %v5156 = vrot.slane %v5148, 3
  %v5157 = vsel %vm577, %v5156, %v5155
  %v5158 = vrot.slane %v5149, 2
  %v5159 = vsel %vm580, %v5158, %v5157
  %v5160 = vrot.slane %v5150, 1
  %v5161 = vsel %vm583, %v5160, %v5159
  %v5162 = vsel %vm586, %v5151, %v5161
  %v5163 = vrot.slane %v5152, 7
  %v5164 = vsel %vm589, %v5163, %v5162
  %v5165 = vrot.slane %v5153, 6
  %v5166 = vsel %vm592, %v5165, %v5164
  %v5167 = vrot.slane %v5154, 5
  %v5168 = vsel %vm595, %v5167, %v5166
  %v5169 = vpack.c.b16 %v5168, %v5168
  %5171 = vmatprep.subr.bf16.mxu0 %v173
  %5172 = vmatpush1.bf16.msra.mxu0 %v172
  %5173 = vmatprep.subr.bf16.mxu0 %v170
  %5174 = vmatpush1.bf16.msra.mxu0 %v169
  %5175 = vmatprep.subr.bf16.mxu0 %v167
  %5176 = vmatpush1.bf16.msra.mxu0 %v166
  %5177 = vmatprep.subr.bf16.mxu0 %v164
  %5178 = vmatpush1.bf16.msra.mxu0 %v163
  %5179 = vmatprep.subr.bf16.mxu0 %v161
  %5180 = vmatpush1.bf16.msra.mxu0 %v160
  %5181 = vmatprep.subr.bf16.mxu0 %v158
  %5182 = vmatpush1.bf16.msra.mxu0 %v157
  %5183 = vmatprep.subr.bf16.mxu0 %v155
  %5184 = vmatpush1.bf16.msra.mxu0 %v154
  %5185 = vmatprep.subr.bf16.mxu0 %v152
  %5186 = vmatpush1.bf16.msra.mxu0 %v151
  %5187 = vmatprep.subr.bf16.mxu0 0
  %5188 = vmatpush2.bf16.msra.mxu0 0
  %5189 = vmatprep.subr.bf16.mxu0 0
  %5190 = vmatpush2.bf16.msra.mxu0 0
  %5191 = vmatprep.subr.bf16.mxu0 0
  %5192 = vmatpush2.bf16.msra.mxu0 0
  %5193 = vmatprep.subr.bf16.mxu0 0
  %5194 = vmatpush2.bf16.msra.mxu0 0
  %5195 = vmatprep.subr.bf16.mxu0 0
  %5196 = vmatpush2.bf16.msra.mxu0 0
  %5197 = vmatprep.subr.bf16.mxu0 0
  %5198 = vmatpush2.bf16.msra.mxu0 0
  %5199 = vmatprep.subr.bf16.mxu0 0
  %5200 = vmatpush2.bf16.msra.mxu0 0
  %5201 = vmatprep.subr.bf16.mxu0 0
  %5202 = vmatpush2.bf16.msra.mxu0 0
  %5203 = vmatprep.mubr.bf16.mxu0 0
  %5204 = vmatmul.mubr.bf16.gmra.mxu0 %v5169
  %v5205 = vpop.f32.mrf.mxu0
  %v5206 = vadd.f32 %v57, %v5205
  %v5207 = vpop.f32.mrf.mxu0
  %v5208 = vadd.f32 %v61, %v5207
  %v5209 = vpop.f32.mrf.mxu0
  %v5210 = vpop.f32.mrf.mxu0
  %5211 = vdwg.mxu0
  %5212 = vmatprep.subr.bf16.mxu0 0
  %5213 = vmatpush1.bf16.msra.mxu0 %v174
  %5214 = vmatprep.subr.bf16.mxu0 0
  %5215 = vmatpush1.bf16.msra.mxu0 %v171
  %5216 = vmatprep.subr.bf16.mxu0 0
  %5217 = vmatpush1.bf16.msra.mxu0 %v168
  %5218 = vmatprep.subr.bf16.mxu0 0
  %5219 = vmatpush1.bf16.msra.mxu0 %v165
  %5220 = vmatprep.subr.bf16.mxu0 0
  %5221 = vmatpush1.bf16.msra.mxu0 %v162
  %5222 = vmatprep.subr.bf16.mxu0 0
  %5223 = vmatpush1.bf16.msra.mxu0 %v159
  %5224 = vmatprep.subr.bf16.mxu0 0
  %5225 = vmatpush1.bf16.msra.mxu0 %v156
  %5226 = vmatprep.subr.bf16.mxu0 0
  %5227 = vmatpush1.bf16.msra.mxu0 %v153
  %5228 = vmatprep.subr.bf16.mxu0 0
  %5229 = vmatpush2.bf16.msra.mxu0 0
  %5230 = vmatprep.subr.bf16.mxu0 0
  %5231 = vmatpush2.bf16.msra.mxu0 0
  %5232 = vmatprep.subr.bf16.mxu0 0
  %5233 = vmatpush2.bf16.msra.mxu0 0
  %5234 = vmatprep.subr.bf16.mxu0 0
  %5235 = vmatpush2.bf16.msra.mxu0 0
  %5236 = vmatprep.subr.bf16.mxu0 0
  %5237 = vmatpush2.bf16.msra.mxu0 0
  %5238 = vmatprep.subr.bf16.mxu0 0
  %5239 = vmatpush2.bf16.msra.mxu0 0
  %5240 = vmatprep.subr.bf16.mxu0 0
  %5241 = vmatpush2.bf16.msra.mxu0 0
  %5242 = vmatprep.subr.bf16.mxu0 0
  %5243 = vmatpush2.bf16.msra.mxu0 0
  %5244 = vmatprep.mubr.bf16.mxu0 0
  %5245 = vmatmul.mubr.bf16.gmra.mxu0 %v5169
  %v5246 = vpop.f32.mrf.mxu0
  %v5247 = vadd.f32 %v65, %v5246
  %v5248 = vpop.f32.mrf.mxu0
  %v5249 = vpop.f32.mrf.mxu0
  %v5250 = vpop.f32.mrf.mxu0
  %5251 = vdwg.mxu0
  %v5253 = vrot.slane %v5206, 3
  %v5254 = vrot.slane %v5206, 4
  %v5255 = vrot.slane %v5206, 5
  %v5256 = vrot.slane %v5206, 6
  %v5257 = vrot.slane %v5206, 7
  %v5258 = vrot.slane %v5206, 1
  %v5259 = vrot.slane %v5206, 2
  %v5268 = vadd.f32 %v4867, %v5253
  %v5269 = vadd.f32 %v4870, %v5254
  %v5270 = vadd.f32 %v4873, %v5255
  %v5271 = vadd.f32 %v4876, %v5256
  %v5272 = vadd.f32 %v4879, %v5257
  %v5273 = vadd.f32 %v4882, %v5206
  %v5274 = vadd.f32 %v4885, %v5258
  %v5275 = vadd.f32 %v4888, %v5259
  %v5276 = vxor.u32 %v5268, 2147483648
  %v5277 = vxor.u32 %v5269, 2147483648
  %v5278 = vxor.u32 %v5270, 2147483648
  %v5279 = vxor.u32 %v5271, 2147483648
  %v5280 = vxor.u32 %v5272, 2147483648
  %v5281 = vxor.u32 %v5273, 2147483648
  %v5282 = vxor.u32 %v5274, 2147483648
  %v5283 = vxor.u32 %v5275, 2147483648
  %v5284 = vmul.f32 %v5276, 1.442695
  %v5285 = vpow.pop %v5284
  %v5286 = vmul.f32 %v5277, 1.442695
  %v5287 = vpow.pop %v5286
  %v5288 = vmul.f32 %v5278, 1.442695
  %v5289 = vpow.pop %v5288
  %v5290 = vmul.f32 %v5279, 1.442695
  %v5291 = vpow.pop %v5290
  %v5292 = vmul.f32 %v5280, 1.442695
  %v5293 = vpow.pop %v5292
  %v5294 = vmul.f32 %v5281, 1.442695
  %v5295 = vpow.pop %v5294
  %v5296 = vmul.f32 %v5282, 1.442695
  %v5297 = vpow.pop %v5296
  %v5298 = vmul.f32 %v5283, 1.442695
  %v5299 = vpow.pop %v5298
  %v5300 = vadd.f32 %v5285, 1.0
  %v5301 = vadd.f32 %v5287, 1.0
  %v5302 = vadd.f32 %v5289, 1.0
  %v5303 = vadd.f32 %v5291, 1.0
  %v5304 = vadd.f32 %v5293, 1.0
  %v5305 = vadd.f32 %v5295, 1.0
  %v5306 = vadd.f32 %v5297, 1.0
  %v5307 = vadd.f32 %v5299, 1.0
  %v5308 = vrcp.pop %v5300
  %v5309 = vmul.f32 1.0, %v5308
  %v5310 = vrcp.pop %v5301
  %v5311 = vmul.f32 1.0, %v5310
  %v5312 = vrcp.pop %v5302
  %v5313 = vmul.f32 1.0, %v5312
  %v5314 = vrcp.pop %v5303
  %v5315 = vmul.f32 1.0, %v5314
  %v5316 = vrcp.pop %v5304
  %v5317 = vmul.f32 1.0, %v5316
  %v5318 = vrcp.pop %v5305
  %v5319 = vmul.f32 1.0, %v5318
  %v5320 = vrcp.pop %v5306
  %v5321 = vmul.f32 1.0, %v5320
  %v5322 = vrcp.pop %v5307
  %v5323 = vmul.f32 1.0, %v5322
  %v5325 = vrot.slane %v5208, 3
  %v5326 = vrot.slane %v5208, 4
  %v5327 = vrot.slane %v5208, 5
  %v5328 = vrot.slane %v5208, 6
  %v5329 = vrot.slane %v5208, 7
  %v5330 = vrot.slane %v5208, 1
  %v5331 = vrot.slane %v5208, 2
  %v5340 = vadd.f32 %v4868, %v5325
  %v5341 = vadd.f32 %v4871, %v5326
  %v5342 = vadd.f32 %v4874, %v5327
  %v5343 = vadd.f32 %v4877, %v5328
  %v5344 = vadd.f32 %v4880, %v5329
  %v5345 = vadd.f32 %v4883, %v5208
  %v5346 = vadd.f32 %v4886, %v5330
  %v5347 = vadd.f32 %v4889, %v5331
  %v5348 = vxor.u32 %v5340, 2147483648
  %v5349 = vxor.u32 %v5341, 2147483648
  %v5350 = vxor.u32 %v5342, 2147483648
  %v5351 = vxor.u32 %v5343, 2147483648
  %v5352 = vxor.u32 %v5344, 2147483648
  %v5353 = vxor.u32 %v5345, 2147483648
  %v5354 = vxor.u32 %v5346, 2147483648
  %v5355 = vxor.u32 %v5347, 2147483648
  %v5356 = vmul.f32 %v5348, 1.442695
  %v5357 = vpow.pop %v5356
  %v5358 = vmul.f32 %v5349, 1.442695
  %v5359 = vpow.pop %v5358
  %v5360 = vmul.f32 %v5350, 1.442695
  %v5361 = vpow.pop %v5360
  %v5362 = vmul.f32 %v5351, 1.442695
  %v5363 = vpow.pop %v5362
  %v5364 = vmul.f32 %v5352, 1.442695
  %v5365 = vpow.pop %v5364
  %v5366 = vmul.f32 %v5353, 1.442695
  %v5367 = vpow.pop %v5366
  %v5368 = vmul.f32 %v5354, 1.442695
  %v5369 = vpow.pop %v5368
  %v5370 = vmul.f32 %v5355, 1.442695
  %v5371 = vpow.pop %v5370
  %v5372 = vadd.f32 %v5357, 1.0
  %v5373 = vadd.f32 %v5359, 1.0
  %v5374 = vadd.f32 %v5361, 1.0
  %v5375 = vadd.f32 %v5363, 1.0
  %v5376 = vadd.f32 %v5365, 1.0
  %v5377 = vadd.f32 %v5367, 1.0
  %v5378 = vadd.f32 %v5369, 1.0
  %v5379 = vadd.f32 %v5371, 1.0
  %v5380 = vrcp.pop %v5372
  %v5381 = vmul.f32 1.0, %v5380
  %v5382 = vrcp.pop %v5373
  %v5383 = vmul.f32 1.0, %v5382
  %v5384 = vrcp.pop %v5374
  %v5385 = vmul.f32 1.0, %v5384
  %v5386 = vrcp.pop %v5375
  %v5387 = vmul.f32 1.0, %v5386
  %v5388 = vrcp.pop %v5376
  %v5389 = vmul.f32 1.0, %v5388
  %v5390 = vrcp.pop %v5377
  %v5391 = vmul.f32 1.0, %v5390
  %v5392 = vrcp.pop %v5378
  %v5393 = vmul.f32 1.0, %v5392
  %v5394 = vrcp.pop %v5379
  %v5395 = vmul.f32 1.0, %v5394
  %v5397 = vrot.slane %v5247, 3
  %v5398 = vrot.slane %v5247, 4
  %v5399 = vrot.slane %v5247, 5
  %v5400 = vrot.slane %v5247, 6
  %v5401 = vrot.slane %v5247, 7
  %v5402 = vrot.slane %v5247, 1
  %v5403 = vrot.slane %v5247, 2
  %v5412 = vmul.f32 %v5309, %v5397
  %v5413 = vmul.f32 %v5311, %v5398
  %v5414 = vmul.f32 %v5313, %v5399
  %v5415 = vmul.f32 %v5315, %v5400
  %v5416 = vmul.f32 %v5317, %v5401
  %v5417 = vmul.f32 %v5319, %v5247
  %v5418 = vmul.f32 %v5321, %v5402
  %v5419 = vmul.f32 %v5323, %v5403
  %v5420 = vadd.f32 %v4869, %v5412
  %v5421 = vadd.f32 %v4872, %v5413
  %v5422 = vadd.f32 %v4875, %v5414
  %v5423 = vadd.f32 %v4878, %v5415
  %v5424 = vadd.f32 %v4881, %v5416
  %v5425 = vadd.f32 %v4884, %v5417
  %v5426 = vadd.f32 %v4887, %v5418
  %v5427 = vadd.f32 %v4890, %v5419
  %v5428 = vtanh.pop %v5420
  %v5429 = vtanh.pop %v5421
  %v5430 = vtanh.pop %v5422
  %v5431 = vtanh.pop %v5423
  %v5432 = vtanh.pop %v5424
  %v5433 = vtanh.pop %v5425
  %v5434 = vtanh.pop %v5426
  %v5435 = vtanh.pop %v5427
  %v5436 = vsub.f32 1.0, %v5381
  %v5437 = vsub.f32 1.0, %v5383
  %v5438 = vsub.f32 1.0, %v5385
  %v5439 = vsub.f32 1.0, %v5387
  %v5440 = vsub.f32 1.0, %v5389
  %v5441 = vsub.f32 1.0, %v5391
  %v5442 = vsub.f32 1.0, %v5393
  %v5443 = vsub.f32 1.0, %v5395
  %v5444 = vmul.f32 %v5436, %v5428
  %v5445 = vmul.f32 %v5437, %v5429
  %v5446 = vmul.f32 %v5438, %v5430
  %v5447 = vmul.f32 %v5439, %v5431
  %v5448 = vmul.f32 %v5440, %v5432
  %v5449 = vmul.f32 %v5441, %v5433
  %v5450 = vmul.f32 %v5442, %v5434
  %v5451 = vmul.f32 %v5443, %v5435
  %v5460 = vrot.slane %v5123, 7
  %v5461 = vrot.slane %v5124, 7
  %v5462 = vrot.slane %v5125, 7
  %v5463 = vrot.slane %v5126, 7
  %v5464 = vrot.slane %v5127, 7
  %v5465 = vrot.slane %v5128, 7
  %v5466 = vrot.slane %v5129, 7
  %v5467 = vrot.slane %v5130, 7
  %v5476 = vmul.f32 %v5381, %v5460
  %v5477 = vmul.f32 %v5383, %v5461
  %v5478 = vmul.f32 %v5385, %v5462
  %v5479 = vmul.f32 %v5387, %v5463
  %v5480 = vmul.f32 %v5389, %v5464
  %v5481 = vmul.f32 %v5391, %v5465
  %v5482 = vmul.f32 %v5393, %v5466
  %v5483 = vmul.f32 %v5395, %v5467
  %v5484 = vadd.f32 %v5444, %v5476
  %v5485 = vadd.f32 %v5445, %v5477
  %v5486 = vadd.f32 %v5446, %v5478
  %v5487 = vadd.f32 %v5447, %v5479
  %v5488 = vadd.f32 %v5448, %v5480
  %v5489 = vadd.f32 %v5449, %v5481
  %v5490 = vadd.f32 %v5450, %v5482
  %v5491 = vadd.f32 %v5451, %v5483
  %v5492 = vpack.c.bf16 %v5484, %v5484
  %v5493 = vpack.c.bf16 %v5485, %v5485
  %v5494 = vpack.c.bf16 %v5486, %v5486
  %v5495 = vpack.c.bf16 %v5487, %v5487
  %v5496 = vpack.c.bf16 %v5488, %v5488
  %v5497 = vpack.c.bf16 %v5489, %v5489
  %v5498 = vpack.c.bf16 %v5490, %v5490
  %v5499 = vpack.c.bf16 %v5491, %v5491
  %v5508 = vunpack.c.l.b16 %v5492
  %v5509 = vunpack.c.l.b16 %v5493
  %v5510 = vunpack.c.l.b16 %v5494
  %v5511 = vunpack.c.l.b16 %v5495
  %v5512 = vunpack.c.l.b16 %v5496
  %v5513 = vunpack.c.l.b16 %v5497
  %v5514 = vunpack.c.l.b16 %v5498
  %v5515 = vunpack.c.l.b16 %v5499
  %v5516 = vrot.slane %v5508, 5
  %v5517 = vrot.slane %v5509, 4
  %v5518 = vsel %vm577, %v5517, %v5516
  %v5519 = vrot.slane %v5510, 3
  %v5520 = vsel %vm580, %v5519, %v5518
  %v5521 = vrot.slane %v5511, 2
  %v5522 = vsel %vm583, %v5521, %v5520
  %v5523 = vrot.slane %v5512, 1
  %v5524 = vsel %vm586, %v5523, %v5522
  %v5525 = vsel %vm589, %v5513, %v5524
  %v5526 = vrot.slane %v5514, 7
  %v5527 = vsel %vm592, %v5526, %v5525
  %v5528 = vrot.slane %v5515, 6
  %v5529 = vsel %vm595, %v5528, %v5527
  %v5530 = vpack.c.b16 %v5529, %v5529
  %5532 = vmatprep.subr.bf16.mxu0 %v173
  %5533 = vmatpush1.bf16.msra.mxu0 %v172
  %5534 = vmatprep.subr.bf16.mxu0 %v170
  %5535 = vmatpush1.bf16.msra.mxu0 %v169
  %5536 = vmatprep.subr.bf16.mxu0 %v167
  %5537 = vmatpush1.bf16.msra.mxu0 %v166
  %5538 = vmatprep.subr.bf16.mxu0 %v164
  %5539 = vmatpush1.bf16.msra.mxu0 %v163
  %5540 = vmatprep.subr.bf16.mxu0 %v161
  %5541 = vmatpush1.bf16.msra.mxu0 %v160
  %5542 = vmatprep.subr.bf16.mxu0 %v158
  %5543 = vmatpush1.bf16.msra.mxu0 %v157
  %5544 = vmatprep.subr.bf16.mxu0 %v155
  %5545 = vmatpush1.bf16.msra.mxu0 %v154
  %5546 = vmatprep.subr.bf16.mxu0 %v152
  %5547 = vmatpush1.bf16.msra.mxu0 %v151
  %5548 = vmatprep.subr.bf16.mxu0 0
  %5549 = vmatpush2.bf16.msra.mxu0 0
  %5550 = vmatprep.subr.bf16.mxu0 0
  %5551 = vmatpush2.bf16.msra.mxu0 0
  %5552 = vmatprep.subr.bf16.mxu0 0
  %5553 = vmatpush2.bf16.msra.mxu0 0
  %5554 = vmatprep.subr.bf16.mxu0 0
  %5555 = vmatpush2.bf16.msra.mxu0 0
  %5556 = vmatprep.subr.bf16.mxu0 0
  %5557 = vmatpush2.bf16.msra.mxu0 0
  %5558 = vmatprep.subr.bf16.mxu0 0
  %5559 = vmatpush2.bf16.msra.mxu0 0
  %5560 = vmatprep.subr.bf16.mxu0 0
  %5561 = vmatpush2.bf16.msra.mxu0 0
  %5562 = vmatprep.subr.bf16.mxu0 0
  %5563 = vmatpush2.bf16.msra.mxu0 0
  %5564 = vmatprep.mubr.bf16.mxu0 0
  %5565 = vmatmul.mubr.bf16.gmra.mxu0 %v5530
  %v5566 = vpop.f32.mrf.mxu0
  %v5567 = vadd.f32 %v57, %v5566
  %v5568 = vpop.f32.mrf.mxu0
  %v5569 = vadd.f32 %v61, %v5568
  %v5570 = vpop.f32.mrf.mxu0
  %v5571 = vpop.f32.mrf.mxu0
  %5572 = vdwg.mxu0
  %5573 = vmatprep.subr.bf16.mxu0 0
  %5574 = vmatpush1.bf16.msra.mxu0 %v174
  %5575 = vmatprep.subr.bf16.mxu0 0
  %5576 = vmatpush1.bf16.msra.mxu0 %v171
  %5577 = vmatprep.subr.bf16.mxu0 0
  %5578 = vmatpush1.bf16.msra.mxu0 %v168
  %5579 = vmatprep.subr.bf16.mxu0 0
  %5580 = vmatpush1.bf16.msra.mxu0 %v165
  %5581 = vmatprep.subr.bf16.mxu0 0
  %5582 = vmatpush1.bf16.msra.mxu0 %v162
  %5583 = vmatprep.subr.bf16.mxu0 0
  %5584 = vmatpush1.bf16.msra.mxu0 %v159
  %5585 = vmatprep.subr.bf16.mxu0 0
  %5586 = vmatpush1.bf16.msra.mxu0 %v156
  %5587 = vmatprep.subr.bf16.mxu0 0
  %5588 = vmatpush1.bf16.msra.mxu0 %v153
  %5589 = vmatprep.subr.bf16.mxu0 0
  %5590 = vmatpush2.bf16.msra.mxu0 0
  %5591 = vmatprep.subr.bf16.mxu0 0
  %5592 = vmatpush2.bf16.msra.mxu0 0
  %5593 = vmatprep.subr.bf16.mxu0 0
  %5594 = vmatpush2.bf16.msra.mxu0 0
  %5595 = vmatprep.subr.bf16.mxu0 0
  %5596 = vmatpush2.bf16.msra.mxu0 0
  %5597 = vmatprep.subr.bf16.mxu0 0
  %5598 = vmatpush2.bf16.msra.mxu0 0
  %5599 = vmatprep.subr.bf16.mxu0 0
  %5600 = vmatpush2.bf16.msra.mxu0 0
  %5601 = vmatprep.subr.bf16.mxu0 0
  %5602 = vmatpush2.bf16.msra.mxu0 0
  %5603 = vmatprep.subr.bf16.mxu0 0
  %5604 = vmatpush2.bf16.msra.mxu0 0
  %5605 = vmatprep.mubr.bf16.mxu0 0
  %5606 = vmatmul.mubr.bf16.gmra.mxu0 %v5530
  %v5607 = vpop.f32.mrf.mxu0
  %v5608 = vadd.f32 %v65, %v5607
  %v5609 = vpop.f32.mrf.mxu0
  %v5610 = vpop.f32.mrf.mxu0
  %v5611 = vpop.f32.mrf.mxu0
  %5612 = vdwg.mxu0
  %v5613 = vld [vmem:[%s0 + $0xc] sm:$0x88]
  %v5614 = vld [vmem:[%s0 + $0x14] sm:$0x8]
  %v5615 = vld [vmem:[%s0 + $0x24] sm:$0x88]
  %v5616 = vld [vmem:[%s0 + $0x2c] sm:$0x8]
  %v5617 = vld [vmem:[%s0 + $0x3c] sm:$0x88]
  %v5618 = vld [vmem:[%s0 + $0x44] sm:$0x8]
  %v5619 = vld [vmem:[%s0 + $0x54] sm:$0x88]
  %v5620 = vld [vmem:[%s0 + $0x5c] sm:$0x8]
  %v5621 = vld [vmem:[%s0 + $0x6c] sm:$0x88]
  %v5622 = vld [vmem:[%s0 + $0x74] sm:$0x8]
  %v5623 = vld [vmem:[%s0 + $0x84] sm:$0x88]
  %v5624 = vld [vmem:[%s0 + $0x8c] sm:$0x8]
  %v5625 = vld [vmem:[%s0 + $0x9c] sm:$0x88]
  %v5626 = vld [vmem:[%s0 + $0xa4] sm:$0x8]
  %v5627 = vld [vmem:[%s0 + $0xb4] sm:$0x88]
  %v5628 = vld [vmem:[%s0 + $0xbc] sm:$0x8]
  %v5629 = vunpack.c.l.bf16 %v5613
  %v5630 = vunpack.c.h.bf16 %v5613
  %v5631 = vunpack.c.l.bf16 %v5614
  %v5632 = vunpack.c.l.bf16 %v5615
  %v5633 = vunpack.c.h.bf16 %v5615
  %v5634 = vunpack.c.l.bf16 %v5616
  %v5635 = vunpack.c.l.bf16 %v5617
  %v5636 = vunpack.c.h.bf16 %v5617
  %v5637 = vunpack.c.l.bf16 %v5618
  %v5638 = vunpack.c.l.bf16 %v5619
  %v5639 = vunpack.c.h.bf16 %v5619
  %v5640 = vunpack.c.l.bf16 %v5620
  %v5641 = vunpack.c.l.bf16 %v5621
  %v5642 = vunpack.c.h.bf16 %v5621
  %v5643 = vunpack.c.l.bf16 %v5622
  %v5644 = vunpack.c.l.bf16 %v5623
  %v5645 = vunpack.c.h.bf16 %v5623
  %v5646 = vunpack.c.l.bf16 %v5624
  %v5647 = vunpack.c.l.bf16 %v5625
  %v5648 = vunpack.c.h.bf16 %v5625
  %v5649 = vunpack.c.l.bf16 %v5626
  %v5650 = vunpack.c.l.bf16 %v5627
  %v5651 = vunpack.c.h.bf16 %v5627
  %v5652 = vunpack.c.l.bf16 %v5628
  %v5654 = vrot.slane %v5567, 2
  %v5655 = vrot.slane %v5567, 3
  %v5656 = vrot.slane %v5567, 4
  %v5657 = vrot.slane %v5567, 5
  %v5658 = vrot.slane %v5567, 6
  %v5659 = vrot.slane %v5567, 7
  %v5660 = vrot.slane %v5567, 1
  %v5669 = vadd.f32 %v5629, %v5654
  %v5670 = vadd.f32 %v5632, %v5655
  %v5671 = vadd.f32 %v5635, %v5656
  %v5672 = vadd.f32 %v5638, %v5657
  %v5673 = vadd.f32 %v5641, %v5658
  %v5674 = vadd.f32 %v5644, %v5659
  %v5675 = vadd.f32 %v5647, %v5567
  %v5676 = vadd.f32 %v5650, %v5660
  %v5677 = vxor.u32 %v5669, 2147483648
  %v5678 = vxor.u32 %v5670, 2147483648
  %v5679 = vxor.u32 %v5671, 2147483648
  %v5680 = vxor.u32 %v5672, 2147483648
  %v5681 = vxor.u32 %v5673, 2147483648
  %v5682 = vxor.u32 %v5674, 2147483648
  %v5683 = vxor.u32 %v5675, 2147483648
  %v5684 = vxor.u32 %v5676, 2147483648
  %v5685 = vmul.f32 %v5677, 1.442695
  %v5686 = vpow.pop %v5685
  %v5687 = vmul.f32 %v5678, 1.442695
  %v5688 = vpow.pop %v5687
  %v5689 = vmul.f32 %v5679, 1.442695
  %v5690 = vpow.pop %v5689
  %v5691 = vmul.f32 %v5680, 1.442695
  %v5692 = vpow.pop %v5691
  %v5693 = vmul.f32 %v5681, 1.442695
  %v5694 = vpow.pop %v5693
  %v5695 = vmul.f32 %v5682, 1.442695
  %v5696 = vpow.pop %v5695
  %v5697 = vmul.f32 %v5683, 1.442695
  %v5698 = vpow.pop %v5697
  %v5699 = vmul.f32 %v5684, 1.442695
  %v5700 = vpow.pop %v5699
  %v5701 = vadd.f32 %v5686, 1.0
  %v5702 = vadd.f32 %v5688, 1.0
  %v5703 = vadd.f32 %v5690, 1.0
  %v5704 = vadd.f32 %v5692, 1.0
  %v5705 = vadd.f32 %v5694, 1.0
  %v5706 = vadd.f32 %v5696, 1.0
  %v5707 = vadd.f32 %v5698, 1.0
  %v5708 = vadd.f32 %v5700, 1.0
  %v5709 = vrcp.pop %v5701
  %v5710 = vmul.f32 1.0, %v5709
  %v5711 = vrcp.pop %v5702
  %v5712 = vmul.f32 1.0, %v5711
  %v5713 = vrcp.pop %v5703
  %v5714 = vmul.f32 1.0, %v5713
  %v5715 = vrcp.pop %v5704
  %v5716 = vmul.f32 1.0, %v5715
  %v5717 = vrcp.pop %v5705
  %v5718 = vmul.f32 1.0, %v5717
  %v5719 = vrcp.pop %v5706
  %v5720 = vmul.f32 1.0, %v5719
  %v5721 = vrcp.pop %v5707
  %v5722 = vmul.f32 1.0, %v5721
  %v5723 = vrcp.pop %v5708
  %v5724 = vmul.f32 1.0, %v5723
  %v5726 = vrot.slane %v5569, 2
  %v5727 = vrot.slane %v5569, 3
  %v5728 = vrot.slane %v5569, 4
  %v5729 = vrot.slane %v5569, 5
  %v5730 = vrot.slane %v5569, 6
  %v5731 = vrot.slane %v5569, 7
  %v5732 = vrot.slane %v5569, 1
  %v5741 = vadd.f32 %v5630, %v5726
  %v5742 = vadd.f32 %v5633, %v5727
  %v5743 = vadd.f32 %v5636, %v5728
  %v5744 = vadd.f32 %v5639, %v5729
  %v5745 = vadd.f32 %v5642, %v5730
  %v5746 = vadd.f32 %v5645, %v5731
  %v5747 = vadd.f32 %v5648, %v5569
  %v5748 = vadd.f32 %v5651, %v5732
  %v5749 = vxor.u32 %v5741, 2147483648
  %v5750 = vxor.u32 %v5742, 2147483648
  %v5751 = vxor.u32 %v5743, 2147483648
  %v5752 = vxor.u32 %v5744, 2147483648
  %v5753 = vxor.u32 %v5745, 2147483648
  %v5754 = vxor.u32 %v5746, 2147483648
  %v5755 = vxor.u32 %v5747, 2147483648
  %v5756 = vxor.u32 %v5748, 2147483648
  %v5757 = vmul.f32 %v5749, 1.442695
  %v5758 = vpow.pop %v5757
  %v5759 = vmul.f32 %v5750, 1.442695
  %v5760 = vpow.pop %v5759
  %v5761 = vmul.f32 %v5751, 1.442695
  %v5762 = vpow.pop %v5761
  %v5763 = vmul.f32 %v5752, 1.442695
  %v5764 = vpow.pop %v5763
  %v5765 = vmul.f32 %v5753, 1.442695
  %v5766 = vpow.pop %v5765
  %v5767 = vmul.f32 %v5754, 1.442695
  %v5768 = vpow.pop %v5767
  %v5769 = vmul.f32 %v5755, 1.442695
  %v5770 = vpow.pop %v5769
  %v5771 = vmul.f32 %v5756, 1.442695
  %v5772 = vpow.pop %v5771
  %v5773 = vadd.f32 %v5758, 1.0
  %v5774 = vadd.f32 %v5760, 1.0
  %v5775 = vadd.f32 %v5762, 1.0
  %v5776 = vadd.f32 %v5764, 1.0
  %v5777 = vadd.f32 %v5766, 1.0
  %v5778 = vadd.f32 %v5768, 1.0
  %v5779 = vadd.f32 %v5770, 1.0
  %v5780 = vadd.f32 %v5772, 1.0
  %v5781 = vrcp.pop %v5773
  %v5782 = vmul.f32 1.0, %v5781
  %v5783 = vrcp.pop %v5774
  %v5784 = vmul.f32 1.0, %v5783
  %v5785 = vrcp.pop %v5775
  %v5786 = vmul.f32 1.0, %v5785
  %v5787 = vrcp.pop %v5776
  %v5788 = vmul.f32 1.0, %v5787
  %v5789 = vrcp.pop %v5777
  %v5790 = vmul.f32 1.0, %v5789
  %v5791 = vrcp.pop %v5778
  %v5792 = vmul.f32 1.0, %v5791
  %v5793 = vrcp.pop %v5779
  %v5794 = vmul.f32 1.0, %v5793
  %v5795 = vrcp.pop %v5780
  %v5796 = vmul.f32 1.0, %v5795
  %v5798 = vrot.slane %v5608, 2
  %v5799 = vrot.slane %v5608, 3
  %v5800 = vrot.slane %v5608, 4
  %v5801 = vrot.slane %v5608, 5
  %v5802 = vrot.slane %v5608, 6
  %v5803 = vrot.slane %v5608, 7
  %v5804 = vrot.slane %v5608, 1
  %v5813 = vmul.f32 %v5710, %v5798
  %v5814 = vmul.f32 %v5712, %v5799
  %v5815 = vmul.f32 %v5714, %v5800
  %v5816 = vmul.f32 %v5716, %v5801
  %v5817 = vmul.f32 %v5718, %v5802
  %v5818 = vmul.f32 %v5720, %v5803
  %v5819 = vmul.f32 %v5722, %v5608
  %v5820 = vmul.f32 %v5724, %v5804
  %v5821 = vadd.f32 %v5631, %v5813
  %v5822 = vadd.f32 %v5634, %v5814
  %v5823 = vadd.f32 %v5637, %v5815
  %v5824 = vadd.f32 %v5640, %v5816
  %v5825 = vadd.f32 %v5643, %v5817
  %v5826 = vadd.f32 %v5646, %v5818
  %v5827 = vadd.f32 %v5649, %v5819
  %v5828 = vadd.f32 %v5652, %v5820
  %v5829 = vtanh.pop %v5821
  %v5830 = vtanh.pop %v5822
  %v5831 = vtanh.pop %v5823
  %v5832 = vtanh.pop %v5824
  %v5833 = vtanh.pop %v5825
  %v5834 = vtanh.pop %v5826
  %v5835 = vtanh.pop %v5827
  %v5836 = vtanh.pop %v5828
  %v5837 = vsub.f32 1.0, %v5782
  %v5838 = vsub.f32 1.0, %v5784
  %v5839 = vsub.f32 1.0, %v5786
  %v5840 = vsub.f32 1.0, %v5788
  %v5841 = vsub.f32 1.0, %v5790
  %v5842 = vsub.f32 1.0, %v5792
  %v5843 = vsub.f32 1.0, %v5794
  %v5844 = vsub.f32 1.0, %v5796
  %v5845 = vmul.f32 %v5837, %v5829
  %v5846 = vmul.f32 %v5838, %v5830
  %v5847 = vmul.f32 %v5839, %v5831
  %v5848 = vmul.f32 %v5840, %v5832
  %v5849 = vmul.f32 %v5841, %v5833
  %v5850 = vmul.f32 %v5842, %v5834
  %v5851 = vmul.f32 %v5843, %v5835
  %v5852 = vmul.f32 %v5844, %v5836
  %v5861 = vrot.slane %v5484, 7
  %v5862 = vrot.slane %v5485, 7
  %v5863 = vrot.slane %v5486, 7
  %v5864 = vrot.slane %v5487, 7
  %v5865 = vrot.slane %v5488, 7
  %v5866 = vrot.slane %v5489, 7
  %v5867 = vrot.slane %v5490, 7
  %v5868 = vrot.slane %v5491, 7
  %v5877 = vmul.f32 %v5782, %v5861
  %v5878 = vmul.f32 %v5784, %v5862
  %v5879 = vmul.f32 %v5786, %v5863
  %v5880 = vmul.f32 %v5788, %v5864
  %v5881 = vmul.f32 %v5790, %v5865
  %v5882 = vmul.f32 %v5792, %v5866
  %v5883 = vmul.f32 %v5794, %v5867
  %v5884 = vmul.f32 %v5796, %v5868
  %v5885 = vadd.f32 %v5845, %v5877
  %v5886 = vadd.f32 %v5846, %v5878
  %v5887 = vadd.f32 %v5847, %v5879
  %v5888 = vadd.f32 %v5848, %v5880
  %v5889 = vadd.f32 %v5849, %v5881
  %v5890 = vadd.f32 %v5850, %v5882
  %v5891 = vadd.f32 %v5851, %v5883
  %v5892 = vadd.f32 %v5852, %v5884
  %v5893 = vpack.c.bf16 %v5885, %v5885
  %v5894 = vpack.c.bf16 %v5886, %v5886
  %v5895 = vpack.c.bf16 %v5887, %v5887
  %v5896 = vpack.c.bf16 %v5888, %v5888
  %v5897 = vpack.c.bf16 %v5889, %v5889
  %v5898 = vpack.c.bf16 %v5890, %v5890
  %v5899 = vpack.c.bf16 %v5891, %v5891
  %v5900 = vpack.c.bf16 %v5892, %v5892
  %v5909 = vunpack.c.l.b16 %v5893
  %v5910 = vunpack.c.l.b16 %v5894
  %v5911 = vunpack.c.l.b16 %v5895
  %v5912 = vunpack.c.l.b16 %v5896
  %v5913 = vunpack.c.l.b16 %v5897
  %v5914 = vunpack.c.l.b16 %v5898
  %v5915 = vunpack.c.l.b16 %v5899
  %v5916 = vunpack.c.l.b16 %v5900
  %v5917 = vrot.slane %v5909, 6
  %v5918 = vrot.slane %v5910, 5
  %v5919 = vsel %vm577, %v5918, %v5917
  %v5920 = vrot.slane %v5911, 4
  %v5921 = vsel %vm580, %v5920, %v5919
  %v5922 = vrot.slane %v5912, 3
  %v5923 = vsel %vm583, %v5922, %v5921
  %v5924 = vrot.slane %v5913, 2
  %v5925 = vsel %vm586, %v5924, %v5923
  %v5926 = vrot.slane %v5914, 1
  %v5927 = vsel %vm589, %v5926, %v5925
  %v5928 = vsel %vm592, %v5915, %v5927
  %v5929 = vrot.slane %v5916, 7
  %v5930 = vsel %vm595, %v5929, %v5928
  %v5931 = vpack.c.b16 %v5930, %v5930
  %5933 = vmatprep.subr.bf16.mxu0 %v173
  %5934 = vmatpush1.bf16.msra.mxu0 %v172
  %5935 = vmatprep.subr.bf16.mxu0 %v170
  %5936 = vmatpush1.bf16.msra.mxu0 %v169
  %5937 = vmatprep.subr.bf16.mxu0 %v167
  %5938 = vmatpush1.bf16.msra.mxu0 %v166
  %5939 = vmatprep.subr.bf16.mxu0 %v164
  %5940 = vmatpush1.bf16.msra.mxu0 %v163
  %5941 = vmatprep.subr.bf16.mxu0 %v161
  %5942 = vmatpush1.bf16.msra.mxu0 %v160
  %5943 = vmatprep.subr.bf16.mxu0 %v158
  %5944 = vmatpush1.bf16.msra.mxu0 %v157
  %5945 = vmatprep.subr.bf16.mxu0 %v155
  %5946 = vmatpush1.bf16.msra.mxu0 %v154
  %5947 = vmatprep.subr.bf16.mxu0 %v152
  %5948 = vmatpush1.bf16.msra.mxu0 %v151
  %5949 = vmatprep.subr.bf16.mxu0 0
  %5950 = vmatpush2.bf16.msra.mxu0 0
  %5951 = vmatprep.subr.bf16.mxu0 0
  %5952 = vmatpush2.bf16.msra.mxu0 0
  %5953 = vmatprep.subr.bf16.mxu0 0
  %5954 = vmatpush2.bf16.msra.mxu0 0
  %5955 = vmatprep.subr.bf16.mxu0 0
  %5956 = vmatpush2.bf16.msra.mxu0 0
  %5957 = vmatprep.subr.bf16.mxu0 0
  %5958 = vmatpush2.bf16.msra.mxu0 0
  %5959 = vmatprep.subr.bf16.mxu0 0
  %5960 = vmatpush2.bf16.msra.mxu0 0
  %5961 = vmatprep.subr.bf16.mxu0 0
  %5962 = vmatpush2.bf16.msra.mxu0 0
  %5963 = vmatprep.subr.bf16.mxu0 0
  %5964 = vmatpush2.bf16.msra.mxu0 0
  %5965 = vmatprep.mubr.bf16.mxu0 0
  %5966 = vmatmul.mubr.bf16.gmra.mxu0 %v5931
  %v5967 = vpop.f32.mrf.mxu0
  %v5968 = vadd.f32 %v57, %v5967
  %v5969 = vpop.f32.mrf.mxu0
  %v5970 = vadd.f32 %v61, %v5969
  %v5971 = vpop.f32.mrf.mxu0
  %v5972 = vpop.f32.mrf.mxu0
  %5973 = vdwg.mxu0
  %5974 = vmatprep.subr.bf16.mxu0 0
  %5975 = vmatpush1.bf16.msra.mxu0 %v174
  %5976 = vmatprep.subr.bf16.mxu0 0
  %5977 = vmatpush1.bf16.msra.mxu0 %v171
  %5978 = vmatprep.subr.bf16.mxu0 0
  %5979 = vmatpush1.bf16.msra.mxu0 %v168
  %5980 = vmatprep.subr.bf16.mxu0 0
  %5981 = vmatpush1.bf16.msra.mxu0 %v165
  %5982 = vmatprep.subr.bf16.mxu0 0
  %5983 = vmatpush1.bf16.msra.mxu0 %v162
  %5984 = vmatprep.subr.bf16.mxu0 0
  %5985 = vmatpush1.bf16.msra.mxu0 %v159
  %5986 = vmatprep.subr.bf16.mxu0 0
  %5987 = vmatpush1.bf16.msra.mxu0 %v156
  %5988 = vmatprep.subr.bf16.mxu0 0
  %5989 = vmatpush1.bf16.msra.mxu0 %v153
  %5990 = vmatprep.subr.bf16.mxu0 0
  %5991 = vmatpush2.bf16.msra.mxu0 0
  %5992 = vmatprep.subr.bf16.mxu0 0
  %5993 = vmatpush2.bf16.msra.mxu0 0
  %5994 = vmatprep.subr.bf16.mxu0 0
  %5995 = vmatpush2.bf16.msra.mxu0 0
  %5996 = vmatprep.subr.bf16.mxu0 0
  %5997 = vmatpush2.bf16.msra.mxu0 0
  %5998 = vmatprep.subr.bf16.mxu0 0
  %5999 = vmatpush2.bf16.msra.mxu0 0
  %6000 = vmatprep.subr.bf16.mxu0 0
  %6001 = vmatpush2.bf16.msra.mxu0 0
  %6002 = vmatprep.subr.bf16.mxu0 0
  %6003 = vmatpush2.bf16.msra.mxu0 0
  %6004 = vmatprep.subr.bf16.mxu0 0
  %6005 = vmatpush2.bf16.msra.mxu0 0
  %6006 = vmatprep.mubr.bf16.mxu0 0
  %6007 = vmatmul.mubr.bf16.gmra.mxu0 %v5931
  %v6008 = vpop.f32.mrf.mxu0
  %v6009 = vadd.f32 %v65, %v6008
  %v6010 = vpop.f32.mrf.mxu0
  %v6011 = vpop.f32.mrf.mxu0
  %v6012 = vpop.f32.mrf.mxu0
  %6013 = vdwg.mxu0
  %v6015 = vrot.slane %v5968, 1
  %v6016 = vrot.slane %v5968, 2
  %v6017 = vrot.slane %v5968, 3
  %v6018 = vrot.slane %v5968, 4
  %v6019 = vrot.slane %v5968, 5
  %v6020 = vrot.slane %v5968, 6
  %v6021 = vrot.slane %v5968, 7
  %v6030 = vadd.f32 %v5629, %v6015
  %v6031 = vadd.f32 %v5632, %v6016
  %v6032 = vadd.f32 %v5635, %v6017
  %v6033 = vadd.f32 %v5638, %v6018
  %v6034 = vadd.f32 %v5641, %v6019
  %v6035 = vadd.f32 %v5644, %v6020
  %v6036 = vadd.f32 %v5647, %v6021
  %v6037 = vadd.f32 %v5650, %v5968
  %v6038 = vxor.u32 %v6030, 2147483648
  %v6039 = vxor.u32 %v6031, 2147483648
  %v6040 = vxor.u32 %v6032, 2147483648
  %v6041 = vxor.u32 %v6033, 2147483648
  %v6042 = vxor.u32 %v6034, 2147483648
  %v6043 = vxor.u32 %v6035, 2147483648
  %v6044 = vxor.u32 %v6036, 2147483648
  %v6045 = vxor.u32 %v6037, 2147483648
  %v6046 = vmul.f32 %v6038, 1.442695
  %v6047 = vpow.pop %v6046
  %v6048 = vmul.f32 %v6039, 1.442695
  %v6049 = vpow.pop %v6048
  %v6050 = vmul.f32 %v6040, 1.442695
  %v6051 = vpow.pop %v6050
  %v6052 = vmul.f32 %v6041, 1.442695
  %v6053 = vpow.pop %v6052
  %v6054 = vmul.f32 %v6042, 1.442695
  %v6055 = vpow.pop %v6054
  %v6056 = vmul.f32 %v6043, 1.442695
  %v6057 = vpow.pop %v6056
  %v6058 = vmul.f32 %v6044, 1.442695
  %v6059 = vpow.pop %v6058
  %v6060 = vmul.f32 %v6045, 1.442695
  %v6061 = vpow.pop %v6060
  %v6062 = vadd.f32 %v6047, 1.0
  %v6063 = vadd.f32 %v6049, 1.0
  %v6064 = vadd.f32 %v6051, 1.0
  %v6065 = vadd.f32 %v6053, 1.0
  %v6066 = vadd.f32 %v6055, 1.0
  %v6067 = vadd.f32 %v6057, 1.0
  %v6068 = vadd.f32 %v6059, 1.0
  %v6069 = vadd.f32 %v6061, 1.0
  %v6070 = vrcp.pop %v6062
  %v6071 = vmul.f32 1.0, %v6070
  %v6072 = vrcp.pop %v6063
  %v6073 = vmul.f32 1.0, %v6072
  %v6074 = vrcp.pop %v6064
  %v6075 = vmul.f32 1.0, %v6074
  %v6076 = vrcp.pop %v6065
  %v6077 = vmul.f32 1.0, %v6076
  %v6078 = vrcp.pop %v6066
  %v6079 = vmul.f32 1.0, %v6078
  %v6080 = vrcp.pop %v6067
  %v6081 = vmul.f32 1.0, %v6080
  %v6082 = vrcp.pop %v6068
  %v6083 = vmul.f32 1.0, %v6082
  %v6084 = vrcp.pop %v6069
  %v6085 = vmul.f32 1.0, %v6084
  %v6087 = vrot.slane %v5970, 1
  %v6088 = vrot.slane %v5970, 2
  %v6089 = vrot.slane %v5970, 3
  %v6090 = vrot.slane %v5970, 4
  %v6091 = vrot.slane %v5970, 5
  %v6092 = vrot.slane %v5970, 6
  %v6093 = vrot.slane %v5970, 7
  %v6102 = vadd.f32 %v5630, %v6087
  %v6103 = vadd.f32 %v5633, %v6088
  %v6104 = vadd.f32 %v5636, %v6089
  %v6105 = vadd.f32 %v5639, %v6090
  %v6106 = vadd.f32 %v5642, %v6091
  %v6107 = vadd.f32 %v5645, %v6092
  %v6108 = vadd.f32 %v5648, %v6093
  %v6109 = vadd.f32 %v5651, %v5970
  %v6110 = vxor.u32 %v6102, 2147483648
  %v6111 = vxor.u32 %v6103, 2147483648
  %v6112 = vxor.u32 %v6104, 2147483648
  %v6113 = vxor.u32 %v6105, 2147483648
  %v6114 = vxor.u32 %v6106, 2147483648
  %v6115 = vxor.u32 %v6107, 2147483648
  %v6116 = vxor.u32 %v6108, 2147483648
  %v6117 = vxor.u32 %v6109, 2147483648
  %v6118 = vmul.f32 %v6110, 1.442695
  %v6119 = vpow.pop %v6118
  %v6120 = vmul.f32 %v6111, 1.442695
  %v6121 = vpow.pop %v6120
  %v6122 = vmul.f32 %v6112, 1.442695
  %v6123 = vpow.pop %v6122
  %v6124 = vmul.f32 %v6113, 1.442695
  %v6125 = vpow.pop %v6124
  %v6126 = vmul.f32 %v6114, 1.442695
  %v6127 = vpow.pop %v6126
  %v6128 = vmul.f32 %v6115, 1.442695
  %v6129 = vpow.pop %v6128
  %v6130 = vmul.f32 %v6116, 1.442695
  %v6131 = vpow.pop %v6130
  %v6132 = vmul.f32 %v6117, 1.442695
  %v6133 = vpow.pop %v6132
  %v6134 = vadd.f32 %v6119, 1.0
  %v6135 = vadd.f32 %v6121, 1.0
  %v6136 = vadd.f32 %v6123, 1.0
  %v6137 = vadd.f32 %v6125, 1.0
  %v6138 = vadd.f32 %v6127, 1.0
  %v6139 = vadd.f32 %v6129, 1.0
  %v6140 = vadd.f32 %v6131, 1.0
  %v6141 = vadd.f32 %v6133, 1.0
  %v6142 = vrcp.pop %v6134
  %v6143 = vmul.f32 1.0, %v6142
  %v6144 = vrcp.pop %v6135
  %v6145 = vmul.f32 1.0, %v6144
  %v6146 = vrcp.pop %v6136
  %v6147 = vmul.f32 1.0, %v6146
  %v6148 = vrcp.pop %v6137
  %v6149 = vmul.f32 1.0, %v6148
  %v6150 = vrcp.pop %v6138
  %v6151 = vmul.f32 1.0, %v6150
  %v6152 = vrcp.pop %v6139
  %v6153 = vmul.f32 1.0, %v6152
  %v6154 = vrcp.pop %v6140
  %v6155 = vmul.f32 1.0, %v6154
  %v6156 = vrcp.pop %v6141
  %v6157 = vmul.f32 1.0, %v6156
  %v6159 = vrot.slane %v6009, 1
  %v6160 = vrot.slane %v6009, 2
  %v6161 = vrot.slane %v6009, 3
  %v6162 = vrot.slane %v6009, 4
  %v6163 = vrot.slane %v6009, 5
  %v6164 = vrot.slane %v6009, 6
  %v6165 = vrot.slane %v6009, 7
  %v6174 = vmul.f32 %v6071, %v6159
  %v6175 = vmul.f32 %v6073, %v6160
  %v6176 = vmul.f32 %v6075, %v6161
  %v6177 = vmul.f32 %v6077, %v6162
  %v6178 = vmul.f32 %v6079, %v6163
  %v6179 = vmul.f32 %v6081, %v6164
  %v6180 = vmul.f32 %v6083, %v6165
  %v6181 = vmul.f32 %v6085, %v6009
  %v6182 = vadd.f32 %v5631, %v6174
  %v6183 = vadd.f32 %v5634, %v6175
  %v6184 = vadd.f32 %v5637, %v6176
  %v6185 = vadd.f32 %v5640, %v6177
  %v6186 = vadd.f32 %v5643, %v6178
  %v6187 = vadd.f32 %v5646, %v6179
  %v6188 = vadd.f32 %v5649, %v6180
  %v6189 = vadd.f32 %v5652, %v6181
  %v6190 = vtanh.pop %v6182
  %v6191 = vtanh.pop %v6183
  %v6192 = vtanh.pop %v6184
  %v6193 = vtanh.pop %v6185
  %v6194 = vtanh.pop %v6186
  %v6195 = vtanh.pop %v6187
  %v6196 = vtanh.pop %v6188
  %v6197 = vtanh.pop %v6189
  %v6198 = vsub.f32 1.0, %v6143
  %v6199 = vsub.f32 1.0, %v6145
  %v6200 = vsub.f32 1.0, %v6147
  %v6201 = vsub.f32 1.0, %v6149
  %v6202 = vsub.f32 1.0, %v6151
  %v6203 = vsub.f32 1.0, %v6153
  %v6204 = vsub.f32 1.0, %v6155
  %v6205 = vsub.f32 1.0, %v6157
  %v6206 = vmul.f32 %v6198, %v6190
  %v6207 = vmul.f32 %v6199, %v6191
  %v6208 = vmul.f32 %v6200, %v6192
  %v6209 = vmul.f32 %v6201, %v6193
  %v6210 = vmul.f32 %v6202, %v6194
  %v6211 = vmul.f32 %v6203, %v6195
  %v6212 = vmul.f32 %v6204, %v6196
  %v6213 = vmul.f32 %v6205, %v6197
  %v6222 = vrot.slane %v5885, 7
  %v6223 = vrot.slane %v5886, 7
  %v6224 = vrot.slane %v5887, 7
  %v6225 = vrot.slane %v5888, 7
  %v6226 = vrot.slane %v5889, 7
  %v6227 = vrot.slane %v5890, 7
  %v6228 = vrot.slane %v5891, 7
  %v6229 = vrot.slane %v5892, 7
  %v6238 = vmul.f32 %v6143, %v6222
  %v6239 = vmul.f32 %v6145, %v6223
  %v6240 = vmul.f32 %v6147, %v6224
  %v6241 = vmul.f32 %v6149, %v6225
  %v6242 = vmul.f32 %v6151, %v6226
  %v6243 = vmul.f32 %v6153, %v6227
  %v6244 = vmul.f32 %v6155, %v6228
  %v6245 = vmul.f32 %v6157, %v6229
  %v6246 = vadd.f32 %v6206, %v6238
  %v6247 = vadd.f32 %v6207, %v6239
  %v6248 = vadd.f32 %v6208, %v6240
  %v6249 = vadd.f32 %v6209, %v6241
  %v6250 = vadd.f32 %v6210, %v6242
  %v6251 = vadd.f32 %v6211, %v6243
  %v6252 = vadd.f32 %v6212, %v6244
  %v6253 = vadd.f32 %v6213, %v6245
  %vm6254 = vcmask 1040384
  %v6255 = vsel %vm6254, %v544, %v912
  %v6256 = vsel %vm6254, %v545, %v913
  %v6257 = vsel %vm6254, %v546, %v914
  %v6258 = vsel %vm6254, %v547, %v915
  %v6259 = vsel %vm6254, %v548, %v916
  %v6260 = vsel %vm6254, %v549, %v917
  %v6261 = vsel %vm6254, %v550, %v918
  %v6262 = vsel %vm6254, %v551, %v919
  %vm6263 = vcmask 1041408
  %v6264 = vsel %vm6263, %v6255, %v1313
  %v6265 = vsel %vm6263, %v6256, %v1314
  %v6266 = vsel %vm6263, %v6257, %v1315
  %v6267 = vsel %vm6263, %v6258, %v1316
  %v6268 = vsel %vm6263, %v6259, %v1317
  %v6269 = vsel %vm6263, %v6260, %v1318
  %v6270 = vsel %vm6263, %v6261, %v1319
  %v6271 = vsel %vm6263, %v6262, %v1320
  %vm6272 = vcmask 1042432
  %v6273 = vsel %vm6272, %v6264, %v1674
  %v6274 = vsel %vm6272, %v6265, %v1675
  %v6275 = vsel %vm6272, %v6266, %v1676
  %v6276 = vsel %vm6272, %v6267, %v1677
  %v6277 = vsel %vm6272, %v6268, %v1678
  %v6278 = vsel %vm6272, %v6269, %v1679
  %v6279 = vsel %vm6272, %v6270, %v1680
  %v6280 = vsel %vm6272, %v6271, %v1681
  %vm6281 = vcmask 1043456
  %v6282 = vsel %vm6281, %v6273, %v2075
  %v6283 = vsel %vm6281, %v6274, %v2076
  %v6284 = vsel %vm6281, %v6275, %v2077
  %v6285 = vsel %vm6281, %v6276, %v2078
  %v6286 = vsel %vm6281, %v6277, %v2079
  %v6287 = vsel %vm6281, %v6278, %v2080
  %v6288 = vsel %vm6281, %v6279, %v2081
  %v6289 = vsel %vm6281, %v6280, %v2082
  %vm6290 = vcmask 1044480
  %v6291 = vsel %vm6290, %v6282, %v2436
  %v6292 = vsel %vm6290, %v6283, %v2437
  %v6293 = vsel %vm6290, %v6284, %v2438
  %v6294 = vsel %vm6290, %v6285, %v2439
  %v6295 = vsel %vm6290, %v6286, %v2440
  %v6296 = vsel %vm6290, %v6287, %v2441
  %v6297 = vsel %vm6290, %v6288, %v2442
  %v6298 = vsel %vm6290, %v6289, %v2443
  %vm6299 = vcmask 1045504
  %v6300 = vsel %vm6299, %v6291, %v2837
  %v6301 = vsel %vm6299, %v6292, %v2838
  %v6302 = vsel %vm6299, %v6293, %v2839
  %v6303 = vsel %vm6299, %v6294, %v2840
  %v6304 = vsel %vm6299, %v6295, %v2841
  %v6305 = vsel %vm6299, %v6296, %v2842
  %v6306 = vsel %vm6299, %v6297, %v2843
  %v6307 = vsel %vm6299, %v6298, %v2844
  %vm6308 = vcmask 1046528
  %v6309 = vsel %vm6308, %v6300, %v3198
  %v6310 = vsel %vm6308, %v6301, %v3199
  %v6311 = vsel %vm6308, %v6302, %v3200
  %v6312 = vsel %vm6308, %v6303, %v3201
  %v6313 = vsel %vm6308, %v6304, %v3202
  %v6314 = vsel %vm6308, %v6305, %v3203
  %v6315 = vsel %vm6308, %v6306, %v3204
  %v6316 = vsel %vm6308, %v6307, %v3205
  %v6317 = vsel %vm6254, %v3599, %v3960
  %v6318 = vsel %vm6254, %v3600, %v3961
  %v6319 = vsel %vm6254, %v3601, %v3962
  %v6320 = vsel %vm6254, %v3602, %v3963
  %v6321 = vsel %vm6254, %v3603, %v3964
  %v6322 = vsel %vm6254, %v3604, %v3965
  %v6323 = vsel %vm6254, %v3605, %v3966
  %v6324 = vsel %vm6254, %v3606, %v3967
  %v6325 = vsel %vm6263, %v6317, %v4361
  %v6326 = vsel %vm6263, %v6318, %v4362
  %v6327 = vsel %vm6263, %v6319, %v4363
  %v6328 = vsel %vm6263, %v6320, %v4364
  %v6329 = vsel %vm6263, %v6321, %v4365
  %v6330 = vsel %vm6263, %v6322, %v4366
  %v6331 = vsel %vm6263, %v6323, %v4367
  %v6332 = vsel %vm6263, %v6324, %v4368
  %v6333 = vsel %vm6272, %v6325, %v4722
  %v6334 = vsel %vm6272, %v6326, %v4723
  %v6335 = vsel %vm6272, %v6327, %v4724
  %v6336 = vsel %vm6272, %v6328, %v4725
  %v6337 = vsel %vm6272, %v6329, %v4726
  %v6338 = vsel %vm6272, %v6330, %v4727
  %v6339 = vsel %vm6272, %v6331, %v4728
  %v6340 = vsel %vm6272, %v6332, %v4729
  %v6341 = vsel %vm6281, %v6333, %v5123
  %v6342 = vsel %vm6281, %v6334, %v5124
  %v6343 = vsel %vm6281, %v6335, %v5125
  %v6344 = vsel %vm6281, %v6336, %v5126
  %v6345 = vsel %vm6281, %v6337, %v5127
  %v6346 = vsel %vm6281, %v6338, %v5128
  %v6347 = vsel %vm6281, %v6339, %v5129
  %v6348 = vsel %vm6281, %v6340, %v5130
  %v6349 = vsel %vm6290, %v6341, %v5484
  %v6350 = vsel %vm6290, %v6342, %v5485
  %v6351 = vsel %vm6290, %v6343, %v5486
  %v6352 = vsel %vm6290, %v6344, %v5487
  %v6353 = vsel %vm6290, %v6345, %v5488
  %v6354 = vsel %vm6290, %v6346, %v5489
  %v6355 = vsel %vm6290, %v6347, %v5490
  %v6356 = vsel %vm6290, %v6348, %v5491
  %v6357 = vsel %vm6299, %v6349, %v5885
  %v6358 = vsel %vm6299, %v6350, %v5886
  %v6359 = vsel %vm6299, %v6351, %v5887
  %v6360 = vsel %vm6299, %v6352, %v5888
  %v6361 = vsel %vm6299, %v6353, %v5889
  %v6362 = vsel %vm6299, %v6354, %v5890
  %v6363 = vsel %vm6299, %v6355, %v5891
  %v6364 = vsel %vm6299, %v6356, %v5892
  %v6365 = vsel %vm6308, %v6357, %v6246
  %v6366 = vsel %vm6308, %v6358, %v6247
  %v6367 = vsel %vm6308, %v6359, %v6248
  %v6368 = vsel %vm6308, %v6360, %v6249
  %v6369 = vsel %vm6308, %v6361, %v6250
  %v6370 = vsel %vm6308, %v6362, %v6251
  %v6371 = vsel %vm6308, %v6363, %v6252
  %v6372 = vsel %vm6308, %v6364, %v6253
  %v6373 = vpack.c.bf16 %v6365, %v6309
  %v6374 = vpack.c.bf16 %v6366, %v6310
  %v6375 = vpack.c.bf16 %v6367, %v6311
  %v6376 = vpack.c.bf16 %v6368, %v6312
  %v6377 = vpack.c.bf16 %v6369, %v6313
  %v6378 = vpack.c.bf16 %v6370, %v6314
  %v6379 = vpack.c.bf16 %v6371, %v6315
  %v6380 = vpack.c.bf16 %v6372, %v6316
  %v6389 = vunpack.c.l.b16 %v6373
  %v6390 = vunpack.c.h.b16 %v6373
  %v6391 = vunpack.c.l.b16 %v6374
  %v6392 = vunpack.c.h.b16 %v6374
  %v6393 = vunpack.c.l.b16 %v6375
  %v6394 = vunpack.c.h.b16 %v6375
  %v6395 = vunpack.c.l.b16 %v6376
  %v6396 = vunpack.c.h.b16 %v6376
  %v6397 = vunpack.c.l.b16 %v6377
  %v6398 = vunpack.c.h.b16 %v6377
  %v6399 = vunpack.c.l.b16 %v6378
  %v6400 = vunpack.c.h.b16 %v6378
  %v6401 = vunpack.c.l.b16 %v6379
  %v6402 = vunpack.c.h.b16 %v6379
  %v6403 = vunpack.c.l.b16 %v6380
  %v6404 = vunpack.c.h.b16 %v6380
  %v6405 = vpack.c.b16 %v6389, %v6389
  %v6406 = vpack.c.b16 %v6390, %v6390
  %v6407 = vpack.c.b16 %v6391, %v6391
  %v6408 = vpack.c.b16 %v6392, %v6392
  %v6409 = vpack.c.b16 %v6393, %v6393
  %v6410 = vpack.c.b16 %v6394, %v6394
  %v6411 = vpack.c.b16 %v6395, %v6395
  %v6412 = vpack.c.b16 %v6396, %v6396
  %v6413 = vpack.c.b16 %v6397, %v6397
  %v6414 = vpack.c.b16 %v6398, %v6398
  %v6415 = vpack.c.b16 %v6399, %v6399
  %v6416 = vpack.c.b16 %v6400, %v6400
  %v6417 = vpack.c.b16 %v6401, %v6401
  %v6418 = vpack.c.b16 %v6402, %v6402
  %v6419 = vpack.c.b16 %v6403, %v6403
  %v6420 = vpack.c.b16 %v6404, %v6404
  %6437 = vst [vmem:[%s3] sm:$0xf] %v6405
  %6438 = vst [vmem:[%s3 + $0x4] sm:$0xf] %v6406
  %6439 = vst [vmem:[%s3 + $0x8] sm:$0xf] %v6407
  %6440 = vst [vmem:[%s3 + $0xc] sm:$0xf] %v6408
  %6441 = vst [vmem:[%s3 + $0x10] sm:$0xf] %v6409
  %6442 = vst [vmem:[%s3 + $0x14] sm:$0xf] %v6410
  %6443 = vst [vmem:[%s3 + $0x18] sm:$0xf] %v6411
  %6444 = vst [vmem:[%s3 + $0x1c] sm:$0xf] %v6412
  %6445 = vst [vmem:[%s3 + $0x20] sm:$0xf] %v6413
  %6446 = vst [vmem:[%s3 + $0x24] sm:$0xf] %v6414
  %6447 = vst [vmem:[%s3 + $0x28] sm:$0xf] %v6415
  %6448 = vst [vmem:[%s3 + $0x2c] sm:$0xf] %v6416
  %6449 = vst [vmem:[%s3 + $0x30] sm:$0xf] %v6417
  %6450 = vst [vmem:[%s3 + $0x34] sm:$0xf] %v6418
  %6451 = vst [vmem:[%s3 + $0x38] sm:$0xf] %v6419
  %6452 = vst [vmem:[%s3 + $0x3c] sm:$0xf] %v6420
  %v6461 = vrot.slane %v6247, 7
  %v6462 = vrot.slane %v6248, 6
  %v6463 = vsel %vm577, %v6462, %v6461
  %v6464 = vrot.slane %v6249, 5
  %v6465 = vsel %vm580, %v6464, %v6463
  %v6466 = vrot.slane %v6250, 4
  %v6467 = vsel %vm583, %v6466, %v6465
  %v6468 = vrot.slane %v6251, 3
  %v6469 = vsel %vm586, %v6468, %v6467
  %v6470 = vrot.slane %v6252, 2
  %v6471 = vsel %vm589, %v6470, %v6469
  %v6472 = vrot.slane %v6253, 1
  %v6473 = vsel %vm592, %v6472, %v6471
  %6476 = vst [vmem:[#allocation2 - $0x7] sm:$0x80] %v6246
  %6477 = vst [vmem:[#allocation2 + $0x1] sm:$0x7f] %v6473
  // Predicated region
  $region18: #{_lambda_.3} parent=0 // pred_check
    _
  $region19: #{_lambda_.3} parent=0 // pred_check_branch
    %6479 = sbr.rel (0) target = $region21
  $region20: #{_lambda_.3} parent=0 // pred_region
    _
  $region21: #{_lambda_.3} parent=0 // pred_fallthru
    _
  // Predicated region
  $region22: #{_lambda_.3} parent=0 // pred_check
    _
  $region23: #{_lambda_.3} parent=0 // pred_check_branch
    %6481 = sbr.rel (0) target = $region25
  $region24: #{_lambda_.3} parent=0 // pred_region
    _
  $region25: #{_lambda_.3} parent=0 // pred_fallthru
    _

</llo_original>
